<compile_context>
chip_gen: v5e
topology: v5e:2x2
jax: 0.10.0
libtpu: 0.0.40
codegen_flags: <defaults>
</compile_context>

<pallas_src>
import functools

import jax
import jax.numpy as jnp
from jax.experimental import pallas as pl
from jax.experimental.pallas import tpu as pltpu


def _round_up(x, m):
    return (x + m - 1) // m * m


# ----------------------------------------------------------------------------
# Fused kernel: every ConvLSTM layer of one time step in a single invocation.
#
# Ref layout (inputs, then outputs, then scratch):
#   refs[0]                      xT      (C0, M)                  bf16
#   per layer l (5 refs each):   wT      (kh*kw, 4*hid, Cin+hid)  bf16
#                                b       (4*hid, 1)               f32
#                                mask    (kh*kw, 1, M)            bf16 (1=valid)
#                                hT      (hid, M)                 f32
#                                cT      (hid, M)                 f32
#   per layer l (1 ref each):    hc_out  (2*hid, M)               f32
#   scratch:                     comb    (Cin_max, M + 2*pad_l)   bf16
#
# M = N*H*W sits on the lane axis everywhere; channels sit on sublanes.
# ----------------------------------------------------------------------------
def _fused_convlstm_kernel(*refs, layer_dims, H, W, N, pad_l):
    num_layers = len(layer_dims)
    n_in = 1 + 5 * num_layers
    x_ref = refs[0]
    lyr_refs = refs[1:n_in]
    out_refs = refs[n_in:n_in + num_layers]
    comb = refs[n_in + num_layers]

    M = N * H * W

    # Zero once so the lane halo (and any unused channel rows) read as zeros.
    comb[...] = jnp.zeros(comb.shape, comb.dtype)

    cur = x_ref[...]                                    # (C_l, M) bf16
    for l, (c_in, hid, kh, kw) in enumerate(layer_dims):
        w_ref, b_ref, m_ref, h_ref, c_ref = lyr_refs[5 * l:5 * l + 5]
        h_cur = h_ref[...]                              # (hid, M) f32
        c_cur = c_ref[...]                              # (hid, M) f32
        ct = c_in + hid

        # combined = concat([layer input, h], channel axis), written straight
        # into the lane-padded VMEM scratch (no HBM im2col round trip).
        comb[0:c_in, pad_l:pad_l + M] = cur
        comb[c_in:ct, pad_l:pad_l + M] = h_cur.astype(jnp.bfloat16)

        # "Same" conv = kh*kw shifted-slice matmuls, accumulated in f32.
        pre = jnp.zeros((4 * hid, M), jnp.float32)
        for dy in range(kh):
            for dx in range(kw):
                tap_idx = dy * kw + dx
                shift = (dy - kh // 2) * W + (dx - kw // 2)
                tap = comb[0:ct, pad_l + shift:pad_l + shift + M]   # (ct, M)
                if not (dy == kh // 2 and dx == kw // 2):
                    tap = tap * m_ref[tap_idx]     # zero out-of-image lanes
                pre = pre + jnp.dot(w_ref[tap_idx], tap,
                                    preferred_element_type=jnp.float32)
        pre = pre + b_ref[...]                     # bias broadcasts over lanes

        # Gates: sigmoid on rows [0:3*hid] (i, f, o); tanh on rows [3*hid:] (g).
        sig = jax.nn.sigmoid(pre[0:3 * hid, :])
        g = jnp.tanh(pre[3 * hid:4 * hid, :])
        i = sig[0 * hid:1 * hid, :]
        f = sig[1 * hid:2 * hid, :]
        o = sig[2 * hid:3 * hid, :]

        c_next = f * c_cur + i * g
        h_next = o * jnp.tanh(c_next)

        out_refs[l][0:hid, :] = h_next
        out_refs[l][hid:2 * hid, :] = c_next

        cur = h_next.astype(jnp.bfloat16)   # next layer's input, stays on-chip


# ----------------------------------------------------------------------------
# ConvLSTM.forward equivalent (NCHW in / NCHW out, like the PyTorch module).
# ----------------------------------------------------------------------------
@functools.partial(jax.jit, static_argnames=("kernel_sizes",))
def convlstm_forward(x_nchw, layer_weights, hidden_state_nchw, kernel_sizes):
    N, c0, H, W = x_nchw.shape
    HW = H * W
    M = N * HW

    xT = jnp.transpose(x_nchw, (1, 0, 2, 3)).reshape(c0, M).astype(jnp.bfloat16)

    # Per-lane (flattened n, y, x) coordinates -> per-tap validity masks,
    # computed once by XLA (constant-folded) and passed in as bf16 {0, 1}.
    flat = jnp.arange(M, dtype=jnp.int32)
    local = flat % HW
    yy = local // W
    xx = local % W

    args = [xT]
    in_specs = [pl.BlockSpec(memory_space=pltpu.MemorySpace.VMEM)]
    out_shape = []
    out_specs = []
    layer_dims = []
    cur_c = c0
    max_ct = 0
    max_shift = 0
    for (w_hwio, b), (h0, c0_st), (kh, kw) in zip(layer_weights,
                                                  hidden_state_nchw,
                                                  kernel_sizes):
        hid = h0.shape[1]
        ct = cur_c + hid
        # (kh, kw, ct, 4*hid) -> (kh*kw, 4*hid, ct): tap-major, out-ch rows.
        wT = jnp.transpose(w_hwio.reshape(kh * kw, ct, 4 * hid),
                           (0, 2, 1)).astype(jnp.bfloat16)
        b2 = b.reshape(4 * hid, 1).astype(jnp.float32)
        masks = []
        for dy in range(kh):
            for dx in range(kw):
                oy, ox = dy - kh // 2, dx - kw // 2
                masks.append((yy + oy >= 0) & (yy + oy < H) &
                             (xx + ox >= 0) & (xx + ox < W))
        mask = jnp.stack(masks).reshape(kh * kw, 1, M).astype(jnp.bfloat16)
        hT = jnp.transpose(h0, (1, 0, 2, 3)).reshape(hid, M).astype(jnp.float32)
        cT = jnp.transpose(c0_st, (1, 0, 2, 3)).reshape(hid, M).astype(jnp.float32)

        args += [wT, b2, mask, hT, cT]
        in_specs += [pl.BlockSpec(memory_space=pltpu.MemorySpace.VMEM)] * 5
        out_shape.append(jax.ShapeDtypeStruct((2 * hid, M), jnp.float32))
        out_specs.append(pl.BlockSpec(memory_space=pltpu.MemorySpace.VMEM))
        layer_dims.append((cur_c, hid, kh, kw))
        max_ct = max(max_ct, ct)
        max_shift = max(max_shift, (kh // 2) * W + (kw // 2))
        cur_c = hid

    # Lane-aligned halo so the in-kernel scratch writes are unmasked stores.
    pad_l = _round_up(max_shift, 128)

    kernel = functools.partial(_fused_convlstm_kernel,
                               layer_dims=tuple(layer_dims),
                               H=H, W=W, N=N, pad_l=pad_l)

    outs = pl.pallas_call(
        kernel,
        out_shape=tuple(out_shape),
        in_specs=in_specs,
        out_specs=tuple(out_specs),
        scratch_shapes=[pltpu.VMEM((max_ct, M + 2 * pad_l), jnp.bfloat16)],
    )(*args)

    new_hidden = []
    h_last = None
    for hc, (_, hid, _, _) in zip(outs, layer_dims):
        h = jnp.transpose(hc[:hid].reshape(hid, N, H, W), (1, 0, 2, 3))
        c = jnp.transpose(hc[hid:].reshape(hid, N, H, W), (1, 0, 2, 3))
        new_hidden.append((h, c))
        h_last = h
    return h_last, new_hidden


# ----------------------------------------------------------------------------
# Pure-JAX reference (lax.conv, f32) for correctness checking.
# ----------------------------------------------------------------------------
def _cell_ref(x, h, c, w_hwio, b):
    combined = jnp.concatenate([x, h], axis=-1)
    conv = jax.lax.conv_general_dilated(
        combined, w_hwio, (1, 1), 'SAME',
        dimension_numbers=('NHWC', 'HWIO', 'NHWC')) + b
    hid = h.shape[-1]
    i = jax.nn.sigmoid(conv[..., 0 * hid:1 * hid])
    f = jax.nn.sigmoid(conv[..., 1 * hid:2 * hid])
    o = jax.nn.sigmoid(conv[..., 2 * hid:3 * hid])
    g = jnp.tanh(conv[..., 3 * hid:4 * hid])
    c_next = f * c + i * g
    h_next = o * jnp.tanh(c_next)
    return h_next, c_next


def _forward_ref(x_nchw, layer_weights, hidden_state_nchw, kernel_sizes):
    cur = jnp.transpose(x_nchw, (0, 2, 3, 1))
    new_hidden = []
    h = None
    for (w_hwio, b), (h0, c0), _ in zip(layer_weights, hidden_state_nchw,
                                        kernel_sizes):
        h, c = _cell_ref(cur,
                         jnp.transpose(h0, (0, 2, 3, 1)),
                         jnp.transpose(c0, (0, 2, 3, 1)),
                         w_hwio, b)
        new_hidden.append((jnp.transpose(h, (0, 3, 1, 2)),
                           jnp.transpose(c, (0, 3, 1, 2))))
        cur = h
    return jnp.transpose(h, (0, 3, 1, 2)), new_hidden


# ----------------------------------------------------------------------------
if __name__ == "__main__":
    # Config consistent with the PyTorch module:
    #   ConvLSTM(input_size=(16,16), input_dim=4, hidden_dim=32,
    #            kernel_size=(3,3), num_layers=2, bias=True)
    B, Cin0, H, W = 2, 4, 16, 16
    hidden_dims = [32, 32]
    kernel_size = (3, 3)
    num_layers = 2

    key = jax.random.PRNGKey(0)

    # PyTorch conv weight is (4*hid, cin, kh, kw); transpose to HWIO.
    layer_weights = []
    kernel_sizes = []
    cur_in = Cin0
    for layer in range(num_layers):
        hid = hidden_dims[layer]
        kh, kw = kernel_size
        cin = cur_in + hid
        key, k_w, k_b = jax.random.split(key, 3)
        w_oihw = 0.05 * jax.random.normal(k_w, (4 * hid, cin, kh, kw),
                                          dtype=jnp.float32)
        b = 0.05 * jax.random.normal(k_b, (4 * hid,), dtype=jnp.float32)
        w_hwio = jnp.transpose(w_oihw, (2, 3, 1, 0))     # (kh, kw, cin, 4*hid)
        layer_weights.append((w_hwio, b))
        kernel_sizes.append((kh, kw))
        cur_in = hid
    kernel_sizes = tuple(kernel_sizes)

    # Input and zero hidden state (matches ConvLSTMCell.init_hidden), NCHW.
    key, kx = jax.random.split(key)
    x = jax.random.normal(kx, (B, Cin0, H, W), dtype=jnp.float32)
    hidden_state = [
        (jnp.zeros((B, hidden_dims[i], H, W), jnp.float32),
         jnp.zeros((B, hidden_dims[i], H, W), jnp.float32))
        for i in range(num_layers)
    ]

    h_out, new_hidden = convlstm_forward(x, layer_weights, hidden_state,
                                         kernel_sizes=kernel_sizes)
    h_out = jax.block_until_ready(h_out)
    jax.block_until_ready(new_hidden)

    # Verify against the pure-JAX f32 reference.  The Pallas kernel uses bf16
    # matmul operands with f32 accumulation, so tolerance is loosened to 1e-2.
    h_ref, hidden_ref = _forward_ref(x, layer_weights, hidden_state,
                                     kernel_sizes)
    if not jnp.allclose(h_out, h_ref, atol=1e-2, rtol=1e-2):
        raise AssertionError("Pallas ConvLSTM output mismatch vs reference")
    for (hp, cp), (hr, cr) in zip(new_hidden, hidden_ref):
        if not jnp.allclose(hp, hr, atol=1e-2, rtol=1e-2):
            raise AssertionError("Pallas ConvLSTM h state mismatch vs reference")
        if not jnp.allclose(cp, cr, atol=1e-2, rtol=1e-2):
            raise AssertionError("Pallas ConvLSTM c state mismatch vs reference")

    print("KERNEL_OK")
</pallas_src>

<mosaic_0001>
module attributes {stable_mosaic.version = 11 : i64} {
  func.func @_fused_convlstm_kernel(%arg0: memref<4x512xbf16, #tpu.memory_space<vmem>>, %arg1: memref<9x128x36xbf16, #tpu.memory_space<vmem>>, %arg2: memref<128x1xf32, #tpu.memory_space<vmem>>, %arg3: memref<9x1x512xbf16, #tpu.memory_space<vmem>>, %arg4: memref<32x512xf32, #tpu.memory_space<vmem>>, %arg5: memref<32x512xf32, #tpu.memory_space<vmem>>, %arg6: memref<9x128x64xbf16, #tpu.memory_space<vmem>>, %arg7: memref<128x1xf32, #tpu.memory_space<vmem>>, %arg8: memref<9x1x512xbf16, #tpu.memory_space<vmem>>, %arg9: memref<32x512xf32, #tpu.memory_space<vmem>>, %arg10: memref<32x512xf32, #tpu.memory_space<vmem>>, %arg11: memref<64x512xf32, #tpu.memory_space<vmem>>, %arg12: memref<64x512xf32, #tpu.memory_space<vmem>>, %arg13: memref<64x768xbf16, #tpu.memory_space<vmem>>) attributes {dimension_semantics = [], scalar_prefetch = 0 : i64, scratch_operands = 1 : i64, tpu.core_type = #tpu.core_type<tc>} {
    %cst = arith.constant 0.000000e+00 : bf16
    %0 = vector.broadcast %cst : bf16 to vector<64x768xbf16>
    %c0 = arith.constant 0 : index
    %c0_0 = arith.constant 0 : index
    %1 = vector.load %arg13[%c0, %c0_0] : memref<64x768xbf16, #tpu.memory_space<vmem>>, vector<64x768xbf16>
    tpu.vector_store %arg13[%c0, %c0_0], %0 {strides = array<i32>} : memref<64x768xbf16, #tpu.memory_space<vmem>>, vector<64x768xbf16>,
    %c0_1 = arith.constant 0 : index
    %c0_2 = arith.constant 0 : index
    %2 = vector.load %arg0[%c0_1, %c0_2] : memref<4x512xbf16, #tpu.memory_space<vmem>>, vector<4x512xbf16>
    %c0_3 = arith.constant 0 : index
    %c0_4 = arith.constant 0 : index
    %3 = vector.load %arg4[%c0_3, %c0_4] : memref<32x512xf32, #tpu.memory_space<vmem>>, vector<32x512xf32>
    %c0_5 = arith.constant 0 : index
    %c0_6 = arith.constant 0 : index
    %4 = vector.load %arg5[%c0_5, %c0_6] : memref<32x512xf32, #tpu.memory_space<vmem>>, vector<32x512xf32>
    %c0_7 = arith.constant 0 : index
    %c128 = arith.constant 128 : index
    %5 = vector.load %arg13[%c0_7, %c128] : memref<64x768xbf16, #tpu.memory_space<vmem>>, vector<4x512xbf16>
    tpu.vector_store %arg13[%c0_7, %c128], %2 {strides = array<i32>} : memref<64x768xbf16, #tpu.memory_space<vmem>>, vector<4x512xbf16>,
    %6 = arith.truncf %3 : vector<32x512xf32> to vector<32x512xbf16>
    %c4 = arith.constant 4 : index
    %c128_8 = arith.constant 128 : index
    %7 = vector.load %arg13[%c4, %c128_8] : memref<64x768xbf16, #tpu.memory_space<vmem>>, vector<32x512xbf16>
    tpu.vector_store %arg13[%c4, %c128_8], %6 {strides = array<i32>} : memref<64x768xbf16, #tpu.memory_space<vmem>>, vector<32x512xbf16>,
    %cst_9 = arith.constant 0.000000e+00 : f32
    %8 = vector.broadcast %cst_9 : f32 to vector<128x512xf32>
    %c0_10 = arith.constant 0 : index
    %c111 = arith.constant 111 : index
    %9 = vector.load %arg13[%c0_10, %c111] : memref<64x768xbf16, #tpu.memory_space<vmem>>, vector<36x512xbf16>
    %c0_11 = arith.constant 0 : index
    %c0_12 = arith.constant 0 : index
    %c0_13 = arith.constant 0 : index
    %10 = vector.load %arg3[%c0_11, %c0_12, %c0_13] : memref<9x1x512xbf16, #tpu.memory_space<vmem>>, vector<1x1x512xbf16>
    %11 = vector.shape_cast %10 : vector<1x1x512xbf16> to vector<1x512xbf16>
    %12 = vector.broadcast %11 : vector<1x512xbf16> to vector<36x512xbf16>
    %13 = arith.mulf %9, %12 : vector<36x512xbf16>
    %c0_14 = arith.constant 0 : index
    %c0_15 = arith.constant 0 : index
    %c0_16 = arith.constant 0 : index
    %14 = vector.load %arg1[%c0_14, %c0_15, %c0_16] : memref<9x128x36xbf16, #tpu.memory_space<vmem>>, vector<1x128x36xbf16>
    %15 = vector.shape_cast %14 : vector<1x128x36xbf16> to vector<128x36xbf16>
    %cst_17 = arith.constant dense<0.000000e+00> : vector<128x512xf32>
    %16 = tpu.matmul %15, %13, %cst_17 {dimension_numbers = #tpu.dot_dimension_numbers<[1], [0], [0], [1], [0, 0, 1, 1], [], []>} : vector<128x36xbf16>, vector<36x512xbf16>, vector<128x512xf32> -> vector<128x512xf32>
    %17 = arith.addf %8, %16 : vector<128x512xf32>
    %c0_18 = arith.constant 0 : index
    %c112 = arith.constant 112 : index
    %18 = vector.load %arg13[%c0_18, %c112] : memref<64x768xbf16, #tpu.memory_space<vmem>>, vector<36x512xbf16>
    %c1 = arith.constant 1 : index
    %c0_19 = arith.constant 0 : index
    %c0_20 = arith.constant 0 : index
    %19 = vector.load %arg3[%c1, %c0_19, %c0_20] : memref<9x1x512xbf16, #tpu.memory_space<vmem>>, vector<1x1x512xbf16>
    %20 = vector.shape_cast %19 : vector<1x1x512xbf16> to vector<1x512xbf16>
    %21 = vector.broadcast %20 : vector<1x512xbf16> to vector<36x512xbf16>
    %22 = arith.mulf %18, %21 : vector<36x512xbf16>
    %c1_21 = arith.constant 1 : index
    %c0_22 = arith.constant 0 : index
    %c0_23 = arith.constant 0 : index
    %23 = vector.load %arg1[%c1_21, %c0_22, %c0_23] : memref<9x128x36xbf16, #tpu.memory_space<vmem>>, vector<1x128x36xbf16>
    %24 = vector.shape_cast %23 : vector<1x128x36xbf16> to vector<128x36xbf16>
    %cst_24 = arith.constant dense<0.000000e+00> : vector<128x512xf32>
    %25 = tpu.matmul %24, %22, %cst_24 {dimension_numbers = #tpu.dot_dimension_numbers<[1], [0], [0], [1], [0, 0, 1, 1], [], []>} : vector<128x36xbf16>, vector<36x512xbf16>, vector<128x512xf32> -> vector<128x512xf32>
    %26 = arith.addf %17, %25 : vector<128x512xf32>
    %c0_25 = arith.constant 0 : index
    %c113 = arith.constant 113 : index
    %27 = vector.load %arg13[%c0_25, %c113] : memref<64x768xbf16, #tpu.memory_space<vmem>>, vector<36x512xbf16>
    %c2 = arith.constant 2 : index
    %c0_26 = arith.constant 0 : index
    %c0_27 = arith.constant 0 : index
    %28 = vector.load %arg3[%c2, %c0_26, %c0_27] : memref<9x1x512xbf16, #tpu.memory_space<vmem>>, vector<1x1x512xbf16>
    %29 = vector.shape_cast %28 : vector<1x1x512xbf16> to vector<1x512xbf16>
    %30 = vector.broadcast %29 : vector<1x512xbf16> to vector<36x512xbf16>
    %31 = arith.mulf %27, %30 : vector<36x512xbf16>
    %c2_28 = arith.constant 2 : index
    %c0_29 = arith.constant 0 : index
    %c0_30 = arith.constant 0 : index
    %32 = vector.load %arg1[%c2_28, %c0_29, %c0_30] : memref<9x128x36xbf16, #tpu.memory_space<vmem>>, vector<1x128x36xbf16>
    %33 = vector.shape_cast %32 : vector<1x128x36xbf16> to vector<128x36xbf16>
    %cst_31 = arith.constant dense<0.000000e+00> : vector<128x512xf32>
    %34 = tpu.matmul %33, %31, %cst_31 {dimension_numbers = #tpu.dot_dimension_numbers<[1], [0], [0], [1], [0, 0, 1, 1], [], []>} : vector<128x36xbf16>, vector<36x512xbf16>, vector<128x512xf32> -> vector<128x512xf32>
    %35 = arith.addf %26, %34 : vector<128x512xf32>
    %c0_32 = arith.constant 0 : index
    %c127 = arith.constant 127 : index
    %36 = vector.load %arg13[%c0_32, %c127] : memref<64x768xbf16, #tpu.memory_space<vmem>>, vector<36x512xbf16>
    %c3 = arith.constant 3 : index
    %c0_33 = arith.constant 0 : index
    %c0_34 = arith.constant 0 : index
    %37 = vector.load %arg3[%c3, %c0_33, %c0_34] : memref<9x1x512xbf16, #tpu.memory_space<vmem>>, vector<1x1x512xbf16>
    %38 = vector.shape_cast %37 : vector<1x1x512xbf16> to vector<1x512xbf16>
    %39 = vector.broadcast %38 : vector<1x512xbf16> to vector<36x512xbf16>
    %40 = arith.mulf %36, %39 : vector<36x512xbf16>
    %c3_35 = arith.constant 3 : index
    %c0_36 = arith.constant 0 : index
    %c0_37 = arith.constant 0 : index
    %41 = vector.load %arg1[%c3_35, %c0_36, %c0_37] : memref<9x128x36xbf16, #tpu.memory_space<vmem>>, vector<1x128x36xbf16>
    %42 = vector.shape_cast %41 : vector<1x128x36xbf16> to vector<128x36xbf16>
    %cst_38 = arith.constant dense<0.000000e+00> : vector<128x512xf32>
    %43 = tpu.matmul %42, %40, %cst_38 {dimension_numbers = #tpu.dot_dimension_numbers<[1], [0], [0], [1], [0, 0, 1, 1], [], []>} : vector<128x36xbf16>, vector<36x512xbf16>, vector<128x512xf32> -> vector<128x512xf32>
    %44 = arith.addf %35, %43 : vector<128x512xf32>
    %c0_39 = arith.constant 0 : index
    %c128_40 = arith.constant 128 : index
    %45 = vector.load %arg13[%c0_39, %c128_40] : memref<64x768xbf16, #tpu.memory_space<vmem>>, vector<36x512xbf16>
    %c4_41 = arith.constant 4 : index
    %c0_42 = arith.constant 0 : index
    %c0_43 = arith.constant 0 : index
    %46 = vector.load %arg1[%c4_41, %c0_42, %c0_43] : memref<9x128x36xbf16, #tpu.memory_space<vmem>>, vector<1x128x36xbf16>
    %47 = vector.shape_cast %46 : vector<1x128x36xbf16> to vector<128x36xbf16>
    %cst_44 = arith.constant dense<0.000000e+00> : vector<128x512xf32>
    %48 = tpu.matmul %47, %45, %cst_44 {dimension_numbers = #tpu.dot_dimension_numbers<[1], [0], [0], [1], [0, 0, 1, 1], [], []>} : vector<128x36xbf16>, vector<36x512xbf16>, vector<128x512xf32> -> vector<128x512xf32>
    %49 = arith.addf %44, %48 : vector<128x512xf32>
    %c0_45 = arith.constant 0 : index
    %c129 = arith.constant 129 : index
    %50 = vector.load %arg13[%c0_45, %c129] : memref<64x768xbf16, #tpu.memory_space<vmem>>, vector<36x512xbf16>
    %c5 = arith.constant 5 : index
    %c0_46 = arith.constant 0 : index
    %c0_47 = arith.constant 0 : index
    %51 = vector.load %arg3[%c5, %c0_46, %c0_47] : memref<9x1x512xbf16, #tpu.memory_space<vmem>>, vector<1x1x512xbf16>
    %52 = vector.shape_cast %51 : vector<1x1x512xbf16> to vector<1x512xbf16>
    %53 = vector.broadcast %52 : vector<1x512xbf16> to vector<36x512xbf16>
    %54 = arith.mulf %50, %53 : vector<36x512xbf16>
    %c5_48 = arith.constant 5 : index
    %c0_49 = arith.constant 0 : index
    %c0_50 = arith.constant 0 : index
    %55 = vector.load %arg1[%c5_48, %c0_49, %c0_50] : memref<9x128x36xbf16, #tpu.memory_space<vmem>>, vector<1x128x36xbf16>
    %56 = vector.shape_cast %55 : vector<1x128x36xbf16> to vector<128x36xbf16>
    %cst_51 = arith.constant dense<0.000000e+00> : vector<128x512xf32>
    %57 = tpu.matmul %56, %54, %cst_51 {dimension_numbers = #tpu.dot_dimension_numbers<[1], [0], [0], [1], [0, 0, 1, 1], [], []>} : vector<128x36xbf16>, vector<36x512xbf16>, vector<128x512xf32> -> vector<128x512xf32>
    %58 = arith.addf %49, %57 : vector<128x512xf32>
    %c0_52 = arith.constant 0 : index
    %c143 = arith.constant 143 : index
    %59 = vector.load %arg13[%c0_52, %c143] : memref<64x768xbf16, #tpu.memory_space<vmem>>, vector<36x512xbf16>
    %c6 = arith.constant 6 : index
    %c0_53 = arith.constant 0 : index
    %c0_54 = arith.constant 0 : index
    %60 = vector.load %arg3[%c6, %c0_53, %c0_54] : memref<9x1x512xbf16, #tpu.memory_space<vmem>>, vector<1x1x512xbf16>
    %61 = vector.shape_cast %60 : vector<1x1x512xbf16> to vector<1x512xbf16>
    %62 = vector.broadcast %61 : vector<1x512xbf16> to vector<36x512xbf16>
    %63 = arith.mulf %59, %62 : vector<36x512xbf16>
    %c6_55 = arith.constant 6 : index
    %c0_56 = arith.constant 0 : index
    %c0_57 = arith.constant 0 : index
    %64 = vector.load %arg1[%c6_55, %c0_56, %c0_57] : memref<9x128x36xbf16, #tpu.memory_space<vmem>>, vector<1x128x36xbf16>
    %65 = vector.shape_cast %64 : vector<1x128x36xbf16> to vector<128x36xbf16>
    %cst_58 = arith.constant dense<0.000000e+00> : vector<128x512xf32>
    %66 = tpu.matmul %65, %63, %cst_58 {dimension_numbers = #tpu.dot_dimension_numbers<[1], [0], [0], [1], [0, 0, 1, 1], [], []>} : vector<128x36xbf16>, vector<36x512xbf16>, vector<128x512xf32> -> vector<128x512xf32>
    %67 = arith.addf %58, %66 : vector<128x512xf32>
    %c0_59 = arith.constant 0 : index
    %c144 = arith.constant 144 : index
    %68 = vector.load %arg13[%c0_59, %c144] : memref<64x768xbf16, #tpu.memory_space<vmem>>, vector<36x512xbf16>
    %c7 = arith.constant 7 : index
    %c0_60 = arith.constant 0 : index
    %c0_61 = arith.constant 0 : index
    %69 = vector.load %arg3[%c7, %c0_60, %c0_61] : memref<9x1x512xbf16, #tpu.memory_space<vmem>>, vector<1x1x512xbf16>
    %70 = vector.shape_cast %69 : vector<1x1x512xbf16> to vector<1x512xbf16>
    %71 = vector.broadcast %70 : vector<1x512xbf16> to vector<36x512xbf16>
    %72 = arith.mulf %68, %71 : vector<36x512xbf16>
    %c7_62 = arith.constant 7 : index
    %c0_63 = arith.constant 0 : index
    %c0_64 = arith.constant 0 : index
    %73 = vector.load %arg1[%c7_62, %c0_63, %c0_64] : memref<9x128x36xbf16, #tpu.memory_space<vmem>>, vector<1x128x36xbf16>
    %74 = vector.shape_cast %73 : vector<1x128x36xbf16> to vector<128x36xbf16>
    %cst_65 = arith.constant dense<0.000000e+00> : vector<128x512xf32>
    %75 = tpu.matmul %74, %72, %cst_65 {dimension_numbers = #tpu.dot_dimension_numbers<[1], [0], [0], [1], [0, 0, 1, 1], [], []>} : vector<128x36xbf16>, vector<36x512xbf16>, vector<128x512xf32> -> vector<128x512xf32>
    %76 = arith.addf %67, %75 : vector<128x512xf32>
    %c0_66 = arith.constant 0 : index
    %c145 = arith.constant 145 : index
    %77 = vector.load %arg13[%c0_66, %c145] : memref<64x768xbf16, #tpu.memory_space<vmem>>, vector<36x512xbf16>
    %c8 = arith.constant 8 : index
    %c0_67 = arith.constant 0 : index
    %c0_68 = arith.constant 0 : index
    %78 = vector.load %arg3[%c8, %c0_67, %c0_68] : memref<9x1x512xbf16, #tpu.memory_space<vmem>>, vector<1x1x512xbf16>
    %79 = vector.shape_cast %78 : vector<1x1x512xbf16> to vector<1x512xbf16>
    %80 = vector.broadcast %79 : vector<1x512xbf16> to vector<36x512xbf16>
    %81 = arith.mulf %77, %80 : vector<36x512xbf16>
    %c8_69 = arith.constant 8 : index
    %c0_70 = arith.constant 0 : index
    %c0_71 = arith.constant 0 : index
    %82 = vector.load %arg1[%c8_69, %c0_70, %c0_71] : memref<9x128x36xbf16, #tpu.memory_space<vmem>>, vector<1x128x36xbf16>
    %83 = vector.shape_cast %82 : vector<1x128x36xbf16> to vector<128x36xbf16>
    %cst_72 = arith.constant dense<0.000000e+00> : vector<128x512xf32>
    %84 = tpu.matmul %83, %81, %cst_72 {dimension_numbers = #tpu.dot_dimension_numbers<[1], [0], [0], [1], [0, 0, 1, 1], [], []>} : vector<128x36xbf16>, vector<36x512xbf16>, vector<128x512xf32> -> vector<128x512xf32>
    %85 = arith.addf %76, %84 : vector<128x512xf32>
    %c0_73 = arith.constant 0 : index
    %c0_74 = arith.constant 0 : index
    %86 = vector.load %arg2[%c0_73, %c0_74] : memref<128x1xf32, #tpu.memory_space<vmem>>, vector<128x1xf32>
    %87 = vector.broadcast %86 : vector<128x1xf32> to vector<128x512xf32>
    %88 = arith.addf %85, %87 : vector<128x512xf32>
    %89 = vector.extract_strided_slice %88 {offsets = [0, 0], sizes = [96, 512], strides = [1, 1]} : vector<128x512xf32> to vector<96x512xf32>
    %90 = arith.negf %89 : vector<96x512xf32>
    %91 = math.exp %90 : vector<96x512xf32>
    %cst_75 = arith.constant 1.000000e+00 : f32
    %92 = vector.broadcast %cst_75 : f32 to vector<96x512xf32>
    %93 = arith.addf %92, %91 : vector<96x512xf32>
    %94 = arith.divf %92, %93 : vector<96x512xf32>
    %95 = vector.extract_strided_slice %88 {offsets = [96, 0], sizes = [32, 512], strides = [1, 1]} : vector<128x512xf32> to vector<32x512xf32>
    %96 = math.tanh %95 : vector<32x512xf32>
    %97 = vector.extract_strided_slice %94 {offsets = [0, 0], sizes = [32, 512], strides = [1, 1]} : vector<96x512xf32> to vector<32x512xf32>
    %98 = vector.extract_strided_slice %94 {offsets = [32, 0], sizes = [32, 512], strides = [1, 1]} : vector<96x512xf32> to vector<32x512xf32>
    %99 = vector.extract_strided_slice %94 {offsets = [64, 0], sizes = [32, 512], strides = [1, 1]} : vector<96x512xf32> to vector<32x512xf32>
    %100 = arith.mulf %98, %4 : vector<32x512xf32>
    %101 = arith.mulf %97, %96 : vector<32x512xf32>
    %102 = arith.addf %100, %101 : vector<32x512xf32>
    %103 = math.tanh %102 : vector<32x512xf32>
    %104 = arith.mulf %99, %103 : vector<32x512xf32>
    %c0_76 = arith.constant 0 : index
    %c0_77 = arith.constant 0 : index
    %105 = vector.load %arg11[%c0_76, %c0_77] : memref<64x512xf32, #tpu.memory_space<vmem>>, vector<32x512xf32>
    tpu.vector_store %arg11[%c0_76, %c0_77], %104 {strides = array<i32>} : memref<64x512xf32, #tpu.memory_space<vmem>>, vector<32x512xf32>,
    %c32 = arith.constant 32 : index
    %c0_78 = arith.constant 0 : index
    %106 = vector.load %arg11[%c32, %c0_78] : memref<64x512xf32, #tpu.memory_space<vmem>>, vector<32x512xf32>
    tpu.vector_store %arg11[%c32, %c0_78], %102 {strides = array<i32>} : memref<64x512xf32, #tpu.memory_space<vmem>>, vector<32x512xf32>,
    %107 = arith.truncf %104 : vector<32x512xf32> to vector<32x512xbf16>
    %c0_79 = arith.constant 0 : index
    %c0_80 = arith.constant 0 : index
    %108 = vector.load %arg9[%c0_79, %c0_80] : memref<32x512xf32, #tpu.memory_space<vmem>>, vector<32x512xf32>
    %c0_81 = arith.constant 0 : index
    %c0_82 = arith.constant 0 : index
    %109 = vector.load %arg10[%c0_81, %c0_82] : memref<32x512xf32, #tpu.memory_space<vmem>>, vector<32x512xf32>
    %c0_83 = arith.constant 0 : index
    %c128_84 = arith.constant 128 : index
    %110 = vector.load %arg13[%c0_83, %c128_84] : memref<64x768xbf16, #tpu.memory_space<vmem>>, vector<32x512xbf16>
    tpu.vector_store %arg13[%c0_83, %c128_84], %107 {strides = array<i32>} : memref<64x768xbf16, #tpu.memory_space<vmem>>, vector<32x512xbf16>,
    %111 = arith.truncf %108 : vector<32x512xf32> to vector<32x512xbf16>
    %c32_85 = arith.constant 32 : index
    %c128_86 = arith.constant 128 : index
    %112 = vector.load %arg13[%c32_85, %c128_86] : memref<64x768xbf16, #tpu.memory_space<vmem>>, vector<32x512xbf16>
    tpu.vector_store %arg13[%c32_85, %c128_86], %111 {strides = array<i32>} : memref<64x768xbf16, #tpu.memory_space<vmem>>, vector<32x512xbf16>,
    %cst_87 = arith.constant 0.000000e+00 : f32
    %113 = vector.broadcast %cst_87 : f32 to vector<128x512xf32>
    %c0_88 = arith.constant 0 : index
    %c111_89 = arith.constant 111 : index
    %114 = vector.load %arg13[%c0_88, %c111_89] : memref<64x768xbf16, #tpu.memory_space<vmem>>, vector<64x512xbf16>
    %c0_90 = arith.constant 0 : index
    %c0_91 = arith.constant 0 : index
    %c0_92 = arith.constant 0 : index
    %115 = vector.load %arg8[%c0_90, %c0_91, %c0_92] : memref<9x1x512xbf16, #tpu.memory_space<vmem>>, vector<1x1x512xbf16>
    %116 = vector.shape_cast %115 : vector<1x1x512xbf16> to vector<1x512xbf16>
    %117 = vector.broadcast %116 : vector<1x512xbf16> to vector<64x512xbf16>
    %118 = arith.mulf %114, %117 : vector<64x512xbf16>
    %c0_93 = arith.constant 0 : index
    %c0_94 = arith.constant 0 : index
    %c0_95 = arith.constant 0 : index
    %119 = vector.load %arg6[%c0_93, %c0_94, %c0_95] : memref<9x128x64xbf16, #tpu.memory_space<vmem>>, vector<1x128x64xbf16>
    %120 = vector.shape_cast %119 : vector<1x128x64xbf16> to vector<128x64xbf16>
    %cst_96 = arith.constant dense<0.000000e+00> : vector<128x512xf32>
    %121 = tpu.matmul %120, %118, %cst_96 {dimension_numbers = #tpu.dot_dimension_numbers<[1], [0], [0], [1], [0, 0, 1, 1], [], []>} : vector<128x64xbf16>, vector<64x512xbf16>, vector<128x512xf32> -> vector<128x512xf32>
    %122 = arith.addf %113, %121 : vector<128x512xf32>
    %c0_97 = arith.constant 0 : index
    %c112_98 = arith.constant 112 : index
    %123 = vector.load %arg13[%c0_97, %c112_98] : memref<64x768xbf16, #tpu.memory_space<vmem>>, vector<64x512xbf16>
    %c1_99 = arith.constant 1 : index
    %c0_100 = arith.constant 0 : index
    %c0_101 = arith.constant 0 : index
    %124 = vector.load %arg8[%c1_99, %c0_100, %c0_101] : memref<9x1x512xbf16, #tpu.memory_space<vmem>>, vector<1x1x512xbf16>
    %125 = vector.shape_cast %124 : vector<1x1x512xbf16> to vector<1x512xbf16>
    %126 = vector.broadcast %125 : vector<1x512xbf16> to vector<64x512xbf16>
    %127 = arith.mulf %123, %126 : vector<64x512xbf16>
    %c1_102 = arith.constant 1 : index
    %c0_103 = arith.constant 0 : index
    %c0_104 = arith.constant 0 : index
    %128 = vector.load %arg6[%c1_102, %c0_103, %c0_104] : memref<9x128x64xbf16, #tpu.memory_space<vmem>>, vector<1x128x64xbf16>
    %129 = vector.shape_cast %128 : vector<1x128x64xbf16> to vector<128x64xbf16>
    %cst_105 = arith.constant dense<0.000000e+00> : vector<128x512xf32>
    %130 = tpu.matmul %129, %127, %cst_105 {dimension_numbers = #tpu.dot_dimension_numbers<[1], [0], [0], [1], [0, 0, 1, 1], [], []>} : vector<128x64xbf16>, vector<64x512xbf16>, vector<128x512xf32> -> vector<128x512xf32>
    %131 = arith.addf %122, %130 : vector<128x512xf32>
    %c0_106 = arith.constant 0 : index
    %c113_107 = arith.constant 113 : index
    %132 = vector.load %arg13[%c0_106, %c113_107] : memref<64x768xbf16, #tpu.memory_space<vmem>>, vector<64x512xbf16>
    %c2_108 = arith.constant 2 : index
    %c0_109 = arith.constant 0 : index
    %c0_110 = arith.constant 0 : index
    %133 = vector.load %arg8[%c2_108, %c0_109, %c0_110] : memref<9x1x512xbf16, #tpu.memory_space<vmem>>, vector<1x1x512xbf16>
    %134 = vector.shape_cast %133 : vector<1x1x512xbf16> to vector<1x512xbf16>
    %135 = vector.broadcast %134 : vector<1x512xbf16> to vector<64x512xbf16>
    %136 = arith.mulf %132, %135 : vector<64x512xbf16>
    %c2_111 = arith.constant 2 : index
    %c0_112 = arith.constant 0 : index
    %c0_113 = arith.constant 0 : index
    %137 = vector.load %arg6[%c2_111, %c0_112, %c0_113] : memref<9x128x64xbf16, #tpu.memory_space<vmem>>, vector<1x128x64xbf16>
    %138 = vector.shape_cast %137 : vector<1x128x64xbf16> to vector<128x64xbf16>
    %cst_114 = arith.constant dense<0.000000e+00> : vector<128x512xf32>
    %139 = tpu.matmul %138, %136, %cst_114 {dimension_numbers = #tpu.dot_dimension_numbers<[1], [0], [0], [1], [0, 0, 1, 1], [], []>} : vector<128x64xbf16>, vector<64x512xbf16>, vector<128x512xf32> -> vector<128x512xf32>
    %140 = arith.addf %131, %139 : vector<128x512xf32>
    %c0_115 = arith.constant 0 : index
    %c127_116 = arith.constant 127 : index
    %141 = vector.load %arg13[%c0_115, %c127_116] : memref<64x768xbf16, #tpu.memory_space<vmem>>, vector<64x512xbf16>
    %c3_117 = arith.constant 3 : index
    %c0_118 = arith.constant 0 : index
    %c0_119 = arith.constant 0 : index
    %142 = vector.load %arg8[%c3_117, %c0_118, %c0_119] : memref<9x1x512xbf16, #tpu.memory_space<vmem>>, vector<1x1x512xbf16>
    %143 = vector.shape_cast %142 : vector<1x1x512xbf16> to vector<1x512xbf16>
    %144 = vector.broadcast %143 : vector<1x512xbf16> to vector<64x512xbf16>
    %145 = arith.mulf %141, %144 : vector<64x512xbf16>
    %c3_120 = arith.constant 3 : index
    %c0_121 = arith.constant 0 : index
    %c0_122 = arith.constant 0 : index
    %146 = vector.load %arg6[%c3_120, %c0_121, %c0_122] : memref<9x128x64xbf16, #tpu.memory_space<vmem>>, vector<1x128x64xbf16>
    %147 = vector.shape_cast %146 : vector<1x128x64xbf16> to vector<128x64xbf16>
    %cst_123 = arith.constant dense<0.000000e+00> : vector<128x512xf32>
    %148 = tpu.matmul %147, %145, %cst_123 {dimension_numbers = #tpu.dot_dimension_numbers<[1], [0], [0], [1], [0, 0, 1, 1], [], []>} : vector<128x64xbf16>, vector<64x512xbf16>, vector<128x512xf32> -> vector<128x512xf32>
    %149 = arith.addf %140, %148 : vector<128x512xf32>
    %c0_124 = arith.constant 0 : index
    %c128_125 = arith.constant 128 : index
    %150 = vector.load %arg13[%c0_124, %c128_125] : memref<64x768xbf16, #tpu.memory_space<vmem>>, vector<64x512xbf16>
    %c4_126 = arith.constant 4 : index
    %c0_127 = arith.constant 0 : index
    %c0_128 = arith.constant 0 : index
    %151 = vector.load %arg6[%c4_126, %c0_127, %c0_128] : memref<9x128x64xbf16, #tpu.memory_space<vmem>>, vector<1x128x64xbf16>
    %152 = vector.shape_cast %151 : vector<1x128x64xbf16> to vector<128x64xbf16>
    %cst_129 = arith.constant dense<0.000000e+00> : vector<128x512xf32>
    %153 = tpu.matmul %152, %150, %cst_129 {dimension_numbers = #tpu.dot_dimension_numbers<[1], [0], [0], [1], [0, 0, 1, 1], [], []>} : vector<128x64xbf16>, vector<64x512xbf16>, vector<128x512xf32> -> vector<128x512xf32>
    %154 = arith.addf %149, %153 : vector<128x512xf32>
    %c0_130 = arith.constant 0 : index
    %c129_131 = arith.constant 129 : index
    %155 = vector.load %arg13[%c0_130, %c129_131] : memref<64x768xbf16, #tpu.memory_space<vmem>>, vector<64x512xbf16>
    %c5_132 = arith.constant 5 : index
    %c0_133 = arith.constant 0 : index
    %c0_134 = arith.constant 0 : index
    %156 = vector.load %arg8[%c5_132, %c0_133, %c0_134] : memref<9x1x512xbf16, #tpu.memory_space<vmem>>, vector<1x1x512xbf16>
    %157 = vector.shape_cast %156 : vector<1x1x512xbf16> to vector<1x512xbf16>
    %158 = vector.broadcast %157 : vector<1x512xbf16> to vector<64x512xbf16>
    %159 = arith.mulf %155, %158 : vector<64x512xbf16>
    %c5_135 = arith.constant 5 : index
    %c0_136 = arith.constant 0 : index
    %c0_137 = arith.constant 0 : index
    %160 = vector.load %arg6[%c5_135, %c0_136, %c0_137] : memref<9x128x64xbf16, #tpu.memory_space<vmem>>, vector<1x128x64xbf16>
    %161 = vector.shape_cast %160 : vector<1x128x64xbf16> to vector<128x64xbf16>
    %cst_138 = arith.constant dense<0.000000e+00> : vector<128x512xf32>
    %162 = tpu.matmul %161, %159, %cst_138 {dimension_numbers = #tpu.dot_dimension_numbers<[1], [0], [0], [1], [0, 0, 1, 1], [], []>} : vector<128x64xbf16>, vector<64x512xbf16>, vector<128x512xf32> -> vector<128x512xf32>
    %163 = arith.addf %154, %162 : vector<128x512xf32>
    %c0_139 = arith.constant 0 : index
    %c143_140 = arith.constant 143 : index
    %164 = vector.load %arg13[%c0_139, %c143_140] : memref<64x768xbf16, #tpu.memory_space<vmem>>, vector<64x512xbf16>
    %c6_141 = arith.constant 6 : index
    %c0_142 = arith.constant 0 : index
    %c0_143 = arith.constant 0 : index
    %165 = vector.load %arg8[%c6_141, %c0_142, %c0_143] : memref<9x1x512xbf16, #tpu.memory_space<vmem>>, vector<1x1x512xbf16>
    %166 = vector.shape_cast %165 : vector<1x1x512xbf16> to vector<1x512xbf16>
    %167 = vector.broadcast %166 : vector<1x512xbf16> to vector<64x512xbf16>
    %168 = arith.mulf %164, %167 : vector<64x512xbf16>
    %c6_144 = arith.constant 6 : index
    %c0_145 = arith.constant 0 : index
    %c0_146 = arith.constant 0 : index
    %169 = vector.load %arg6[%c6_144, %c0_145, %c0_146] : memref<9x128x64xbf16, #tpu.memory_space<vmem>>, vector<1x128x64xbf16>
    %170 = vector.shape_cast %169 : vector<1x128x64xbf16> to vector<128x64xbf16>
    %cst_147 = arith.constant dense<0.000000e+00> : vector<128x512xf32>
    %171 = tpu.matmul %170, %168, %cst_147 {dimension_numbers = #tpu.dot_dimension_numbers<[1], [0], [0], [1], [0, 0, 1, 1], [], []>} : vector<128x64xbf16>, vector<64x512xbf16>, vector<128x512xf32> -> vector<128x512xf32>
    %172 = arith.addf %163, %171 : vector<128x512xf32>
    %c0_148 = arith.constant 0 : index
    %c144_149 = arith.constant 144 : index
    %173 = vector.load %arg13[%c0_148, %c144_149] : memref<64x768xbf16, #tpu.memory_space<vmem>>, vector<64x512xbf16>
    %c7_150 = arith.constant 7 : index
    %c0_151 = arith.constant 0 : index
    %c0_152 = arith.constant 0 : index
    %174 = vector.load %arg8[%c7_150, %c0_151, %c0_152] : memref<9x1x512xbf16, #tpu.memory_space<vmem>>, vector<1x1x512xbf16>
    %175 = vector.shape_cast %174 : vector<1x1x512xbf16> to vector<1x512xbf16>
    %176 = vector.broadcast %175 : vector<1x512xbf16> to vector<64x512xbf16>
    %177 = arith.mulf %173, %176 : vector<64x512xbf16>
    %c7_153 = arith.constant 7 : index
    %c0_154 = arith.constant 0 : index
    %c0_155 = arith.constant 0 : index
    %178 = vector.load %arg6[%c7_153, %c0_154, %c0_155] : memref<9x128x64xbf16, #tpu.memory_space<vmem>>, vector<1x128x64xbf16>
    %179 = vector.shape_cast %178 : vector<1x128x64xbf16> to vector<128x64xbf16>
    %cst_156 = arith.constant dense<0.000000e+00> : vector<128x512xf32>
    %180 = tpu.matmul %179, %177, %cst_156 {dimension_numbers = #tpu.dot_dimension_numbers<[1], [0], [0], [1], [0, 0, 1, 1], [], []>} : vector<128x64xbf16>, vector<64x512xbf16>, vector<128x512xf32> -> vector<128x512xf32>
    %181 = arith.addf %172, %180 : vector<128x512xf32>
    %c0_157 = arith.constant 0 : index
    %c145_158 = arith.constant 145 : index
    %182 = vector.load %arg13[%c0_157, %c145_158] : memref<64x768xbf16, #tpu.memory_space<vmem>>, vector<64x512xbf16>
    %c8_159 = arith.constant 8 : index
    %c0_160 = arith.constant 0 : index
    %c0_161 = arith.constant 0 : index
    %183 = vector.load %arg8[%c8_159, %c0_160, %c0_161] : memref<9x1x512xbf16, #tpu.memory_space<vmem>>, vector<1x1x512xbf16>
    %184 = vector.shape_cast %183 : vector<1x1x512xbf16> to vector<1x512xbf16>
    %185 = vector.broadcast %184 : vector<1x512xbf16> to vector<64x512xbf16>
    %186 = arith.mulf %182, %185 : vector<64x512xbf16>
    %c8_162 = arith.constant 8 : index
    %c0_163 = arith.constant 0 : index
    %c0_164 = arith.constant 0 : index
    %187 = vector.load %arg6[%c8_162, %c0_163, %c0_164] : memref<9x128x64xbf16, #tpu.memory_space<vmem>>, vector<1x128x64xbf16>
    %188 = vector.shape_cast %187 : vector<1x128x64xbf16> to vector<128x64xbf16>
    %cst_165 = arith.constant dense<0.000000e+00> : vector<128x512xf32>
    %189 = tpu.matmul %188, %186, %cst_165 {dimension_numbers = #tpu.dot_dimension_numbers<[1], [0], [0], [1], [0, 0, 1, 1], [], []>} : vector<128x64xbf16>, vector<64x512xbf16>, vector<128x512xf32> -> vector<128x512xf32>
    %190 = arith.addf %181, %189 : vector<128x512xf32>
    %c0_166 = arith.constant 0 : index
    %c0_167 = arith.constant 0 : index
    %191 = vector.load %arg7[%c0_166, %c0_167] : memref<128x1xf32, #tpu.memory_space<vmem>>, vector<128x1xf32>
    %192 = vector.broadcast %191 : vector<128x1xf32> to vector<128x512xf32>
    %193 = arith.addf %190, %192 : vector<128x512xf32>
    %194 = vector.extract_strided_slice %193 {offsets = [0, 0], sizes = [96, 512], strides = [1, 1]} : vector<128x512xf32> to vector<96x512xf32>
    %195 = arith.negf %194 : vector<96x512xf32>
    %196 = math.exp %195 : vector<96x512xf32>
    %cst_168 = arith.constant 1.000000e+00 : f32
    %197 = vector.broadcast %cst_168 : f32 to vector<96x512xf32>
    %198 = arith.addf %197, %196 : vector<96x512xf32>
    %199 = arith.divf %197, %198 : vector<96x512xf32>
    %200 = vector.extract_strided_slice %193 {offsets = [96, 0], sizes = [32, 512], strides = [1, 1]} : vector<128x512xf32> to vector<32x512xf32>
    %201 = math.tanh %200 : vector<32x512xf32>
    %202 = vector.extract_strided_slice %199 {offsets = [0, 0], sizes = [32, 512], strides = [1, 1]} : vector<96x512xf32> to vector<32x512xf32>
    %203 = vector.extract_strided_slice %199 {offsets = [32, 0], sizes = [32, 512], strides = [1, 1]} : vector<96x512xf32> to vector<32x512xf32>
    %204 = vector.extract_strided_slice %199 {offsets = [64, 0], sizes = [32, 512], strides = [1, 1]} : vector<96x512xf32> to vector<32x512xf32>
    %205 = arith.mulf %203, %109 : vector<32x512xf32>
    %206 = arith.mulf %202, %201 : vector<32x512xf32>
    %207 = arith.addf %205, %206 : vector<32x512xf32>
    %208 = math.tanh %207 : vector<32x512xf32>
    %209 = arith.mulf %204, %208 : vector<32x512xf32>
    %c0_169 = arith.constant 0 : index
    %c0_170 = arith.constant 0 : index
    %210 = vector.load %arg12[%c0_169, %c0_170] : memref<64x512xf32, #tpu.memory_space<vmem>>, vector<32x512xf32>
    tpu.vector_store %arg12[%c0_169, %c0_170], %209 {strides = array<i32>} : memref<64x512xf32, #tpu.memory_space<vmem>>, vector<32x512xf32>,
    %c32_171 = arith.constant 32 : index
    %c0_172 = arith.constant 0 : index
    %211 = vector.load %arg12[%c32_171, %c0_172] : memref<64x512xf32, #tpu.memory_space<vmem>>, vector<32x512xf32>
    tpu.vector_store %arg12[%c32_171, %c0_172], %207 {strides = array<i32>} : memref<64x512xf32, #tpu.memory_space<vmem>>, vector<32x512xf32>,
    return
  }
}

</mosaic_0001>

<llo_original>
// kernel: convlstm_forward.1
$region0: #{convlstm_forward.1}
  #allocation0 [shape = 'u32[]', space=smem, size = 0x4, offset = 0x4, fixed_abs, tag = 'smem constant byte address 0x4 - core index']
  #allocation1 [shape = 'u32[72,128]{1,0:T(1,128)}', space=vmem, size = 0x9000, scoped, tag = 'internal scratch']
  #allocation2 [shape = 'bf16[64,768]{1,0:T(8,128)(2,1)}', space=vmem, size = 0x18000, scoped, tag = 'scratch operand']
  %s0 = inlined_call_operand.vmem [shape: bf16[4,512], index: 0, kind: input, shape index: {}]
  %s1 = inlined_call_operand.vmem [shape: bf16[9,128,36], index: 1, kind: input, shape index: {}]
  %s2 = inlined_call_operand.vmem [shape: f32[128,1], index: 2, kind: input, shape index: {}]
  %s3 = inlined_call_operand.vmem [shape: bf16[9,1,512], index: 3, kind: input, shape index: {}, may-alias: {3,8}]
  %s4 = inlined_call_operand.vmem [shape: f32[32,512], index: 4, kind: input, shape index: {}]
  %s5 = inlined_call_operand.vmem [shape: f32[32,512], index: 5, kind: input, shape index: {}]
  %s6 = inlined_call_operand.vmem [shape: bf16[9,128,64], index: 6, kind: input, shape index: {}]
  %s7 = inlined_call_operand.vmem [shape: f32[128,1], index: 7, kind: input, shape index: {}]
  %s8 = inlined_call_operand.vmem [shape: bf16[9,1,512], index: 8, kind: input, shape index: {}, may-alias: {3,8}]
  %s9 = inlined_call_operand.vmem [shape: f32[32,512], index: 9, kind: input, shape index: {}]
  %s10 = inlined_call_operand.vmem [shape: f32[32,512], index: 10, kind: input, shape index: {}]
  %s11 = inlined_call_operand.vmem [shape: f32[64,512], index: 11, kind: output, shape index: {0}]
  %s12 = inlined_call_operand.vmem [shape: f32[64,512], index: 12, kind: output, shape index: {1}]
  %13 = xla_tuple %s11, %s12
  %s14 = sld [smem:[#allocation0]]
  $region62: #{convlstm_forward.1} parent=0
    _
  %s16 = ssub.s32 1, %s14
  %s17 = scalar_select 0, %s16, %s14
  // Predicated region
  $region2: #{convlstm_forward.1} parent=0 // pred_check
    _
  $region3: #{convlstm_forward.1} parent=0 // pred_check_branch
    %19 = sbr.rel (0) target = $region5
  $region4: #{convlstm_forward.1} parent=0 // pred_region
    _
  $region5: #{convlstm_forward.1} parent=0 // pred_fallthru
    _
  // Predicated region
  $region6: #{convlstm_forward.1} parent=0 // pred_check
    _
  $region7: #{convlstm_forward.1} parent=0 // pred_check_branch
    %21 = sbr.rel (0) target = $region9
  $region8: #{convlstm_forward.1} parent=0 // pred_region
    _
  $region9: #{convlstm_forward.1} parent=0 // pred_fallthru
    _
  // Predicated region
  $region10: #{convlstm_forward.1} parent=0 // pred_check
    _
  $region11: #{convlstm_forward.1} parent=0 // pred_check_branch
    %23 = sbr.rel (0) target = $region13
  $region12: #{convlstm_forward.1} parent=0 // pred_region
    _
  $region13: #{convlstm_forward.1} parent=0 // pred_fallthru
    _
  // Predicated region
  $region14: #{convlstm_forward.1} parent=0 // pred_check
    _
  $region15: #{convlstm_forward.1} parent=0 // pred_check_branch
    %25 = sbr.rel (0) target = $region17
  $region16: #{convlstm_forward.1} parent=0 // pred_region
    _
  $region17: #{convlstm_forward.1} parent=0 // pred_fallthru
    _
  // Predicated region
  $region18: #{convlstm_forward.1} parent=0 // pred_check
    _
  $region19: #{convlstm_forward.1} parent=0 // pred_check_branch
    %27 = sbr.rel (0) target = $region21
  $region20: #{convlstm_forward.1} parent=0 // pred_region
    _
  $region21: #{convlstm_forward.1} parent=0 // pred_fallthru
    _
  // Predicated region
  $region22: #{convlstm_forward.1} parent=0 // pred_check
    _
  $region23: #{convlstm_forward.1} parent=0 // pred_check_branch
    %29 = sbr.rel (0) target = $region25
  $region24: #{convlstm_forward.1} parent=0 // pred_region
    _
  $region25: #{convlstm_forward.1} parent=0 // pred_fallthru
    _
  // Predicated region
  $region26: #{convlstm_forward.1} parent=0 // pred_check
    _
  $region27: #{convlstm_forward.1} parent=0 // pred_check_branch
    %31 = sbr.rel (0) target = $region29
  $region28: #{convlstm_forward.1} parent=0 // pred_region
    _
  $region29: #{convlstm_forward.1} parent=0 // pred_fallthru
    _
  // Predicated region
  $region30: #{convlstm_forward.1} parent=0 // pred_check
    _
  $region31: #{convlstm_forward.1} parent=0 // pred_check_branch
    %33 = sbr.rel (0) target = $region33
  $region32: #{convlstm_forward.1} parent=0 // pred_region
    _
  $region33: #{convlstm_forward.1} parent=0 // pred_fallthru
    _
  // Predicated region
  $region34: #{convlstm_forward.1} parent=0 // pred_check
    _
  $region35: #{convlstm_forward.1} parent=0 // pred_check_branch
    %35 = sbr.rel (0) target = $region37
  $region36: #{convlstm_forward.1} parent=0 // pred_region
    _
  $region37: #{convlstm_forward.1} parent=0 // pred_fallthru
    _
  // Predicated region
  $region38: #{convlstm_forward.1} parent=0 // pred_check
    _
  $region39: #{convlstm_forward.1} parent=0 // pred_check_branch
    %37 = sbr.rel (0) target = $region41
  $region40: #{convlstm_forward.1} parent=0 // pred_region
    _
  $region41: #{convlstm_forward.1} parent=0 // pred_fallthru
    _
  // Predicated region
  $region42: #{convlstm_forward.1} parent=0 // pred_check
    _
  $region43: #{convlstm_forward.1} parent=0 // pred_check_branch
    %39 = sbr.rel (0) target = $region45
  $region44: #{convlstm_forward.1} parent=0 // pred_region
    _
  $region45: #{convlstm_forward.1} parent=0 // pred_fallthru
    _
  %41 = vst [vmem:[#allocation2] sm:$0xff] 0
  %42 = vst [vmem:[#allocation2 + $0x8] sm:$0xff] 0
  %43 = vst [vmem:[#allocation2 + $0x10] sm:$0xff] 0
  %44 = vst [vmem:[#allocation2 + $0x18] sm:$0xff] 0
  %45 = vst [vmem:[#allocation2 + $0x20] sm:$0xff] 0
  %46 = vst [vmem:[#allocation2 + $0x28] sm:$0xff] 0
  %47 = vst [vmem:[#allocation2 + $0x30] sm:$0xff] 0
  %48 = vst [vmem:[#allocation2 + $0x38] sm:$0xff] 0
  %49 = vst [vmem:[#allocation2 + $0x40] sm:$0xff] 0
  %50 = vst [vmem:[#allocation2 + $0x48] sm:$0xff] 0
  %51 = vst [vmem:[#allocation2 + $0x50] sm:$0xff] 0
  %52 = vst [vmem:[#allocation2 + $0x58] sm:$0xff] 0
  %53 = vst [vmem:[#allocation2 + $0x60] sm:$0xff] 0
  %54 = vst [vmem:[#allocation2 + $0x68] sm:$0xff] 0
  %55 = vst [vmem:[#allocation2 + $0x70] sm:$0xff] 0
  %56 = vst [vmem:[#allocation2 + $0x78] sm:$0xff] 0
  %57 = vst [vmem:[#allocation2 + $0x80] sm:$0xff] 0
  %58 = vst [vmem:[#allocation2 + $0x88] sm:$0xff] 0
  %59 = vst [vmem:[#allocation2 + $0x90] sm:$0xff] 0
  %60 = vst [vmem:[#allocation2 + $0x98] sm:$0xff] 0
  %61 = vst [vmem:[#allocation2 + $0xa0] sm:$0xff] 0
  %62 = vst [vmem:[#allocation2 + $0xa8] sm:$0xff] 0
  %63 = vst [vmem:[#allocation2 + $0xb0] sm:$0xff] 0
  %64 = vst [vmem:[#allocation2 + $0xb8] sm:$0xff] 0
  %v65 = vld [vmem:[%s0] sm:$0xff]
  %v66 = vld [vmem:[%s4] sm:$0xff]
  %v67 = vld [vmem:[%s4 + $0x8] sm:$0xff]
  %v68 = vld [vmem:[%s4 + $0x10] sm:$0xff]
  %v69 = vld [vmem:[%s4 + $0x18] sm:$0xff]
  %v70 = vld [vmem:[%s4 + $0x20] sm:$0xff]
  %v71 = vld [vmem:[%s4 + $0x28] sm:$0xff]
  %v72 = vld [vmem:[%s4 + $0x30] sm:$0xff]
  %v73 = vld [vmem:[%s4 + $0x38] sm:$0xff]
  %v74 = vld [vmem:[%s4 + $0x40] sm:$0xff]
  %v75 = vld [vmem:[%s4 + $0x48] sm:$0xff]
  %v76 = vld [vmem:[%s4 + $0x50] sm:$0xff]
  %v77 = vld [vmem:[%s4 + $0x58] sm:$0xff]
  %v78 = vld [vmem:[%s4 + $0x60] sm:$0xff]
  %v79 = vld [vmem:[%s4 + $0x68] sm:$0xff]
  %v80 = vld [vmem:[%s4 + $0x70] sm:$0xff]
  %v81 = vld [vmem:[%s4 + $0x78] sm:$0xff]
  %v82 = vld [vmem:[%s5] sm:$0xff]
  %v83 = vld [vmem:[%s5 + $0x8] sm:$0xff]
  %v84 = vld [vmem:[%s5 + $0x10] sm:$0xff]
  %v85 = vld [vmem:[%s5 + $0x18] sm:$0xff]
  %v86 = vld [vmem:[%s5 + $0x20] sm:$0xff]
  %v87 = vld [vmem:[%s5 + $0x28] sm:$0xff]
  %v88 = vld [vmem:[%s5 + $0x30] sm:$0xff]
  %v89 = vld [vmem:[%s5 + $0x38] sm:$0xff]
  %v90 = vld [vmem:[%s5 + $0x40] sm:$0xff]
  %v91 = vld [vmem:[%s5 + $0x48] sm:$0xff]
  %v92 = vld [vmem:[%s5 + $0x50] sm:$0xff]
  %v93 = vld [vmem:[%s5 + $0x58] sm:$0xff]
  %v94 = vld [vmem:[%s5 + $0x60] sm:$0xff]
  %v95 = vld [vmem:[%s5 + $0x68] sm:$0xff]
  %v96 = vld [vmem:[%s5 + $0x70] sm:$0xff]
  %v97 = vld [vmem:[%s5 + $0x78] sm:$0xff]
  %99 = vst [vmem:[#allocation1] ss:$2 sm:$0xff] %v65
  %v100 = vld.sshfl [vmem:[#allocation1] sm:$0xff pattern:$0x75643120]
  %v101 = vld.sshfl [vmem:[#allocation1 + $0x8] sm:$0xff pattern:$0x75643120]
  %104 = vst [vmem:[#allocation2 + $0x4] sm:$0x33] %v100
  %105 = vst [vmem:[#allocation2 + $0xc] sm:$0x33] %v101
  %v106 = vpack.c.bf16 %v67, %v66
  %v107 = vpack.c.bf16 %v69, %v68
  %v108 = vpack.c.bf16 %v71, %v70
  %v109 = vpack.c.bf16 %v73, %v72
  %v110 = vpack.c.bf16 %v75, %v74
  %v111 = vpack.c.bf16 %v77, %v76
  %v112 = vpack.c.bf16 %v79, %v78
  %v113 = vpack.c.bf16 %v81, %v80
  %vm122 = vcmask 1041408
  %vm123 = vcmask 1045508
  %vm124 = vmor %vm122, %vm123
  %v125 = vrot.slane %v106, 6
  %v126 = vrot.slane %v107, 6
  %v127 = vrot.slane %v125, 4
  %v128 = vrot.slane %v108, 6
  %v129 = vsel %vm124, %v127, %v128
  %v130 = vrot.slane %v126, 4
  %v131 = vrot.slane %v109, 6
  %v132 = vsel %vm124, %v130, %v131
  %v133 = vrot.slane %v128, 4
  %v134 = vrot.slane %v110, 6
  %v135 = vsel %vm124, %v133, %v134
  %v136 = vrot.slane %v131, 4
  %v137 = vrot.slane %v111, 6
  %v138 = vsel %vm124, %v136, %v137
  %v139 = vrot.slane %v134, 4
  %v140 = vrot.slane %v112, 6
  %v141 = vsel %vm124, %v139, %v140
  %v142 = vrot.slane %v137, 4
  %v143 = vrot.slane %v113, 6
  %v144 = vsel %vm124, %v142, %v143
  %v145 = vrot.slane %v140, 4
  %v146 = vrot.slane %v143, 4
  %157 = vst [vmem:[#allocation2 + $0x4] sm:$0xcc] %v125
  %158 = vst [vmem:[#allocation2 + $0xc] sm:$0xcc] %v126
  %159 = vst [vmem:[#allocation2 + $0x1c] sm:$0xff] %v129
  %160 = vst [vmem:[#allocation2 + $0x24] sm:$0xff] %v132
  %161 = vst [vmem:[#allocation2 + $0x34] sm:$0xff] %v135
  %162 = vst [vmem:[#allocation2 + $0x3c] sm:$0xff] %v138
  %163 = vst [vmem:[#allocation2 + $0x4c] sm:$0xff] %v141
  %164 = vst [vmem:[#allocation2 + $0x54] sm:$0xff] %v144
  %165 = vst [vmem:[#allocation2 + $0x64] sm:$0x33] %v145
  %166 = vst [vmem:[#allocation2 + $0x6c] sm:$0x33] %v146
  %v167 = vld [vmem:[#allocation2] sm:$0xff]
  %v168 = vld [vmem:[#allocation2 + $0x8] sm:$0xff]
  %v169 = vld [vmem:[#allocation2 + $0x10] sm:$0xf]
  %v170 = vld [vmem:[#allocation2 + $0x18] sm:$0xff]
  %v171 = vld [vmem:[#allocation2 + $0x20] sm:$0xff]
  %v172 = vld [vmem:[#allocation2 + $0x28] sm:$0xf]
  %v173 = vld [vmem:[#allocation2 + $0x30] sm:$0xff]
  %v174 = vld [vmem:[#allocation2 + $0x38] sm:$0xff]
  %v175 = vld [vmem:[#allocation2 + $0x40] sm:$0xf]
  %v176 = vld [vmem:[#allocation2 + $0x48] sm:$0xff]
  %v177 = vld [vmem:[#allocation2 + $0x50] sm:$0xff]
  %v178 = vld [vmem:[#allocation2 + $0x58] sm:$0xf]
  %v179 = vld [vmem:[#allocation2 + $0x60] sm:$0x33]
  %v180 = vld [vmem:[#allocation2 + $0x68] sm:$0x33]
  %v181 = vld [vmem:[#allocation2 + $0x70] sm:$0x3]
  %v182 = vld [vmem:[%s3] sm:$0xf]
  %184 = vst [vmem:[#allocation1] ss:$9 sm:$0xff] %v182
  %v185 = vld [vmem:[#allocation1] sm:$0xff]
  %v186 = vld [vmem:[#allocation1 + $0x9] sm:$0xff]
  %v187 = vld [vmem:[#allocation1 + $0x12] sm:$0xff]
  %v188 = vld [vmem:[#allocation1 + $0x1b] sm:$0xff]
  %v189 = vpack.i.b16 %v185, %v185
  %v191 = vperm.slane %v189, 0
  %v192 = vpack.i.b16 %v186, %v186
  %v194 = vperm.slane %v192, 0
  %v195 = vpack.i.b16 %v187, %v187
  %v197 = vperm.slane %v195, 0
  %v198 = vpack.i.b16 %v188, %v188
  %v200 = vperm.slane %v198, 0
  %v201 = vunpack.c.l.bf16 %v167
  %v202 = vunpack.c.h.bf16 %v167
  %v203 = vunpack.c.l.bf16 %v168
  %v204 = vunpack.c.h.bf16 %v168
  %v205 = vunpack.c.l.bf16 %v169
  %v206 = vunpack.c.l.bf16 %v170
  %v207 = vunpack.c.h.bf16 %v170
  %v208 = vunpack.c.l.bf16 %v171
  %v209 = vunpack.c.h.bf16 %v171
  %v210 = vunpack.c.l.bf16 %v172
  %v211 = vunpack.c.l.bf16 %v173
  %v212 = vunpack.c.h.bf16 %v173
  %v213 = vunpack.c.l.bf16 %v174
  %v214 = vunpack.c.h.bf16 %v174
  %v215 = vunpack.c.l.bf16 %v175
  %v216 = vunpack.c.l.bf16 %v176
  %v217 = vunpack.c.h.bf16 %v176
  %v218 = vunpack.c.l.bf16 %v177
  %v219 = vunpack.c.h.bf16 %v177
  %v220 = vunpack.c.l.bf16 %v178
  %v221 = vunpack.c.l.bf16 %v179
  %v222 = vunpack.c.h.bf16 %v179
  %v223 = vunpack.c.l.bf16 %v180
  %v224 = vunpack.c.h.bf16 %v180
  %v225 = vunpack.c.l.bf16 %v181
  %v226 = vunpack.c.l.bf16 %v191
  %v227 = vunpack.c.l.bf16 %v194
  %v228 = vunpack.c.l.bf16 %v197
  %v229 = vunpack.c.l.bf16 %v200
  %234 = vrot.lane.b32.xlu0 %v226, 111
  %v235 = vpop.permute.xlu0 %234
  %236 = vrot.lane.b32.xlu0 %v227, 111
  %v237 = vpop.permute.xlu0 %236
  %238 = vrot.lane.b32.xlu0 %v228, 111
  %v239 = vpop.permute.xlu0 %238
  %240 = vrot.lane.b32.xlu0 %v229, 111
  %v241 = vpop.permute.xlu0 %240
  %vm242 = vcmask 908288
  %v243 = vsel %vm242, %v235, %v237
  %v244 = vsel %vm242, %v237, %v239
  %v245 = vsel %vm242, %v239, %v241
  %v251 = vmul.f32 %v201, %v235
  %v252 = vmul.f32 %v202, %v243
  %v253 = vmul.f32 %v203, %v244
  %v254 = vmul.f32 %v204, %v245
  %v255 = vmul.f32 %v205, %v241
  %v256 = vmul.f32 %v206, %v235
  %v257 = vmul.f32 %v207, %v243
  %v258 = vmul.f32 %v208, %v244
  %v259 = vmul.f32 %v209, %v245
  %v260 = vmul.f32 %v210, %v241
  %v261 = vmul.f32 %v211, %v235
  %v262 = vmul.f32 %v212, %v243
  %v263 = vmul.f32 %v213, %v244
  %v264 = vmul.f32 %v214, %v245
  %v265 = vmul.f32 %v215, %v241
  %v266 = vmul.f32 %v216, %v235
  %v267 = vmul.f32 %v217, %v243
  %v268 = vmul.f32 %v218, %v244
  %v269 = vmul.f32 %v219, %v245
  %v270 = vmul.f32 %v220, %v241
  %v271 = vmul.f32 %v221, %v235
  %v272 = vmul.f32 %v222, %v243
  %v273 = vmul.f32 %v223, %v244
  %v274 = vmul.f32 %v224, %v245
  %v275 = vmul.f32 %v225, %v241
  %v276 = vpack.c.bf16 %v256, %v251
  %v277 = vpack.c.bf16 %v257, %v252
  %v278 = vpack.c.bf16 %v258, %v253
  %v279 = vpack.c.bf16 %v259, %v254
  %v280 = vpack.c.bf16 %v260, %v255
  %v281 = vpack.c.bf16 %v266, %v261
  %v282 = vpack.c.bf16 %v267, %v262
  %v283 = vpack.c.bf16 %v268, %v263
  %v284 = vpack.c.bf16 %v269, %v264
  %v285 = vpack.c.bf16 %v270, %v265
  %v286 = vpack.c.bf16 %v271, %v271
  %v287 = vpack.c.bf16 %v272, %v272
  %v288 = vpack.c.bf16 %v273, %v273
  %v289 = vpack.c.bf16 %v274, %v274
  %v290 = vpack.c.bf16 %v275, %v275
  %v291 = vld [vmem:[%s1] sm:$0xf]
  %v292 = vld [vmem:[%s1 + $0x4] sm:$0xf]
  %v293 = vld [vmem:[%s1 + $0x8] sm:$0xf]
  %v294 = vld [vmem:[%s1 + $0xc] sm:$0xf]
  %v295 = vld [vmem:[%s1 + $0x10] sm:$0xf]
  %v296 = vld [vmem:[%s1 + $0x14] sm:$0xf]
  %v297 = vld [vmem:[%s1 + $0x18] sm:$0xf]
  %v298 = vld [vmem:[%s1 + $0x1c] sm:$0xf]
  %v299 = vld [vmem:[%s1 + $0x20] sm:$0xf]
  %v300 = vld [vmem:[%s1 + $0x24] sm:$0xf]
  %v301 = vld [vmem:[%s1 + $0x28] sm:$0xf]
  %v302 = vld [vmem:[%s1 + $0x2c] sm:$0xf]
  %v303 = vld [vmem:[%s1 + $0x30] sm:$0xf]
  %v304 = vld [vmem:[%s1 + $0x34] sm:$0xf]
  %v305 = vld [vmem:[%s1 + $0x38] sm:$0xf]
  %v306 = vld [vmem:[%s1 + $0x3c] sm:$0xf]
  %v307 = vld [vmem:[#allocation2] sm:$0xff]
  %v308 = vld [vmem:[#allocation2 + $0x8] sm:$0xff]
  %v309 = vld [vmem:[#allocation2 + $0x10] sm:$0xf]
  %v310 = vld [vmem:[#allocation2 + $0x18] sm:$0xff]
  %v311 = vld [vmem:[#allocation2 + $0x20] sm:$0xff]
  %v312 = vld [vmem:[#allocation2 + $0x28] sm:$0xf]
  %v313 = vld [vmem:[#allocation2 + $0x30] sm:$0xff]
  %v314 = vld [vmem:[#allocation2 + $0x38] sm:$0xff]
  %v315 = vld [vmem:[#allocation2 + $0x40] sm:$0xf]
  %v316 = vld [vmem:[#allocation2 + $0x48] sm:$0xff]
  %v317 = vld [vmem:[#allocation2 + $0x50] sm:$0xff]
  %v318 = vld [vmem:[#allocation2 + $0x58] sm:$0xf]
  %v319 = vld [vmem:[#allocation2 + $0x60] sm:$0x33]
  %v320 = vld [vmem:[#allocation2 + $0x68] sm:$0x33]
  %v321 = vld [vmem:[#allocation2 + $0x70] sm:$0x3]
  %s322 = scalar_lea.vmem %s3, 4
  %v323 = vld [vmem:[%s322] sm:$0xf]
  %325 = vst [vmem:[#allocation1] ss:$9 sm:$0xff] %v323
  %v326 = vld [vmem:[#allocation1] sm:$0xff]
  %v327 = vld [vmem:[#allocation1 + $0x9] sm:$0xff]
  %v328 = vld [vmem:[#allocation1 + $0x12] sm:$0xff]
  %v329 = vld [vmem:[#allocation1 + $0x1b] sm:$0xff]
  %v330 = vpack.i.b16 %v326, %v326
  %v332 = vperm.slane %v330, 0
  %v333 = vpack.i.b16 %v327, %v327
  %v335 = vperm.slane %v333, 0
  %v336 = vpack.i.b16 %v328, %v328
  %v338 = vperm.slane %v336, 0
  %v339 = vpack.i.b16 %v329, %v329
  %v341 = vperm.slane %v339, 0
  %v342 = vunpack.c.l.bf16 %v307
  %v343 = vunpack.c.h.bf16 %v307
  %v344 = vunpack.c.l.bf16 %v308
  %v345 = vunpack.c.h.bf16 %v308
  %v346 = vunpack.c.l.bf16 %v309
  %v347 = vunpack.c.l.bf16 %v310
  %v348 = vunpack.c.h.bf16 %v310
  %v349 = vunpack.c.l.bf16 %v311
  %v350 = vunpack.c.h.bf16 %v311
  %v351 = vunpack.c.l.bf16 %v312
  %v352 = vunpack.c.l.bf16 %v313
  %v353 = vunpack.c.h.bf16 %v313
  %v354 = vunpack.c.l.bf16 %v314
  %v355 = vunpack.c.h.bf16 %v314
  %v356 = vunpack.c.l.bf16 %v315
  %v357 = vunpack.c.l.bf16 %v316
  %v358 = vunpack.c.h.bf16 %v316
  %v359 = vunpack.c.l.bf16 %v317
  %v360 = vunpack.c.h.bf16 %v317
  %v361 = vunpack.c.l.bf16 %v318
  %v362 = vunpack.c.l.bf16 %v319
  %v363 = vunpack.c.h.bf16 %v319
  %v364 = vunpack.c.l.bf16 %v320
  %v365 = vunpack.c.h.bf16 %v320
  %v366 = vunpack.c.l.bf16 %v321
  %v367 = vunpack.c.l.bf16 %v332
  %v368 = vunpack.c.l.bf16 %v335
  %v369 = vunpack.c.l.bf16 %v338
  %v370 = vunpack.c.l.bf16 %v341
  %375 = vrot.lane.b32.xlu0 %v367, 112
  %v376 = vpop.permute.xlu0 %375
  %377 = vrot.lane.b32.xlu0 %v368, 112
  %v378 = vpop.permute.xlu0 %377
  %379 = vrot.lane.b32.xlu0 %v369, 112
  %v380 = vpop.permute.xlu0 %379
  %381 = vrot.lane.b32.xlu0 %v370, 112
  %v382 = vpop.permute.xlu0 %381
  %vm383 = vcmask 916480
  %v384 = vsel %vm383, %v376, %v378
  %v385 = vsel %vm383, %v378, %v380
  %v386 = vsel %vm383, %v380, %v382
  %v392 = vmul.f32 %v342, %v376
  %v393 = vmul.f32 %v343, %v384
  %v394 = vmul.f32 %v344, %v385
  %v395 = vmul.f32 %v345, %v386
  %v396 = vmul.f32 %v346, %v382
  %v397 = vmul.f32 %v347, %v376
  %v398 = vmul.f32 %v348, %v384
  %v399 = vmul.f32 %v349, %v385
  %v400 = vmul.f32 %v350, %v386
  %v401 = vmul.f32 %v351, %v382
  %v402 = vmul.f32 %v352, %v376
  %v403 = vmul.f32 %v353, %v384
  %v404 = vmul.f32 %v354, %v385
  %v405 = vmul.f32 %v355, %v386
  %v406 = vmul.f32 %v356, %v382
  %v407 = vmul.f32 %v357, %v376
  %v408 = vmul.f32 %v358, %v384
  %v409 = vmul.f32 %v359, %v385
  %v410 = vmul.f32 %v360, %v386
  %v411 = vmul.f32 %v361, %v382
  %v412 = vmul.f32 %v362, %v376
  %v413 = vmul.f32 %v363, %v384
  %v414 = vmul.f32 %v364, %v385
  %v415 = vmul.f32 %v365, %v386
  %v416 = vmul.f32 %v366, %v382
  %v417 = vpack.c.bf16 %v397, %v392
  %v418 = vpack.c.bf16 %v398, %v393
  %v419 = vpack.c.bf16 %v399, %v394
  %v420 = vpack.c.bf16 %v400, %v395
  %v421 = vpack.c.bf16 %v401, %v396
  %v422 = vpack.c.bf16 %v407, %v402
  %v423 = vpack.c.bf16 %v408, %v403
  %v424 = vpack.c.bf16 %v409, %v404
  %v425 = vpack.c.bf16 %v410, %v405
  %v426 = vpack.c.bf16 %v411, %v406
  %v427 = vpack.c.bf16 %v412, %v412
  %v428 = vpack.c.bf16 %v413, %v413
  %v429 = vpack.c.bf16 %v414, %v414
  %v430 = vpack.c.bf16 %v415, %v415
  %v431 = vpack.c.bf16 %v416, %v416
  %s432 = scalar_lea.vmem %s1, 64
  %v433 = vld [vmem:[%s432] sm:$0xf]
  %v434 = vld [vmem:[%s432 + $0x4] sm:$0xf]
  %v435 = vld [vmem:[%s432 + $0x8] sm:$0xf]
  %v436 = vld [vmem:[%s432 + $0xc] sm:$0xf]
  %v437 = vld [vmem:[%s432 + $0x10] sm:$0xf]
  %v438 = vld [vmem:[%s432 + $0x14] sm:$0xf]
  %v439 = vld [vmem:[%s432 + $0x18] sm:$0xf]
  %v440 = vld [vmem:[%s432 + $0x1c] sm:$0xf]
  %v441 = vld [vmem:[%s432 + $0x20] sm:$0xf]
  %v442 = vld [vmem:[%s432 + $0x24] sm:$0xf]
  %v443 = vld [vmem:[%s432 + $0x28] sm:$0xf]
  %v444 = vld [vmem:[%s432 + $0x2c] sm:$0xf]
  %v445 = vld [vmem:[%s432 + $0x30] sm:$0xf]
  %v446 = vld [vmem:[%s432 + $0x34] sm:$0xf]
  %v447 = vld [vmem:[%s432 + $0x38] sm:$0xf]
  %v448 = vld [vmem:[%s432 + $0x3c] sm:$0xf]
  %v465 = vunpack.c.l.b16 %v433
  %v466 = vunpack.c.l.b16 %v434
  %v467 = vunpack.c.l.b16 %v435
  %v468 = vunpack.c.l.b16 %v436
  %v469 = vunpack.c.l.b16 %v437
  %v470 = vunpack.c.l.b16 %v438
  %v471 = vunpack.c.l.b16 %v439
  %v472 = vunpack.c.l.b16 %v440
  %v473 = vunpack.c.l.b16 %v441
  %v474 = vunpack.c.l.b16 %v442
  %v475 = vunpack.c.l.b16 %v443
  %v476 = vunpack.c.l.b16 %v444
  %v477 = vunpack.c.l.b16 %v445
  %v478 = vunpack.c.l.b16 %v446
  %v479 = vunpack.c.l.b16 %v447
  %v480 = vunpack.c.l.b16 %v448
  %v481 = vpack.c.b16 %v466, %v465
  %v482 = vpack.c.b16 %v468, %v467
  %v483 = vpack.c.b16 %v470, %v469
  %v484 = vpack.c.b16 %v472, %v471
  %v485 = vpack.c.b16 %v474, %v473
  %v486 = vpack.c.b16 %v476, %v475
  %v487 = vpack.c.b16 %v478, %v477
  %v488 = vpack.c.b16 %v480, %v479
  %504 = vrot.lane.b32.xlu0 %v417, 16
  %v505 = vpop.permute.xlu0 %504
  %506 = vrot.lane.b32.xlu0 %v418, 16
  %v507 = vpop.permute.xlu0 %506
  %508 = vrot.lane.b32.xlu0 %v419, 16
  %v509 = vpop.permute.xlu0 %508
  %510 = vrot.lane.b32.xlu0 %v420, 16
  %v511 = vpop.permute.xlu0 %510
  %512 = vrot.lane.b32.xlu0 %v421, 16
  %v513 = vpop.permute.xlu0 %512
  %514 = vrot.lane.b32.xlu0 %v422, 16
  %v515 = vpop.permute.xlu0 %514
  %516 = vrot.lane.b32.xlu0 %v423, 16
  %v517 = vpop.permute.xlu0 %516
  %518 = vrot.lane.b32.xlu0 %v424, 16
  %v519 = vpop.permute.xlu0 %518
  %520 = vrot.lane.b32.xlu0 %v425, 16
  %v521 = vpop.permute.xlu0 %520
  %522 = vrot.lane.b32.xlu0 %v426, 16
  %v523 = vpop.permute.xlu0 %522
  %524 = vrot.lane.b32.xlu0 %v427, 16
  %v525 = vpop.permute.xlu0 %524
  %526 = vrot.lane.b32.xlu0 %v428, 16
  %v527 = vpop.permute.xlu0 %526
  %528 = vrot.lane.b32.xlu0 %v429, 16
  %v529 = vpop.permute.xlu0 %528
  %530 = vrot.lane.b32.xlu0 %v430, 16
  %v531 = vpop.permute.xlu0 %530
  %532 = vrot.lane.b32.xlu0 %v431, 16
  %v533 = vpop.permute.xlu0 %532
  %vm534 = vcmask 130048
  %v535 = vsel %vm534, %v505, %v507
  %v536 = vsel %vm534, %v507, %v509
  %v537 = vsel %vm534, %v509, %v511
  %v538 = vsel %vm534, %v511, %v513
  %v539 = vsel %vm534, %v515, %v517
  %v540 = vsel %vm534, %v517, %v519
  %v541 = vsel %vm534, %v519, %v521
  %v542 = vsel %vm534, %v521, %v523
  %v543 = vsel %vm534, %v525, %v527
  %v544 = vsel %vm534, %v527, %v529
  %v545 = vsel %vm534, %v529, %v531
  %v546 = vsel %vm534, %v531, %v533
  %vm555 = vcmask 293888
  %v557 = vsel %vm555, %v481, 0
  %v560 = vsel %vm555, %v482, 0
  %v563 = vsel %vm555, %v483, 0
  %v566 = vsel %vm555, %v484, 0
  %v569 = vsel %vm555, %v485, 0
  %v572 = vsel %vm555, %v486, 0
  %v575 = vsel %vm555, %v487, 0
  %v578 = vsel %vm555, %v488, 0
  %vm580 = vcmask 1041408
  %v582 = vsel %vm580, %v543, 0
  %v585 = vsel %vm580, %v544, 0
  %v588 = vsel %vm580, %v545, 0
  %v591 = vsel %vm580, %v546, 0
  %593 = vmatpush.bf16.msra.mxu0 0
  %594 = vmatpush.bf16.msra.mxu0 0
  %595 = vmatpush.bf16.msra.mxu0 0
  %596 = vmatpush.bf16.msra.mxu0 0
  %597 = vmatpush.bf16.msra.mxu0 0
  %598 = vmatpush.bf16.msra.mxu0 %v582
  %599 = vmatpush.bf16.msra.mxu0 %v539
  %600 = vmatpush.bf16.msra.mxu0 %v535
  %601 = vmatmul.bf16.gmra.mxu0 %v557
  %v602 = vpop.f32.mrf.mxu0
  %v603 = vadd.f32 0.0, %v602
  %v604 = vpop.f32.mrf.mxu0
  %v605 = vadd.f32 0.0, %v604
  %606 = vmatmul.bf16.gmra.mxu0 %v560
  %v607 = vpop.f32.mrf.mxu0
  %v608 = vadd.f32 0.0, %v607
  %v609 = vpop.f32.mrf.mxu0
  %v610 = vadd.f32 0.0, %v609
  %611 = vmatmul.bf16.gmra.mxu0 %v563
  %v612 = vpop.f32.mrf.mxu0
  %v613 = vadd.f32 0.0, %v612
  %v614 = vpop.f32.mrf.mxu0
  %v615 = vadd.f32 0.0, %v614
  %616 = vmatmul.bf16.gmra.mxu0 %v566
  %v617 = vpop.f32.mrf.mxu0
  %v618 = vadd.f32 0.0, %v617
  %v619 = vpop.f32.mrf.mxu0
  %v620 = vadd.f32 0.0, %v619
  %621 = vmatmul.bf16.gmra.mxu0 %v569
  %v622 = vpop.f32.mrf.mxu0
  %v623 = vadd.f32 0.0, %v622
  %v624 = vpop.f32.mrf.mxu0
  %v625 = vadd.f32 0.0, %v624
  %626 = vmatmul.bf16.gmra.mxu0 %v572
  %v627 = vpop.f32.mrf.mxu0
  %v628 = vadd.f32 0.0, %v627
  %v629 = vpop.f32.mrf.mxu0
  %v630 = vadd.f32 0.0, %v629
  %631 = vmatmul.bf16.gmra.mxu0 %v575
  %v632 = vpop.f32.mrf.mxu0
  %v633 = vadd.f32 0.0, %v632
  %v634 = vpop.f32.mrf.mxu0
  %v635 = vadd.f32 0.0, %v634
  %636 = vmatmul.bf16.gmra.mxu0 %v578
  %v637 = vpop.f32.mrf.mxu0
  %v638 = vadd.f32 0.0, %v637
  %v639 = vpop.f32.mrf.mxu0
  %v640 = vadd.f32 0.0, %v639
  %641 = vdwg.mxu0
  %642 = vmatpush.bf16.msra.mxu0 0
  %643 = vmatpush.bf16.msra.mxu0 0
  %644 = vmatpush.bf16.msra.mxu0 0
  %645 = vmatpush.bf16.msra.mxu0 0
  %646 = vmatpush.bf16.msra.mxu0 0
  %647 = vmatpush.bf16.msra.mxu0 %v585
  %648 = vmatpush.bf16.msra.mxu0 %v540
  %649 = vmatpush.bf16.msra.mxu0 %v536
  %650 = vmatmul.bf16.gmra.mxu0 %v557
  %v651 = vpop.f32.mrf.mxu0
  %v652 = vadd.f32 0.0, %v651
  %v653 = vpop.f32.mrf.mxu0
  %v654 = vadd.f32 0.0, %v653
  %655 = vmatmul.bf16.gmra.mxu0 %v560
  %v656 = vpop.f32.mrf.mxu0
  %v657 = vadd.f32 0.0, %v656
  %v658 = vpop.f32.mrf.mxu0
  %v659 = vadd.f32 0.0, %v658
  %660 = vmatmul.bf16.gmra.mxu0 %v563
  %v661 = vpop.f32.mrf.mxu0
  %v662 = vadd.f32 0.0, %v661
  %v663 = vpop.f32.mrf.mxu0
  %v664 = vadd.f32 0.0, %v663
  %665 = vmatmul.bf16.gmra.mxu0 %v566
  %v666 = vpop.f32.mrf.mxu0
  %v667 = vadd.f32 0.0, %v666
  %v668 = vpop.f32.mrf.mxu0
  %v669 = vadd.f32 0.0, %v668
  %670 = vmatmul.bf16.gmra.mxu0 %v569
  %v671 = vpop.f32.mrf.mxu0
  %v672 = vadd.f32 0.0, %v671
  %v673 = vpop.f32.mrf.mxu0
  %v674 = vadd.f32 0.0, %v673
  %675 = vmatmul.bf16.gmra.mxu0 %v572
  %v676 = vpop.f32.mrf.mxu0
  %v677 = vadd.f32 0.0, %v676
  %v678 = vpop.f32.mrf.mxu0
  %v679 = vadd.f32 0.0, %v678
  %680 = vmatmul.bf16.gmra.mxu0 %v575
  %v681 = vpop.f32.mrf.mxu0
  %v682 = vadd.f32 0.0, %v681
  %v683 = vpop.f32.mrf.mxu0
  %v684 = vadd.f32 0.0, %v683
  %685 = vmatmul.bf16.gmra.mxu0 %v578
  %v686 = vpop.f32.mrf.mxu0
  %v687 = vadd.f32 0.0, %v686
  %v688 = vpop.f32.mrf.mxu0
  %v689 = vadd.f32 0.0, %v688
  %690 = vdwg.mxu0
  %691 = vmatpush.bf16.msra.mxu0 0
  %692 = vmatpush.bf16.msra.mxu0 0
  %693 = vmatpush.bf16.msra.mxu0 0
  %694 = vmatpush.bf16.msra.mxu0 0
  %695 = vmatpush.bf16.msra.mxu0 0
  %696 = vmatpush.bf16.msra.mxu0 %v588
  %697 = vmatpush.bf16.msra.mxu0 %v541
  %698 = vmatpush.bf16.msra.mxu0 %v537
  %699 = vmatmul.bf16.gmra.mxu0 %v557
  %v700 = vpop.f32.mrf.mxu0
  %v701 = vadd.f32 0.0, %v700
  %v702 = vpop.f32.mrf.mxu0
  %v703 = vadd.f32 0.0, %v702
  %704 = vmatmul.bf16.gmra.mxu0 %v560
  %v705 = vpop.f32.mrf.mxu0
  %v706 = vadd.f32 0.0, %v705
  %v707 = vpop.f32.mrf.mxu0
  %v708 = vadd.f32 0.0, %v707
  %709 = vmatmul.bf16.gmra.mxu0 %v563
  %v710 = vpop.f32.mrf.mxu0
  %v711 = vadd.f32 0.0, %v710
  %v712 = vpop.f32.mrf.mxu0
  %v713 = vadd.f32 0.0, %v712
  %714 = vmatmul.bf16.gmra.mxu0 %v566
  %v715 = vpop.f32.mrf.mxu0
  %v716 = vadd.f32 0.0, %v715
  %v717 = vpop.f32.mrf.mxu0
  %v718 = vadd.f32 0.0, %v717
  %719 = vmatmul.bf16.gmra.mxu0 %v569
  %v720 = vpop.f32.mrf.mxu0
  %v721 = vadd.f32 0.0, %v720
  %v722 = vpop.f32.mrf.mxu0
  %v723 = vadd.f32 0.0, %v722
  %724 = vmatmul.bf16.gmra.mxu0 %v572
  %v725 = vpop.f32.mrf.mxu0
  %v726 = vadd.f32 0.0, %v725
  %v727 = vpop.f32.mrf.mxu0
  %v728 = vadd.f32 0.0, %v727
  %729 = vmatmul.bf16.gmra.mxu0 %v575
  %v730 = vpop.f32.mrf.mxu0
  %v731 = vadd.f32 0.0, %v730
  %v732 = vpop.f32.mrf.mxu0
  %v733 = vadd.f32 0.0, %v732
  %734 = vmatmul.bf16.gmra.mxu0 %v578
  %v735 = vpop.f32.mrf.mxu0
  %v736 = vadd.f32 0.0, %v735
  %v737 = vpop.f32.mrf.mxu0
  %v738 = vadd.f32 0.0, %v737
  %739 = vdwg.mxu0
  %740 = vmatpush.bf16.msra.mxu0 0
  %741 = vmatpush.bf16.msra.mxu0 0
  %742 = vmatpush.bf16.msra.mxu0 0
  %743 = vmatpush.bf16.msra.mxu0 0
  %744 = vmatpush.bf16.msra.mxu0 0
  %745 = vmatpush.bf16.msra.mxu0 %v591
  %746 = vmatpush.bf16.msra.mxu0 %v542
  %747 = vmatpush.bf16.msra.mxu0 %v538
  %748 = vmatmul.bf16.gmra.mxu0 %v557
  %v749 = vpop.f32.mrf.mxu0
  %v750 = vadd.f32 0.0, %v749
  %v751 = vpop.f32.mrf.mxu0
  %v752 = vadd.f32 0.0, %v751
  %753 = vmatmul.bf16.gmra.mxu0 %v560
  %v754 = vpop.f32.mrf.mxu0
  %v755 = vadd.f32 0.0, %v754
  %v756 = vpop.f32.mrf.mxu0
  %v757 = vadd.f32 0.0, %v756
  %758 = vmatmul.bf16.gmra.mxu0 %v563
  %v759 = vpop.f32.mrf.mxu0
  %v760 = vadd.f32 0.0, %v759
  %v761 = vpop.f32.mrf.mxu0
  %v762 = vadd.f32 0.0, %v761
  %763 = vmatmul.bf16.gmra.mxu0 %v566
  %v764 = vpop.f32.mrf.mxu0
  %v765 = vadd.f32 0.0, %v764
  %v766 = vpop.f32.mrf.mxu0
  %v767 = vadd.f32 0.0, %v766
  %768 = vmatmul.bf16.gmra.mxu0 %v569
  %v769 = vpop.f32.mrf.mxu0
  %v770 = vadd.f32 0.0, %v769
  %v771 = vpop.f32.mrf.mxu0
  %v772 = vadd.f32 0.0, %v771
  %773 = vmatmul.bf16.gmra.mxu0 %v572
  %v774 = vpop.f32.mrf.mxu0
  %v775 = vadd.f32 0.0, %v774
  %v776 = vpop.f32.mrf.mxu0
  %v777 = vadd.f32 0.0, %v776
  %778 = vmatmul.bf16.gmra.mxu0 %v575
  %v779 = vpop.f32.mrf.mxu0
  %v780 = vadd.f32 0.0, %v779
  %v781 = vpop.f32.mrf.mxu0
  %v782 = vadd.f32 0.0, %v781
  %783 = vmatmul.bf16.gmra.mxu0 %v578
  %v784 = vpop.f32.mrf.mxu0
  %v785 = vadd.f32 0.0, %v784
  %v786 = vpop.f32.mrf.mxu0
  %v787 = vadd.f32 0.0, %v786
  %788 = vdwg.mxu0
  %v805 = vunpack.c.l.b16 %v291
  %v806 = vunpack.c.l.b16 %v292
  %v807 = vunpack.c.l.b16 %v293
  %v808 = vunpack.c.l.b16 %v294
  %v809 = vunpack.c.l.b16 %v295
  %v810 = vunpack.c.l.b16 %v296
  %v811 = vunpack.c.l.b16 %v297
  %v812 = vunpack.c.l.b16 %v298
  %v813 = vunpack.c.l.b16 %v299
  %v814 = vunpack.c.l.b16 %v300
  %v815 = vunpack.c.l.b16 %v301
  %v816 = vunpack.c.l.b16 %v302
  %v817 = vunpack.c.l.b16 %v303
  %v818 = vunpack.c.l.b16 %v304
  %v819 = vunpack.c.l.b16 %v305
  %v820 = vunpack.c.l.b16 %v306
  %v821 = vpack.c.b16 %v806, %v805
  %v822 = vpack.c.b16 %v808, %v807
  %v823 = vpack.c.b16 %v810, %v809
  %v824 = vpack.c.b16 %v812, %v811
  %v825 = vpack.c.b16 %v814, %v813
  %v826 = vpack.c.b16 %v816, %v815
  %v827 = vpack.c.b16 %v818, %v817
  %v828 = vpack.c.b16 %v820, %v819
  %844 = vrot.lane.b32.xlu0 %v276, 17
  %v845 = vpop.permute.xlu0 %844
  %846 = vrot.lane.b32.xlu0 %v277, 17
  %v847 = vpop.permute.xlu0 %846
  %848 = vrot.lane.b32.xlu0 %v278, 17
  %v849 = vpop.permute.xlu0 %848
  %850 = vrot.lane.b32.xlu0 %v279, 17
  %v851 = vpop.permute.xlu0 %850
  %852 = vrot.lane.b32.xlu0 %v280, 17
  %v853 = vpop.permute.xlu0 %852
  %854 = vrot.lane.b32.xlu0 %v281, 17
  %v855 = vpop.permute.xlu0 %854
  %856 = vrot.lane.b32.xlu0 %v282, 17
  %v857 = vpop.permute.xlu0 %856
  %858 = vrot.lane.b32.xlu0 %v283, 17
  %v859 = vpop.permute.xlu0 %858
  %860 = vrot.lane.b32.xlu0 %v284, 17
  %v861 = vpop.permute.xlu0 %860
  %862 = vrot.lane.b32.xlu0 %v285, 17
  %v863 = vpop.permute.xlu0 %862
  %864 = vrot.lane.b32.xlu0 %v286, 17
  %v865 = vpop.permute.xlu0 %864
  %866 = vrot.lane.b32.xlu0 %v287, 17
  %v867 = vpop.permute.xlu0 %866
  %868 = vrot.lane.b32.xlu0 %v288, 17
  %v869 = vpop.permute.xlu0 %868
  %870 = vrot.lane.b32.xlu0 %v289, 17
  %v871 = vpop.permute.xlu0 %870
  %872 = vrot.lane.b32.xlu0 %v290, 17
  %v873 = vpop.permute.xlu0 %872
  %vm874 = vcmask 138240
  %v875 = vsel %vm874, %v845, %v847
  %v876 = vsel %vm874, %v847, %v849
  %v877 = vsel %vm874, %v849, %v851
  %v878 = vsel %vm874, %v851, %v853
  %v879 = vsel %vm874, %v855, %v857
  %v880 = vsel %vm874, %v857, %v859
  %v881 = vsel %vm874, %v859, %v861
  %v882 = vsel %vm874, %v861, %v863
  %v883 = vsel %vm874, %v865, %v867
  %v884 = vsel %vm874, %v867, %v869
  %v885 = vsel %vm874, %v869, %v871
  %v886 = vsel %vm874, %v871, %v873
  %v896 = vsel %vm555, %v821, 0
  %v899 = vsel %vm555, %v822, 0
  %v902 = vsel %vm555, %v823, 0
  %v905 = vsel %vm555, %v824, 0
  %v908 = vsel %vm555, %v825, 0
  %v911 = vsel %vm555, %v826, 0
  %v914 = vsel %vm555, %v827, 0
  %v917 = vsel %vm555, %v828, 0
  %v920 = vsel %vm580, %v883, 0
  %v923 = vsel %vm580, %v884, 0
  %v926 = vsel %vm580, %v885, 0
  %v929 = vsel %vm580, %v886, 0
  %931 = vmatpush.bf16.msra.mxu0 0
  %932 = vmatpush.bf16.msra.mxu0 0
  %933 = vmatpush.bf16.msra.mxu0 0
  %934 = vmatpush.bf16.msra.mxu0 0
  %935 = vmatpush.bf16.msra.mxu0 0
  %936 = vmatpush.bf16.msra.mxu0 %v920
  %937 = vmatpush.bf16.msra.mxu0 %v879
  %938 = vmatpush.bf16.msra.mxu0 %v875
  %939 = vmatmul.bf16.gmra.mxu0 %v896
  %v940 = vpop.f32.mrf.mxu0
  %v941 = vadd.f32 %v603, %v940
  %v942 = vpop.f32.mrf.mxu0
  %v943 = vadd.f32 %v605, %v942
  %944 = vmatmul.bf16.gmra.mxu0 %v899
  %v945 = vpop.f32.mrf.mxu0
  %v946 = vadd.f32 %v608, %v945
  %v947 = vpop.f32.mrf.mxu0
  %v948 = vadd.f32 %v610, %v947
  %949 = vmatmul.bf16.gmra.mxu0 %v902
  %v950 = vpop.f32.mrf.mxu0
  %v951 = vadd.f32 %v613, %v950
  %v952 = vpop.f32.mrf.mxu0
  %v953 = vadd.f32 %v615, %v952
  %954 = vmatmul.bf16.gmra.mxu0 %v905
  %v955 = vpop.f32.mrf.mxu0
  %v956 = vadd.f32 %v618, %v955
  %v957 = vpop.f32.mrf.mxu0
  %v958 = vadd.f32 %v620, %v957
  %959 = vmatmul.bf16.gmra.mxu0 %v908
  %v960 = vpop.f32.mrf.mxu0
  %v961 = vadd.f32 %v623, %v960
  %v962 = vpop.f32.mrf.mxu0
  %v963 = vadd.f32 %v625, %v962
  %964 = vmatmul.bf16.gmra.mxu0 %v911
  %v965 = vpop.f32.mrf.mxu0
  %v966 = vadd.f32 %v628, %v965
  %v967 = vpop.f32.mrf.mxu0
  %v968 = vadd.f32 %v630, %v967
  %969 = vmatmul.bf16.gmra.mxu0 %v914
  %v970 = vpop.f32.mrf.mxu0
  %v971 = vadd.f32 %v633, %v970
  %v972 = vpop.f32.mrf.mxu0
  %v973 = vadd.f32 %v635, %v972
  %974 = vmatmul.bf16.gmra.mxu0 %v917
  %v975 = vpop.f32.mrf.mxu0
  %v976 = vadd.f32 %v638, %v975
  %v977 = vpop.f32.mrf.mxu0
  %v978 = vadd.f32 %v640, %v977
  %979 = vdwg.mxu0
  %980 = vmatpush.bf16.msra.mxu0 0
  %981 = vmatpush.bf16.msra.mxu0 0
  %982 = vmatpush.bf16.msra.mxu0 0
  %983 = vmatpush.bf16.msra.mxu0 0
  %984 = vmatpush.bf16.msra.mxu0 0
  %985 = vmatpush.bf16.msra.mxu0 %v923
  %986 = vmatpush.bf16.msra.mxu0 %v880
  %987 = vmatpush.bf16.msra.mxu0 %v876
  %988 = vmatmul.bf16.gmra.mxu0 %v896
  %v989 = vpop.f32.mrf.mxu0
  %v990 = vadd.f32 %v652, %v989
  %v991 = vpop.f32.mrf.mxu0
  %v992 = vadd.f32 %v654, %v991
  %993 = vmatmul.bf16.gmra.mxu0 %v899
  %v994 = vpop.f32.mrf.mxu0
  %v995 = vadd.f32 %v657, %v994
  %v996 = vpop.f32.mrf.mxu0
  %v997 = vadd.f32 %v659, %v996
  %998 = vmatmul.bf16.gmra.mxu0 %v902
  %v999 = vpop.f32.mrf.mxu0
  %v1000 = vadd.f32 %v662, %v999
  %v1001 = vpop.f32.mrf.mxu0
  %v1002 = vadd.f32 %v664, %v1001
  %1003 = vmatmul.bf16.gmra.mxu0 %v905
  %v1004 = vpop.f32.mrf.mxu0
  %v1005 = vadd.f32 %v667, %v1004
  %v1006 = vpop.f32.mrf.mxu0
  %v1007 = vadd.f32 %v669, %v1006
  %1008 = vmatmul.bf16.gmra.mxu0 %v908
  %v1009 = vpop.f32.mrf.mxu0
  %v1010 = vadd.f32 %v672, %v1009
  %v1011 = vpop.f32.mrf.mxu0
  %v1012 = vadd.f32 %v674, %v1011
  %1013 = vmatmul.bf16.gmra.mxu0 %v911
  %v1014 = vpop.f32.mrf.mxu0
  %v1015 = vadd.f32 %v677, %v1014
  %v1016 = vpop.f32.mrf.mxu0
  %v1017 = vadd.f32 %v679, %v1016
  %1018 = vmatmul.bf16.gmra.mxu0 %v914
  %v1019 = vpop.f32.mrf.mxu0
  %v1020 = vadd.f32 %v682, %v1019
  %v1021 = vpop.f32.mrf.mxu0
  %v1022 = vadd.f32 %v684, %v1021
  %1023 = vmatmul.bf16.gmra.mxu0 %v917
  %v1024 = vpop.f32.mrf.mxu0
  %v1025 = vadd.f32 %v687, %v1024
  %v1026 = vpop.f32.mrf.mxu0
  %v1027 = vadd.f32 %v689, %v1026
  %1028 = vdwg.mxu0
  %1029 = vmatpush.bf16.msra.mxu0 0
  %1030 = vmatpush.bf16.msra.mxu0 0
  %1031 = vmatpush.bf16.msra.mxu0 0
  %1032 = vmatpush.bf16.msra.mxu0 0
  %1033 = vmatpush.bf16.msra.mxu0 0
  %1034 = vmatpush.bf16.msra.mxu0 %v926
  %1035 = vmatpush.bf16.msra.mxu0 %v881
  %1036 = vmatpush.bf16.msra.mxu0 %v877
  %1037 = vmatmul.bf16.gmra.mxu0 %v896
  %v1038 = vpop.f32.mrf.mxu0
  %v1039 = vadd.f32 %v701, %v1038
  %v1040 = vpop.f32.mrf.mxu0
  %v1041 = vadd.f32 %v703, %v1040
  %1042 = vmatmul.bf16.gmra.mxu0 %v899
  %v1043 = vpop.f32.mrf.mxu0
  %v1044 = vadd.f32 %v706, %v1043
  %v1045 = vpop.f32.mrf.mxu0
  %v1046 = vadd.f32 %v708, %v1045
  %1047 = vmatmul.bf16.gmra.mxu0 %v902
  %v1048 = vpop.f32.mrf.mxu0
  %v1049 = vadd.f32 %v711, %v1048
  %v1050 = vpop.f32.mrf.mxu0
  %v1051 = vadd.f32 %v713, %v1050
  %1052 = vmatmul.bf16.gmra.mxu0 %v905
  %v1053 = vpop.f32.mrf.mxu0
  %v1054 = vadd.f32 %v716, %v1053
  %v1055 = vpop.f32.mrf.mxu0
  %v1056 = vadd.f32 %v718, %v1055
  %1057 = vmatmul.bf16.gmra.mxu0 %v908
  %v1058 = vpop.f32.mrf.mxu0
  %v1059 = vadd.f32 %v721, %v1058
  %v1060 = vpop.f32.mrf.mxu0
  %v1061 = vadd.f32 %v723, %v1060
  %1062 = vmatmul.bf16.gmra.mxu0 %v911
  %v1063 = vpop.f32.mrf.mxu0
  %v1064 = vadd.f32 %v726, %v1063
  %v1065 = vpop.f32.mrf.mxu0
  %v1066 = vadd.f32 %v728, %v1065
  %1067 = vmatmul.bf16.gmra.mxu0 %v914
  %v1068 = vpop.f32.mrf.mxu0
  %v1069 = vadd.f32 %v731, %v1068
  %v1070 = vpop.f32.mrf.mxu0
  %v1071 = vadd.f32 %v733, %v1070
  %1072 = vmatmul.bf16.gmra.mxu0 %v917
  %v1073 = vpop.f32.mrf.mxu0
  %v1074 = vadd.f32 %v736, %v1073
  %v1075 = vpop.f32.mrf.mxu0
  %v1076 = vadd.f32 %v738, %v1075
  %1077 = vdwg.mxu0
  %1078 = vmatpush.bf16.msra.mxu0 0
  %1079 = vmatpush.bf16.msra.mxu0 0
  %1080 = vmatpush.bf16.msra.mxu0 0
  %1081 = vmatpush.bf16.msra.mxu0 0
  %1082 = vmatpush.bf16.msra.mxu0 0
  %1083 = vmatpush.bf16.msra.mxu0 %v929
  %1084 = vmatpush.bf16.msra.mxu0 %v882
  %1085 = vmatpush.bf16.msra.mxu0 %v878
  %1086 = vmatmul.bf16.gmra.mxu0 %v896
  %v1087 = vpop.f32.mrf.mxu0
  %v1088 = vadd.f32 %v750, %v1087
  %v1089 = vpop.f32.mrf.mxu0
  %v1090 = vadd.f32 %v752, %v1089
  %1091 = vmatmul.bf16.gmra.mxu0 %v899
  %v1092 = vpop.f32.mrf.mxu0
  %v1093 = vadd.f32 %v755, %v1092
  %v1094 = vpop.f32.mrf.mxu0
  %v1095 = vadd.f32 %v757, %v1094
  %1096 = vmatmul.bf16.gmra.mxu0 %v902
  %v1097 = vpop.f32.mrf.mxu0
  %v1098 = vadd.f32 %v760, %v1097
  %v1099 = vpop.f32.mrf.mxu0
  %v1100 = vadd.f32 %v762, %v1099
  %1101 = vmatmul.bf16.gmra.mxu0 %v905
  %v1102 = vpop.f32.mrf.mxu0
  %v1103 = vadd.f32 %v765, %v1102
  %v1104 = vpop.f32.mrf.mxu0
  %v1105 = vadd.f32 %v767, %v1104
  %1106 = vmatmul.bf16.gmra.mxu0 %v908
  %v1107 = vpop.f32.mrf.mxu0
  %v1108 = vadd.f32 %v770, %v1107
  %v1109 = vpop.f32.mrf.mxu0
  %v1110 = vadd.f32 %v772, %v1109
  %1111 = vmatmul.bf16.gmra.mxu0 %v911
  %v1112 = vpop.f32.mrf.mxu0
  %v1113 = vadd.f32 %v775, %v1112
  %v1114 = vpop.f32.mrf.mxu0
  %v1115 = vadd.f32 %v777, %v1114
  %1116 = vmatmul.bf16.gmra.mxu0 %v914
  %v1117 = vpop.f32.mrf.mxu0
  %v1118 = vadd.f32 %v780, %v1117
  %v1119 = vpop.f32.mrf.mxu0
  %v1120 = vadd.f32 %v782, %v1119
  %1121 = vmatmul.bf16.gmra.mxu0 %v917
  %v1122 = vpop.f32.mrf.mxu0
  %v1123 = vadd.f32 %v785, %v1122
  %v1124 = vpop.f32.mrf.mxu0
  %v1125 = vadd.f32 %v787, %v1124
  %1126 = vdwg.mxu0
  %v1127 = vld [vmem:[#allocation2] sm:$0xff]
  %v1128 = vld [vmem:[#allocation2 + $0x8] sm:$0xff]
  %v1129 = vld [vmem:[#allocation2 + $0x10] sm:$0xf]
  %v1130 = vld [vmem:[#allocation2 + $0x18] sm:$0xff]
  %v1131 = vld [vmem:[#allocation2 + $0x20] sm:$0xff]
  %v1132 = vld [vmem:[#allocation2 + $0x28] sm:$0xf]
  %v1133 = vld [vmem:[#allocation2 + $0x30] sm:$0xff]
  %v1134 = vld [vmem:[#allocation2 + $0x38] sm:$0xff]
  %v1135 = vld [vmem:[#allocation2 + $0x40] sm:$0xf]
  %v1136 = vld [vmem:[#allocation2 + $0x48] sm:$0xff]
  %v1137 = vld [vmem:[#allocation2 + $0x50] sm:$0xff]
  %v1138 = vld [vmem:[#allocation2 + $0x58] sm:$0xf]
  %v1139 = vld [vmem:[#allocation2 + $0x60] sm:$0x33]
  %v1140 = vld [vmem:[#allocation2 + $0x68] sm:$0x33]
  %v1141 = vld [vmem:[#allocation2 + $0x70] sm:$0x3]
  %s1142 = scalar_lea.vmem %s3, 8
  %v1143 = vld [vmem:[%s1142] sm:$0xf]
  %1145 = vst [vmem:[#allocation1] ss:$9 sm:$0xff] %v1143
  %v1146 = vld [vmem:[#allocation1] sm:$0xff]
  %v1147 = vld [vmem:[#allocation1 + $0x9] sm:$0xff]
  %v1148 = vld [vmem:[#allocation1 + $0x12] sm:$0xff]
  %v1149 = vld [vmem:[#allocation1 + $0x1b] sm:$0xff]
  %v1150 = vpack.i.b16 %v1146, %v1146
  %v1152 = vperm.slane %v1150, 0
  %v1153 = vpack.i.b16 %v1147, %v1147
  %v1155 = vperm.slane %v1153, 0
  %v1156 = vpack.i.b16 %v1148, %v1148
  %v1158 = vperm.slane %v1156, 0
  %v1159 = vpack.i.b16 %v1149, %v1149
  %v1161 = vperm.slane %v1159, 0
  %v1162 = vunpack.c.l.bf16 %v1127
  %v1163 = vunpack.c.h.bf16 %v1127
  %v1164 = vunpack.c.l.bf16 %v1128
  %v1165 = vunpack.c.h.bf16 %v1128
  %v1166 = vunpack.c.l.bf16 %v1129
  %v1167 = vunpack.c.l.bf16 %v1130
  %v1168 = vunpack.c.h.bf16 %v1130
  %v1169 = vunpack.c.l.bf16 %v1131
  %v1170 = vunpack.c.h.bf16 %v1131
  %v1171 = vunpack.c.l.bf16 %v1132
  %v1172 = vunpack.c.l.bf16 %v1133
  %v1173 = vunpack.c.h.bf16 %v1133
  %v1174 = vunpack.c.l.bf16 %v1134
  %v1175 = vunpack.c.h.bf16 %v1134
  %v1176 = vunpack.c.l.bf16 %v1135
  %v1177 = vunpack.c.l.bf16 %v1136
  %v1178 = vunpack.c.h.bf16 %v1136
  %v1179 = vunpack.c.l.bf16 %v1137
  %v1180 = vunpack.c.h.bf16 %v1137
  %v1181 = vunpack.c.l.bf16 %v1138
  %v1182 = vunpack.c.l.bf16 %v1139
  %v1183 = vunpack.c.h.bf16 %v1139
  %v1184 = vunpack.c.l.bf16 %v1140
  %v1185 = vunpack.c.h.bf16 %v1140
  %v1186 = vunpack.c.l.bf16 %v1141
  %v1187 = vunpack.c.l.bf16 %v1152
  %v1188 = vunpack.c.l.bf16 %v1155
  %v1189 = vunpack.c.l.bf16 %v1158
  %v1190 = vunpack.c.l.bf16 %v1161
  %1195 = vrot.lane.b32.xlu0 %v1187, 113
  %v1196 = vpop.permute.xlu0 %1195
  %1197 = vrot.lane.b32.xlu0 %v1188, 113
  %v1198 = vpop.permute.xlu0 %1197
  %1199 = vrot.lane.b32.xlu0 %v1189, 113
  %v1200 = vpop.permute.xlu0 %1199
  %1201 = vrot.lane.b32.xlu0 %v1190, 113
  %v1202 = vpop.permute.xlu0 %1201
  %vm1203 = vcmask 924672
  %v1204 = vsel %vm1203, %v1196, %v1198
  %v1205 = vsel %vm1203, %v1198, %v1200
  %v1206 = vsel %vm1203, %v1200, %v1202
  %v1212 = vmul.f32 %v1162, %v1196
  %v1213 = vmul.f32 %v1163, %v1204
  %v1214 = vmul.f32 %v1164, %v1205
  %v1215 = vmul.f32 %v1165, %v1206
  %v1216 = vmul.f32 %v1166, %v1202
  %v1217 = vmul.f32 %v1167, %v1196
  %v1218 = vmul.f32 %v1168, %v1204
  %v1219 = vmul.f32 %v1169, %v1205
  %v1220 = vmul.f32 %v1170, %v1206
  %v1221 = vmul.f32 %v1171, %v1202
  %v1222 = vmul.f32 %v1172, %v1196
  %v1223 = vmul.f32 %v1173, %v1204
  %v1224 = vmul.f32 %v1174, %v1205
  %v1225 = vmul.f32 %v1175, %v1206
  %v1226 = vmul.f32 %v1176, %v1202
  %v1227 = vmul.f32 %v1177, %v1196
  %v1228 = vmul.f32 %v1178, %v1204
  %v1229 = vmul.f32 %v1179, %v1205
  %v1230 = vmul.f32 %v1180, %v1206
  %v1231 = vmul.f32 %v1181, %v1202
  %v1232 = vmul.f32 %v1182, %v1196
  %v1233 = vmul.f32 %v1183, %v1204
  %v1234 = vmul.f32 %v1184, %v1205
  %v1235 = vmul.f32 %v1185, %v1206
  %v1236 = vmul.f32 %v1186, %v1202
  %v1237 = vpack.c.bf16 %v1217, %v1212
  %v1238 = vpack.c.bf16 %v1218, %v1213
  %v1239 = vpack.c.bf16 %v1219, %v1214
  %v1240 = vpack.c.bf16 %v1220, %v1215
  %v1241 = vpack.c.bf16 %v1221, %v1216
  %v1242 = vpack.c.bf16 %v1227, %v1222
  %v1243 = vpack.c.bf16 %v1228, %v1223
  %v1244 = vpack.c.bf16 %v1229, %v1224
  %v1245 = vpack.c.bf16 %v1230, %v1225
  %v1246 = vpack.c.bf16 %v1231, %v1226
  %v1247 = vpack.c.bf16 %v1232, %v1232
  %v1248 = vpack.c.bf16 %v1233, %v1233
  %v1249 = vpack.c.bf16 %v1234, %v1234
  %v1250 = vpack.c.bf16 %v1235, %v1235
  %v1251 = vpack.c.bf16 %v1236, %v1236
  %s1252 = scalar_lea.vmem %s1, 128
  %v1253 = vld [vmem:[%s1252] sm:$0xf]
  %v1254 = vld [vmem:[%s1252 + $0x4] sm:$0xf]
  %v1255 = vld [vmem:[%s1252 + $0x8] sm:$0xf]
  %v1256 = vld [vmem:[%s1252 + $0xc] sm:$0xf]
  %v1257 = vld [vmem:[%s1252 + $0x10] sm:$0xf]
  %v1258 = vld [vmem:[%s1252 + $0x14] sm:$0xf]
  %v1259 = vld [vmem:[%s1252 + $0x18] sm:$0xf]
  %v1260 = vld [vmem:[%s1252 + $0x1c] sm:$0xf]
  %v1261 = vld [vmem:[%s1252 + $0x20] sm:$0xf]
  %v1262 = vld [vmem:[%s1252 + $0x24] sm:$0xf]
  %v1263 = vld [vmem:[%s1252 + $0x28] sm:$0xf]
  %v1264 = vld [vmem:[%s1252 + $0x2c] sm:$0xf]
  %v1265 = vld [vmem:[%s1252 + $0x30] sm:$0xf]
  %v1266 = vld [vmem:[%s1252 + $0x34] sm:$0xf]
  %v1267 = vld [vmem:[%s1252 + $0x38] sm:$0xf]
  %v1268 = vld [vmem:[%s1252 + $0x3c] sm:$0xf]
  %v1285 = vunpack.c.l.b16 %v1253
  %v1286 = vunpack.c.l.b16 %v1254
  %v1287 = vunpack.c.l.b16 %v1255
  %v1288 = vunpack.c.l.b16 %v1256
  %v1289 = vunpack.c.l.b16 %v1257
  %v1290 = vunpack.c.l.b16 %v1258
  %v1291 = vunpack.c.l.b16 %v1259
  %v1292 = vunpack.c.l.b16 %v1260
  %v1293 = vunpack.c.l.b16 %v1261
  %v1294 = vunpack.c.l.b16 %v1262
  %v1295 = vunpack.c.l.b16 %v1263
  %v1296 = vunpack.c.l.b16 %v1264
  %v1297 = vunpack.c.l.b16 %v1265
  %v1298 = vunpack.c.l.b16 %v1266
  %v1299 = vunpack.c.l.b16 %v1267
  %v1300 = vunpack.c.l.b16 %v1268
  %v1301 = vpack.c.b16 %v1286, %v1285
  %v1302 = vpack.c.b16 %v1288, %v1287
  %v1303 = vpack.c.b16 %v1290, %v1289
  %v1304 = vpack.c.b16 %v1292, %v1291
  %v1305 = vpack.c.b16 %v1294, %v1293
  %v1306 = vpack.c.b16 %v1296, %v1295
  %v1307 = vpack.c.b16 %v1298, %v1297
  %v1308 = vpack.c.b16 %v1300, %v1299
  %1324 = vrot.lane.b32.xlu0 %v1237, 15
  %v1325 = vpop.permute.xlu0 %1324
  %1326 = vrot.lane.b32.xlu0 %v1238, 15
  %v1327 = vpop.permute.xlu0 %1326
  %1328 = vrot.lane.b32.xlu0 %v1239, 15
  %v1329 = vpop.permute.xlu0 %1328
  %1330 = vrot.lane.b32.xlu0 %v1240, 15
  %v1331 = vpop.permute.xlu0 %1330
  %1332 = vrot.lane.b32.xlu0 %v1241, 15
  %v1333 = vpop.permute.xlu0 %1332
  %1334 = vrot.lane.b32.xlu0 %v1242, 15
  %v1335 = vpop.permute.xlu0 %1334
  %1336 = vrot.lane.b32.xlu0 %v1243, 15
  %v1337 = vpop.permute.xlu0 %1336
  %1338 = vrot.lane.b32.xlu0 %v1244, 15
  %v1339 = vpop.permute.xlu0 %1338
  %1340 = vrot.lane.b32.xlu0 %v1245, 15
  %v1341 = vpop.permute.xlu0 %1340
  %1342 = vrot.lane.b32.xlu0 %v1246, 15
  %v1343 = vpop.permute.xlu0 %1342
  %1344 = vrot.lane.b32.xlu0 %v1247, 15
  %v1345 = vpop.permute.xlu0 %1344
  %1346 = vrot.lane.b32.xlu0 %v1248, 15
  %v1347 = vpop.permute.xlu0 %1346
  %1348 = vrot.lane.b32.xlu0 %v1249, 15
  %v1349 = vpop.permute.xlu0 %1348
  %1350 = vrot.lane.b32.xlu0 %v1250, 15
  %v1351 = vpop.permute.xlu0 %1350
  %1352 = vrot.lane.b32.xlu0 %v1251, 15
  %v1353 = vpop.permute.xlu0 %1352
  %vm1354 = vcmask 121856
  %v1355 = vsel %vm1354, %v1325, %v1327
  %v1356 = vsel %vm1354, %v1327, %v1329
  %v1357 = vsel %vm1354, %v1329, %v1331
  %v1358 = vsel %vm1354, %v1331, %v1333
  %v1359 = vsel %vm1354, %v1335, %v1337
  %v1360 = vsel %vm1354, %v1337, %v1339
  %v1361 = vsel %vm1354, %v1339, %v1341
  %v1362 = vsel %vm1354, %v1341, %v1343
  %v1363 = vsel %vm1354, %v1345, %v1347
  %v1364 = vsel %vm1354, %v1347, %v1349
  %v1365 = vsel %vm1354, %v1349, %v1351
  %v1366 = vsel %vm1354, %v1351, %v1353
  %v1376 = vsel %vm555, %v1301, 0
  %v1379 = vsel %vm555, %v1302, 0
  %v1382 = vsel %vm555, %v1303, 0
  %v1385 = vsel %vm555, %v1304, 0
  %v1388 = vsel %vm555, %v1305, 0
  %v1391 = vsel %vm555, %v1306, 0
  %v1394 = vsel %vm555, %v1307, 0
  %v1397 = vsel %vm555, %v1308, 0
  %v1400 = vsel %vm580, %v1363, 0
  %v1403 = vsel %vm580, %v1364, 0
  %v1406 = vsel %vm580, %v1365, 0
  %v1409 = vsel %vm580, %v1366, 0
  %1411 = vmatpush.bf16.msra.mxu0 0
  %1412 = vmatpush.bf16.msra.mxu0 0
  %1413 = vmatpush.bf16.msra.mxu0 0
  %1414 = vmatpush.bf16.msra.mxu0 0
  %1415 = vmatpush.bf16.msra.mxu0 0
  %1416 = vmatpush.bf16.msra.mxu0 %v1400
  %1417 = vmatpush.bf16.msra.mxu0 %v1359
  %1418 = vmatpush.bf16.msra.mxu0 %v1355
  %1419 = vmatmul.bf16.gmra.mxu0 %v1376
  %v1420 = vpop.f32.mrf.mxu0
  %v1421 = vadd.f32 0.0, %v1420
  %v1422 = vpop.f32.mrf.mxu0
  %v1423 = vadd.f32 0.0, %v1422
  %1424 = vmatmul.bf16.gmra.mxu0 %v1379
  %v1425 = vpop.f32.mrf.mxu0
  %v1426 = vadd.f32 0.0, %v1425
  %v1427 = vpop.f32.mrf.mxu0
  %v1428 = vadd.f32 0.0, %v1427
  %1429 = vmatmul.bf16.gmra.mxu0 %v1382
  %v1430 = vpop.f32.mrf.mxu0
  %v1431 = vadd.f32 0.0, %v1430
  %v1432 = vpop.f32.mrf.mxu0
  %v1433 = vadd.f32 0.0, %v1432
  %1434 = vmatmul.bf16.gmra.mxu0 %v1385
  %v1435 = vpop.f32.mrf.mxu0
  %v1436 = vadd.f32 0.0, %v1435
  %v1437 = vpop.f32.mrf.mxu0
  %v1438 = vadd.f32 0.0, %v1437
  %1439 = vmatmul.bf16.gmra.mxu0 %v1388
  %v1440 = vpop.f32.mrf.mxu0
  %v1441 = vadd.f32 0.0, %v1440
  %v1442 = vpop.f32.mrf.mxu0
  %v1443 = vadd.f32 0.0, %v1442
  %1444 = vmatmul.bf16.gmra.mxu0 %v1391
  %v1445 = vpop.f32.mrf.mxu0
  %v1446 = vadd.f32 0.0, %v1445
  %v1447 = vpop.f32.mrf.mxu0
  %v1448 = vadd.f32 0.0, %v1447
  %1449 = vmatmul.bf16.gmra.mxu0 %v1394
  %v1450 = vpop.f32.mrf.mxu0
  %v1451 = vadd.f32 0.0, %v1450
  %v1452 = vpop.f32.mrf.mxu0
  %v1453 = vadd.f32 0.0, %v1452
  %1454 = vmatmul.bf16.gmra.mxu0 %v1397
  %v1455 = vpop.f32.mrf.mxu0
  %v1456 = vadd.f32 0.0, %v1455
  %v1457 = vpop.f32.mrf.mxu0
  %v1458 = vadd.f32 0.0, %v1457
  %1459 = vdwg.mxu0
  %1460 = vmatpush.bf16.msra.mxu0 0
  %1461 = vmatpush.bf16.msra.mxu0 0
  %1462 = vmatpush.bf16.msra.mxu0 0
  %1463 = vmatpush.bf16.msra.mxu0 0
  %1464 = vmatpush.bf16.msra.mxu0 0
  %1465 = vmatpush.bf16.msra.mxu0 %v1403
  %1466 = vmatpush.bf16.msra.mxu0 %v1360
  %1467 = vmatpush.bf16.msra.mxu0 %v1356
  %1468 = vmatmul.bf16.gmra.mxu0 %v1376
  %v1469 = vpop.f32.mrf.mxu0
  %v1470 = vadd.f32 0.0, %v1469
  %v1471 = vpop.f32.mrf.mxu0
  %v1472 = vadd.f32 0.0, %v1471
  %1473 = vmatmul.bf16.gmra.mxu0 %v1379
  %v1474 = vpop.f32.mrf.mxu0
  %v1475 = vadd.f32 0.0, %v1474
  %v1476 = vpop.f32.mrf.mxu0
  %v1477 = vadd.f32 0.0, %v1476
  %1478 = vmatmul.bf16.gmra.mxu0 %v1382
  %v1479 = vpop.f32.mrf.mxu0
  %v1480 = vadd.f32 0.0, %v1479
  %v1481 = vpop.f32.mrf.mxu0
  %v1482 = vadd.f32 0.0, %v1481
  %1483 = vmatmul.bf16.gmra.mxu0 %v1385
  %v1484 = vpop.f32.mrf.mxu0
  %v1485 = vadd.f32 0.0, %v1484
  %v1486 = vpop.f32.mrf.mxu0
  %v1487 = vadd.f32 0.0, %v1486
  %1488 = vmatmul.bf16.gmra.mxu0 %v1388
  %v1489 = vpop.f32.mrf.mxu0
  %v1490 = vadd.f32 0.0, %v1489
  %v1491 = vpop.f32.mrf.mxu0
  %v1492 = vadd.f32 0.0, %v1491
  %1493 = vmatmul.bf16.gmra.mxu0 %v1391
  %v1494 = vpop.f32.mrf.mxu0
  %v1495 = vadd.f32 0.0, %v1494
  %v1496 = vpop.f32.mrf.mxu0
  %v1497 = vadd.f32 0.0, %v1496
  %1498 = vmatmul.bf16.gmra.mxu0 %v1394
  %v1499 = vpop.f32.mrf.mxu0
  %v1500 = vadd.f32 0.0, %v1499
  %v1501 = vpop.f32.mrf.mxu0
  %v1502 = vadd.f32 0.0, %v1501
  %1503 = vmatmul.bf16.gmra.mxu0 %v1397
  %v1504 = vpop.f32.mrf.mxu0
  %v1505 = vadd.f32 0.0, %v1504
  %v1506 = vpop.f32.mrf.mxu0
  %v1507 = vadd.f32 0.0, %v1506
  %1508 = vdwg.mxu0
  %1509 = vmatpush.bf16.msra.mxu0 0
  %1510 = vmatpush.bf16.msra.mxu0 0
  %1511 = vmatpush.bf16.msra.mxu0 0
  %1512 = vmatpush.bf16.msra.mxu0 0
  %1513 = vmatpush.bf16.msra.mxu0 0
  %1514 = vmatpush.bf16.msra.mxu0 %v1406
  %1515 = vmatpush.bf16.msra.mxu0 %v1361
  %1516 = vmatpush.bf16.msra.mxu0 %v1357
  %1517 = vmatmul.bf16.gmra.mxu0 %v1376
  %v1518 = vpop.f32.mrf.mxu0
  %v1519 = vadd.f32 0.0, %v1518
  %v1520 = vpop.f32.mrf.mxu0
  %v1521 = vadd.f32 0.0, %v1520
  %1522 = vmatmul.bf16.gmra.mxu0 %v1379
  %v1523 = vpop.f32.mrf.mxu0
  %v1524 = vadd.f32 0.0, %v1523
  %v1525 = vpop.f32.mrf.mxu0
  %v1526 = vadd.f32 0.0, %v1525
  %1527 = vmatmul.bf16.gmra.mxu0 %v1382
  %v1528 = vpop.f32.mrf.mxu0
  %v1529 = vadd.f32 0.0, %v1528
  %v1530 = vpop.f32.mrf.mxu0
  %v1531 = vadd.f32 0.0, %v1530
  %1532 = vmatmul.bf16.gmra.mxu0 %v1385
  %v1533 = vpop.f32.mrf.mxu0
  %v1534 = vadd.f32 0.0, %v1533
  %v1535 = vpop.f32.mrf.mxu0
  %v1536 = vadd.f32 0.0, %v1535
  %1537 = vmatmul.bf16.gmra.mxu0 %v1388
  %v1538 = vpop.f32.mrf.mxu0
  %v1539 = vadd.f32 0.0, %v1538
  %v1540 = vpop.f32.mrf.mxu0
  %v1541 = vadd.f32 0.0, %v1540
  %1542 = vmatmul.bf16.gmra.mxu0 %v1391
  %v1543 = vpop.f32.mrf.mxu0
  %v1544 = vadd.f32 0.0, %v1543
  %v1545 = vpop.f32.mrf.mxu0
  %v1546 = vadd.f32 0.0, %v1545
  %1547 = vmatmul.bf16.gmra.mxu0 %v1394
  %v1548 = vpop.f32.mrf.mxu0
  %v1549 = vadd.f32 0.0, %v1548
  %v1550 = vpop.f32.mrf.mxu0
  %v1551 = vadd.f32 0.0, %v1550
  %1552 = vmatmul.bf16.gmra.mxu0 %v1397
  %v1553 = vpop.f32.mrf.mxu0
  %v1554 = vadd.f32 0.0, %v1553
  %v1555 = vpop.f32.mrf.mxu0
  %v1556 = vadd.f32 0.0, %v1555
  %1557 = vdwg.mxu0
  %1558 = vmatpush.bf16.msra.mxu0 0
  %1559 = vmatpush.bf16.msra.mxu0 0
  %1560 = vmatpush.bf16.msra.mxu0 0
  %1561 = vmatpush.bf16.msra.mxu0 0
  %1562 = vmatpush.bf16.msra.mxu0 0
  %1563 = vmatpush.bf16.msra.mxu0 %v1409
  %1564 = vmatpush.bf16.msra.mxu0 %v1362
  %1565 = vmatpush.bf16.msra.mxu0 %v1358
  %1566 = vmatmul.bf16.gmra.mxu0 %v1376
  %v1567 = vpop.f32.mrf.mxu0
  %v1568 = vadd.f32 0.0, %v1567
  %v1569 = vpop.f32.mrf.mxu0
  %v1570 = vadd.f32 0.0, %v1569
  %1571 = vmatmul.bf16.gmra.mxu0 %v1379
  %v1572 = vpop.f32.mrf.mxu0
  %v1573 = vadd.f32 0.0, %v1572
  %v1574 = vpop.f32.mrf.mxu0
  %v1575 = vadd.f32 0.0, %v1574
  %1576 = vmatmul.bf16.gmra.mxu0 %v1382
  %v1577 = vpop.f32.mrf.mxu0
  %v1578 = vadd.f32 0.0, %v1577
  %v1579 = vpop.f32.mrf.mxu0
  %v1580 = vadd.f32 0.0, %v1579
  %1581 = vmatmul.bf16.gmra.mxu0 %v1385
  %v1582 = vpop.f32.mrf.mxu0
  %v1583 = vadd.f32 0.0, %v1582
  %v1584 = vpop.f32.mrf.mxu0
  %v1585 = vadd.f32 0.0, %v1584
  %1586 = vmatmul.bf16.gmra.mxu0 %v1388
  %v1587 = vpop.f32.mrf.mxu0
  %v1588 = vadd.f32 0.0, %v1587
  %v1589 = vpop.f32.mrf.mxu0
  %v1590 = vadd.f32 0.0, %v1589
  %1591 = vmatmul.bf16.gmra.mxu0 %v1391
  %v1592 = vpop.f32.mrf.mxu0
  %v1593 = vadd.f32 0.0, %v1592
  %v1594 = vpop.f32.mrf.mxu0
  %v1595 = vadd.f32 0.0, %v1594
  %1596 = vmatmul.bf16.gmra.mxu0 %v1394
  %v1597 = vpop.f32.mrf.mxu0
  %v1598 = vadd.f32 0.0, %v1597
  %v1599 = vpop.f32.mrf.mxu0
  %v1600 = vadd.f32 0.0, %v1599
  %1601 = vmatmul.bf16.gmra.mxu0 %v1397
  %v1602 = vpop.f32.mrf.mxu0
  %v1603 = vadd.f32 0.0, %v1602
  %v1604 = vpop.f32.mrf.mxu0
  %v1605 = vadd.f32 0.0, %v1604
  %1606 = vdwg.mxu0
  %v1607 = vadd.f32 %v941, %v1421
  %v1608 = vadd.f32 %v990, %v1470
  %v1609 = vadd.f32 %v1039, %v1519
  %v1610 = vadd.f32 %v1088, %v1568
  %v1611 = vadd.f32 %v943, %v1423
  %v1612 = vadd.f32 %v992, %v1472
  %v1613 = vadd.f32 %v1041, %v1521
  %v1614 = vadd.f32 %v1090, %v1570
  %v1615 = vadd.f32 %v946, %v1426
  %v1616 = vadd.f32 %v995, %v1475
  %v1617 = vadd.f32 %v1044, %v1524
  %v1618 = vadd.f32 %v1093, %v1573
  %v1619 = vadd.f32 %v948, %v1428
  %v1620 = vadd.f32 %v997, %v1477
  %v1621 = vadd.f32 %v1046, %v1526
  %v1622 = vadd.f32 %v1095, %v1575
  %v1623 = vadd.f32 %v951, %v1431
  %v1624 = vadd.f32 %v1000, %v1480
  %v1625 = vadd.f32 %v1049, %v1529
  %v1626 = vadd.f32 %v1098, %v1578
  %v1627 = vadd.f32 %v953, %v1433
  %v1628 = vadd.f32 %v1002, %v1482
  %v1629 = vadd.f32 %v1051, %v1531
  %v1630 = vadd.f32 %v1100, %v1580
  %v1631 = vadd.f32 %v956, %v1436
  %v1632 = vadd.f32 %v1005, %v1485
  %v1633 = vadd.f32 %v1054, %v1534
  %v1634 = vadd.f32 %v1103, %v1583
  %v1635 = vadd.f32 %v958, %v1438
  %v1636 = vadd.f32 %v1007, %v1487
  %v1637 = vadd.f32 %v1056, %v1536
  %v1638 = vadd.f32 %v1105, %v1585
  %v1639 = vadd.f32 %v961, %v1441
  %v1640 = vadd.f32 %v1010, %v1490
  %v1641 = vadd.f32 %v1059, %v1539
  %v1642 = vadd.f32 %v1108, %v1588
  %v1643 = vadd.f32 %v963, %v1443
  %v1644 = vadd.f32 %v1012, %v1492
  %v1645 = vadd.f32 %v1061, %v1541
  %v1646 = vadd.f32 %v1110, %v1590
  %v1647 = vadd.f32 %v966, %v1446
  %v1648 = vadd.f32 %v1015, %v1495
  %v1649 = vadd.f32 %v1064, %v1544
  %v1650 = vadd.f32 %v1113, %v1593
  %v1651 = vadd.f32 %v968, %v1448
  %v1652 = vadd.f32 %v1017, %v1497
  %v1653 = vadd.f32 %v1066, %v1546
  %v1654 = vadd.f32 %v1115, %v1595
  %v1655 = vadd.f32 %v971, %v1451
  %v1656 = vadd.f32 %v1020, %v1500
  %v1657 = vadd.f32 %v1069, %v1549
  %v1658 = vadd.f32 %v1118, %v1598
  %v1659 = vadd.f32 %v973, %v1453
  %v1660 = vadd.f32 %v1022, %v1502
  %v1661 = vadd.f32 %v1071, %v1551
  %v1662 = vadd.f32 %v1120, %v1600
  %v1663 = vadd.f32 %v976, %v1456
  %v1664 = vadd.f32 %v1025, %v1505
  %v1665 = vadd.f32 %v1074, %v1554
  %v1666 = vadd.f32 %v1123, %v1603
  %v1667 = vadd.f32 %v978, %v1458
  %v1668 = vadd.f32 %v1027, %v1507
  %v1669 = vadd.f32 %v1076, %v1556
  %v1670 = vadd.f32 %v1125, %v1605
  %v1671 = vld [vmem:[#allocation2] sm:$0xff]
  %v1672 = vld [vmem:[#allocation2 + $0x8] sm:$0xff]
  %v1673 = vld [vmem:[#allocation2 + $0x10] sm:$0xf]
  %v1674 = vld [vmem:[#allocation2 + $0x18] sm:$0xff]
  %v1675 = vld [vmem:[#allocation2 + $0x20] sm:$0xff]
  %v1676 = vld [vmem:[#allocation2 + $0x28] sm:$0xf]
  %v1677 = vld [vmem:[#allocation2 + $0x30] sm:$0xff]
  %v1678 = vld [vmem:[#allocation2 + $0x38] sm:$0xff]
  %v1679 = vld [vmem:[#allocation2 + $0x40] sm:$0xf]
  %v1680 = vld [vmem:[#allocation2 + $0x48] sm:$0xff]
  %v1681 = vld [vmem:[#allocation2 + $0x50] sm:$0xff]
  %v1682 = vld [vmem:[#allocation2 + $0x58] sm:$0xf]
  %v1683 = vld [vmem:[#allocation2 + $0x60] sm:$0x33]
  %v1684 = vld [vmem:[#allocation2 + $0x68] sm:$0x33]
  %v1685 = vld [vmem:[#allocation2 + $0x70] sm:$0x3]
  %s1686 = scalar_lea.vmem %s3, 12
  %v1687 = vld [vmem:[%s1686] sm:$0xf]
  %1689 = vst [vmem:[#allocation1] ss:$9 sm:$0xff] %v1687
  %v1690 = vld [vmem:[#allocation1] sm:$0xff]
  %v1691 = vld [vmem:[#allocation1 + $0x9] sm:$0xff]
  %v1692 = vld [vmem:[#allocation1 + $0x12] sm:$0xff]
  %v1693 = vld [vmem:[#allocation1 + $0x1b] sm:$0xff]
  %v1694 = vpack.i.b16 %v1690, %v1690
  %v1696 = vperm.slane %v1694, 0
  %v1697 = vpack.i.b16 %v1691, %v1691
  %v1699 = vperm.slane %v1697, 0
  %v1700 = vpack.i.b16 %v1692, %v1692
  %v1702 = vperm.slane %v1700, 0
  %v1703 = vpack.i.b16 %v1693, %v1693
  %v1705 = vperm.slane %v1703, 0
  %v1706 = vunpack.c.l.bf16 %v1671
  %v1707 = vunpack.c.h.bf16 %v1671
  %v1708 = vunpack.c.l.bf16 %v1672
  %v1709 = vunpack.c.h.bf16 %v1672
  %v1710 = vunpack.c.l.bf16 %v1673
  %v1711 = vunpack.c.l.bf16 %v1674
  %v1712 = vunpack.c.h.bf16 %v1674
  %v1713 = vunpack.c.l.bf16 %v1675
  %v1714 = vunpack.c.h.bf16 %v1675
  %v1715 = vunpack.c.l.bf16 %v1676
  %v1716 = vunpack.c.l.bf16 %v1677
  %v1717 = vunpack.c.h.bf16 %v1677
  %v1718 = vunpack.c.l.bf16 %v1678
  %v1719 = vunpack.c.h.bf16 %v1678
  %v1720 = vunpack.c.l.bf16 %v1679
  %v1721 = vunpack.c.l.bf16 %v1680
  %v1722 = vunpack.c.h.bf16 %v1680
  %v1723 = vunpack.c.l.bf16 %v1681
  %v1724 = vunpack.c.h.bf16 %v1681
  %v1725 = vunpack.c.l.bf16 %v1682
  %v1726 = vunpack.c.l.bf16 %v1683
  %v1727 = vunpack.c.h.bf16 %v1683
  %v1728 = vunpack.c.l.bf16 %v1684
  %v1729 = vunpack.c.h.bf16 %v1684
  %v1730 = vunpack.c.l.bf16 %v1685
  %v1731 = vunpack.c.l.bf16 %v1696
  %v1732 = vunpack.c.l.bf16 %v1699
  %v1733 = vunpack.c.l.bf16 %v1702
  %v1734 = vunpack.c.l.bf16 %v1705
  %1739 = vrot.lane.b32.xlu0 %v1731, 127
  %v1740 = vpop.permute.xlu0 %1739
  %1741 = vrot.lane.b32.xlu0 %v1732, 127
  %v1742 = vpop.permute.xlu0 %1741
  %1743 = vrot.lane.b32.xlu0 %v1733, 127
  %v1744 = vpop.permute.xlu0 %1743
  %1745 = vrot.lane.b32.xlu0 %v1734, 127
  %v1746 = vpop.permute.xlu0 %1745
  %vm1747 = vcmask 1039360
  %v1748 = vsel %vm1747, %v1740, %v1742
  %v1749 = vsel %vm1747, %v1742, %v1744
  %v1750 = vsel %vm1747, %v1744, %v1746
  %v1756 = vmul.f32 %v1706, %v1740
  %v1757 = vmul.f32 %v1707, %v1748
  %v1758 = vmul.f32 %v1708, %v1749
  %v1759 = vmul.f32 %v1709, %v1750
  %v1760 = vmul.f32 %v1710, %v1746
  %v1761 = vmul.f32 %v1711, %v1740
  %v1762 = vmul.f32 %v1712, %v1748
  %v1763 = vmul.f32 %v1713, %v1749
  %v1764 = vmul.f32 %v1714, %v1750
  %v1765 = vmul.f32 %v1715, %v1746
  %v1766 = vmul.f32 %v1716, %v1740
  %v1767 = vmul.f32 %v1717, %v1748
  %v1768 = vmul.f32 %v1718, %v1749
  %v1769 = vmul.f32 %v1719, %v1750
  %v1770 = vmul.f32 %v1720, %v1746
  %v1771 = vmul.f32 %v1721, %v1740
  %v1772 = vmul.f32 %v1722, %v1748
  %v1773 = vmul.f32 %v1723, %v1749
  %v1774 = vmul.f32 %v1724, %v1750
  %v1775 = vmul.f32 %v1725, %v1746
  %v1776 = vmul.f32 %v1726, %v1740
  %v1777 = vmul.f32 %v1727, %v1748
  %v1778 = vmul.f32 %v1728, %v1749
  %v1779 = vmul.f32 %v1729, %v1750
  %v1780 = vmul.f32 %v1730, %v1746
  %v1781 = vpack.c.bf16 %v1761, %v1756
  %v1782 = vpack.c.bf16 %v1762, %v1757
  %v1783 = vpack.c.bf16 %v1763, %v1758
  %v1784 = vpack.c.bf16 %v1764, %v1759
  %v1785 = vpack.c.bf16 %v1765, %v1760
  %v1786 = vpack.c.bf16 %v1771, %v1766
  %v1787 = vpack.c.bf16 %v1772, %v1767
  %v1788 = vpack.c.bf16 %v1773, %v1768
  %v1789 = vpack.c.bf16 %v1774, %v1769
  %v1790 = vpack.c.bf16 %v1775, %v1770
  %v1791 = vpack.c.bf16 %v1776, %v1776
  %v1792 = vpack.c.bf16 %v1777, %v1777
  %v1793 = vpack.c.bf16 %v1778, %v1778
  %v1794 = vpack.c.bf16 %v1779, %v1779
  %v1795 = vpack.c.bf16 %v1780, %v1780
  %s1796 = scalar_lea.vmem %s1, 192
  %v1797 = vld [vmem:[%s1796] sm:$0xf]
  %v1798 = vld [vmem:[%s1796 + $0x4] sm:$0xf]
  %v1799 = vld [vmem:[%s1796 + $0x8] sm:$0xf]
  %v1800 = vld [vmem:[%s1796 + $0xc] sm:$0xf]
  %v1801 = vld [vmem:[%s1796 + $0x10] sm:$0xf]
  %v1802 = vld [vmem:[%s1796 + $0x14] sm:$0xf]
  %v1803 = vld [vmem:[%s1796 + $0x18] sm:$0xf]
  %v1804 = vld [vmem:[%s1796 + $0x1c] sm:$0xf]
  %v1805 = vld [vmem:[%s1796 + $0x20] sm:$0xf]
  %v1806 = vld [vmem:[%s1796 + $0x24] sm:$0xf]
  %v1807 = vld [vmem:[%s1796 + $0x28] sm:$0xf]
  %v1808 = vld [vmem:[%s1796 + $0x2c] sm:$0xf]
  %v1809 = vld [vmem:[%s1796 + $0x30] sm:$0xf]
  %v1810 = vld [vmem:[%s1796 + $0x34] sm:$0xf]
  %v1811 = vld [vmem:[%s1796 + $0x38] sm:$0xf]
  %v1812 = vld [vmem:[%s1796 + $0x3c] sm:$0xf]
  %v1829 = vunpack.c.l.b16 %v1797
  %v1830 = vunpack.c.l.b16 %v1798
  %v1831 = vunpack.c.l.b16 %v1799
  %v1832 = vunpack.c.l.b16 %v1800
  %v1833 = vunpack.c.l.b16 %v1801
  %v1834 = vunpack.c.l.b16 %v1802
  %v1835 = vunpack.c.l.b16 %v1803
  %v1836 = vunpack.c.l.b16 %v1804
  %v1837 = vunpack.c.l.b16 %v1805
  %v1838 = vunpack.c.l.b16 %v1806
  %v1839 = vunpack.c.l.b16 %v1807
  %v1840 = vunpack.c.l.b16 %v1808
  %v1841 = vunpack.c.l.b16 %v1809
  %v1842 = vunpack.c.l.b16 %v1810
  %v1843 = vunpack.c.l.b16 %v1811
  %v1844 = vunpack.c.l.b16 %v1812
  %v1845 = vpack.c.b16 %v1830, %v1829
  %v1846 = vpack.c.b16 %v1832, %v1831
  %v1847 = vpack.c.b16 %v1834, %v1833
  %v1848 = vpack.c.b16 %v1836, %v1835
  %v1849 = vpack.c.b16 %v1838, %v1837
  %v1850 = vpack.c.b16 %v1840, %v1839
  %v1851 = vpack.c.b16 %v1842, %v1841
  %v1852 = vpack.c.b16 %v1844, %v1843
  %1868 = vrot.lane.b32.xlu0 %v1781, 1
  %v1869 = vpop.permute.xlu0 %1868
  %1870 = vrot.lane.b32.xlu0 %v1782, 1
  %v1871 = vpop.permute.xlu0 %1870
  %1872 = vrot.lane.b32.xlu0 %v1783, 1
  %v1873 = vpop.permute.xlu0 %1872
  %1874 = vrot.lane.b32.xlu0 %v1784, 1
  %v1875 = vpop.permute.xlu0 %1874
  %1876 = vrot.lane.b32.xlu0 %v1785, 1
  %v1877 = vpop.permute.xlu0 %1876
  %1878 = vrot.lane.b32.xlu0 %v1786, 1
  %v1879 = vpop.permute.xlu0 %1878
  %1880 = vrot.lane.b32.xlu0 %v1787, 1
  %v1881 = vpop.permute.xlu0 %1880
  %1882 = vrot.lane.b32.xlu0 %v1788, 1
  %v1883 = vpop.permute.xlu0 %1882
  %1884 = vrot.lane.b32.xlu0 %v1789, 1
  %v1885 = vpop.permute.xlu0 %1884
  %1886 = vrot.lane.b32.xlu0 %v1790, 1
  %v1887 = vpop.permute.xlu0 %1886
  %1888 = vrot.lane.b32.xlu0 %v1791, 1
  %v1889 = vpop.permute.xlu0 %1888
  %1890 = vrot.lane.b32.xlu0 %v1792, 1
  %v1891 = vpop.permute.xlu0 %1890
  %1892 = vrot.lane.b32.xlu0 %v1793, 1
  %v1893 = vpop.permute.xlu0 %1892
  %1894 = vrot.lane.b32.xlu0 %v1794, 1
  %v1895 = vpop.permute.xlu0 %1894
  %1896 = vrot.lane.b32.xlu0 %v1795, 1
  %v1897 = vpop.permute.xlu0 %1896
  %vm1898 = vcmask 7168
  %v1899 = vsel %vm1898, %v1869, %v1871
  %v1900 = vsel %vm1898, %v1871, %v1873
  %v1901 = vsel %vm1898, %v1873, %v1875
  %v1902 = vsel %vm1898, %v1875, %v1877
  %v1903 = vsel %vm1898, %v1879, %v1881
  %v1904 = vsel %vm1898, %v1881, %v1883
  %v1905 = vsel %vm1898, %v1883, %v1885
  %v1906 = vsel %vm1898, %v1885, %v1887
  %v1907 = vsel %vm1898, %v1889, %v1891
  %v1908 = vsel %vm1898, %v1891, %v1893
  %v1909 = vsel %vm1898, %v1893, %v1895
  %v1910 = vsel %vm1898, %v1895, %v1897
  %v1920 = vsel %vm555, %v1845, 0
  %v1923 = vsel %vm555, %v1846, 0
  %v1926 = vsel %vm555, %v1847, 0
  %v1929 = vsel %vm555, %v1848, 0
  %v1932 = vsel %vm555, %v1849, 0
  %v1935 = vsel %vm555, %v1850, 0
  %v1938 = vsel %vm555, %v1851, 0
  %v1941 = vsel %vm555, %v1852, 0
  %v1944 = vsel %vm580, %v1907, 0
  %v1947 = vsel %vm580, %v1908, 0
  %v1950 = vsel %vm580, %v1909, 0
  %v1953 = vsel %vm580, %v1910, 0
  %1955 = vmatpush.bf16.msra.mxu0 0
  %1956 = vmatpush.bf16.msra.mxu0 0
  %1957 = vmatpush.bf16.msra.mxu0 0
  %1958 = vmatpush.bf16.msra.mxu0 0
  %1959 = vmatpush.bf16.msra.mxu0 0
  %1960 = vmatpush.bf16.msra.mxu0 %v1944
  %1961 = vmatpush.bf16.msra.mxu0 %v1903
  %1962 = vmatpush.bf16.msra.mxu0 %v1899
  %1963 = vmatmul.bf16.gmra.mxu0 %v1920
  %v1964 = vpop.f32.mrf.mxu0
  %v1965 = vadd.f32 0.0, %v1964
  %v1966 = vpop.f32.mrf.mxu0
  %v1967 = vadd.f32 0.0, %v1966
  %1968 = vmatmul.bf16.gmra.mxu0 %v1923
  %v1969 = vpop.f32.mrf.mxu0
  %v1970 = vadd.f32 0.0, %v1969
  %v1971 = vpop.f32.mrf.mxu0
  %v1972 = vadd.f32 0.0, %v1971
  %1973 = vmatmul.bf16.gmra.mxu0 %v1926
  %v1974 = vpop.f32.mrf.mxu0
  %v1975 = vadd.f32 0.0, %v1974
  %v1976 = vpop.f32.mrf.mxu0
  %v1977 = vadd.f32 0.0, %v1976
  %1978 = vmatmul.bf16.gmra.mxu0 %v1929
  %v1979 = vpop.f32.mrf.mxu0
  %v1980 = vadd.f32 0.0, %v1979
  %v1981 = vpop.f32.mrf.mxu0
  %v1982 = vadd.f32 0.0, %v1981
  %1983 = vmatmul.bf16.gmra.mxu0 %v1932
  %v1984 = vpop.f32.mrf.mxu0
  %v1985 = vadd.f32 0.0, %v1984
  %v1986 = vpop.f32.mrf.mxu0
  %v1987 = vadd.f32 0.0, %v1986
  %1988 = vmatmul.bf16.gmra.mxu0 %v1935
  %v1989 = vpop.f32.mrf.mxu0
  %v1990 = vadd.f32 0.0, %v1989
  %v1991 = vpop.f32.mrf.mxu0
  %v1992 = vadd.f32 0.0, %v1991
  %1993 = vmatmul.bf16.gmra.mxu0 %v1938
  %v1994 = vpop.f32.mrf.mxu0
  %v1995 = vadd.f32 0.0, %v1994
  %v1996 = vpop.f32.mrf.mxu0
  %v1997 = vadd.f32 0.0, %v1996
  %1998 = vmatmul.bf16.gmra.mxu0 %v1941
  %v1999 = vpop.f32.mrf.mxu0
  %v2000 = vadd.f32 0.0, %v1999
  %v2001 = vpop.f32.mrf.mxu0
  %v2002 = vadd.f32 0.0, %v2001
  %2003 = vdwg.mxu0
  %2004 = vmatpush.bf16.msra.mxu0 0
  %2005 = vmatpush.bf16.msra.mxu0 0
  %2006 = vmatpush.bf16.msra.mxu0 0
  %2007 = vmatpush.bf16.msra.mxu0 0
  %2008 = vmatpush.bf16.msra.mxu0 0
  %2009 = vmatpush.bf16.msra.mxu0 %v1947
  %2010 = vmatpush.bf16.msra.mxu0 %v1904
  %2011 = vmatpush.bf16.msra.mxu0 %v1900
  %2012 = vmatmul.bf16.gmra.mxu0 %v1920
  %v2013 = vpop.f32.mrf.mxu0
  %v2014 = vadd.f32 0.0, %v2013
  %v2015 = vpop.f32.mrf.mxu0
  %v2016 = vadd.f32 0.0, %v2015
  %2017 = vmatmul.bf16.gmra.mxu0 %v1923
  %v2018 = vpop.f32.mrf.mxu0
  %v2019 = vadd.f32 0.0, %v2018
  %v2020 = vpop.f32.mrf.mxu0
  %v2021 = vadd.f32 0.0, %v2020
  %2022 = vmatmul.bf16.gmra.mxu0 %v1926
  %v2023 = vpop.f32.mrf.mxu0
  %v2024 = vadd.f32 0.0, %v2023
  %v2025 = vpop.f32.mrf.mxu0
  %v2026 = vadd.f32 0.0, %v2025
  %2027 = vmatmul.bf16.gmra.mxu0 %v1929
  %v2028 = vpop.f32.mrf.mxu0
  %v2029 = vadd.f32 0.0, %v2028
  %v2030 = vpop.f32.mrf.mxu0
  %v2031 = vadd.f32 0.0, %v2030
  %2032 = vmatmul.bf16.gmra.mxu0 %v1932
  %v2033 = vpop.f32.mrf.mxu0
  %v2034 = vadd.f32 0.0, %v2033
  %v2035 = vpop.f32.mrf.mxu0
  %v2036 = vadd.f32 0.0, %v2035
  %2037 = vmatmul.bf16.gmra.mxu0 %v1935
  %v2038 = vpop.f32.mrf.mxu0
  %v2039 = vadd.f32 0.0, %v2038
  %v2040 = vpop.f32.mrf.mxu0
  %v2041 = vadd.f32 0.0, %v2040
  %2042 = vmatmul.bf16.gmra.mxu0 %v1938
  %v2043 = vpop.f32.mrf.mxu0
  %v2044 = vadd.f32 0.0, %v2043
  %v2045 = vpop.f32.mrf.mxu0
  %v2046 = vadd.f32 0.0, %v2045
  %2047 = vmatmul.bf16.gmra.mxu0 %v1941
  %v2048 = vpop.f32.mrf.mxu0
  %v2049 = vadd.f32 0.0, %v2048
  %v2050 = vpop.f32.mrf.mxu0
  %v2051 = vadd.f32 0.0, %v2050
  %2052 = vdwg.mxu0
  %2053 = vmatpush.bf16.msra.mxu0 0
  %2054 = vmatpush.bf16.msra.mxu0 0
  %2055 = vmatpush.bf16.msra.mxu0 0
  %2056 = vmatpush.bf16.msra.mxu0 0
  %2057 = vmatpush.bf16.msra.mxu0 0
  %2058 = vmatpush.bf16.msra.mxu0 %v1950
  %2059 = vmatpush.bf16.msra.mxu0 %v1905
  %2060 = vmatpush.bf16.msra.mxu0 %v1901
  %2061 = vmatmul.bf16.gmra.mxu0 %v1920
  %v2062 = vpop.f32.mrf.mxu0
  %v2063 = vadd.f32 0.0, %v2062
  %v2064 = vpop.f32.mrf.mxu0
  %v2065 = vadd.f32 0.0, %v2064
  %2066 = vmatmul.bf16.gmra.mxu0 %v1923
  %v2067 = vpop.f32.mrf.mxu0
  %v2068 = vadd.f32 0.0, %v2067
  %v2069 = vpop.f32.mrf.mxu0
  %v2070 = vadd.f32 0.0, %v2069
  %2071 = vmatmul.bf16.gmra.mxu0 %v1926
  %v2072 = vpop.f32.mrf.mxu0
  %v2073 = vadd.f32 0.0, %v2072
  %v2074 = vpop.f32.mrf.mxu0
  %v2075 = vadd.f32 0.0, %v2074
  %2076 = vmatmul.bf16.gmra.mxu0 %v1929
  %v2077 = vpop.f32.mrf.mxu0
  %v2078 = vadd.f32 0.0, %v2077
  %v2079 = vpop.f32.mrf.mxu0
  %v2080 = vadd.f32 0.0, %v2079
  %2081 = vmatmul.bf16.gmra.mxu0 %v1932
  %v2082 = vpop.f32.mrf.mxu0
  %v2083 = vadd.f32 0.0, %v2082
  %v2084 = vpop.f32.mrf.mxu0
  %v2085 = vadd.f32 0.0, %v2084
  %2086 = vmatmul.bf16.gmra.mxu0 %v1935
  %v2087 = vpop.f32.mrf.mxu0
  %v2088 = vadd.f32 0.0, %v2087
  %v2089 = vpop.f32.mrf.mxu0
  %v2090 = vadd.f32 0.0, %v2089
  %2091 = vmatmul.bf16.gmra.mxu0 %v1938
  %v2092 = vpop.f32.mrf.mxu0
  %v2093 = vadd.f32 0.0, %v2092
  %v2094 = vpop.f32.mrf.mxu0
  %v2095 = vadd.f32 0.0, %v2094
  %2096 = vmatmul.bf16.gmra.mxu0 %v1941
  %v2097 = vpop.f32.mrf.mxu0
  %v2098 = vadd.f32 0.0, %v2097
  %v2099 = vpop.f32.mrf.mxu0
  %v2100 = vadd.f32 0.0, %v2099
  %2101 = vdwg.mxu0
  %2102 = vmatpush.bf16.msra.mxu0 0
  %2103 = vmatpush.bf16.msra.mxu0 0
  %2104 = vmatpush.bf16.msra.mxu0 0
  %2105 = vmatpush.bf16.msra.mxu0 0
  %2106 = vmatpush.bf16.msra.mxu0 0
  %2107 = vmatpush.bf16.msra.mxu0 %v1953
  %2108 = vmatpush.bf16.msra.mxu0 %v1906
  %2109 = vmatpush.bf16.msra.mxu0 %v1902
  %2110 = vmatmul.bf16.gmra.mxu0 %v1920
  %v2111 = vpop.f32.mrf.mxu0
  %v2112 = vadd.f32 0.0, %v2111
  %v2113 = vpop.f32.mrf.mxu0
  %v2114 = vadd.f32 0.0, %v2113
  %2115 = vmatmul.bf16.gmra.mxu0 %v1923
  %v2116 = vpop.f32.mrf.mxu0
  %v2117 = vadd.f32 0.0, %v2116
  %v2118 = vpop.f32.mrf.mxu0
  %v2119 = vadd.f32 0.0, %v2118
  %2120 = vmatmul.bf16.gmra.mxu0 %v1926
  %v2121 = vpop.f32.mrf.mxu0
  %v2122 = vadd.f32 0.0, %v2121
  %v2123 = vpop.f32.mrf.mxu0
  %v2124 = vadd.f32 0.0, %v2123
  %2125 = vmatmul.bf16.gmra.mxu0 %v1929
  %v2126 = vpop.f32.mrf.mxu0
  %v2127 = vadd.f32 0.0, %v2126
  %v2128 = vpop.f32.mrf.mxu0
  %v2129 = vadd.f32 0.0, %v2128
  %2130 = vmatmul.bf16.gmra.mxu0 %v1932
  %v2131 = vpop.f32.mrf.mxu0
  %v2132 = vadd.f32 0.0, %v2131
  %v2133 = vpop.f32.mrf.mxu0
  %v2134 = vadd.f32 0.0, %v2133
  %2135 = vmatmul.bf16.gmra.mxu0 %v1935
  %v2136 = vpop.f32.mrf.mxu0
  %v2137 = vadd.f32 0.0, %v2136
  %v2138 = vpop.f32.mrf.mxu0
  %v2139 = vadd.f32 0.0, %v2138
  %2140 = vmatmul.bf16.gmra.mxu0 %v1938
  %v2141 = vpop.f32.mrf.mxu0
  %v2142 = vadd.f32 0.0, %v2141
  %v2143 = vpop.f32.mrf.mxu0
  %v2144 = vadd.f32 0.0, %v2143
  %2145 = vmatmul.bf16.gmra.mxu0 %v1941
  %v2146 = vpop.f32.mrf.mxu0
  %v2147 = vadd.f32 0.0, %v2146
  %v2148 = vpop.f32.mrf.mxu0
  %v2149 = vadd.f32 0.0, %v2148
  %2150 = vdwg.mxu0
  %v2151 = vadd.f32 %v1607, %v1965
  %v2152 = vadd.f32 %v1608, %v2014
  %v2153 = vadd.f32 %v1609, %v2063
  %v2154 = vadd.f32 %v1610, %v2112
  %v2155 = vadd.f32 %v1611, %v1967
  %v2156 = vadd.f32 %v1612, %v2016
  %v2157 = vadd.f32 %v1613, %v2065
  %v2158 = vadd.f32 %v1614, %v2114
  %v2159 = vadd.f32 %v1615, %v1970
  %v2160 = vadd.f32 %v1616, %v2019
  %v2161 = vadd.f32 %v1617, %v2068
  %v2162 = vadd.f32 %v1618, %v2117
  %v2163 = vadd.f32 %v1619, %v1972
  %v2164 = vadd.f32 %v1620, %v2021
  %v2165 = vadd.f32 %v1621, %v2070
  %v2166 = vadd.f32 %v1622, %v2119
  %v2167 = vadd.f32 %v1623, %v1975
  %v2168 = vadd.f32 %v1624, %v2024
  %v2169 = vadd.f32 %v1625, %v2073
  %v2170 = vadd.f32 %v1626, %v2122
  %v2171 = vadd.f32 %v1627, %v1977
  %v2172 = vadd.f32 %v1628, %v2026
  %v2173 = vadd.f32 %v1629, %v2075
  %v2174 = vadd.f32 %v1630, %v2124
  %v2175 = vadd.f32 %v1631, %v1980
  %v2176 = vadd.f32 %v1632, %v2029
  %v2177 = vadd.f32 %v1633, %v2078
  %v2178 = vadd.f32 %v1634, %v2127
  %v2179 = vadd.f32 %v1635, %v1982
  %v2180 = vadd.f32 %v1636, %v2031
  %v2181 = vadd.f32 %v1637, %v2080
  %v2182 = vadd.f32 %v1638, %v2129
  %v2183 = vadd.f32 %v1639, %v1985
  %v2184 = vadd.f32 %v1640, %v2034
  %v2185 = vadd.f32 %v1641, %v2083
  %v2186 = vadd.f32 %v1642, %v2132
  %v2187 = vadd.f32 %v1643, %v1987
  %v2188 = vadd.f32 %v1644, %v2036
  %v2189 = vadd.f32 %v1645, %v2085
  %v2190 = vadd.f32 %v1646, %v2134
  %v2191 = vadd.f32 %v1647, %v1990
  %v2192 = vadd.f32 %v1648, %v2039
  %v2193 = vadd.f32 %v1649, %v2088
  %v2194 = vadd.f32 %v1650, %v2137
  %v2195 = vadd.f32 %v1651, %v1992
  %v2196 = vadd.f32 %v1652, %v2041
  %v2197 = vadd.f32 %v1653, %v2090
  %v2198 = vadd.f32 %v1654, %v2139
  %v2199 = vadd.f32 %v1655, %v1995
  %v2200 = vadd.f32 %v1656, %v2044
  %v2201 = vadd.f32 %v1657, %v2093
  %v2202 = vadd.f32 %v1658, %v2142
  %v2203 = vadd.f32 %v1659, %v1997
  %v2204 = vadd.f32 %v1660, %v2046
  %v2205 = vadd.f32 %v1661, %v2095
  %v2206 = vadd.f32 %v1662, %v2144
  %v2207 = vadd.f32 %v1663, %v2000
  %v2208 = vadd.f32 %v1664, %v2049
  %v2209 = vadd.f32 %v1665, %v2098
  %v2210 = vadd.f32 %v1666, %v2147
  %v2211 = vadd.f32 %v1667, %v2002
  %v2212 = vadd.f32 %v1668, %v2051
  %v2213 = vadd.f32 %v1669, %v2100
  %v2214 = vadd.f32 %v1670, %v2149
  %v2215 = vld [vmem:[#allocation2 + $0x4] sm:$0xff]
  %v2216 = vld [vmem:[#allocation2 + $0xc] sm:$0xff]
  %v2217 = vld [vmem:[#allocation2 + $0x1c] sm:$0xff]
  %v2218 = vld [vmem:[#allocation2 + $0x24] sm:$0xff]
  %v2219 = vld [vmem:[#allocation2 + $0x34] sm:$0xff]
  %v2220 = vld [vmem:[#allocation2 + $0x3c] sm:$0xff]
  %v2221 = vld [vmem:[#allocation2 + $0x4c] sm:$0xff]
  %v2222 = vld [vmem:[#allocation2 + $0x54] sm:$0xff]
  %v2223 = vld [vmem:[#allocation2 + $0x64] sm:$0x33]
  %v2224 = vld [vmem:[#allocation2 + $0x6c] sm:$0x33]
  %s2225 = scalar_lea.vmem %s1, 256
  %v2226 = vld [vmem:[%s2225] sm:$0xf]
  %v2227 = vld [vmem:[%s2225 + $0x4] sm:$0xf]
  %v2228 = vld [vmem:[%s2225 + $0x8] sm:$0xf]
  %v2229 = vld [vmem:[%s2225 + $0xc] sm:$0xf]
  %v2230 = vld [vmem:[%s2225 + $0x10] sm:$0xf]
  %v2231 = vld [vmem:[%s2225 + $0x14] sm:$0xf]
  %v2232 = vld [vmem:[%s2225 + $0x18] sm:$0xf]
  %v2233 = vld [vmem:[%s2225 + $0x1c] sm:$0xf]
  %v2234 = vld [vmem:[%s2225 + $0x20] sm:$0xf]
  %v2235 = vld [vmem:[%s2225 + $0x24] sm:$0xf]
  %v2236 = vld [vmem:[%s2225 + $0x28] sm:$0xf]
  %v2237 = vld [vmem:[%s2225 + $0x2c] sm:$0xf]
  %v2238 = vld [vmem:[%s2225 + $0x30] sm:$0xf]
  %v2239 = vld [vmem:[%s2225 + $0x34] sm:$0xf]
  %v2240 = vld [vmem:[%s2225 + $0x38] sm:$0xf]
  %v2241 = vld [vmem:[%s2225 + $0x3c] sm:$0xf]
  %v2258 = vunpack.c.l.b16 %v2226
  %v2259 = vunpack.c.l.b16 %v2227
  %v2260 = vunpack.c.l.b16 %v2228
  %v2261 = vunpack.c.l.b16 %v2229
  %v2262 = vunpack.c.l.b16 %v2230
  %v2263 = vunpack.c.l.b16 %v2231
  %v2264 = vunpack.c.l.b16 %v2232
  %v2265 = vunpack.c.l.b16 %v2233
  %v2266 = vunpack.c.l.b16 %v2234
  %v2267 = vunpack.c.l.b16 %v2235
  %v2268 = vunpack.c.l.b16 %v2236
  %v2269 = vunpack.c.l.b16 %v2237
  %v2270 = vunpack.c.l.b16 %v2238
  %v2271 = vunpack.c.l.b16 %v2239
  %v2272 = vunpack.c.l.b16 %v2240
  %v2273 = vunpack.c.l.b16 %v2241
  %v2274 = vpack.c.b16 %v2259, %v2258
  %v2275 = vpack.c.b16 %v2261, %v2260
  %v2276 = vpack.c.b16 %v2263, %v2262
  %v2277 = vpack.c.b16 %v2265, %v2264
  %v2278 = vpack.c.b16 %v2267, %v2266
  %v2279 = vpack.c.b16 %v2269, %v2268
  %v2280 = vpack.c.b16 %v2271, %v2270
  %v2281 = vpack.c.b16 %v2273, %v2272
  %v2292 = vunpack.c.l.b16 %v2215
  %v2293 = vunpack.c.h.b16 %v2215
  %v2294 = vunpack.c.l.b16 %v2216
  %v2295 = vunpack.c.h.b16 %v2216
  %v2296 = vunpack.c.l.b16 %v2217
  %v2297 = vunpack.c.h.b16 %v2217
  %v2298 = vunpack.c.l.b16 %v2218
  %v2299 = vunpack.c.h.b16 %v2218
  %v2300 = vunpack.c.l.b16 %v2219
  %v2301 = vunpack.c.h.b16 %v2219
  %v2302 = vunpack.c.l.b16 %v2220
  %v2303 = vunpack.c.h.b16 %v2220
  %v2304 = vunpack.c.l.b16 %v2221
  %v2305 = vunpack.c.h.b16 %v2221
  %v2306 = vunpack.c.l.b16 %v2222
  %v2307 = vunpack.c.h.b16 %v2222
  %v2308 = vunpack.c.l.b16 %v2223
  %v2309 = vunpack.c.h.b16 %v2223
  %v2310 = vunpack.c.l.b16 %v2224
  %v2311 = vunpack.c.h.b16 %v2224
  %v2312 = vpack.c.b16 %v2296, %v2292
  %v2313 = vpack.c.b16 %v2297, %v2293
  %v2314 = vpack.c.b16 %v2298, %v2294
  %v2315 = vpack.c.b16 %v2299, %v2295
  %v2316 = vpack.c.b16 %v2304, %v2300
  %v2317 = vpack.c.b16 %v2305, %v2301
  %v2318 = vpack.c.b16 %v2306, %v2302
  %v2319 = vpack.c.b16 %v2307, %v2303
  %v2320 = vpack.c.b16 %v2308, %v2308
  %v2321 = vpack.c.b16 %v2309, %v2309
  %v2322 = vpack.c.b16 %v2310, %v2310
  %v2323 = vpack.c.b16 %v2311, %v2311
  %v2333 = vsel %vm555, %v2274, 0
  %v2336 = vsel %vm555, %v2275, 0
  %v2339 = vsel %vm555, %v2276, 0
  %v2342 = vsel %vm555, %v2277, 0
  %v2345 = vsel %vm555, %v2278, 0
  %v2348 = vsel %vm555, %v2279, 0
  %v2351 = vsel %vm555, %v2280, 0
  %v2354 = vsel %vm555, %v2281, 0
  %v2357 = vsel %vm580, %v2320, 0
  %v2360 = vsel %vm580, %v2321, 0
  %v2363 = vsel %vm580, %v2322, 0
  %v2366 = vsel %vm580, %v2323, 0
  %2368 = vmatpush.bf16.msra.mxu0 0
  %2369 = vmatpush.bf16.msra.mxu0 0
  %2370 = vmatpush.bf16.msra.mxu0 0
  %2371 = vmatpush.bf16.msra.mxu0 0
  %2372 = vmatpush.bf16.msra.mxu0 0
  %2373 = vmatpush.bf16.msra.mxu0 %v2357
  %2374 = vmatpush.bf16.msra.mxu0 %v2316
  %2375 = vmatpush.bf16.msra.mxu0 %v2312
  %2376 = vmatmul.bf16.gmra.mxu0 %v2333
  %v2377 = vpop.f32.mrf.mxu0
  %v2378 = vadd.f32 0.0, %v2377
  %v2379 = vpop.f32.mrf.mxu0
  %v2380 = vadd.f32 0.0, %v2379
  %2381 = vmatmul.bf16.gmra.mxu0 %v2336
  %v2382 = vpop.f32.mrf.mxu0
  %v2383 = vadd.f32 0.0, %v2382
  %v2384 = vpop.f32.mrf.mxu0
  %v2385 = vadd.f32 0.0, %v2384
  %2386 = vmatmul.bf16.gmra.mxu0 %v2339
  %v2387 = vpop.f32.mrf.mxu0
  %v2388 = vadd.f32 0.0, %v2387
  %v2389 = vpop.f32.mrf.mxu0
  %v2390 = vadd.f32 0.0, %v2389
  %2391 = vmatmul.bf16.gmra.mxu0 %v2342
  %v2392 = vpop.f32.mrf.mxu0
  %v2393 = vadd.f32 0.0, %v2392
  %v2394 = vpop.f32.mrf.mxu0
  %v2395 = vadd.f32 0.0, %v2394
  %2396 = vmatmul.bf16.gmra.mxu0 %v2345
  %v2397 = vpop.f32.mrf.mxu0
  %v2398 = vadd.f32 0.0, %v2397
  %v2399 = vpop.f32.mrf.mxu0
  %v2400 = vadd.f32 0.0, %v2399
  %2401 = vmatmul.bf16.gmra.mxu0 %v2348
  %v2402 = vpop.f32.mrf.mxu0
  %v2403 = vadd.f32 0.0, %v2402
  %v2404 = vpop.f32.mrf.mxu0
  %v2405 = vadd.f32 0.0, %v2404
  %2406 = vmatmul.bf16.gmra.mxu0 %v2351
  %v2407 = vpop.f32.mrf.mxu0
  %v2408 = vadd.f32 0.0, %v2407
  %v2409 = vpop.f32.mrf.mxu0
  %v2410 = vadd.f32 0.0, %v2409
  %2411 = vmatmul.bf16.gmra.mxu0 %v2354
  %v2412 = vpop.f32.mrf.mxu0
  %v2413 = vadd.f32 0.0, %v2412
  %v2414 = vpop.f32.mrf.mxu0
  %v2415 = vadd.f32 0.0, %v2414
  %2416 = vdwg.mxu0
  %2417 = vmatpush.bf16.msra.mxu0 0
  %2418 = vmatpush.bf16.msra.mxu0 0
  %2419 = vmatpush.bf16.msra.mxu0 0
  %2420 = vmatpush.bf16.msra.mxu0 0
  %2421 = vmatpush.bf16.msra.mxu0 0
  %2422 = vmatpush.bf16.msra.mxu0 %v2360
  %2423 = vmatpush.bf16.msra.mxu0 %v2317
  %2424 = vmatpush.bf16.msra.mxu0 %v2313
  %2425 = vmatmul.bf16.gmra.mxu0 %v2333
  %v2426 = vpop.f32.mrf.mxu0
  %v2427 = vadd.f32 0.0, %v2426
  %v2428 = vpop.f32.mrf.mxu0
  %v2429 = vadd.f32 0.0, %v2428
  %2430 = vmatmul.bf16.gmra.mxu0 %v2336
  %v2431 = vpop.f32.mrf.mxu0
  %v2432 = vadd.f32 0.0, %v2431
  %v2433 = vpop.f32.mrf.mxu0
  %v2434 = vadd.f32 0.0, %v2433
  %2435 = vmatmul.bf16.gmra.mxu0 %v2339
  %v2436 = vpop.f32.mrf.mxu0
  %v2437 = vadd.f32 0.0, %v2436
  %v2438 = vpop.f32.mrf.mxu0
  %v2439 = vadd.f32 0.0, %v2438
  %2440 = vmatmul.bf16.gmra.mxu0 %v2342
  %v2441 = vpop.f32.mrf.mxu0
  %v2442 = vadd.f32 0.0, %v2441
  %v2443 = vpop.f32.mrf.mxu0
  %v2444 = vadd.f32 0.0, %v2443
  %2445 = vmatmul.bf16.gmra.mxu0 %v2345
  %v2446 = vpop.f32.mrf.mxu0
  %v2447 = vadd.f32 0.0, %v2446
  %v2448 = vpop.f32.mrf.mxu0
  %v2449 = vadd.f32 0.0, %v2448
  %2450 = vmatmul.bf16.gmra.mxu0 %v2348
  %v2451 = vpop.f32.mrf.mxu0
  %v2452 = vadd.f32 0.0, %v2451
  %v2453 = vpop.f32.mrf.mxu0
  %v2454 = vadd.f32 0.0, %v2453
  %2455 = vmatmul.bf16.gmra.mxu0 %v2351
  %v2456 = vpop.f32.mrf.mxu0
  %v2457 = vadd.f32 0.0, %v2456
  %v2458 = vpop.f32.mrf.mxu0
  %v2459 = vadd.f32 0.0, %v2458
  %2460 = vmatmul.bf16.gmra.mxu0 %v2354
  %v2461 = vpop.f32.mrf.mxu0
  %v2462 = vadd.f32 0.0, %v2461
  %v2463 = vpop.f32.mrf.mxu0
  %v2464 = vadd.f32 0.0, %v2463
  %2465 = vdwg.mxu0
  %2466 = vmatpush.bf16.msra.mxu0 0
  %2467 = vmatpush.bf16.msra.mxu0 0
  %2468 = vmatpush.bf16.msra.mxu0 0
  %2469 = vmatpush.bf16.msra.mxu0 0
  %2470 = vmatpush.bf16.msra.mxu0 0
  %2471 = vmatpush.bf16.msra.mxu0 %v2363
  %2472 = vmatpush.bf16.msra.mxu0 %v2318
  %2473 = vmatpush.bf16.msra.mxu0 %v2314
  %2474 = vmatmul.bf16.gmra.mxu0 %v2333
  %v2475 = vpop.f32.mrf.mxu0
  %v2476 = vadd.f32 0.0, %v2475
  %v2477 = vpop.f32.mrf.mxu0
  %v2478 = vadd.f32 0.0, %v2477
  %2479 = vmatmul.bf16.gmra.mxu0 %v2336
  %v2480 = vpop.f32.mrf.mxu0
  %v2481 = vadd.f32 0.0, %v2480
  %v2482 = vpop.f32.mrf.mxu0
  %v2483 = vadd.f32 0.0, %v2482
  %2484 = vmatmul.bf16.gmra.mxu0 %v2339
  %v2485 = vpop.f32.mrf.mxu0
  %v2486 = vadd.f32 0.0, %v2485
  %v2487 = vpop.f32.mrf.mxu0
  %v2488 = vadd.f32 0.0, %v2487
  %2489 = vmatmul.bf16.gmra.mxu0 %v2342
  %v2490 = vpop.f32.mrf.mxu0
  %v2491 = vadd.f32 0.0, %v2490
  %v2492 = vpop.f32.mrf.mxu0
  %v2493 = vadd.f32 0.0, %v2492
  %2494 = vmatmul.bf16.gmra.mxu0 %v2345
  %v2495 = vpop.f32.mrf.mxu0
  %v2496 = vadd.f32 0.0, %v2495
  %v2497 = vpop.f32.mrf.mxu0
  %v2498 = vadd.f32 0.0, %v2497
  %2499 = vmatmul.bf16.gmra.mxu0 %v2348
  %v2500 = vpop.f32.mrf.mxu0
  %v2501 = vadd.f32 0.0, %v2500
  %v2502 = vpop.f32.mrf.mxu0
  %v2503 = vadd.f32 0.0, %v2502
  %2504 = vmatmul.bf16.gmra.mxu0 %v2351
  %v2505 = vpop.f32.mrf.mxu0
  %v2506 = vadd.f32 0.0, %v2505
  %v2507 = vpop.f32.mrf.mxu0
  %v2508 = vadd.f32 0.0, %v2507
  %2509 = vmatmul.bf16.gmra.mxu0 %v2354
  %v2510 = vpop.f32.mrf.mxu0
  %v2511 = vadd.f32 0.0, %v2510
  %v2512 = vpop.f32.mrf.mxu0
  %v2513 = vadd.f32 0.0, %v2512
  %2514 = vdwg.mxu0
  %2515 = vmatpush.bf16.msra.mxu0 0
  %2516 = vmatpush.bf16.msra.mxu0 0
  %2517 = vmatpush.bf16.msra.mxu0 0
  %2518 = vmatpush.bf16.msra.mxu0 0
  %2519 = vmatpush.bf16.msra.mxu0 0
  %2520 = vmatpush.bf16.msra.mxu0 %v2366
  %2521 = vmatpush.bf16.msra.mxu0 %v2319
  %2522 = vmatpush.bf16.msra.mxu0 %v2315
  %2523 = vmatmul.bf16.gmra.mxu0 %v2333
  %v2524 = vpop.f32.mrf.mxu0
  %v2525 = vadd.f32 0.0, %v2524
  %v2526 = vpop.f32.mrf.mxu0
  %v2527 = vadd.f32 0.0, %v2526
  %2528 = vmatmul.bf16.gmra.mxu0 %v2336
  %v2529 = vpop.f32.mrf.mxu0
  %v2530 = vadd.f32 0.0, %v2529
  %v2531 = vpop.f32.mrf.mxu0
  %v2532 = vadd.f32 0.0, %v2531
  %2533 = vmatmul.bf16.gmra.mxu0 %v2339
  %v2534 = vpop.f32.mrf.mxu0
  %v2535 = vadd.f32 0.0, %v2534
  %v2536 = vpop.f32.mrf.mxu0
  %v2537 = vadd.f32 0.0, %v2536
  %2538 = vmatmul.bf16.gmra.mxu0 %v2342
  %v2539 = vpop.f32.mrf.mxu0
  %v2540 = vadd.f32 0.0, %v2539
  %v2541 = vpop.f32.mrf.mxu0
  %v2542 = vadd.f32 0.0, %v2541
  %2543 = vmatmul.bf16.gmra.mxu0 %v2345
  %v2544 = vpop.f32.mrf.mxu0
  %v2545 = vadd.f32 0.0, %v2544
  %v2546 = vpop.f32.mrf.mxu0
  %v2547 = vadd.f32 0.0, %v2546
  %2548 = vmatmul.bf16.gmra.mxu0 %v2348
  %v2549 = vpop.f32.mrf.mxu0
  %v2550 = vadd.f32 0.0, %v2549
  %v2551 = vpop.f32.mrf.mxu0
  %v2552 = vadd.f32 0.0, %v2551
  %2553 = vmatmul.bf16.gmra.mxu0 %v2351
  %v2554 = vpop.f32.mrf.mxu0
  %v2555 = vadd.f32 0.0, %v2554
  %v2556 = vpop.f32.mrf.mxu0
  %v2557 = vadd.f32 0.0, %v2556
  %2558 = vmatmul.bf16.gmra.mxu0 %v2354
  %v2559 = vpop.f32.mrf.mxu0
  %v2560 = vadd.f32 0.0, %v2559
  %v2561 = vpop.f32.mrf.mxu0
  %v2562 = vadd.f32 0.0, %v2561
  %2563 = vdwg.mxu0
  %v2564 = vadd.f32 %v2151, %v2378
  %v2565 = vadd.f32 %v2152, %v2427
  %v2566 = vadd.f32 %v2153, %v2476
  %v2567 = vadd.f32 %v2154, %v2525
  %v2568 = vadd.f32 %v2155, %v2380
  %v2569 = vadd.f32 %v2156, %v2429
  %v2570 = vadd.f32 %v2157, %v2478
  %v2571 = vadd.f32 %v2158, %v2527
  %v2572 = vadd.f32 %v2159, %v2383
  %v2573 = vadd.f32 %v2160, %v2432
  %v2574 = vadd.f32 %v2161, %v2481
  %v2575 = vadd.f32 %v2162, %v2530
  %v2576 = vadd.f32 %v2163, %v2385
  %v2577 = vadd.f32 %v2164, %v2434
  %v2578 = vadd.f32 %v2165, %v2483
  %v2579 = vadd.f32 %v2166, %v2532
  %v2580 = vadd.f32 %v2167, %v2388
  %v2581 = vadd.f32 %v2168, %v2437
  %v2582 = vadd.f32 %v2169, %v2486
  %v2583 = vadd.f32 %v2170, %v2535
  %v2584 = vadd.f32 %v2171, %v2390
  %v2585 = vadd.f32 %v2172, %v2439
  %v2586 = vadd.f32 %v2173, %v2488
  %v2587 = vadd.f32 %v2174, %v2537
  %v2588 = vadd.f32 %v2175, %v2393
  %v2589 = vadd.f32 %v2176, %v2442
  %v2590 = vadd.f32 %v2177, %v2491
  %v2591 = vadd.f32 %v2178, %v2540
  %v2592 = vadd.f32 %v2179, %v2395
  %v2593 = vadd.f32 %v2180, %v2444
  %v2594 = vadd.f32 %v2181, %v2493
  %v2595 = vadd.f32 %v2182, %v2542
  %v2596 = vadd.f32 %v2183, %v2398
  %v2597 = vadd.f32 %v2184, %v2447
  %v2598 = vadd.f32 %v2185, %v2496
  %v2599 = vadd.f32 %v2186, %v2545
  %v2600 = vadd.f32 %v2187, %v2400
  %v2601 = vadd.f32 %v2188, %v2449
  %v2602 = vadd.f32 %v2189, %v2498
  %v2603 = vadd.f32 %v2190, %v2547
  %v2604 = vadd.f32 %v2191, %v2403
  %v2605 = vadd.f32 %v2192, %v2452
  %v2606 = vadd.f32 %v2193, %v2501
  %v2607 = vadd.f32 %v2194, %v2550
  %v2608 = vadd.f32 %v2195, %v2405
  %v2609 = vadd.f32 %v2196, %v2454
  %v2610 = vadd.f32 %v2197, %v2503
  %v2611 = vadd.f32 %v2198, %v2552
  %v2612 = vadd.f32 %v2199, %v2408
  %v2613 = vadd.f32 %v2200, %v2457
  %v2614 = vadd.f32 %v2201, %v2506
  %v2615 = vadd.f32 %v2202, %v2555
  %v2616 = vadd.f32 %v2203, %v2410
  %v2617 = vadd.f32 %v2204, %v2459
  %v2618 = vadd.f32 %v2205, %v2508
  %v2619 = vadd.f32 %v2206, %v2557
  %v2620 = vadd.f32 %v2207, %v2413
  %v2621 = vadd.f32 %v2208, %v2462
  %v2622 = vadd.f32 %v2209, %v2511
  %v2623 = vadd.f32 %v2210, %v2560
  %v2624 = vadd.f32 %v2211, %v2415
  %v2625 = vadd.f32 %v2212, %v2464
  %v2626 = vadd.f32 %v2213, %v2513
  %v2627 = vadd.f32 %v2214, %v2562
  %v2628 = vld [vmem:[#allocation2 + $0x4] sm:$0xff]
  %v2629 = vld [vmem:[#allocation2 + $0xc] sm:$0xff]
  %v2630 = vld [vmem:[#allocation2 + $0x14] sm:$0xf]
  %v2631 = vld [vmem:[#allocation2 + $0x1c] sm:$0xff]
  %v2632 = vld [vmem:[#allocation2 + $0x24] sm:$0xff]
  %v2633 = vld [vmem:[#allocation2 + $0x2c] sm:$0xf]
  %v2634 = vld [vmem:[#allocation2 + $0x34] sm:$0xff]
  %v2635 = vld [vmem:[#allocation2 + $0x3c] sm:$0xff]
  %v2636 = vld [vmem:[#allocation2 + $0x44] sm:$0xf]
  %v2637 = vld [vmem:[#allocation2 + $0x4c] sm:$0xff]
  %v2638 = vld [vmem:[#allocation2 + $0x54] sm:$0xff]
  %v2639 = vld [vmem:[#allocation2 + $0x5c] sm:$0xf]
  %v2640 = vld [vmem:[#allocation2 + $0x64] sm:$0x33]
  %v2641 = vld [vmem:[#allocation2 + $0x6c] sm:$0x33]
  %v2642 = vld [vmem:[#allocation2 + $0x74] sm:$0x3]
  %s2643 = scalar_lea.vmem %s3, 20
  %v2644 = vld [vmem:[%s2643] sm:$0xf]
  %2646 = vst [vmem:[#allocation1] ss:$9 sm:$0xff] %v2644
  %v2647 = vld [vmem:[#allocation1] sm:$0xff]
  %v2648 = vld [vmem:[#allocation1 + $0x9] sm:$0xff]
  %v2649 = vld [vmem:[#allocation1 + $0x12] sm:$0xff]
  %v2650 = vld [vmem:[#allocation1 + $0x1b] sm:$0xff]
  %v2651 = vpack.i.b16 %v2647, %v2647
  %v2653 = vperm.slane %v2651, 0
  %v2654 = vpack.i.b16 %v2648, %v2648
  %v2656 = vperm.slane %v2654, 0
  %v2657 = vpack.i.b16 %v2649, %v2649
  %v2659 = vperm.slane %v2657, 0
  %v2660 = vpack.i.b16 %v2650, %v2650
  %v2662 = vperm.slane %v2660, 0
  %v2663 = vunpack.c.l.bf16 %v2628
  %v2664 = vunpack.c.h.bf16 %v2628
  %v2665 = vunpack.c.l.bf16 %v2629
  %v2666 = vunpack.c.h.bf16 %v2629
  %v2667 = vunpack.c.l.bf16 %v2630
  %v2668 = vunpack.c.l.bf16 %v2631
  %v2669 = vunpack.c.h.bf16 %v2631
  %v2670 = vunpack.c.l.bf16 %v2632
  %v2671 = vunpack.c.h.bf16 %v2632
  %v2672 = vunpack.c.l.bf16 %v2633
  %v2673 = vunpack.c.l.bf16 %v2634
  %v2674 = vunpack.c.h.bf16 %v2634
  %v2675 = vunpack.c.l.bf16 %v2635
  %v2676 = vunpack.c.h.bf16 %v2635
  %v2677 = vunpack.c.l.bf16 %v2636
  %v2678 = vunpack.c.l.bf16 %v2637
  %v2679 = vunpack.c.h.bf16 %v2637
  %v2680 = vunpack.c.l.bf16 %v2638
  %v2681 = vunpack.c.h.bf16 %v2638
  %v2682 = vunpack.c.l.bf16 %v2639
  %v2683 = vunpack.c.l.bf16 %v2640
  %v2684 = vunpack.c.h.bf16 %v2640
  %v2685 = vunpack.c.l.bf16 %v2641
  %v2686 = vunpack.c.h.bf16 %v2641
  %v2687 = vunpack.c.l.bf16 %v2642
  %v2688 = vunpack.c.l.bf16 %v2653
  %v2689 = vunpack.c.l.bf16 %v2656
  %v2690 = vunpack.c.l.bf16 %v2659
  %v2691 = vunpack.c.l.bf16 %v2662
  %2696 = vrot.lane.b32.xlu0 %v2688, 1
  %v2697 = vpop.permute.xlu0 %2696
  %2698 = vrot.lane.b32.xlu0 %v2689, 1
  %v2699 = vpop.permute.xlu0 %2698
  %2700 = vrot.lane.b32.xlu0 %v2690, 1
  %v2701 = vpop.permute.xlu0 %2700
  %2702 = vrot.lane.b32.xlu0 %v2691, 1
  %v2703 = vpop.permute.xlu0 %2702
  %vm2704 = vcmask 7168
  %v2705 = vsel %vm2704, %v2697, %v2699
  %v2706 = vsel %vm2704, %v2699, %v2701
  %v2707 = vsel %vm2704, %v2701, %v2703
  %v2713 = vmul.f32 %v2663, %v2697
  %v2714 = vmul.f32 %v2664, %v2705
  %v2715 = vmul.f32 %v2665, %v2706
  %v2716 = vmul.f32 %v2666, %v2707
  %v2717 = vmul.f32 %v2667, %v2703
  %v2718 = vmul.f32 %v2668, %v2697
  %v2719 = vmul.f32 %v2669, %v2705
  %v2720 = vmul.f32 %v2670, %v2706
  %v2721 = vmul.f32 %v2671, %v2707
  %v2722 = vmul.f32 %v2672, %v2703
  %v2723 = vmul.f32 %v2673, %v2697
  %v2724 = vmul.f32 %v2674, %v2705
  %v2725 = vmul.f32 %v2675, %v2706
  %v2726 = vmul.f32 %v2676, %v2707
  %v2727 = vmul.f32 %v2677, %v2703
  %v2728 = vmul.f32 %v2678, %v2697
  %v2729 = vmul.f32 %v2679, %v2705
  %v2730 = vmul.f32 %v2680, %v2706
  %v2731 = vmul.f32 %v2681, %v2707
  %v2732 = vmul.f32 %v2682, %v2703
  %v2733 = vmul.f32 %v2683, %v2697
  %v2734 = vmul.f32 %v2684, %v2705
  %v2735 = vmul.f32 %v2685, %v2706
  %v2736 = vmul.f32 %v2686, %v2707
  %v2737 = vmul.f32 %v2687, %v2703
  %v2738 = vpack.c.bf16 %v2718, %v2713
  %v2739 = vpack.c.bf16 %v2719, %v2714
  %v2740 = vpack.c.bf16 %v2720, %v2715
  %v2741 = vpack.c.bf16 %v2721, %v2716
  %v2742 = vpack.c.bf16 %v2722, %v2717
  %v2743 = vpack.c.bf16 %v2728, %v2723
  %v2744 = vpack.c.bf16 %v2729, %v2724
  %v2745 = vpack.c.bf16 %v2730, %v2725
  %v2746 = vpack.c.bf16 %v2731, %v2726
  %v2747 = vpack.c.bf16 %v2732, %v2727
  %v2748 = vpack.c.bf16 %v2733, %v2733
  %v2749 = vpack.c.bf16 %v2734, %v2734
  %v2750 = vpack.c.bf16 %v2735, %v2735
  %v2751 = vpack.c.bf16 %v2736, %v2736
  %v2752 = vpack.c.bf16 %v2737, %v2737
  %s2753 = scalar_lea.vmem %s1, 320
  %v2754 = vld [vmem:[%s2753] sm:$0xf]
  %v2755 = vld [vmem:[%s2753 + $0x4] sm:$0xf]
  %v2756 = vld [vmem:[%s2753 + $0x8] sm:$0xf]
  %v2757 = vld [vmem:[%s2753 + $0xc] sm:$0xf]
  %v2758 = vld [vmem:[%s2753 + $0x10] sm:$0xf]
  %v2759 = vld [vmem:[%s2753 + $0x14] sm:$0xf]
  %v2760 = vld [vmem:[%s2753 + $0x18] sm:$0xf]
  %v2761 = vld [vmem:[%s2753 + $0x1c] sm:$0xf]
  %v2762 = vld [vmem:[%s2753 + $0x20] sm:$0xf]
  %v2763 = vld [vmem:[%s2753 + $0x24] sm:$0xf]
  %v2764 = vld [vmem:[%s2753 + $0x28] sm:$0xf]
  %v2765 = vld [vmem:[%s2753 + $0x2c] sm:$0xf]
  %v2766 = vld [vmem:[%s2753 + $0x30] sm:$0xf]
  %v2767 = vld [vmem:[%s2753 + $0x34] sm:$0xf]
  %v2768 = vld [vmem:[%s2753 + $0x38] sm:$0xf]
  %v2769 = vld [vmem:[%s2753 + $0x3c] sm:$0xf]
  %v2786 = vunpack.c.l.b16 %v2754
  %v2787 = vunpack.c.l.b16 %v2755
  %v2788 = vunpack.c.l.b16 %v2756
  %v2789 = vunpack.c.l.b16 %v2757
  %v2790 = vunpack.c.l.b16 %v2758
  %v2791 = vunpack.c.l.b16 %v2759
  %v2792 = vunpack.c.l.b16 %v2760
  %v2793 = vunpack.c.l.b16 %v2761
  %v2794 = vunpack.c.l.b16 %v2762
  %v2795 = vunpack.c.l.b16 %v2763
  %v2796 = vunpack.c.l.b16 %v2764
  %v2797 = vunpack.c.l.b16 %v2765
  %v2798 = vunpack.c.l.b16 %v2766
  %v2799 = vunpack.c.l.b16 %v2767
  %v2800 = vunpack.c.l.b16 %v2768
  %v2801 = vunpack.c.l.b16 %v2769
  %v2802 = vpack.c.b16 %v2787, %v2786
  %v2803 = vpack.c.b16 %v2789, %v2788
  %v2804 = vpack.c.b16 %v2791, %v2790
  %v2805 = vpack.c.b16 %v2793, %v2792
  %v2806 = vpack.c.b16 %v2795, %v2794
  %v2807 = vpack.c.b16 %v2797, %v2796
  %v2808 = vpack.c.b16 %v2799, %v2798
  %v2809 = vpack.c.b16 %v2801, %v2800
  %2825 = vrot.lane.b32.xlu0 %v2738, 127
  %v2826 = vpop.permute.xlu0 %2825
  %2827 = vrot.lane.b32.xlu0 %v2739, 127
  %v2828 = vpop.permute.xlu0 %2827
  %2829 = vrot.lane.b32.xlu0 %v2740, 127
  %v2830 = vpop.permute.xlu0 %2829
  %2831 = vrot.lane.b32.xlu0 %v2741, 127
  %v2832 = vpop.permute.xlu0 %2831
  %2833 = vrot.lane.b32.xlu0 %v2742, 127
  %v2834 = vpop.permute.xlu0 %2833
  %2835 = vrot.lane.b32.xlu0 %v2743, 127
  %v2836 = vpop.permute.xlu0 %2835
  %2837 = vrot.lane.b32.xlu0 %v2744, 127
  %v2838 = vpop.permute.xlu0 %2837
  %2839 = vrot.lane.b32.xlu0 %v2745, 127
  %v2840 = vpop.permute.xlu0 %2839
  %2841 = vrot.lane.b32.xlu0 %v2746, 127
  %v2842 = vpop.permute.xlu0 %2841
  %2843 = vrot.lane.b32.xlu0 %v2747, 127
  %v2844 = vpop.permute.xlu0 %2843
  %2845 = vrot.lane.b32.xlu0 %v2748, 127
  %v2846 = vpop.permute.xlu0 %2845
  %2847 = vrot.lane.b32.xlu0 %v2749, 127
  %v2848 = vpop.permute.xlu0 %2847
  %2849 = vrot.lane.b32.xlu0 %v2750, 127
  %v2850 = vpop.permute.xlu0 %2849
  %2851 = vrot.lane.b32.xlu0 %v2751, 127
  %v2852 = vpop.permute.xlu0 %2851
  %2853 = vrot.lane.b32.xlu0 %v2752, 127
  %v2854 = vpop.permute.xlu0 %2853
  %vm2855 = vcmask 1039360
  %v2856 = vsel %vm2855, %v2826, %v2828
  %v2857 = vsel %vm2855, %v2828, %v2830
  %v2858 = vsel %vm2855, %v2830, %v2832
  %v2859 = vsel %vm2855, %v2832, %v2834
  %v2860 = vsel %vm2855, %v2836, %v2838
  %v2861 = vsel %vm2855, %v2838, %v2840
  %v2862 = vsel %vm2855, %v2840, %v2842
  %v2863 = vsel %vm2855, %v2842, %v2844
  %v2864 = vsel %vm2855, %v2846, %v2848
  %v2865 = vsel %vm2855, %v2848, %v2850
  %v2866 = vsel %vm2855, %v2850, %v2852
  %v2867 = vsel %vm2855, %v2852, %v2854
  %v2877 = vsel %vm555, %v2802, 0
  %v2880 = vsel %vm555, %v2803, 0
  %v2883 = vsel %vm555, %v2804, 0
  %v2886 = vsel %vm555, %v2805, 0
  %v2889 = vsel %vm555, %v2806, 0
  %v2892 = vsel %vm555, %v2807, 0
  %v2895 = vsel %vm555, %v2808, 0
  %v2898 = vsel %vm555, %v2809, 0
  %v2901 = vsel %vm580, %v2864, 0
  %v2904 = vsel %vm580, %v2865, 0
  %v2907 = vsel %vm580, %v2866, 0
  %v2910 = vsel %vm580, %v2867, 0
  %2912 = vmatpush.bf16.msra.mxu0 0
  %2913 = vmatpush.bf16.msra.mxu0 0
  %2914 = vmatpush.bf16.msra.mxu0 0
  %2915 = vmatpush.bf16.msra.mxu0 0
  %2916 = vmatpush.bf16.msra.mxu0 0
  %2917 = vmatpush.bf16.msra.mxu0 %v2901
  %2918 = vmatpush.bf16.msra.mxu0 %v2860
  %2919 = vmatpush.bf16.msra.mxu0 %v2856
  %2920 = vmatmul.bf16.gmra.mxu0 %v2877
  %v2921 = vpop.f32.mrf.mxu0
  %v2922 = vadd.f32 0.0, %v2921
  %v2923 = vpop.f32.mrf.mxu0
  %v2924 = vadd.f32 0.0, %v2923
  %2925 = vmatmul.bf16.gmra.mxu0 %v2880
  %v2926 = vpop.f32.mrf.mxu0
  %v2927 = vadd.f32 0.0, %v2926
  %v2928 = vpop.f32.mrf.mxu0
  %v2929 = vadd.f32 0.0, %v2928
  %2930 = vmatmul.bf16.gmra.mxu0 %v2883
  %v2931 = vpop.f32.mrf.mxu0
  %v2932 = vadd.f32 0.0, %v2931
  %v2933 = vpop.f32.mrf.mxu0
  %v2934 = vadd.f32 0.0, %v2933
  %2935 = vmatmul.bf16.gmra.mxu0 %v2886
  %v2936 = vpop.f32.mrf.mxu0
  %v2937 = vadd.f32 0.0, %v2936
  %v2938 = vpop.f32.mrf.mxu0
  %v2939 = vadd.f32 0.0, %v2938
  %2940 = vmatmul.bf16.gmra.mxu0 %v2889
  %v2941 = vpop.f32.mrf.mxu0
  %v2942 = vadd.f32 0.0, %v2941
  %v2943 = vpop.f32.mrf.mxu0
  %v2944 = vadd.f32 0.0, %v2943
  %2945 = vmatmul.bf16.gmra.mxu0 %v2892
  %v2946 = vpop.f32.mrf.mxu0
  %v2947 = vadd.f32 0.0, %v2946
  %v2948 = vpop.f32.mrf.mxu0
  %v2949 = vadd.f32 0.0, %v2948
  %2950 = vmatmul.bf16.gmra.mxu0 %v2895
  %v2951 = vpop.f32.mrf.mxu0
  %v2952 = vadd.f32 0.0, %v2951
  %v2953 = vpop.f32.mrf.mxu0
  %v2954 = vadd.f32 0.0, %v2953
  %2955 = vmatmul.bf16.gmra.mxu0 %v2898
  %v2956 = vpop.f32.mrf.mxu0
  %v2957 = vadd.f32 0.0, %v2956
  %v2958 = vpop.f32.mrf.mxu0
  %v2959 = vadd.f32 0.0, %v2958
  %2960 = vdwg.mxu0
  %2961 = vmatpush.bf16.msra.mxu0 0
  %2962 = vmatpush.bf16.msra.mxu0 0
  %2963 = vmatpush.bf16.msra.mxu0 0
  %2964 = vmatpush.bf16.msra.mxu0 0
  %2965 = vmatpush.bf16.msra.mxu0 0
  %2966 = vmatpush.bf16.msra.mxu0 %v2904
  %2967 = vmatpush.bf16.msra.mxu0 %v2861
  %2968 = vmatpush.bf16.msra.mxu0 %v2857
  %2969 = vmatmul.bf16.gmra.mxu0 %v2877
  %v2970 = vpop.f32.mrf.mxu0
  %v2971 = vadd.f32 0.0, %v2970
  %v2972 = vpop.f32.mrf.mxu0
  %v2973 = vadd.f32 0.0, %v2972
  %2974 = vmatmul.bf16.gmra.mxu0 %v2880
  %v2975 = vpop.f32.mrf.mxu0
  %v2976 = vadd.f32 0.0, %v2975
  %v2977 = vpop.f32.mrf.mxu0
  %v2978 = vadd.f32 0.0, %v2977
  %2979 = vmatmul.bf16.gmra.mxu0 %v2883
  %v2980 = vpop.f32.mrf.mxu0
  %v2981 = vadd.f32 0.0, %v2980
  %v2982 = vpop.f32.mrf.mxu0
  %v2983 = vadd.f32 0.0, %v2982
  %2984 = vmatmul.bf16.gmra.mxu0 %v2886
  %v2985 = vpop.f32.mrf.mxu0
  %v2986 = vadd.f32 0.0, %v2985
  %v2987 = vpop.f32.mrf.mxu0
  %v2988 = vadd.f32 0.0, %v2987
  %2989 = vmatmul.bf16.gmra.mxu0 %v2889
  %v2990 = vpop.f32.mrf.mxu0
  %v2991 = vadd.f32 0.0, %v2990
  %v2992 = vpop.f32.mrf.mxu0
  %v2993 = vadd.f32 0.0, %v2992
  %2994 = vmatmul.bf16.gmra.mxu0 %v2892
  %v2995 = vpop.f32.mrf.mxu0
  %v2996 = vadd.f32 0.0, %v2995
  %v2997 = vpop.f32.mrf.mxu0
  %v2998 = vadd.f32 0.0, %v2997
  %2999 = vmatmul.bf16.gmra.mxu0 %v2895
  %v3000 = vpop.f32.mrf.mxu0
  %v3001 = vadd.f32 0.0, %v3000
  %v3002 = vpop.f32.mrf.mxu0
  %v3003 = vadd.f32 0.0, %v3002
  %3004 = vmatmul.bf16.gmra.mxu0 %v2898
  %v3005 = vpop.f32.mrf.mxu0
  %v3006 = vadd.f32 0.0, %v3005
  %v3007 = vpop.f32.mrf.mxu0
  %v3008 = vadd.f32 0.0, %v3007
  %3009 = vdwg.mxu0
  %3010 = vmatpush.bf16.msra.mxu0 0
  %3011 = vmatpush.bf16.msra.mxu0 0
  %3012 = vmatpush.bf16.msra.mxu0 0
  %3013 = vmatpush.bf16.msra.mxu0 0
  %3014 = vmatpush.bf16.msra.mxu0 0
  %3015 = vmatpush.bf16.msra.mxu0 %v2907
  %3016 = vmatpush.bf16.msra.mxu0 %v2862
  %3017 = vmatpush.bf16.msra.mxu0 %v2858
  %3018 = vmatmul.bf16.gmra.mxu0 %v2877
  %v3019 = vpop.f32.mrf.mxu0
  %v3020 = vadd.f32 0.0, %v3019
  %v3021 = vpop.f32.mrf.mxu0
  %v3022 = vadd.f32 0.0, %v3021
  %3023 = vmatmul.bf16.gmra.mxu0 %v2880
  %v3024 = vpop.f32.mrf.mxu0
  %v3025 = vadd.f32 0.0, %v3024
  %v3026 = vpop.f32.mrf.mxu0
  %v3027 = vadd.f32 0.0, %v3026
  %3028 = vmatmul.bf16.gmra.mxu0 %v2883
  %v3029 = vpop.f32.mrf.mxu0
  %v3030 = vadd.f32 0.0, %v3029
  %v3031 = vpop.f32.mrf.mxu0
  %v3032 = vadd.f32 0.0, %v3031
  %3033 = vmatmul.bf16.gmra.mxu0 %v2886
  %v3034 = vpop.f32.mrf.mxu0
  %v3035 = vadd.f32 0.0, %v3034
  %v3036 = vpop.f32.mrf.mxu0
  %v3037 = vadd.f32 0.0, %v3036
  %3038 = vmatmul.bf16.gmra.mxu0 %v2889
  %v3039 = vpop.f32.mrf.mxu0
  %v3040 = vadd.f32 0.0, %v3039
  %v3041 = vpop.f32.mrf.mxu0
  %v3042 = vadd.f32 0.0, %v3041
  %3043 = vmatmul.bf16.gmra.mxu0 %v2892
  %v3044 = vpop.f32.mrf.mxu0
  %v3045 = vadd.f32 0.0, %v3044
  %v3046 = vpop.f32.mrf.mxu0
  %v3047 = vadd.f32 0.0, %v3046
  %3048 = vmatmul.bf16.gmra.mxu0 %v2895
  %v3049 = vpop.f32.mrf.mxu0
  %v3050 = vadd.f32 0.0, %v3049
  %v3051 = vpop.f32.mrf.mxu0
  %v3052 = vadd.f32 0.0, %v3051
  %3053 = vmatmul.bf16.gmra.mxu0 %v2898
  %v3054 = vpop.f32.mrf.mxu0
  %v3055 = vadd.f32 0.0, %v3054
  %v3056 = vpop.f32.mrf.mxu0
  %v3057 = vadd.f32 0.0, %v3056
  %3058 = vdwg.mxu0
  %3059 = vmatpush.bf16.msra.mxu0 0
  %3060 = vmatpush.bf16.msra.mxu0 0
  %3061 = vmatpush.bf16.msra.mxu0 0
  %3062 = vmatpush.bf16.msra.mxu0 0
  %3063 = vmatpush.bf16.msra.mxu0 0
  %3064 = vmatpush.bf16.msra.mxu0 %v2910
  %3065 = vmatpush.bf16.msra.mxu0 %v2863
  %3066 = vmatpush.bf16.msra.mxu0 %v2859
  %3067 = vmatmul.bf16.gmra.mxu0 %v2877
  %v3068 = vpop.f32.mrf.mxu0
  %v3069 = vadd.f32 0.0, %v3068
  %v3070 = vpop.f32.mrf.mxu0
  %v3071 = vadd.f32 0.0, %v3070
  %3072 = vmatmul.bf16.gmra.mxu0 %v2880
  %v3073 = vpop.f32.mrf.mxu0
  %v3074 = vadd.f32 0.0, %v3073
  %v3075 = vpop.f32.mrf.mxu0
  %v3076 = vadd.f32 0.0, %v3075
  %3077 = vmatmul.bf16.gmra.mxu0 %v2883
  %v3078 = vpop.f32.mrf.mxu0
  %v3079 = vadd.f32 0.0, %v3078
  %v3080 = vpop.f32.mrf.mxu0
  %v3081 = vadd.f32 0.0, %v3080
  %3082 = vmatmul.bf16.gmra.mxu0 %v2886
  %v3083 = vpop.f32.mrf.mxu0
  %v3084 = vadd.f32 0.0, %v3083
  %v3085 = vpop.f32.mrf.mxu0
  %v3086 = vadd.f32 0.0, %v3085
  %3087 = vmatmul.bf16.gmra.mxu0 %v2889
  %v3088 = vpop.f32.mrf.mxu0
  %v3089 = vadd.f32 0.0, %v3088
  %v3090 = vpop.f32.mrf.mxu0
  %v3091 = vadd.f32 0.0, %v3090
  %3092 = vmatmul.bf16.gmra.mxu0 %v2892
  %v3093 = vpop.f32.mrf.mxu0
  %v3094 = vadd.f32 0.0, %v3093
  %v3095 = vpop.f32.mrf.mxu0
  %v3096 = vadd.f32 0.0, %v3095
  %3097 = vmatmul.bf16.gmra.mxu0 %v2895
  %v3098 = vpop.f32.mrf.mxu0
  %v3099 = vadd.f32 0.0, %v3098
  %v3100 = vpop.f32.mrf.mxu0
  %v3101 = vadd.f32 0.0, %v3100
  %3102 = vmatmul.bf16.gmra.mxu0 %v2898
  %v3103 = vpop.f32.mrf.mxu0
  %v3104 = vadd.f32 0.0, %v3103
  %v3105 = vpop.f32.mrf.mxu0
  %v3106 = vadd.f32 0.0, %v3105
  %3107 = vdwg.mxu0
  %v3108 = vadd.f32 %v2564, %v2922
  %v3109 = vadd.f32 %v2565, %v2971
  %v3110 = vadd.f32 %v2566, %v3020
  %v3111 = vadd.f32 %v2567, %v3069
  %v3112 = vadd.f32 %v2568, %v2924
  %v3113 = vadd.f32 %v2569, %v2973
  %v3114 = vadd.f32 %v2570, %v3022
  %v3115 = vadd.f32 %v2571, %v3071
  %v3116 = vadd.f32 %v2572, %v2927
  %v3117 = vadd.f32 %v2573, %v2976
  %v3118 = vadd.f32 %v2574, %v3025
  %v3119 = vadd.f32 %v2575, %v3074
  %v3120 = vadd.f32 %v2576, %v2929
  %v3121 = vadd.f32 %v2577, %v2978
  %v3122 = vadd.f32 %v2578, %v3027
  %v3123 = vadd.f32 %v2579, %v3076
  %v3124 = vadd.f32 %v2580, %v2932
  %v3125 = vadd.f32 %v2581, %v2981
  %v3126 = vadd.f32 %v2582, %v3030
  %v3127 = vadd.f32 %v2583, %v3079
  %v3128 = vadd.f32 %v2584, %v2934
  %v3129 = vadd.f32 %v2585, %v2983
  %v3130 = vadd.f32 %v2586, %v3032
  %v3131 = vadd.f32 %v2587, %v3081
  %v3132 = vadd.f32 %v2588, %v2937
  %v3133 = vadd.f32 %v2589, %v2986
  %v3134 = vadd.f32 %v2590, %v3035
  %v3135 = vadd.f32 %v2591, %v3084
  %v3136 = vadd.f32 %v2592, %v2939
  %v3137 = vadd.f32 %v2593, %v2988
  %v3138 = vadd.f32 %v2594, %v3037
  %v3139 = vadd.f32 %v2595, %v3086
  %v3140 = vadd.f32 %v2596, %v2942
  %v3141 = vadd.f32 %v2597, %v2991
  %v3142 = vadd.f32 %v2598, %v3040
  %v3143 = vadd.f32 %v2599, %v3089
  %v3144 = vadd.f32 %v2600, %v2944
  %v3145 = vadd.f32 %v2601, %v2993
  %v3146 = vadd.f32 %v2602, %v3042
  %v3147 = vadd.f32 %v2603, %v3091
  %v3148 = vadd.f32 %v2604, %v2947
  %v3149 = vadd.f32 %v2605, %v2996
  %v3150 = vadd.f32 %v2606, %v3045
  %v3151 = vadd.f32 %v2607, %v3094
  %v3152 = vadd.f32 %v2608, %v2949
  %v3153 = vadd.f32 %v2609, %v2998
  %v3154 = vadd.f32 %v2610, %v3047
  %v3155 = vadd.f32 %v2611, %v3096
  %v3156 = vadd.f32 %v2612, %v2952
  %v3157 = vadd.f32 %v2613, %v3001
  %v3158 = vadd.f32 %v2614, %v3050
  %v3159 = vadd.f32 %v2615, %v3099
  %v3160 = vadd.f32 %v2616, %v2954
  %v3161 = vadd.f32 %v2617, %v3003
  %v3162 = vadd.f32 %v2618, %v3052
  %v3163 = vadd.f32 %v2619, %v3101
  %v3164 = vadd.f32 %v2620, %v2957
  %v3165 = vadd.f32 %v2621, %v3006
  %v3166 = vadd.f32 %v2622, %v3055
  %v3167 = vadd.f32 %v2623, %v3104
  %v3168 = vadd.f32 %v2624, %v2959
  %v3169 = vadd.f32 %v2625, %v3008
  %v3170 = vadd.f32 %v2626, %v3057
  %v3171 = vadd.f32 %v2627, %v3106
  %v3172 = vld [vmem:[#allocation2 + $0x4] sm:$0xff]
  %v3173 = vld [vmem:[#allocation2 + $0xc] sm:$0xff]
  %v3174 = vld [vmem:[#allocation2 + $0x14] sm:$0xf]
  %v3175 = vld [vmem:[#allocation2 + $0x1c] sm:$0xff]
  %v3176 = vld [vmem:[#allocation2 + $0x24] sm:$0xff]
  %v3177 = vld [vmem:[#allocation2 + $0x2c] sm:$0xf]
  %v3178 = vld [vmem:[#allocation2 + $0x34] sm:$0xff]
  %v3179 = vld [vmem:[#allocation2 + $0x3c] sm:$0xff]
  %v3180 = vld [vmem:[#allocation2 + $0x44] sm:$0xf]
  %v3181 = vld [vmem:[#allocation2 + $0x4c] sm:$0xff]
  %v3182 = vld [vmem:[#allocation2 + $0x54] sm:$0xff]
  %v3183 = vld [vmem:[#allocation2 + $0x5c] sm:$0xf]
  %v3184 = vld [vmem:[#allocation2 + $0x64] sm:$0x33]
  %v3185 = vld [vmem:[#allocation2 + $0x6c] sm:$0x33]
  %v3186 = vld [vmem:[#allocation2 + $0x74] sm:$0x3]
  %s3187 = scalar_lea.vmem %s3, 24
  %v3188 = vld [vmem:[%s3187] sm:$0xf]
  %3190 = vst [vmem:[#allocation1] ss:$9 sm:$0xff] %v3188
  %v3191 = vld [vmem:[#allocation1] sm:$0xff]
  %v3192 = vld [vmem:[#allocation1 + $0x9] sm:$0xff]
  %v3193 = vld [vmem:[#allocation1 + $0x12] sm:$0xff]
  %v3194 = vld [vmem:[#allocation1 + $0x1b] sm:$0xff]
  %v3195 = vpack.i.b16 %v3191, %v3191
  %v3197 = vperm.slane %v3195, 0
  %v3198 = vpack.i.b16 %v3192, %v3192
  %v3200 = vperm.slane %v3198, 0
  %v3201 = vpack.i.b16 %v3193, %v3193
  %v3203 = vperm.slane %v3201, 0
  %v3204 = vpack.i.b16 %v3194, %v3194
  %v3206 = vperm.slane %v3204, 0
  %v3207 = vunpack.c.l.bf16 %v3172
  %v3208 = vunpack.c.h.bf16 %v3172
  %v3209 = vunpack.c.l.bf16 %v3173
  %v3210 = vunpack.c.h.bf16 %v3173
  %v3211 = vunpack.c.l.bf16 %v3174
  %v3212 = vunpack.c.l.bf16 %v3175
  %v3213 = vunpack.c.h.bf16 %v3175
  %v3214 = vunpack.c.l.bf16 %v3176
  %v3215 = vunpack.c.h.bf16 %v3176
  %v3216 = vunpack.c.l.bf16 %v3177
  %v3217 = vunpack.c.l.bf16 %v3178
  %v3218 = vunpack.c.h.bf16 %v3178
  %v3219 = vunpack.c.l.bf16 %v3179
  %v3220 = vunpack.c.h.bf16 %v3179
  %v3221 = vunpack.c.l.bf16 %v3180
  %v3222 = vunpack.c.l.bf16 %v3181
  %v3223 = vunpack.c.h.bf16 %v3181
  %v3224 = vunpack.c.l.bf16 %v3182
  %v3225 = vunpack.c.h.bf16 %v3182
  %v3226 = vunpack.c.l.bf16 %v3183
  %v3227 = vunpack.c.l.bf16 %v3184
  %v3228 = vunpack.c.h.bf16 %v3184
  %v3229 = vunpack.c.l.bf16 %v3185
  %v3230 = vunpack.c.h.bf16 %v3185
  %v3231 = vunpack.c.l.bf16 %v3186
  %v3232 = vunpack.c.l.bf16 %v3197
  %v3233 = vunpack.c.l.bf16 %v3200
  %v3234 = vunpack.c.l.bf16 %v3203
  %v3235 = vunpack.c.l.bf16 %v3206
  %3240 = vrot.lane.b32.xlu0 %v3232, 15
  %v3241 = vpop.permute.xlu0 %3240
  %3242 = vrot.lane.b32.xlu0 %v3233, 15
  %v3243 = vpop.permute.xlu0 %3242
  %3244 = vrot.lane.b32.xlu0 %v3234, 15
  %v3245 = vpop.permute.xlu0 %3244
  %3246 = vrot.lane.b32.xlu0 %v3235, 15
  %v3247 = vpop.permute.xlu0 %3246
  %vm3248 = vcmask 121856
  %v3249 = vsel %vm3248, %v3241, %v3243
  %v3250 = vsel %vm3248, %v3243, %v3245
  %v3251 = vsel %vm3248, %v3245, %v3247
  %v3257 = vmul.f32 %v3207, %v3241
  %v3258 = vmul.f32 %v3208, %v3249
  %v3259 = vmul.f32 %v3209, %v3250
  %v3260 = vmul.f32 %v3210, %v3251
  %v3261 = vmul.f32 %v3211, %v3247
  %v3262 = vmul.f32 %v3212, %v3241
  %v3263 = vmul.f32 %v3213, %v3249
  %v3264 = vmul.f32 %v3214, %v3250
  %v3265 = vmul.f32 %v3215, %v3251
  %v3266 = vmul.f32 %v3216, %v3247
  %v3267 = vmul.f32 %v3217, %v3241
  %v3268 = vmul.f32 %v3218, %v3249
  %v3269 = vmul.f32 %v3219, %v3250
  %v3270 = vmul.f32 %v3220, %v3251
  %v3271 = vmul.f32 %v3221, %v3247
  %v3272 = vmul.f32 %v3222, %v3241
  %v3273 = vmul.f32 %v3223, %v3249
  %v3274 = vmul.f32 %v3224, %v3250
  %v3275 = vmul.f32 %v3225, %v3251
  %v3276 = vmul.f32 %v3226, %v3247
  %v3277 = vmul.f32 %v3227, %v3241
  %v3278 = vmul.f32 %v3228, %v3249
  %v3279 = vmul.f32 %v3229, %v3250
  %v3280 = vmul.f32 %v3230, %v3251
  %v3281 = vmul.f32 %v3231, %v3247
  %v3282 = vpack.c.bf16 %v3262, %v3257
  %v3283 = vpack.c.bf16 %v3263, %v3258
  %v3284 = vpack.c.bf16 %v3264, %v3259
  %v3285 = vpack.c.bf16 %v3265, %v3260
  %v3286 = vpack.c.bf16 %v3266, %v3261
  %v3287 = vpack.c.bf16 %v3272, %v3267
  %v3288 = vpack.c.bf16 %v3273, %v3268
  %v3289 = vpack.c.bf16 %v3274, %v3269
  %v3290 = vpack.c.bf16 %v3275, %v3270
  %v3291 = vpack.c.bf16 %v3276, %v3271
  %v3292 = vpack.c.bf16 %v3277, %v3277
  %v3293 = vpack.c.bf16 %v3278, %v3278
  %v3294 = vpack.c.bf16 %v3279, %v3279
  %v3295 = vpack.c.bf16 %v3280, %v3280
  %v3296 = vpack.c.bf16 %v3281, %v3281
  %s3297 = scalar_lea.vmem %s1, 384
  %v3298 = vld [vmem:[%s3297] sm:$0xf]
  %v3299 = vld [vmem:[%s3297 + $0x4] sm:$0xf]
  %v3300 = vld [vmem:[%s3297 + $0x8] sm:$0xf]
  %v3301 = vld [vmem:[%s3297 + $0xc] sm:$0xf]
  %v3302 = vld [vmem:[%s3297 + $0x10] sm:$0xf]
  %v3303 = vld [vmem:[%s3297 + $0x14] sm:$0xf]
  %v3304 = vld [vmem:[%s3297 + $0x18] sm:$0xf]
  %v3305 = vld [vmem:[%s3297 + $0x1c] sm:$0xf]
  %v3306 = vld [vmem:[%s3297 + $0x20] sm:$0xf]
  %v3307 = vld [vmem:[%s3297 + $0x24] sm:$0xf]
  %v3308 = vld [vmem:[%s3297 + $0x28] sm:$0xf]
  %v3309 = vld [vmem:[%s3297 + $0x2c] sm:$0xf]
  %v3310 = vld [vmem:[%s3297 + $0x30] sm:$0xf]
  %v3311 = vld [vmem:[%s3297 + $0x34] sm:$0xf]
  %v3312 = vld [vmem:[%s3297 + $0x38] sm:$0xf]
  %v3313 = vld [vmem:[%s3297 + $0x3c] sm:$0xf]
  %v3330 = vunpack.c.l.b16 %v3298
  %v3331 = vunpack.c.l.b16 %v3299
  %v3332 = vunpack.c.l.b16 %v3300
  %v3333 = vunpack.c.l.b16 %v3301
  %v3334 = vunpack.c.l.b16 %v3302
  %v3335 = vunpack.c.l.b16 %v3303
  %v3336 = vunpack.c.l.b16 %v3304
  %v3337 = vunpack.c.l.b16 %v3305
  %v3338 = vunpack.c.l.b16 %v3306
  %v3339 = vunpack.c.l.b16 %v3307
  %v3340 = vunpack.c.l.b16 %v3308
  %v3341 = vunpack.c.l.b16 %v3309
  %v3342 = vunpack.c.l.b16 %v3310
  %v3343 = vunpack.c.l.b16 %v3311
  %v3344 = vunpack.c.l.b16 %v3312
  %v3345 = vunpack.c.l.b16 %v3313
  %v3346 = vpack.c.b16 %v3331, %v3330
  %v3347 = vpack.c.b16 %v3333, %v3332
  %v3348 = vpack.c.b16 %v3335, %v3334
  %v3349 = vpack.c.b16 %v3337, %v3336
  %v3350 = vpack.c.b16 %v3339, %v3338
  %v3351 = vpack.c.b16 %v3341, %v3340
  %v3352 = vpack.c.b16 %v3343, %v3342
  %v3353 = vpack.c.b16 %v3345, %v3344
  %3369 = vrot.lane.b32.xlu0 %v3282, 113
  %v3370 = vpop.permute.xlu0 %3369
  %3371 = vrot.lane.b32.xlu0 %v3283, 113
  %v3372 = vpop.permute.xlu0 %3371
  %3373 = vrot.lane.b32.xlu0 %v3284, 113
  %v3374 = vpop.permute.xlu0 %3373
  %3375 = vrot.lane.b32.xlu0 %v3285, 113
  %v3376 = vpop.permute.xlu0 %3375
  %3377 = vrot.lane.b32.xlu0 %v3286, 113
  %v3378 = vpop.permute.xlu0 %3377
  %3379 = vrot.lane.b32.xlu0 %v3287, 113
  %v3380 = vpop.permute.xlu0 %3379
  %3381 = vrot.lane.b32.xlu0 %v3288, 113
  %v3382 = vpop.permute.xlu0 %3381
  %3383 = vrot.lane.b32.xlu0 %v3289, 113
  %v3384 = vpop.permute.xlu0 %3383
  %3385 = vrot.lane.b32.xlu0 %v3290, 113
  %v3386 = vpop.permute.xlu0 %3385
  %3387 = vrot.lane.b32.xlu0 %v3291, 113
  %v3388 = vpop.permute.xlu0 %3387
  %3389 = vrot.lane.b32.xlu0 %v3292, 113
  %v3390 = vpop.permute.xlu0 %3389
  %3391 = vrot.lane.b32.xlu0 %v3293, 113
  %v3392 = vpop.permute.xlu0 %3391
  %3393 = vrot.lane.b32.xlu0 %v3294, 113
  %v3394 = vpop.permute.xlu0 %3393
  %3395 = vrot.lane.b32.xlu0 %v3295, 113
  %v3396 = vpop.permute.xlu0 %3395
  %3397 = vrot.lane.b32.xlu0 %v3296, 113
  %v3398 = vpop.permute.xlu0 %3397
  %vm3399 = vcmask 924672
  %v3400 = vsel %vm3399, %v3370, %v3372
  %v3401 = vsel %vm3399, %v3372, %v3374
  %v3402 = vsel %vm3399, %v3374, %v3376
  %v3403 = vsel %vm3399, %v3376, %v3378
  %v3404 = vsel %vm3399, %v3380, %v3382
  %v3405 = vsel %vm3399, %v3382, %v3384
  %v3406 = vsel %vm3399, %v3384, %v3386
  %v3407 = vsel %vm3399, %v3386, %v3388
  %v3408 = vsel %vm3399, %v3390, %v3392
  %v3409 = vsel %vm3399, %v3392, %v3394
  %v3410 = vsel %vm3399, %v3394, %v3396
  %v3411 = vsel %vm3399, %v3396, %v3398
  %v3421 = vsel %vm555, %v3346, 0
  %v3424 = vsel %vm555, %v3347, 0
  %v3427 = vsel %vm555, %v3348, 0
  %v3430 = vsel %vm555, %v3349, 0
  %v3433 = vsel %vm555, %v3350, 0
  %v3436 = vsel %vm555, %v3351, 0
  %v3439 = vsel %vm555, %v3352, 0
  %v3442 = vsel %vm555, %v3353, 0
  %v3445 = vsel %vm580, %v3408, 0
  %v3448 = vsel %vm580, %v3409, 0
  %v3451 = vsel %vm580, %v3410, 0
  %v3454 = vsel %vm580, %v3411, 0
  %3456 = vmatpush.bf16.msra.mxu0 0
  %3457 = vmatpush.bf16.msra.mxu0 0
  %3458 = vmatpush.bf16.msra.mxu0 0
  %3459 = vmatpush.bf16.msra.mxu0 0
  %3460 = vmatpush.bf16.msra.mxu0 0
  %3461 = vmatpush.bf16.msra.mxu0 %v3445
  %3462 = vmatpush.bf16.msra.mxu0 %v3404
  %3463 = vmatpush.bf16.msra.mxu0 %v3400
  %3464 = vmatmul.bf16.gmra.mxu0 %v3421
  %v3465 = vpop.f32.mrf.mxu0
  %v3466 = vadd.f32 0.0, %v3465
  %v3467 = vpop.f32.mrf.mxu0
  %v3468 = vadd.f32 0.0, %v3467
  %3469 = vmatmul.bf16.gmra.mxu0 %v3424
  %v3470 = vpop.f32.mrf.mxu0
  %v3471 = vadd.f32 0.0, %v3470
  %v3472 = vpop.f32.mrf.mxu0
  %v3473 = vadd.f32 0.0, %v3472
  %3474 = vmatmul.bf16.gmra.mxu0 %v3427
  %v3475 = vpop.f32.mrf.mxu0
  %v3476 = vadd.f32 0.0, %v3475
  %v3477 = vpop.f32.mrf.mxu0
  %v3478 = vadd.f32 0.0, %v3477
  %3479 = vmatmul.bf16.gmra.mxu0 %v3430
  %v3480 = vpop.f32.mrf.mxu0
  %v3481 = vadd.f32 0.0, %v3480
  %v3482 = vpop.f32.mrf.mxu0
  %v3483 = vadd.f32 0.0, %v3482
  %3484 = vmatmul.bf16.gmra.mxu0 %v3433
  %v3485 = vpop.f32.mrf.mxu0
  %v3486 = vadd.f32 0.0, %v3485
  %v3487 = vpop.f32.mrf.mxu0
  %v3488 = vadd.f32 0.0, %v3487
  %3489 = vmatmul.bf16.gmra.mxu0 %v3436
  %v3490 = vpop.f32.mrf.mxu0
  %v3491 = vadd.f32 0.0, %v3490
  %v3492 = vpop.f32.mrf.mxu0
  %v3493 = vadd.f32 0.0, %v3492
  %3494 = vmatmul.bf16.gmra.mxu0 %v3439
  %v3495 = vpop.f32.mrf.mxu0
  %v3496 = vadd.f32 0.0, %v3495
  %v3497 = vpop.f32.mrf.mxu0
  %v3498 = vadd.f32 0.0, %v3497
  %3499 = vmatmul.bf16.gmra.mxu0 %v3442
  %v3500 = vpop.f32.mrf.mxu0
  %v3501 = vadd.f32 0.0, %v3500
  %v3502 = vpop.f32.mrf.mxu0
  %v3503 = vadd.f32 0.0, %v3502
  %3504 = vdwg.mxu0
  %3505 = vmatpush.bf16.msra.mxu0 0
  %3506 = vmatpush.bf16.msra.mxu0 0
  %3507 = vmatpush.bf16.msra.mxu0 0
  %3508 = vmatpush.bf16.msra.mxu0 0
  %3509 = vmatpush.bf16.msra.mxu0 0
  %3510 = vmatpush.bf16.msra.mxu0 %v3448
  %3511 = vmatpush.bf16.msra.mxu0 %v3405
  %3512 = vmatpush.bf16.msra.mxu0 %v3401
  %3513 = vmatmul.bf16.gmra.mxu0 %v3421
  %v3514 = vpop.f32.mrf.mxu0
  %v3515 = vadd.f32 0.0, %v3514
  %v3516 = vpop.f32.mrf.mxu0
  %v3517 = vadd.f32 0.0, %v3516
  %3518 = vmatmul.bf16.gmra.mxu0 %v3424
  %v3519 = vpop.f32.mrf.mxu0
  %v3520 = vadd.f32 0.0, %v3519
  %v3521 = vpop.f32.mrf.mxu0
  %v3522 = vadd.f32 0.0, %v3521
  %3523 = vmatmul.bf16.gmra.mxu0 %v3427
  %v3524 = vpop.f32.mrf.mxu0
  %v3525 = vadd.f32 0.0, %v3524
  %v3526 = vpop.f32.mrf.mxu0
  %v3527 = vadd.f32 0.0, %v3526
  %3528 = vmatmul.bf16.gmra.mxu0 %v3430
  %v3529 = vpop.f32.mrf.mxu0
  %v3530 = vadd.f32 0.0, %v3529
  %v3531 = vpop.f32.mrf.mxu0
  %v3532 = vadd.f32 0.0, %v3531
  %3533 = vmatmul.bf16.gmra.mxu0 %v3433
  %v3534 = vpop.f32.mrf.mxu0
  %v3535 = vadd.f32 0.0, %v3534
  %v3536 = vpop.f32.mrf.mxu0
  %v3537 = vadd.f32 0.0, %v3536
  %3538 = vmatmul.bf16.gmra.mxu0 %v3436
  %v3539 = vpop.f32.mrf.mxu0
  %v3540 = vadd.f32 0.0, %v3539
  %v3541 = vpop.f32.mrf.mxu0
  %v3542 = vadd.f32 0.0, %v3541
  %3543 = vmatmul.bf16.gmra.mxu0 %v3439
  %v3544 = vpop.f32.mrf.mxu0
  %v3545 = vadd.f32 0.0, %v3544
  %v3546 = vpop.f32.mrf.mxu0
  %v3547 = vadd.f32 0.0, %v3546
  %3548 = vmatmul.bf16.gmra.mxu0 %v3442
  %v3549 = vpop.f32.mrf.mxu0
  %v3550 = vadd.f32 0.0, %v3549
  %v3551 = vpop.f32.mrf.mxu0
  %v3552 = vadd.f32 0.0, %v3551
  %3553 = vdwg.mxu0
  %3554 = vmatpush.bf16.msra.mxu0 0
  %3555 = vmatpush.bf16.msra.mxu0 0
  %3556 = vmatpush.bf16.msra.mxu0 0
  %3557 = vmatpush.bf16.msra.mxu0 0
  %3558 = vmatpush.bf16.msra.mxu0 0
  %3559 = vmatpush.bf16.msra.mxu0 %v3451
  %3560 = vmatpush.bf16.msra.mxu0 %v3406
  %3561 = vmatpush.bf16.msra.mxu0 %v3402
  %3562 = vmatmul.bf16.gmra.mxu0 %v3421
  %v3563 = vpop.f32.mrf.mxu0
  %v3564 = vadd.f32 0.0, %v3563
  %v3565 = vpop.f32.mrf.mxu0
  %v3566 = vadd.f32 0.0, %v3565
  %3567 = vmatmul.bf16.gmra.mxu0 %v3424
  %v3568 = vpop.f32.mrf.mxu0
  %v3569 = vadd.f32 0.0, %v3568
  %v3570 = vpop.f32.mrf.mxu0
  %v3571 = vadd.f32 0.0, %v3570
  %3572 = vmatmul.bf16.gmra.mxu0 %v3427
  %v3573 = vpop.f32.mrf.mxu0
  %v3574 = vadd.f32 0.0, %v3573
  %v3575 = vpop.f32.mrf.mxu0
  %v3576 = vadd.f32 0.0, %v3575
  %3577 = vmatmul.bf16.gmra.mxu0 %v3430
  %v3578 = vpop.f32.mrf.mxu0
  %v3579 = vadd.f32 0.0, %v3578
  %v3580 = vpop.f32.mrf.mxu0
  %v3581 = vadd.f32 0.0, %v3580
  %3582 = vmatmul.bf16.gmra.mxu0 %v3433
  %v3583 = vpop.f32.mrf.mxu0
  %v3584 = vadd.f32 0.0, %v3583
  %v3585 = vpop.f32.mrf.mxu0
  %v3586 = vadd.f32 0.0, %v3585
  %3587 = vmatmul.bf16.gmra.mxu0 %v3436
  %v3588 = vpop.f32.mrf.mxu0
  %v3589 = vadd.f32 0.0, %v3588
  %v3590 = vpop.f32.mrf.mxu0
  %v3591 = vadd.f32 0.0, %v3590
  %3592 = vmatmul.bf16.gmra.mxu0 %v3439
  %v3593 = vpop.f32.mrf.mxu0
  %v3594 = vadd.f32 0.0, %v3593
  %v3595 = vpop.f32.mrf.mxu0
  %v3596 = vadd.f32 0.0, %v3595
  %3597 = vmatmul.bf16.gmra.mxu0 %v3442
  %v3598 = vpop.f32.mrf.mxu0
  %v3599 = vadd.f32 0.0, %v3598
  %v3600 = vpop.f32.mrf.mxu0
  %v3601 = vadd.f32 0.0, %v3600
  %3602 = vdwg.mxu0
  %3603 = vmatpush.bf16.msra.mxu0 0
  %3604 = vmatpush.bf16.msra.mxu0 0
  %3605 = vmatpush.bf16.msra.mxu0 0
  %3606 = vmatpush.bf16.msra.mxu0 0
  %3607 = vmatpush.bf16.msra.mxu0 0
  %3608 = vmatpush.bf16.msra.mxu0 %v3454
  %3609 = vmatpush.bf16.msra.mxu0 %v3407
  %3610 = vmatpush.bf16.msra.mxu0 %v3403
  %3611 = vmatmul.bf16.gmra.mxu0 %v3421
  %v3612 = vpop.f32.mrf.mxu0
  %v3613 = vadd.f32 0.0, %v3612
  %v3614 = vpop.f32.mrf.mxu0
  %v3615 = vadd.f32 0.0, %v3614
  %3616 = vmatmul.bf16.gmra.mxu0 %v3424
  %v3617 = vpop.f32.mrf.mxu0
  %v3618 = vadd.f32 0.0, %v3617
  %v3619 = vpop.f32.mrf.mxu0
  %v3620 = vadd.f32 0.0, %v3619
  %3621 = vmatmul.bf16.gmra.mxu0 %v3427
  %v3622 = vpop.f32.mrf.mxu0
  %v3623 = vadd.f32 0.0, %v3622
  %v3624 = vpop.f32.mrf.mxu0
  %v3625 = vadd.f32 0.0, %v3624
  %3626 = vmatmul.bf16.gmra.mxu0 %v3430
  %v3627 = vpop.f32.mrf.mxu0
  %v3628 = vadd.f32 0.0, %v3627
  %v3629 = vpop.f32.mrf.mxu0
  %v3630 = vadd.f32 0.0, %v3629
  %3631 = vmatmul.bf16.gmra.mxu0 %v3433
  %v3632 = vpop.f32.mrf.mxu0
  %v3633 = vadd.f32 0.0, %v3632
  %v3634 = vpop.f32.mrf.mxu0
  %v3635 = vadd.f32 0.0, %v3634
  %3636 = vmatmul.bf16.gmra.mxu0 %v3436
  %v3637 = vpop.f32.mrf.mxu0
  %v3638 = vadd.f32 0.0, %v3637
  %v3639 = vpop.f32.mrf.mxu0
  %v3640 = vadd.f32 0.0, %v3639
  %3641 = vmatmul.bf16.gmra.mxu0 %v3439
  %v3642 = vpop.f32.mrf.mxu0
  %v3643 = vadd.f32 0.0, %v3642
  %v3644 = vpop.f32.mrf.mxu0
  %v3645 = vadd.f32 0.0, %v3644
  %3646 = vmatmul.bf16.gmra.mxu0 %v3442
  %v3647 = vpop.f32.mrf.mxu0
  %v3648 = vadd.f32 0.0, %v3647
  %v3649 = vpop.f32.mrf.mxu0
  %v3650 = vadd.f32 0.0, %v3649
  %3651 = vdwg.mxu0
  %v3652 = vadd.f32 %v3108, %v3466
  %v3653 = vadd.f32 %v3109, %v3515
  %v3654 = vadd.f32 %v3110, %v3564
  %v3655 = vadd.f32 %v3111, %v3613
  %v3656 = vadd.f32 %v3112, %v3468
  %v3657 = vadd.f32 %v3113, %v3517
  %v3658 = vadd.f32 %v3114, %v3566
  %v3659 = vadd.f32 %v3115, %v3615
  %v3660 = vadd.f32 %v3116, %v3471
  %v3661 = vadd.f32 %v3117, %v3520
  %v3662 = vadd.f32 %v3118, %v3569
  %v3663 = vadd.f32 %v3119, %v3618
  %v3664 = vadd.f32 %v3120, %v3473
  %v3665 = vadd.f32 %v3121, %v3522
  %v3666 = vadd.f32 %v3122, %v3571
  %v3667 = vadd.f32 %v3123, %v3620
  %v3668 = vadd.f32 %v3124, %v3476
  %v3669 = vadd.f32 %v3125, %v3525
  %v3670 = vadd.f32 %v3126, %v3574
  %v3671 = vadd.f32 %v3127, %v3623
  %v3672 = vadd.f32 %v3128, %v3478
  %v3673 = vadd.f32 %v3129, %v3527
  %v3674 = vadd.f32 %v3130, %v3576
  %v3675 = vadd.f32 %v3131, %v3625
  %v3676 = vadd.f32 %v3132, %v3481
  %v3677 = vadd.f32 %v3133, %v3530
  %v3678 = vadd.f32 %v3134, %v3579
  %v3679 = vadd.f32 %v3135, %v3628
  %v3680 = vadd.f32 %v3136, %v3483
  %v3681 = vadd.f32 %v3137, %v3532
  %v3682 = vadd.f32 %v3138, %v3581
  %v3683 = vadd.f32 %v3139, %v3630
  %v3684 = vadd.f32 %v3140, %v3486
  %v3685 = vadd.f32 %v3141, %v3535
  %v3686 = vadd.f32 %v3142, %v3584
  %v3687 = vadd.f32 %v3143, %v3633
  %v3688 = vadd.f32 %v3144, %v3488
  %v3689 = vadd.f32 %v3145, %v3537
  %v3690 = vadd.f32 %v3146, %v3586
  %v3691 = vadd.f32 %v3147, %v3635
  %v3692 = vadd.f32 %v3148, %v3491
  %v3693 = vadd.f32 %v3149, %v3540
  %v3694 = vadd.f32 %v3150, %v3589
  %v3695 = vadd.f32 %v3151, %v3638
  %v3696 = vadd.f32 %v3152, %v3493
  %v3697 = vadd.f32 %v3153, %v3542
  %v3698 = vadd.f32 %v3154, %v3591
  %v3699 = vadd.f32 %v3155, %v3640
  %v3700 = vadd.f32 %v3156, %v3496
  %v3701 = vadd.f32 %v3157, %v3545
  %v3702 = vadd.f32 %v3158, %v3594
  %v3703 = vadd.f32 %v3159, %v3643
  %v3704 = vadd.f32 %v3160, %v3498
  %v3705 = vadd.f32 %v3161, %v3547
  %v3706 = vadd.f32 %v3162, %v3596
  %v3707 = vadd.f32 %v3163, %v3645
  %v3708 = vadd.f32 %v3164, %v3501
  %v3709 = vadd.f32 %v3165, %v3550
  %v3710 = vadd.f32 %v3166, %v3599
  %v3711 = vadd.f32 %v3167, %v3648
  %v3712 = vadd.f32 %v3168, %v3503
  %v3713 = vadd.f32 %v3169, %v3552
  %v3714 = vadd.f32 %v3170, %v3601
  %v3715 = vadd.f32 %v3171, %v3650
  %v3716 = vld [vmem:[#allocation2 + $0x4] sm:$0xff]
  %v3717 = vld [vmem:[#allocation2 + $0xc] sm:$0xff]
  %v3718 = vld [vmem:[#allocation2 + $0x14] sm:$0xf]
  %v3719 = vld [vmem:[#allocation2 + $0x1c] sm:$0xff]
  %v3720 = vld [vmem:[#allocation2 + $0x24] sm:$0xff]
  %v3721 = vld [vmem:[#allocation2 + $0x2c] sm:$0xf]
  %v3722 = vld [vmem:[#allocation2 + $0x34] sm:$0xff]
  %v3723 = vld [vmem:[#allocation2 + $0x3c] sm:$0xff]
  %v3724 = vld [vmem:[#allocation2 + $0x44] sm:$0xf]
  %v3725 = vld [vmem:[#allocation2 + $0x4c] sm:$0xff]
  %v3726 = vld [vmem:[#allocation2 + $0x54] sm:$0xff]
  %v3727 = vld [vmem:[#allocation2 + $0x5c] sm:$0xf]
  %v3728 = vld [vmem:[#allocation2 + $0x64] sm:$0x33]
  %v3729 = vld [vmem:[#allocation2 + $0x6c] sm:$0x33]
  %v3730 = vld [vmem:[#allocation2 + $0x74] sm:$0x3]
  %s3731 = scalar_lea.vmem %s3, 28
  %v3732 = vld [vmem:[%s3731] sm:$0xf]
  %3734 = vst [vmem:[#allocation1] ss:$9 sm:$0xff] %v3732
  %v3735 = vld [vmem:[#allocation1] sm:$0xff]
  %v3736 = vld [vmem:[#allocation1 + $0x9] sm:$0xff]
  %v3737 = vld [vmem:[#allocation1 + $0x12] sm:$0xff]
  %v3738 = vld [vmem:[#allocation1 + $0x1b] sm:$0xff]
  %v3739 = vpack.i.b16 %v3735, %v3735
  %v3741 = vperm.slane %v3739, 0
  %v3742 = vpack.i.b16 %v3736, %v3736
  %v3744 = vperm.slane %v3742, 0
  %v3745 = vpack.i.b16 %v3737, %v3737
  %v3747 = vperm.slane %v3745, 0
  %v3748 = vpack.i.b16 %v3738, %v3738
  %v3750 = vperm.slane %v3748, 0
  %v3751 = vunpack.c.l.bf16 %v3716
  %v3752 = vunpack.c.h.bf16 %v3716
  %v3753 = vunpack.c.l.bf16 %v3717
  %v3754 = vunpack.c.h.bf16 %v3717
  %v3755 = vunpack.c.l.bf16 %v3718
  %v3756 = vunpack.c.l.bf16 %v3719
  %v3757 = vunpack.c.h.bf16 %v3719
  %v3758 = vunpack.c.l.bf16 %v3720
  %v3759 = vunpack.c.h.bf16 %v3720
  %v3760 = vunpack.c.l.bf16 %v3721
  %v3761 = vunpack.c.l.bf16 %v3722
  %v3762 = vunpack.c.h.bf16 %v3722
  %v3763 = vunpack.c.l.bf16 %v3723
  %v3764 = vunpack.c.h.bf16 %v3723
  %v3765 = vunpack.c.l.bf16 %v3724
  %v3766 = vunpack.c.l.bf16 %v3725
  %v3767 = vunpack.c.h.bf16 %v3725
  %v3768 = vunpack.c.l.bf16 %v3726
  %v3769 = vunpack.c.h.bf16 %v3726
  %v3770 = vunpack.c.l.bf16 %v3727
  %v3771 = vunpack.c.l.bf16 %v3728
  %v3772 = vunpack.c.h.bf16 %v3728
  %v3773 = vunpack.c.l.bf16 %v3729
  %v3774 = vunpack.c.h.bf16 %v3729
  %v3775 = vunpack.c.l.bf16 %v3730
  %v3776 = vunpack.c.l.bf16 %v3741
  %v3777 = vunpack.c.l.bf16 %v3744
  %v3778 = vunpack.c.l.bf16 %v3747
  %v3779 = vunpack.c.l.bf16 %v3750
  %3784 = vrot.lane.b32.xlu0 %v3776, 16
  %v3785 = vpop.permute.xlu0 %3784
  %3786 = vrot.lane.b32.xlu0 %v3777, 16
  %v3787 = vpop.permute.xlu0 %3786
  %3788 = vrot.lane.b32.xlu0 %v3778, 16
  %v3789 = vpop.permute.xlu0 %3788
  %3790 = vrot.lane.b32.xlu0 %v3779, 16
  %v3791 = vpop.permute.xlu0 %3790
  %vm3792 = vcmask 130048
  %v3793 = vsel %vm3792, %v3785, %v3787
  %v3794 = vsel %vm3792, %v3787, %v3789
  %v3795 = vsel %vm3792, %v3789, %v3791
  %v3801 = vmul.f32 %v3751, %v3785
  %v3802 = vmul.f32 %v3752, %v3793
  %v3803 = vmul.f32 %v3753, %v3794
  %v3804 = vmul.f32 %v3754, %v3795
  %v3805 = vmul.f32 %v3755, %v3791
  %v3806 = vmul.f32 %v3756, %v3785
  %v3807 = vmul.f32 %v3757, %v3793
  %v3808 = vmul.f32 %v3758, %v3794
  %v3809 = vmul.f32 %v3759, %v3795
  %v3810 = vmul.f32 %v3760, %v3791
  %v3811 = vmul.f32 %v3761, %v3785
  %v3812 = vmul.f32 %v3762, %v3793
  %v3813 = vmul.f32 %v3763, %v3794
  %v3814 = vmul.f32 %v3764, %v3795
  %v3815 = vmul.f32 %v3765, %v3791
  %v3816 = vmul.f32 %v3766, %v3785
  %v3817 = vmul.f32 %v3767, %v3793
  %v3818 = vmul.f32 %v3768, %v3794
  %v3819 = vmul.f32 %v3769, %v3795
  %v3820 = vmul.f32 %v3770, %v3791
  %v3821 = vmul.f32 %v3771, %v3785
  %v3822 = vmul.f32 %v3772, %v3793
  %v3823 = vmul.f32 %v3773, %v3794
  %v3824 = vmul.f32 %v3774, %v3795
  %v3825 = vmul.f32 %v3775, %v3791
  %v3826 = vpack.c.bf16 %v3806, %v3801
  %v3827 = vpack.c.bf16 %v3807, %v3802
  %v3828 = vpack.c.bf16 %v3808, %v3803
  %v3829 = vpack.c.bf16 %v3809, %v3804
  %v3830 = vpack.c.bf16 %v3810, %v3805
  %v3831 = vpack.c.bf16 %v3816, %v3811
  %v3832 = vpack.c.bf16 %v3817, %v3812
  %v3833 = vpack.c.bf16 %v3818, %v3813
  %v3834 = vpack.c.bf16 %v3819, %v3814
  %v3835 = vpack.c.bf16 %v3820, %v3815
  %v3836 = vpack.c.bf16 %v3821, %v3821
  %v3837 = vpack.c.bf16 %v3822, %v3822
  %v3838 = vpack.c.bf16 %v3823, %v3823
  %v3839 = vpack.c.bf16 %v3824, %v3824
  %v3840 = vpack.c.bf16 %v3825, %v3825
  %s3841 = scalar_lea.vmem %s1, 448
  %v3842 = vld [vmem:[%s3841] sm:$0xf]
  %v3843 = vld [vmem:[%s3841 + $0x4] sm:$0xf]
  %v3844 = vld [vmem:[%s3841 + $0x8] sm:$0xf]
  %v3845 = vld [vmem:[%s3841 + $0xc] sm:$0xf]
  %v3846 = vld [vmem:[%s3841 + $0x10] sm:$0xf]
  %v3847 = vld [vmem:[%s3841 + $0x14] sm:$0xf]
  %v3848 = vld [vmem:[%s3841 + $0x18] sm:$0xf]
  %v3849 = vld [vmem:[%s3841 + $0x1c] sm:$0xf]
  %v3850 = vld [vmem:[%s3841 + $0x20] sm:$0xf]
  %v3851 = vld [vmem:[%s3841 + $0x24] sm:$0xf]
  %v3852 = vld [vmem:[%s3841 + $0x28] sm:$0xf]
  %v3853 = vld [vmem:[%s3841 + $0x2c] sm:$0xf]
  %v3854 = vld [vmem:[%s3841 + $0x30] sm:$0xf]
  %v3855 = vld [vmem:[%s3841 + $0x34] sm:$0xf]
  %v3856 = vld [vmem:[%s3841 + $0x38] sm:$0xf]
  %v3857 = vld [vmem:[%s3841 + $0x3c] sm:$0xf]
  %v3874 = vunpack.c.l.b16 %v3842
  %v3875 = vunpack.c.l.b16 %v3843
  %v3876 = vunpack.c.l.b16 %v3844
  %v3877 = vunpack.c.l.b16 %v3845
  %v3878 = vunpack.c.l.b16 %v3846
  %v3879 = vunpack.c.l.b16 %v3847
  %v3880 = vunpack.c.l.b16 %v3848
  %v3881 = vunpack.c.l.b16 %v3849
  %v3882 = vunpack.c.l.b16 %v3850
  %v3883 = vunpack.c.l.b16 %v3851
  %v3884 = vunpack.c.l.b16 %v3852
  %v3885 = vunpack.c.l.b16 %v3853
  %v3886 = vunpack.c.l.b16 %v3854
  %v3887 = vunpack.c.l.b16 %v3855
  %v3888 = vunpack.c.l.b16 %v3856
  %v3889 = vunpack.c.l.b16 %v3857
  %v3890 = vpack.c.b16 %v3875, %v3874
  %v3891 = vpack.c.b16 %v3877, %v3876
  %v3892 = vpack.c.b16 %v3879, %v3878
  %v3893 = vpack.c.b16 %v3881, %v3880
  %v3894 = vpack.c.b16 %v3883, %v3882
  %v3895 = vpack.c.b16 %v3885, %v3884
  %v3896 = vpack.c.b16 %v3887, %v3886
  %v3897 = vpack.c.b16 %v3889, %v3888
  %3913 = vrot.lane.b32.xlu0 %v3826, 112
  %v3914 = vpop.permute.xlu0 %3913
  %3915 = vrot.lane.b32.xlu0 %v3827, 112
  %v3916 = vpop.permute.xlu0 %3915
  %3917 = vrot.lane.b32.xlu0 %v3828, 112
  %v3918 = vpop.permute.xlu0 %3917
  %3919 = vrot.lane.b32.xlu0 %v3829, 112
  %v3920 = vpop.permute.xlu0 %3919
  %3921 = vrot.lane.b32.xlu0 %v3830, 112
  %v3922 = vpop.permute.xlu0 %3921
  %3923 = vrot.lane.b32.xlu0 %v3831, 112
  %v3924 = vpop.permute.xlu0 %3923
  %3925 = vrot.lane.b32.xlu0 %v3832, 112
  %v3926 = vpop.permute.xlu0 %3925
  %3927 = vrot.lane.b32.xlu0 %v3833, 112
  %v3928 = vpop.permute.xlu0 %3927
  %3929 = vrot.lane.b32.xlu0 %v3834, 112
  %v3930 = vpop.permute.xlu0 %3929
  %3931 = vrot.lane.b32.xlu0 %v3835, 112
  %v3932 = vpop.permute.xlu0 %3931
  %3933 = vrot.lane.b32.xlu0 %v3836, 112
  %v3934 = vpop.permute.xlu0 %3933
  %3935 = vrot.lane.b32.xlu0 %v3837, 112
  %v3936 = vpop.permute.xlu0 %3935
  %3937 = vrot.lane.b32.xlu0 %v3838, 112
  %v3938 = vpop.permute.xlu0 %3937
  %3939 = vrot.lane.b32.xlu0 %v3839, 112
  %v3940 = vpop.permute.xlu0 %3939
  %3941 = vrot.lane.b32.xlu0 %v3840, 112
  %v3942 = vpop.permute.xlu0 %3941
  %vm3943 = vcmask 916480
  %v3944 = vsel %vm3943, %v3914, %v3916
  %v3945 = vsel %vm3943, %v3916, %v3918
  %v3946 = vsel %vm3943, %v3918, %v3920
  %v3947 = vsel %vm3943, %v3920, %v3922
  %v3948 = vsel %vm3943, %v3924, %v3926
  %v3949 = vsel %vm3943, %v3926, %v3928
  %v3950 = vsel %vm3943, %v3928, %v3930
  %v3951 = vsel %vm3943, %v3930, %v3932
  %v3952 = vsel %vm3943, %v3934, %v3936
  %v3953 = vsel %vm3943, %v3936, %v3938
  %v3954 = vsel %vm3943, %v3938, %v3940
  %v3955 = vsel %vm3943, %v3940, %v3942
  %v3965 = vsel %vm555, %v3890, 0
  %v3968 = vsel %vm555, %v3891, 0
  %v3971 = vsel %vm555, %v3892, 0
  %v3974 = vsel %vm555, %v3893, 0
  %v3977 = vsel %vm555, %v3894, 0
  %v3980 = vsel %vm555, %v3895, 0
  %v3983 = vsel %vm555, %v3896, 0
  %v3986 = vsel %vm555, %v3897, 0
  %v3989 = vsel %vm580, %v3952, 0
  %v3992 = vsel %vm580, %v3953, 0
  %v3995 = vsel %vm580, %v3954, 0
  %v3998 = vsel %vm580, %v3955, 0
  %4000 = vmatpush.bf16.msra.mxu0 0
  %4001 = vmatpush.bf16.msra.mxu0 0
  %4002 = vmatpush.bf16.msra.mxu0 0
  %4003 = vmatpush.bf16.msra.mxu0 0
  %4004 = vmatpush.bf16.msra.mxu0 0
  %4005 = vmatpush.bf16.msra.mxu0 %v3989
  %4006 = vmatpush.bf16.msra.mxu0 %v3948
  %4007 = vmatpush.bf16.msra.mxu0 %v3944
  %4008 = vmatmul.bf16.gmra.mxu0 %v3965
  %v4009 = vpop.f32.mrf.mxu0
  %v4010 = vadd.f32 0.0, %v4009
  %v4011 = vpop.f32.mrf.mxu0
  %v4012 = vadd.f32 0.0, %v4011
  %4013 = vmatmul.bf16.gmra.mxu0 %v3968
  %v4014 = vpop.f32.mrf.mxu0
  %v4015 = vadd.f32 0.0, %v4014
  %v4016 = vpop.f32.mrf.mxu0
  %v4017 = vadd.f32 0.0, %v4016
  %4018 = vmatmul.bf16.gmra.mxu0 %v3971
  %v4019 = vpop.f32.mrf.mxu0
  %v4020 = vadd.f32 0.0, %v4019
  %v4021 = vpop.f32.mrf.mxu0
  %v4022 = vadd.f32 0.0, %v4021
  %4023 = vmatmul.bf16.gmra.mxu0 %v3974
  %v4024 = vpop.f32.mrf.mxu0
  %v4025 = vadd.f32 0.0, %v4024
  %v4026 = vpop.f32.mrf.mxu0
  %v4027 = vadd.f32 0.0, %v4026
  %4028 = vmatmul.bf16.gmra.mxu0 %v3977
  %v4029 = vpop.f32.mrf.mxu0
  %v4030 = vadd.f32 0.0, %v4029
  %v4031 = vpop.f32.mrf.mxu0
  %v4032 = vadd.f32 0.0, %v4031
  %4033 = vmatmul.bf16.gmra.mxu0 %v3980
  %v4034 = vpop.f32.mrf.mxu0
  %v4035 = vadd.f32 0.0, %v4034
  %v4036 = vpop.f32.mrf.mxu0
  %v4037 = vadd.f32 0.0, %v4036
  %4038 = vmatmul.bf16.gmra.mxu0 %v3983
  %v4039 = vpop.f32.mrf.mxu0
  %v4040 = vadd.f32 0.0, %v4039
  %v4041 = vpop.f32.mrf.mxu0
  %v4042 = vadd.f32 0.0, %v4041
  %4043 = vmatmul.bf16.gmra.mxu0 %v3986
  %v4044 = vpop.f32.mrf.mxu0
  %v4045 = vadd.f32 0.0, %v4044
  %v4046 = vpop.f32.mrf.mxu0
  %v4047 = vadd.f32 0.0, %v4046
  %4048 = vdwg.mxu0
  %4049 = vmatpush.bf16.msra.mxu0 0
  %4050 = vmatpush.bf16.msra.mxu0 0
  %4051 = vmatpush.bf16.msra.mxu0 0
  %4052 = vmatpush.bf16.msra.mxu0 0
  %4053 = vmatpush.bf16.msra.mxu0 0
  %4054 = vmatpush.bf16.msra.mxu0 %v3992
  %4055 = vmatpush.bf16.msra.mxu0 %v3949
  %4056 = vmatpush.bf16.msra.mxu0 %v3945
  %4057 = vmatmul.bf16.gmra.mxu0 %v3965
  %v4058 = vpop.f32.mrf.mxu0
  %v4059 = vadd.f32 0.0, %v4058
  %v4060 = vpop.f32.mrf.mxu0
  %v4061 = vadd.f32 0.0, %v4060
  %4062 = vmatmul.bf16.gmra.mxu0 %v3968
  %v4063 = vpop.f32.mrf.mxu0
  %v4064 = vadd.f32 0.0, %v4063
  %v4065 = vpop.f32.mrf.mxu0
  %v4066 = vadd.f32 0.0, %v4065
  %4067 = vmatmul.bf16.gmra.mxu0 %v3971
  %v4068 = vpop.f32.mrf.mxu0
  %v4069 = vadd.f32 0.0, %v4068
  %v4070 = vpop.f32.mrf.mxu0
  %v4071 = vadd.f32 0.0, %v4070
  %4072 = vmatmul.bf16.gmra.mxu0 %v3974
  %v4073 = vpop.f32.mrf.mxu0
  %v4074 = vadd.f32 0.0, %v4073
  %v4075 = vpop.f32.mrf.mxu0
  %v4076 = vadd.f32 0.0, %v4075
  %4077 = vmatmul.bf16.gmra.mxu0 %v3977
  %v4078 = vpop.f32.mrf.mxu0
  %v4079 = vadd.f32 0.0, %v4078
  %v4080 = vpop.f32.mrf.mxu0
  %v4081 = vadd.f32 0.0, %v4080
  %4082 = vmatmul.bf16.gmra.mxu0 %v3980
  %v4083 = vpop.f32.mrf.mxu0
  %v4084 = vadd.f32 0.0, %v4083
  %v4085 = vpop.f32.mrf.mxu0
  %v4086 = vadd.f32 0.0, %v4085
  %4087 = vmatmul.bf16.gmra.mxu0 %v3983
  %v4088 = vpop.f32.mrf.mxu0
  %v4089 = vadd.f32 0.0, %v4088
  %v4090 = vpop.f32.mrf.mxu0
  %v4091 = vadd.f32 0.0, %v4090
  %4092 = vmatmul.bf16.gmra.mxu0 %v3986
  %v4093 = vpop.f32.mrf.mxu0
  %v4094 = vadd.f32 0.0, %v4093
  %v4095 = vpop.f32.mrf.mxu0
  %v4096 = vadd.f32 0.0, %v4095
  %4097 = vdwg.mxu0
  %4098 = vmatpush.bf16.msra.mxu0 0
  %4099 = vmatpush.bf16.msra.mxu0 0
  %4100 = vmatpush.bf16.msra.mxu0 0
  %4101 = vmatpush.bf16.msra.mxu0 0
  %4102 = vmatpush.bf16.msra.mxu0 0
  %4103 = vmatpush.bf16.msra.mxu0 %v3995
  %4104 = vmatpush.bf16.msra.mxu0 %v3950
  %4105 = vmatpush.bf16.msra.mxu0 %v3946
  %4106 = vmatmul.bf16.gmra.mxu0 %v3965
  %v4107 = vpop.f32.mrf.mxu0
  %v4108 = vadd.f32 0.0, %v4107
  %v4109 = vpop.f32.mrf.mxu0
  %v4110 = vadd.f32 0.0, %v4109
  %4111 = vmatmul.bf16.gmra.mxu0 %v3968
  %v4112 = vpop.f32.mrf.mxu0
  %v4113 = vadd.f32 0.0, %v4112
  %v4114 = vpop.f32.mrf.mxu0
  %v4115 = vadd.f32 0.0, %v4114
  %4116 = vmatmul.bf16.gmra.mxu0 %v3971
  %v4117 = vpop.f32.mrf.mxu0
  %v4118 = vadd.f32 0.0, %v4117
  %v4119 = vpop.f32.mrf.mxu0
  %v4120 = vadd.f32 0.0, %v4119
  %4121 = vmatmul.bf16.gmra.mxu0 %v3974
  %v4122 = vpop.f32.mrf.mxu0
  %v4123 = vadd.f32 0.0, %v4122
  %v4124 = vpop.f32.mrf.mxu0
  %v4125 = vadd.f32 0.0, %v4124
  %4126 = vmatmul.bf16.gmra.mxu0 %v3977
  %v4127 = vpop.f32.mrf.mxu0
  %v4128 = vadd.f32 0.0, %v4127
  %v4129 = vpop.f32.mrf.mxu0
  %v4130 = vadd.f32 0.0, %v4129
  %4131 = vmatmul.bf16.gmra.mxu0 %v3980
  %v4132 = vpop.f32.mrf.mxu0
  %v4133 = vadd.f32 0.0, %v4132
  %v4134 = vpop.f32.mrf.mxu0
  %v4135 = vadd.f32 0.0, %v4134
  %4136 = vmatmul.bf16.gmra.mxu0 %v3983
  %v4137 = vpop.f32.mrf.mxu0
  %v4138 = vadd.f32 0.0, %v4137
  %v4139 = vpop.f32.mrf.mxu0
  %v4140 = vadd.f32 0.0, %v4139
  %4141 = vmatmul.bf16.gmra.mxu0 %v3986
  %v4142 = vpop.f32.mrf.mxu0
  %v4143 = vadd.f32 0.0, %v4142
  %v4144 = vpop.f32.mrf.mxu0
  %v4145 = vadd.f32 0.0, %v4144
  %4146 = vdwg.mxu0
  %4147 = vmatpush.bf16.msra.mxu0 0
  %4148 = vmatpush.bf16.msra.mxu0 0
  %4149 = vmatpush.bf16.msra.mxu0 0
  %4150 = vmatpush.bf16.msra.mxu0 0
  %4151 = vmatpush.bf16.msra.mxu0 0
  %4152 = vmatpush.bf16.msra.mxu0 %v3998
  %4153 = vmatpush.bf16.msra.mxu0 %v3951
  %4154 = vmatpush.bf16.msra.mxu0 %v3947
  %4155 = vmatmul.bf16.gmra.mxu0 %v3965
  %v4156 = vpop.f32.mrf.mxu0
  %v4157 = vadd.f32 0.0, %v4156
  %v4158 = vpop.f32.mrf.mxu0
  %v4159 = vadd.f32 0.0, %v4158
  %4160 = vmatmul.bf16.gmra.mxu0 %v3968
  %v4161 = vpop.f32.mrf.mxu0
  %v4162 = vadd.f32 0.0, %v4161
  %v4163 = vpop.f32.mrf.mxu0
  %v4164 = vadd.f32 0.0, %v4163
  %4165 = vmatmul.bf16.gmra.mxu0 %v3971
  %v4166 = vpop.f32.mrf.mxu0
  %v4167 = vadd.f32 0.0, %v4166
  %v4168 = vpop.f32.mrf.mxu0
  %v4169 = vadd.f32 0.0, %v4168
  %4170 = vmatmul.bf16.gmra.mxu0 %v3974
  %v4171 = vpop.f32.mrf.mxu0
  %v4172 = vadd.f32 0.0, %v4171
  %v4173 = vpop.f32.mrf.mxu0
  %v4174 = vadd.f32 0.0, %v4173
  %4175 = vmatmul.bf16.gmra.mxu0 %v3977
  %v4176 = vpop.f32.mrf.mxu0
  %v4177 = vadd.f32 0.0, %v4176
  %v4178 = vpop.f32.mrf.mxu0
  %v4179 = vadd.f32 0.0, %v4178
  %4180 = vmatmul.bf16.gmra.mxu0 %v3980
  %v4181 = vpop.f32.mrf.mxu0
  %v4182 = vadd.f32 0.0, %v4181
  %v4183 = vpop.f32.mrf.mxu0
  %v4184 = vadd.f32 0.0, %v4183
  %4185 = vmatmul.bf16.gmra.mxu0 %v3983
  %v4186 = vpop.f32.mrf.mxu0
  %v4187 = vadd.f32 0.0, %v4186
  %v4188 = vpop.f32.mrf.mxu0
  %v4189 = vadd.f32 0.0, %v4188
  %4190 = vmatmul.bf16.gmra.mxu0 %v3986
  %v4191 = vpop.f32.mrf.mxu0
  %v4192 = vadd.f32 0.0, %v4191
  %v4193 = vpop.f32.mrf.mxu0
  %v4194 = vadd.f32 0.0, %v4193
  %4195 = vdwg.mxu0
  %v4196 = vadd.f32 %v3652, %v4010
  %v4197 = vadd.f32 %v3653, %v4059
  %v4198 = vadd.f32 %v3654, %v4108
  %v4199 = vadd.f32 %v3655, %v4157
  %v4200 = vadd.f32 %v3656, %v4012
  %v4201 = vadd.f32 %v3657, %v4061
  %v4202 = vadd.f32 %v3658, %v4110
  %v4203 = vadd.f32 %v3659, %v4159
  %v4204 = vadd.f32 %v3660, %v4015
  %v4205 = vadd.f32 %v3661, %v4064
  %v4206 = vadd.f32 %v3662, %v4113
  %v4207 = vadd.f32 %v3663, %v4162
  %v4208 = vadd.f32 %v3664, %v4017
  %v4209 = vadd.f32 %v3665, %v4066
  %v4210 = vadd.f32 %v3666, %v4115
  %v4211 = vadd.f32 %v3667, %v4164
  %v4212 = vadd.f32 %v3668, %v4020
  %v4213 = vadd.f32 %v3669, %v4069
  %v4214 = vadd.f32 %v3670, %v4118
  %v4215 = vadd.f32 %v3671, %v4167
  %v4216 = vadd.f32 %v3672, %v4022
  %v4217 = vadd.f32 %v3673, %v4071
  %v4218 = vadd.f32 %v3674, %v4120
  %v4219 = vadd.f32 %v3675, %v4169
  %v4220 = vadd.f32 %v3676, %v4025
  %v4221 = vadd.f32 %v3677, %v4074
  %v4222 = vadd.f32 %v3678, %v4123
  %v4223 = vadd.f32 %v3679, %v4172
  %v4224 = vadd.f32 %v3680, %v4027
  %v4225 = vadd.f32 %v3681, %v4076
  %v4226 = vadd.f32 %v3682, %v4125
  %v4227 = vadd.f32 %v3683, %v4174
  %v4228 = vadd.f32 %v3684, %v4030
  %v4229 = vadd.f32 %v3685, %v4079
  %v4230 = vadd.f32 %v3686, %v4128
  %v4231 = vadd.f32 %v3687, %v4177
  %v4232 = vadd.f32 %v3688, %v4032
  %v4233 = vadd.f32 %v3689, %v4081
  %v4234 = vadd.f32 %v3690, %v4130
  %v4235 = vadd.f32 %v3691, %v4179
  %v4236 = vadd.f32 %v3692, %v4035
  %v4237 = vadd.f32 %v3693, %v4084
  %v4238 = vadd.f32 %v3694, %v4133
  %v4239 = vadd.f32 %v3695, %v4182
  %v4240 = vadd.f32 %v3696, %v4037
  %v4241 = vadd.f32 %v3697, %v4086
  %v4242 = vadd.f32 %v3698, %v4135
  %v4243 = vadd.f32 %v3699, %v4184
  %v4244 = vadd.f32 %v3700, %v4040
  %v4245 = vadd.f32 %v3701, %v4089
  %v4246 = vadd.f32 %v3702, %v4138
  %v4247 = vadd.f32 %v3703, %v4187
  %v4248 = vadd.f32 %v3704, %v4042
  %v4249 = vadd.f32 %v3705, %v4091
  %v4250 = vadd.f32 %v3706, %v4140
  %v4251 = vadd.f32 %v3707, %v4189
  %v4252 = vadd.f32 %v3708, %v4045
  %v4253 = vadd.f32 %v3709, %v4094
  %v4254 = vadd.f32 %v3710, %v4143
  %v4255 = vadd.f32 %v3711, %v4192
  %v4256 = vadd.f32 %v3712, %v4047
  %v4257 = vadd.f32 %v3713, %v4096
  %v4258 = vadd.f32 %v3714, %v4145
  %v4259 = vadd.f32 %v3715, %v4194
  %v4260 = vld [vmem:[#allocation2 + $0x4] sm:$0xff]
  %v4261 = vld [vmem:[#allocation2 + $0xc] sm:$0xff]
  %v4262 = vld [vmem:[#allocation2 + $0x14] sm:$0xf]
  %v4263 = vld [vmem:[#allocation2 + $0x1c] sm:$0xff]
  %v4264 = vld [vmem:[#allocation2 + $0x24] sm:$0xff]
  %v4265 = vld [vmem:[#allocation2 + $0x2c] sm:$0xf]
  %v4266 = vld [vmem:[#allocation2 + $0x34] sm:$0xff]
  %v4267 = vld [vmem:[#allocation2 + $0x3c] sm:$0xff]
  %v4268 = vld [vmem:[#allocation2 + $0x44] sm:$0xf]
  %v4269 = vld [vmem:[#allocation2 + $0x4c] sm:$0xff]
  %v4270 = vld [vmem:[#allocation2 + $0x54] sm:$0xff]
  %v4271 = vld [vmem:[#allocation2 + $0x5c] sm:$0xf]
  %v4272 = vld [vmem:[#allocation2 + $0x64] sm:$0x33]
  %v4273 = vld [vmem:[#allocation2 + $0x6c] sm:$0x33]
  %v4274 = vld [vmem:[#allocation2 + $0x74] sm:$0x3]
  %s4275 = scalar_lea.vmem %s3, 32
  %v4276 = vld [vmem:[%s4275] sm:$0xf]
  %4278 = vst [vmem:[#allocation1] ss:$9 sm:$0xff] %v4276
  %v4279 = vld [vmem:[#allocation1] sm:$0xff]
  %v4280 = vld [vmem:[#allocation1 + $0x9] sm:$0xff]
  %v4281 = vld [vmem:[#allocation1 + $0x12] sm:$0xff]
  %v4282 = vld [vmem:[#allocation1 + $0x1b] sm:$0xff]
  %v4283 = vpack.i.b16 %v4279, %v4279
  %v4285 = vperm.slane %v4283, 0
  %v4286 = vpack.i.b16 %v4280, %v4280
  %v4288 = vperm.slane %v4286, 0
  %v4289 = vpack.i.b16 %v4281, %v4281
  %v4291 = vperm.slane %v4289, 0
  %v4292 = vpack.i.b16 %v4282, %v4282
  %v4294 = vperm.slane %v4292, 0
  %v4295 = vunpack.c.l.bf16 %v4260
  %v4296 = vunpack.c.h.bf16 %v4260
  %v4297 = vunpack.c.l.bf16 %v4261
  %v4298 = vunpack.c.h.bf16 %v4261
  %v4299 = vunpack.c.l.bf16 %v4262
  %v4300 = vunpack.c.l.bf16 %v4263
  %v4301 = vunpack.c.h.bf16 %v4263
  %v4302 = vunpack.c.l.bf16 %v4264
  %v4303 = vunpack.c.h.bf16 %v4264
  %v4304 = vunpack.c.l.bf16 %v4265
  %v4305 = vunpack.c.l.bf16 %v4266
  %v4306 = vunpack.c.h.bf16 %v4266
  %v4307 = vunpack.c.l.bf16 %v4267
  %v4308 = vunpack.c.h.bf16 %v4267
  %v4309 = vunpack.c.l.bf16 %v4268
  %v4310 = vunpack.c.l.bf16 %v4269
  %v4311 = vunpack.c.h.bf16 %v4269
  %v4312 = vunpack.c.l.bf16 %v4270
  %v4313 = vunpack.c.h.bf16 %v4270
  %v4314 = vunpack.c.l.bf16 %v4271
  %v4315 = vunpack.c.l.bf16 %v4272
  %v4316 = vunpack.c.h.bf16 %v4272
  %v4317 = vunpack.c.l.bf16 %v4273
  %v4318 = vunpack.c.h.bf16 %v4273
  %v4319 = vunpack.c.l.bf16 %v4274
  %v4320 = vunpack.c.l.bf16 %v4285
  %v4321 = vunpack.c.l.bf16 %v4288
  %v4322 = vunpack.c.l.bf16 %v4291
  %v4323 = vunpack.c.l.bf16 %v4294
  %4328 = vrot.lane.b32.xlu0 %v4320, 17
  %v4329 = vpop.permute.xlu0 %4328
  %4330 = vrot.lane.b32.xlu0 %v4321, 17
  %v4331 = vpop.permute.xlu0 %4330
  %4332 = vrot.lane.b32.xlu0 %v4322, 17
  %v4333 = vpop.permute.xlu0 %4332
  %4334 = vrot.lane.b32.xlu0 %v4323, 17
  %v4335 = vpop.permute.xlu0 %4334
  %vm4336 = vcmask 138240
  %v4337 = vsel %vm4336, %v4329, %v4331
  %v4338 = vsel %vm4336, %v4331, %v4333
  %v4339 = vsel %vm4336, %v4333, %v4335
  %v4345 = vmul.f32 %v4295, %v4329
  %v4346 = vmul.f32 %v4296, %v4337
  %v4347 = vmul.f32 %v4297, %v4338
  %v4348 = vmul.f32 %v4298, %v4339
  %v4349 = vmul.f32 %v4299, %v4335
  %v4350 = vmul.f32 %v4300, %v4329
  %v4351 = vmul.f32 %v4301, %v4337
  %v4352 = vmul.f32 %v4302, %v4338
  %v4353 = vmul.f32 %v4303, %v4339
  %v4354 = vmul.f32 %v4304, %v4335
  %v4355 = vmul.f32 %v4305, %v4329
  %v4356 = vmul.f32 %v4306, %v4337
  %v4357 = vmul.f32 %v4307, %v4338
  %v4358 = vmul.f32 %v4308, %v4339
  %v4359 = vmul.f32 %v4309, %v4335
  %v4360 = vmul.f32 %v4310, %v4329
  %v4361 = vmul.f32 %v4311, %v4337
  %v4362 = vmul.f32 %v4312, %v4338
  %v4363 = vmul.f32 %v4313, %v4339
  %v4364 = vmul.f32 %v4314, %v4335
  %v4365 = vmul.f32 %v4315, %v4329
  %v4366 = vmul.f32 %v4316, %v4337
  %v4367 = vmul.f32 %v4317, %v4338
  %v4368 = vmul.f32 %v4318, %v4339
  %v4369 = vmul.f32 %v4319, %v4335
  %v4370 = vpack.c.bf16 %v4350, %v4345
  %v4371 = vpack.c.bf16 %v4351, %v4346
  %v4372 = vpack.c.bf16 %v4352, %v4347
  %v4373 = vpack.c.bf16 %v4353, %v4348
  %v4374 = vpack.c.bf16 %v4354, %v4349
  %v4375 = vpack.c.bf16 %v4360, %v4355
  %v4376 = vpack.c.bf16 %v4361, %v4356
  %v4377 = vpack.c.bf16 %v4362, %v4357
  %v4378 = vpack.c.bf16 %v4363, %v4358
  %v4379 = vpack.c.bf16 %v4364, %v4359
  %v4380 = vpack.c.bf16 %v4365, %v4365
  %v4381 = vpack.c.bf16 %v4366, %v4366
  %v4382 = vpack.c.bf16 %v4367, %v4367
  %v4383 = vpack.c.bf16 %v4368, %v4368
  %v4384 = vpack.c.bf16 %v4369, %v4369
  %s4385 = scalar_lea.vmem %s1, 512
  %v4386 = vld [vmem:[%s4385] sm:$0xf]
  %v4387 = vld [vmem:[%s4385 + $0x4] sm:$0xf]
  %v4388 = vld [vmem:[%s4385 + $0x8] sm:$0xf]
  %v4389 = vld [vmem:[%s4385 + $0xc] sm:$0xf]
  %v4390 = vld [vmem:[%s4385 + $0x10] sm:$0xf]
  %v4391 = vld [vmem:[%s4385 + $0x14] sm:$0xf]
  %v4392 = vld [vmem:[%s4385 + $0x18] sm:$0xf]
  %v4393 = vld [vmem:[%s4385 + $0x1c] sm:$0xf]
  %v4394 = vld [vmem:[%s4385 + $0x20] sm:$0xf]
  %v4395 = vld [vmem:[%s4385 + $0x24] sm:$0xf]
  %v4396 = vld [vmem:[%s4385 + $0x28] sm:$0xf]
  %v4397 = vld [vmem:[%s4385 + $0x2c] sm:$0xf]
  %v4398 = vld [vmem:[%s4385 + $0x30] sm:$0xf]
  %v4399 = vld [vmem:[%s4385 + $0x34] sm:$0xf]
  %v4400 = vld [vmem:[%s4385 + $0x38] sm:$0xf]
  %v4401 = vld [vmem:[%s4385 + $0x3c] sm:$0xf]
  %v4418 = vunpack.c.l.b16 %v4386
  %v4419 = vunpack.c.l.b16 %v4387
  %v4420 = vunpack.c.l.b16 %v4388
  %v4421 = vunpack.c.l.b16 %v4389
  %v4422 = vunpack.c.l.b16 %v4390
  %v4423 = vunpack.c.l.b16 %v4391
  %v4424 = vunpack.c.l.b16 %v4392
  %v4425 = vunpack.c.l.b16 %v4393
  %v4426 = vunpack.c.l.b16 %v4394
  %v4427 = vunpack.c.l.b16 %v4395
  %v4428 = vunpack.c.l.b16 %v4396
  %v4429 = vunpack.c.l.b16 %v4397
  %v4430 = vunpack.c.l.b16 %v4398
  %v4431 = vunpack.c.l.b16 %v4399
  %v4432 = vunpack.c.l.b16 %v4400
  %v4433 = vunpack.c.l.b16 %v4401
  %v4434 = vpack.c.b16 %v4419, %v4418
  %v4435 = vpack.c.b16 %v4421, %v4420
  %v4436 = vpack.c.b16 %v4423, %v4422
  %v4437 = vpack.c.b16 %v4425, %v4424
  %v4438 = vpack.c.b16 %v4427, %v4426
  %v4439 = vpack.c.b16 %v4429, %v4428
  %v4440 = vpack.c.b16 %v4431, %v4430
  %v4441 = vpack.c.b16 %v4433, %v4432
  %4457 = vrot.lane.b32.xlu0 %v4370, 111
  %v4458 = vpop.permute.xlu0 %4457
  %4459 = vrot.lane.b32.xlu0 %v4371, 111
  %v4460 = vpop.permute.xlu0 %4459
  %4461 = vrot.lane.b32.xlu0 %v4372, 111
  %v4462 = vpop.permute.xlu0 %4461
  %4463 = vrot.lane.b32.xlu0 %v4373, 111
  %v4464 = vpop.permute.xlu0 %4463
  %4465 = vrot.lane.b32.xlu0 %v4374, 111
  %v4466 = vpop.permute.xlu0 %4465
  %4467 = vrot.lane.b32.xlu0 %v4375, 111
  %v4468 = vpop.permute.xlu0 %4467
  %4469 = vrot.lane.b32.xlu0 %v4376, 111
  %v4470 = vpop.permute.xlu0 %4469
  %4471 = vrot.lane.b32.xlu0 %v4377, 111
  %v4472 = vpop.permute.xlu0 %4471
  %4473 = vrot.lane.b32.xlu0 %v4378, 111
  %v4474 = vpop.permute.xlu0 %4473
  %4475 = vrot.lane.b32.xlu0 %v4379, 111
  %v4476 = vpop.permute.xlu0 %4475
  %4477 = vrot.lane.b32.xlu0 %v4380, 111
  %v4478 = vpop.permute.xlu0 %4477
  %4479 = vrot.lane.b32.xlu0 %v4381, 111
  %v4480 = vpop.permute.xlu0 %4479
  %4481 = vrot.lane.b32.xlu0 %v4382, 111
  %v4482 = vpop.permute.xlu0 %4481
  %4483 = vrot.lane.b32.xlu0 %v4383, 111
  %v4484 = vpop.permute.xlu0 %4483
  %4485 = vrot.lane.b32.xlu0 %v4384, 111
  %v4486 = vpop.permute.xlu0 %4485
  %vm4487 = vcmask 908288
  %v4488 = vsel %vm4487, %v4458, %v4460
  %v4489 = vsel %vm4487, %v4460, %v4462
  %v4490 = vsel %vm4487, %v4462, %v4464
  %v4491 = vsel %vm4487, %v4464, %v4466
  %v4492 = vsel %vm4487, %v4468, %v4470
  %v4493 = vsel %vm4487, %v4470, %v4472
  %v4494 = vsel %vm4487, %v4472, %v4474
  %v4495 = vsel %vm4487, %v4474, %v4476
  %v4496 = vsel %vm4487, %v4478, %v4480
  %v4497 = vsel %vm4487, %v4480, %v4482
  %v4498 = vsel %vm4487, %v4482, %v4484
  %v4499 = vsel %vm4487, %v4484, %v4486
  %v4509 = vsel %vm555, %v4434, 0
  %v4512 = vsel %vm555, %v4435, 0
  %v4515 = vsel %vm555, %v4436, 0
  %v4518 = vsel %vm555, %v4437, 0
  %v4521 = vsel %vm555, %v4438, 0
  %v4524 = vsel %vm555, %v4439, 0
  %v4527 = vsel %vm555, %v4440, 0
  %v4530 = vsel %vm555, %v4441, 0
  %v4533 = vsel %vm580, %v4496, 0
  %v4536 = vsel %vm580, %v4497, 0
  %v4539 = vsel %vm580, %v4498, 0
  %v4542 = vsel %vm580, %v4499, 0
  %4544 = vmatpush.bf16.msra.mxu0 0
  %4545 = vmatpush.bf16.msra.mxu0 0
  %4546 = vmatpush.bf16.msra.mxu0 0
  %4547 = vmatpush.bf16.msra.mxu0 0
  %4548 = vmatpush.bf16.msra.mxu0 0
  %4549 = vmatpush.bf16.msra.mxu0 %v4533
  %4550 = vmatpush.bf16.msra.mxu0 %v4492
  %4551 = vmatpush.bf16.msra.mxu0 %v4488
  %4552 = vmatmul.bf16.gmra.mxu0 %v4509
  %v4553 = vpop.f32.mrf.mxu0
  %v4554 = vadd.f32 0.0, %v4553
  %v4555 = vpop.f32.mrf.mxu0
  %v4556 = vadd.f32 0.0, %v4555
  %4557 = vmatmul.bf16.gmra.mxu0 %v4512
  %v4558 = vpop.f32.mrf.mxu0
  %v4559 = vadd.f32 0.0, %v4558
  %v4560 = vpop.f32.mrf.mxu0
  %v4561 = vadd.f32 0.0, %v4560
  %4562 = vmatmul.bf16.gmra.mxu0 %v4515
  %v4563 = vpop.f32.mrf.mxu0
  %v4564 = vadd.f32 0.0, %v4563
  %v4565 = vpop.f32.mrf.mxu0
  %v4566 = vadd.f32 0.0, %v4565
  %4567 = vmatmul.bf16.gmra.mxu0 %v4518
  %v4568 = vpop.f32.mrf.mxu0
  %v4569 = vadd.f32 0.0, %v4568
  %v4570 = vpop.f32.mrf.mxu0
  %v4571 = vadd.f32 0.0, %v4570
  %4572 = vmatmul.bf16.gmra.mxu0 %v4521
  %v4573 = vpop.f32.mrf.mxu0
  %v4574 = vadd.f32 0.0, %v4573
  %v4575 = vpop.f32.mrf.mxu0
  %v4576 = vadd.f32 0.0, %v4575
  %4577 = vmatmul.bf16.gmra.mxu0 %v4524
  %v4578 = vpop.f32.mrf.mxu0
  %v4579 = vadd.f32 0.0, %v4578
  %v4580 = vpop.f32.mrf.mxu0
  %v4581 = vadd.f32 0.0, %v4580
  %4582 = vmatmul.bf16.gmra.mxu0 %v4527
  %v4583 = vpop.f32.mrf.mxu0
  %v4584 = vadd.f32 0.0, %v4583
  %v4585 = vpop.f32.mrf.mxu0
  %v4586 = vadd.f32 0.0, %v4585
  %4587 = vmatmul.bf16.gmra.mxu0 %v4530
  %v4588 = vpop.f32.mrf.mxu0
  %v4589 = vadd.f32 0.0, %v4588
  %v4590 = vpop.f32.mrf.mxu0
  %v4591 = vadd.f32 0.0, %v4590
  %4592 = vdwg.mxu0
  %4593 = vmatpush.bf16.msra.mxu0 0
  %4594 = vmatpush.bf16.msra.mxu0 0
  %4595 = vmatpush.bf16.msra.mxu0 0
  %4596 = vmatpush.bf16.msra.mxu0 0
  %4597 = vmatpush.bf16.msra.mxu0 0
  %4598 = vmatpush.bf16.msra.mxu0 %v4536
  %4599 = vmatpush.bf16.msra.mxu0 %v4493
  %4600 = vmatpush.bf16.msra.mxu0 %v4489
  %4601 = vmatmul.bf16.gmra.mxu0 %v4509
  %v4602 = vpop.f32.mrf.mxu0
  %v4603 = vadd.f32 0.0, %v4602
  %v4604 = vpop.f32.mrf.mxu0
  %v4605 = vadd.f32 0.0, %v4604
  %4606 = vmatmul.bf16.gmra.mxu0 %v4512
  %v4607 = vpop.f32.mrf.mxu0
  %v4608 = vadd.f32 0.0, %v4607
  %v4609 = vpop.f32.mrf.mxu0
  %v4610 = vadd.f32 0.0, %v4609
  %4611 = vmatmul.bf16.gmra.mxu0 %v4515
  %v4612 = vpop.f32.mrf.mxu0
  %v4613 = vadd.f32 0.0, %v4612
  %v4614 = vpop.f32.mrf.mxu0
  %v4615 = vadd.f32 0.0, %v4614
  %4616 = vmatmul.bf16.gmra.mxu0 %v4518
  %v4617 = vpop.f32.mrf.mxu0
  %v4618 = vadd.f32 0.0, %v4617
  %v4619 = vpop.f32.mrf.mxu0
  %v4620 = vadd.f32 0.0, %v4619
  %4621 = vmatmul.bf16.gmra.mxu0 %v4521
  %v4622 = vpop.f32.mrf.mxu0
  %v4623 = vadd.f32 0.0, %v4622
  %v4624 = vpop.f32.mrf.mxu0
  %v4625 = vadd.f32 0.0, %v4624
  %4626 = vmatmul.bf16.gmra.mxu0 %v4524
  %v4627 = vpop.f32.mrf.mxu0
  %v4628 = vadd.f32 0.0, %v4627
  %v4629 = vpop.f32.mrf.mxu0
  %v4630 = vadd.f32 0.0, %v4629
  %4631 = vmatmul.bf16.gmra.mxu0 %v4527
  %v4632 = vpop.f32.mrf.mxu0
  %v4633 = vadd.f32 0.0, %v4632
  %v4634 = vpop.f32.mrf.mxu0
  %v4635 = vadd.f32 0.0, %v4634
  %4636 = vmatmul.bf16.gmra.mxu0 %v4530
  %v4637 = vpop.f32.mrf.mxu0
  %v4638 = vadd.f32 0.0, %v4637
  %v4639 = vpop.f32.mrf.mxu0
  %v4640 = vadd.f32 0.0, %v4639
  %4641 = vdwg.mxu0
  %4642 = vmatpush.bf16.msra.mxu0 0
  %4643 = vmatpush.bf16.msra.mxu0 0
  %4644 = vmatpush.bf16.msra.mxu0 0
  %4645 = vmatpush.bf16.msra.mxu0 0
  %4646 = vmatpush.bf16.msra.mxu0 0
  %4647 = vmatpush.bf16.msra.mxu0 %v4539
  %4648 = vmatpush.bf16.msra.mxu0 %v4494
  %4649 = vmatpush.bf16.msra.mxu0 %v4490
  %4650 = vmatmul.bf16.gmra.mxu0 %v4509
  %v4651 = vpop.f32.mrf.mxu0
  %v4652 = vadd.f32 0.0, %v4651
  %v4653 = vpop.f32.mrf.mxu0
  %v4654 = vadd.f32 0.0, %v4653
  %4655 = vmatmul.bf16.gmra.mxu0 %v4512
  %v4656 = vpop.f32.mrf.mxu0
  %v4657 = vadd.f32 0.0, %v4656
  %v4658 = vpop.f32.mrf.mxu0
  %v4659 = vadd.f32 0.0, %v4658
  %4660 = vmatmul.bf16.gmra.mxu0 %v4515
  %v4661 = vpop.f32.mrf.mxu0
  %v4662 = vadd.f32 0.0, %v4661
  %v4663 = vpop.f32.mrf.mxu0
  %v4664 = vadd.f32 0.0, %v4663
  %4665 = vmatmul.bf16.gmra.mxu0 %v4518
  %v4666 = vpop.f32.mrf.mxu0
  %v4667 = vadd.f32 0.0, %v4666
  %v4668 = vpop.f32.mrf.mxu0
  %v4669 = vadd.f32 0.0, %v4668
  %4670 = vmatmul.bf16.gmra.mxu0 %v4521
  %v4671 = vpop.f32.mrf.mxu0
  %v4672 = vadd.f32 0.0, %v4671
  %v4673 = vpop.f32.mrf.mxu0
  %v4674 = vadd.f32 0.0, %v4673
  %4675 = vmatmul.bf16.gmra.mxu0 %v4524
  %v4676 = vpop.f32.mrf.mxu0
  %v4677 = vadd.f32 0.0, %v4676
  %v4678 = vpop.f32.mrf.mxu0
  %v4679 = vadd.f32 0.0, %v4678
  %4680 = vmatmul.bf16.gmra.mxu0 %v4527
  %v4681 = vpop.f32.mrf.mxu0
  %v4682 = vadd.f32 0.0, %v4681
  %v4683 = vpop.f32.mrf.mxu0
  %v4684 = vadd.f32 0.0, %v4683
  %4685 = vmatmul.bf16.gmra.mxu0 %v4530
  %v4686 = vpop.f32.mrf.mxu0
  %v4687 = vadd.f32 0.0, %v4686
  %v4688 = vpop.f32.mrf.mxu0
  %v4689 = vadd.f32 0.0, %v4688
  %4690 = vdwg.mxu0
  %4691 = vmatpush.bf16.msra.mxu0 0
  %4692 = vmatpush.bf16.msra.mxu0 0
  %4693 = vmatpush.bf16.msra.mxu0 0
  %4694 = vmatpush.bf16.msra.mxu0 0
  %4695 = vmatpush.bf16.msra.mxu0 0
  %4696 = vmatpush.bf16.msra.mxu0 %v4542
  %4697 = vmatpush.bf16.msra.mxu0 %v4495
  %4698 = vmatpush.bf16.msra.mxu0 %v4491
  %4699 = vmatmul.bf16.gmra.mxu0 %v4509
  %v4700 = vpop.f32.mrf.mxu0
  %v4701 = vadd.f32 0.0, %v4700
  %v4702 = vpop.f32.mrf.mxu0
  %v4703 = vadd.f32 0.0, %v4702
  %4704 = vmatmul.bf16.gmra.mxu0 %v4512
  %v4705 = vpop.f32.mrf.mxu0
  %v4706 = vadd.f32 0.0, %v4705
  %v4707 = vpop.f32.mrf.mxu0
  %v4708 = vadd.f32 0.0, %v4707
  %4709 = vmatmul.bf16.gmra.mxu0 %v4515
  %v4710 = vpop.f32.mrf.mxu0
  %v4711 = vadd.f32 0.0, %v4710
  %v4712 = vpop.f32.mrf.mxu0
  %v4713 = vadd.f32 0.0, %v4712
  %4714 = vmatmul.bf16.gmra.mxu0 %v4518
  %v4715 = vpop.f32.mrf.mxu0
  %v4716 = vadd.f32 0.0, %v4715
  %v4717 = vpop.f32.mrf.mxu0
  %v4718 = vadd.f32 0.0, %v4717
  %4719 = vmatmul.bf16.gmra.mxu0 %v4521
  %v4720 = vpop.f32.mrf.mxu0
  %v4721 = vadd.f32 0.0, %v4720
  %v4722 = vpop.f32.mrf.mxu0
  %v4723 = vadd.f32 0.0, %v4722
  %4724 = vmatmul.bf16.gmra.mxu0 %v4524
  %v4725 = vpop.f32.mrf.mxu0
  %v4726 = vadd.f32 0.0, %v4725
  %v4727 = vpop.f32.mrf.mxu0
  %v4728 = vadd.f32 0.0, %v4727
  %4729 = vmatmul.bf16.gmra.mxu0 %v4527
  %v4730 = vpop.f32.mrf.mxu0
  %v4731 = vadd.f32 0.0, %v4730
  %v4732 = vpop.f32.mrf.mxu0
  %v4733 = vadd.f32 0.0, %v4732
  %4734 = vmatmul.bf16.gmra.mxu0 %v4530
  %v4735 = vpop.f32.mrf.mxu0
  %v4736 = vadd.f32 0.0, %v4735
  %v4737 = vpop.f32.mrf.mxu0
  %v4738 = vadd.f32 0.0, %v4737
  %4739 = vdwg.mxu0
  %v4740 = vadd.f32 %v4196, %v4554
  %v4741 = vadd.f32 %v4197, %v4603
  %v4742 = vadd.f32 %v4198, %v4652
  %v4743 = vadd.f32 %v4199, %v4701
  %v4744 = vadd.f32 %v4200, %v4556
  %v4745 = vadd.f32 %v4201, %v4605
  %v4746 = vadd.f32 %v4202, %v4654
  %v4747 = vadd.f32 %v4203, %v4703
  %v4748 = vadd.f32 %v4204, %v4559
  %v4749 = vadd.f32 %v4205, %v4608
  %v4750 = vadd.f32 %v4206, %v4657
  %v4751 = vadd.f32 %v4207, %v4706
  %v4752 = vadd.f32 %v4208, %v4561
  %v4753 = vadd.f32 %v4209, %v4610
  %v4754 = vadd.f32 %v4210, %v4659
  %v4755 = vadd.f32 %v4211, %v4708
  %v4756 = vadd.f32 %v4212, %v4564
  %v4757 = vadd.f32 %v4213, %v4613
  %v4758 = vadd.f32 %v4214, %v4662
  %v4759 = vadd.f32 %v4215, %v4711
  %v4760 = vadd.f32 %v4216, %v4566
  %v4761 = vadd.f32 %v4217, %v4615
  %v4762 = vadd.f32 %v4218, %v4664
  %v4763 = vadd.f32 %v4219, %v4713
  %v4764 = vadd.f32 %v4220, %v4569
  %v4765 = vadd.f32 %v4221, %v4618
  %v4766 = vadd.f32 %v4222, %v4667
  %v4767 = vadd.f32 %v4223, %v4716
  %v4768 = vadd.f32 %v4224, %v4571
  %v4769 = vadd.f32 %v4225, %v4620
  %v4770 = vadd.f32 %v4226, %v4669
  %v4771 = vadd.f32 %v4227, %v4718
  %v4772 = vadd.f32 %v4228, %v4574
  %v4773 = vadd.f32 %v4229, %v4623
  %v4774 = vadd.f32 %v4230, %v4672
  %v4775 = vadd.f32 %v4231, %v4721
  %v4776 = vadd.f32 %v4232, %v4576
  %v4777 = vadd.f32 %v4233, %v4625
  %v4778 = vadd.f32 %v4234, %v4674
  %v4779 = vadd.f32 %v4235, %v4723
  %v4780 = vadd.f32 %v4236, %v4579
  %v4781 = vadd.f32 %v4237, %v4628
  %v4782 = vadd.f32 %v4238, %v4677
  %v4783 = vadd.f32 %v4239, %v4726
  %v4784 = vadd.f32 %v4240, %v4581
  %v4785 = vadd.f32 %v4241, %v4630
  %v4786 = vadd.f32 %v4242, %v4679
  %v4787 = vadd.f32 %v4243, %v4728
  %v4788 = vadd.f32 %v4244, %v4584
  %v4789 = vadd.f32 %v4245, %v4633
  %v4790 = vadd.f32 %v4246, %v4682
  %v4791 = vadd.f32 %v4247, %v4731
  %v4792 = vadd.f32 %v4248, %v4586
  %v4793 = vadd.f32 %v4249, %v4635
  %v4794 = vadd.f32 %v4250, %v4684
  %v4795 = vadd.f32 %v4251, %v4733
  %v4796 = vadd.f32 %v4252, %v4589
  %v4797 = vadd.f32 %v4253, %v4638
  %v4798 = vadd.f32 %v4254, %v4687
  %v4799 = vadd.f32 %v4255, %v4736
  %v4800 = vadd.f32 %v4256, %v4591
  %v4801 = vadd.f32 %v4257, %v4640
  %v4802 = vadd.f32 %v4258, %v4689
  %v4803 = vadd.f32 %v4259, %v4738
  %v4804 = vld [vmem:[%s2] sm:$0xff]
  %v4805 = vld [vmem:[%s2 + $0x8] sm:$0xff]
  %v4806 = vld [vmem:[%s2 + $0x10] sm:$0xff]
  %v4807 = vld [vmem:[%s2 + $0x18] sm:$0xff]
  %v4808 = vld [vmem:[%s2 + $0x20] sm:$0xff]
  %v4809 = vld [vmem:[%s2 + $0x28] sm:$0xff]
  %v4810 = vld [vmem:[%s2 + $0x30] sm:$0xff]
  %v4811 = vld [vmem:[%s2 + $0x38] sm:$0xff]
  %v4812 = vld [vmem:[%s2 + $0x40] sm:$0xff]
  %v4813 = vld [vmem:[%s2 + $0x48] sm:$0xff]
  %v4814 = vld [vmem:[%s2 + $0x50] sm:$0xff]
  %v4815 = vld [vmem:[%s2 + $0x58] sm:$0xff]
  %v4816 = vld [vmem:[%s2 + $0x60] sm:$0xff]
  %v4817 = vld [vmem:[%s2 + $0x68] sm:$0xff]
  %v4818 = vld [vmem:[%s2 + $0x70] sm:$0xff]
  %v4819 = vld [vmem:[%s2 + $0x78] sm:$0xff]
  %4821 = vset.pattern.permute.xlu0 0
  %4822 = vperm.xlu0 %4821, %v4804
  %v4823 = vpop.permute.xlu0 %4822
  %4826 = vset.pattern.permute.xlu0 0
  %4827 = vperm.xlu0 %4826, %v4805
  %v4828 = vpop.permute.xlu0 %4827
  %4831 = vset.pattern.permute.xlu0 0
  %4832 = vperm.xlu0 %4831, %v4806
  %v4833 = vpop.permute.xlu0 %4832
  %4836 = vset.pattern.permute.xlu0 0
  %4837 = vperm.xlu0 %4836, %v4807
  %v4838 = vpop.permute.xlu0 %4837
  %4841 = vset.pattern.permute.xlu0 0
  %4842 = vperm.xlu0 %4841, %v4808
  %v4843 = vpop.permute.xlu0 %4842
  %4846 = vset.pattern.permute.xlu0 0
  %4847 = vperm.xlu0 %4846, %v4809
  %v4848 = vpop.permute.xlu0 %4847
  %4851 = vset.pattern.permute.xlu0 0
  %4852 = vperm.xlu0 %4851, %v4810
  %v4853 = vpop.permute.xlu0 %4852
  %4856 = vset.pattern.permute.xlu0 0
  %4857 = vperm.xlu0 %4856, %v4811
  %v4858 = vpop.permute.xlu0 %4857
  %4861 = vset.pattern.permute.xlu0 0
  %4862 = vperm.xlu0 %4861, %v4812
  %v4863 = vpop.permute.xlu0 %4862
  %4866 = vset.pattern.permute.xlu0 0
  %4867 = vperm.xlu0 %4866, %v4813
  %v4868 = vpop.permute.xlu0 %4867
  %4871 = vset.pattern.permute.xlu0 0
  %4872 = vperm.xlu0 %4871, %v4814
  %v4873 = vpop.permute.xlu0 %4872
  %4876 = vset.pattern.permute.xlu0 0
  %4877 = vperm.xlu0 %4876, %v4815
  %v4878 = vpop.permute.xlu0 %4877
  %4881 = vset.pattern.permute.xlu0 0
  %4882 = vperm.xlu0 %4881, %v4816
  %v4883 = vpop.permute.xlu0 %4882
  %4886 = vset.pattern.permute.xlu0 0
  %4887 = vperm.xlu0 %4886, %v4817
  %v4888 = vpop.permute.xlu0 %4887
  %4891 = vset.pattern.permute.xlu0 0
  %4892 = vperm.xlu0 %4891, %v4818
  %v4893 = vpop.permute.xlu0 %4892
  %4896 = vset.pattern.permute.xlu0 0
  %4897 = vperm.xlu0 %4896, %v4819
  %v4898 = vpop.permute.xlu0 %4897
  %v4900 = vadd.f32 %v4740, %v4823
  %v4901 = vadd.f32 %v4741, %v4823
  %v4902 = vadd.f32 %v4742, %v4823
  %v4903 = vadd.f32 %v4743, %v4823
  %v4904 = vadd.f32 %v4744, %v4828
  %v4905 = vadd.f32 %v4745, %v4828
  %v4906 = vadd.f32 %v4746, %v4828
  %v4907 = vadd.f32 %v4747, %v4828
  %v4908 = vadd.f32 %v4748, %v4833
  %v4909 = vadd.f32 %v4749, %v4833
  %v4910 = vadd.f32 %v4750, %v4833
  %v4911 = vadd.f32 %v4751, %v4833
  %v4912 = vadd.f32 %v4752, %v4838
  %v4913 = vadd.f32 %v4753, %v4838
  %v4914 = vadd.f32 %v4754, %v4838
  %v4915 = vadd.f32 %v4755, %v4838
  %v4916 = vadd.f32 %v4756, %v4843
  %v4917 = vadd.f32 %v4757, %v4843
  %v4918 = vadd.f32 %v4758, %v4843
  %v4919 = vadd.f32 %v4759, %v4843
  %v4920 = vadd.f32 %v4760, %v4848
  %v4921 = vadd.f32 %v4761, %v4848
  %v4922 = vadd.f32 %v4762, %v4848
  %v4923 = vadd.f32 %v4763, %v4848
  %v4924 = vadd.f32 %v4764, %v4853
  %v4925 = vadd.f32 %v4765, %v4853
  %v4926 = vadd.f32 %v4766, %v4853
  %v4927 = vadd.f32 %v4767, %v4853
  %v4928 = vadd.f32 %v4768, %v4858
  %v4929 = vadd.f32 %v4769, %v4858
  %v4930 = vadd.f32 %v4770, %v4858
  %v4931 = vadd.f32 %v4771, %v4858
  %v4932 = vadd.f32 %v4772, %v4863
  %v4933 = vadd.f32 %v4773, %v4863
  %v4934 = vadd.f32 %v4774, %v4863
  %v4935 = vadd.f32 %v4775, %v4863
  %v4936 = vadd.f32 %v4776, %v4868
  %v4937 = vadd.f32 %v4777, %v4868
  %v4938 = vadd.f32 %v4778, %v4868
  %v4939 = vadd.f32 %v4779, %v4868
  %v4940 = vadd.f32 %v4780, %v4873
  %v4941 = vadd.f32 %v4781, %v4873
  %v4942 = vadd.f32 %v4782, %v4873
  %v4943 = vadd.f32 %v4783, %v4873
  %v4944 = vadd.f32 %v4784, %v4878
  %v4945 = vadd.f32 %v4785, %v4878
  %v4946 = vadd.f32 %v4786, %v4878
  %v4947 = vadd.f32 %v4787, %v4878
  %v4948 = vadd.f32 %v4788, %v4883
  %v4949 = vadd.f32 %v4789, %v4883
  %v4950 = vadd.f32 %v4790, %v4883
  %v4951 = vadd.f32 %v4791, %v4883
  %v4952 = vadd.f32 %v4792, %v4888
  %v4953 = vadd.f32 %v4793, %v4888
  %v4954 = vadd.f32 %v4794, %v4888
  %v4955 = vadd.f32 %v4795, %v4888
  %v4956 = vadd.f32 %v4796, %v4893
  %v4957 = vadd.f32 %v4797, %v4893
  %v4958 = vadd.f32 %v4798, %v4893
  %v4959 = vadd.f32 %v4799, %v4893
  %v4960 = vadd.f32 %v4800, %v4898
  %v4961 = vadd.f32 %v4801, %v4898
  %v4962 = vadd.f32 %v4802, %v4898
  %v4963 = vadd.f32 %v4803, %v4898
  %v4964 = vxor.u32 %v4900, 2147483648
  %v4965 = vxor.u32 %v4901, 2147483648
  %v4966 = vxor.u32 %v4902, 2147483648
  %v4967 = vxor.u32 %v4903, 2147483648
  %v4968 = vxor.u32 %v4904, 2147483648
  %v4969 = vxor.u32 %v4905, 2147483648
  %v4970 = vxor.u32 %v4906, 2147483648
  %v4971 = vxor.u32 %v4907, 2147483648
  %v4972 = vxor.u32 %v4908, 2147483648
  %v4973 = vxor.u32 %v4909, 2147483648
  %v4974 = vxor.u32 %v4910, 2147483648
  %v4975 = vxor.u32 %v4911, 2147483648
  %v4976 = vxor.u32 %v4912, 2147483648
  %v4977 = vxor.u32 %v4913, 2147483648
  %v4978 = vxor.u32 %v4914, 2147483648
  %v4979 = vxor.u32 %v4915, 2147483648
  %v4980 = vxor.u32 %v4916, 2147483648
  %v4981 = vxor.u32 %v4917, 2147483648
  %v4982 = vxor.u32 %v4918, 2147483648
  %v4983 = vxor.u32 %v4919, 2147483648
  %v4984 = vxor.u32 %v4920, 2147483648
  %v4985 = vxor.u32 %v4921, 2147483648
  %v4986 = vxor.u32 %v4922, 2147483648
  %v4987 = vxor.u32 %v4923, 2147483648
  %v4988 = vxor.u32 %v4924, 2147483648
  %v4989 = vxor.u32 %v4925, 2147483648
  %v4990 = vxor.u32 %v4926, 2147483648
  %v4991 = vxor.u32 %v4927, 2147483648
  %v4992 = vxor.u32 %v4928, 2147483648
  %v4993 = vxor.u32 %v4929, 2147483648
  %v4994 = vxor.u32 %v4930, 2147483648
  %v4995 = vxor.u32 %v4931, 2147483648
  %v4996 = vxor.u32 %v4932, 2147483648
  %v4997 = vxor.u32 %v4933, 2147483648
  %v4998 = vxor.u32 %v4934, 2147483648
  %v4999 = vxor.u32 %v4935, 2147483648
  %v5000 = vxor.u32 %v4936, 2147483648
  %v5001 = vxor.u32 %v4937, 2147483648
  %v5002 = vxor.u32 %v4938, 2147483648
  %v5003 = vxor.u32 %v4939, 2147483648
  %v5004 = vxor.u32 %v4940, 2147483648
  %v5005 = vxor.u32 %v4941, 2147483648
  %v5006 = vxor.u32 %v4942, 2147483648
  %v5007 = vxor.u32 %v4943, 2147483648
  %v5008 = vxor.u32 %v4944, 2147483648
  %v5009 = vxor.u32 %v4945, 2147483648
  %v5010 = vxor.u32 %v4946, 2147483648
  %v5011 = vxor.u32 %v4947, 2147483648
  %v5012 = vmul.f32 %v4964, 1.442695
  %v5013 = vpow.pop %v5012
  %v5014 = vmul.f32 %v4965, 1.442695
  %v5015 = vpow.pop %v5014
  %v5016 = vmul.f32 %v4966, 1.442695
  %v5017 = vpow.pop %v5016
  %v5018 = vmul.f32 %v4967, 1.442695
  %v5019 = vpow.pop %v5018
  %v5020 = vmul.f32 %v4968, 1.442695
  %v5021 = vpow.pop %v5020
  %v5022 = vmul.f32 %v4969, 1.442695
  %v5023 = vpow.pop %v5022
  %v5024 = vmul.f32 %v4970, 1.442695
  %v5025 = vpow.pop %v5024
  %v5026 = vmul.f32 %v4971, 1.442695
  %v5027 = vpow.pop %v5026
  %v5028 = vmul.f32 %v4972, 1.442695
  %v5029 = vpow.pop %v5028
  %v5030 = vmul.f32 %v4973, 1.442695
  %v5031 = vpow.pop %v5030
  %v5032 = vmul.f32 %v4974, 1.442695
  %v5033 = vpow.pop %v5032
  %v5034 = vmul.f32 %v4975, 1.442695
  %v5035 = vpow.pop %v5034
  %v5036 = vmul.f32 %v4976, 1.442695
  %v5037 = vpow.pop %v5036
  %v5038 = vmul.f32 %v4977, 1.442695
  %v5039 = vpow.pop %v5038
  %v5040 = vmul.f32 %v4978, 1.442695
  %v5041 = vpow.pop %v5040
  %v5042 = vmul.f32 %v4979, 1.442695
  %v5043 = vpow.pop %v5042
  %v5044 = vmul.f32 %v4980, 1.442695
  %v5045 = vpow.pop %v5044
  %v5046 = vmul.f32 %v4981, 1.442695
  %v5047 = vpow.pop %v5046
  %v5048 = vmul.f32 %v4982, 1.442695
  %v5049 = vpow.pop %v5048
  %v5050 = vmul.f32 %v4983, 1.442695
  %v5051 = vpow.pop %v5050
  %v5052 = vmul.f32 %v4984, 1.442695
  %v5053 = vpow.pop %v5052
  %v5054 = vmul.f32 %v4985, 1.442695
  %v5055 = vpow.pop %v5054
  %v5056 = vmul.f32 %v4986, 1.442695
  %v5057 = vpow.pop %v5056
  %v5058 = vmul.f32 %v4987, 1.442695
  %v5059 = vpow.pop %v5058
  %v5060 = vmul.f32 %v4988, 1.442695
  %v5061 = vpow.pop %v5060
  %v5062 = vmul.f32 %v4989, 1.442695
  %v5063 = vpow.pop %v5062
  %v5064 = vmul.f32 %v4990, 1.442695
  %v5065 = vpow.pop %v5064
  %v5066 = vmul.f32 %v4991, 1.442695
  %v5067 = vpow.pop %v5066
  %v5068 = vmul.f32 %v4992, 1.442695
  %v5069 = vpow.pop %v5068
  %v5070 = vmul.f32 %v4993, 1.442695
  %v5071 = vpow.pop %v5070
  %v5072 = vmul.f32 %v4994, 1.442695
  %v5073 = vpow.pop %v5072
  %v5074 = vmul.f32 %v4995, 1.442695
  %v5075 = vpow.pop %v5074
  %v5076 = vmul.f32 %v4996, 1.442695
  %v5077 = vpow.pop %v5076
  %v5078 = vmul.f32 %v4997, 1.442695
  %v5079 = vpow.pop %v5078
  %v5080 = vmul.f32 %v4998, 1.442695
  %v5081 = vpow.pop %v5080
  %v5082 = vmul.f32 %v4999, 1.442695
  %v5083 = vpow.pop %v5082
  %v5084 = vmul.f32 %v5000, 1.442695
  %v5085 = vpow.pop %v5084
  %v5086 = vmul.f32 %v5001, 1.442695
  %v5087 = vpow.pop %v5086
  %v5088 = vmul.f32 %v5002, 1.442695
  %v5089 = vpow.pop %v5088
  %v5090 = vmul.f32 %v5003, 1.442695
  %v5091 = vpow.pop %v5090
  %v5092 = vmul.f32 %v5004, 1.442695
  %v5093 = vpow.pop %v5092
  %v5094 = vmul.f32 %v5005, 1.442695
  %v5095 = vpow.pop %v5094
  %v5096 = vmul.f32 %v5006, 1.442695
  %v5097 = vpow.pop %v5096
  %v5098 = vmul.f32 %v5007, 1.442695
  %v5099 = vpow.pop %v5098
  %v5100 = vmul.f32 %v5008, 1.442695
  %v5101 = vpow.pop %v5100
  %v5102 = vmul.f32 %v5009, 1.442695
  %v5103 = vpow.pop %v5102
  %v5104 = vmul.f32 %v5010, 1.442695
  %v5105 = vpow.pop %v5104
  %v5106 = vmul.f32 %v5011, 1.442695
  %v5107 = vpow.pop %v5106
  %v5108 = vadd.f32 %v5013, 1.0
  %v5109 = vadd.f32 %v5015, 1.0
  %v5110 = vadd.f32 %v5017, 1.0
  %v5111 = vadd.f32 %v5019, 1.0
  %v5112 = vadd.f32 %v5021, 1.0
  %v5113 = vadd.f32 %v5023, 1.0
  %v5114 = vadd.f32 %v5025, 1.0
  %v5115 = vadd.f32 %v5027, 1.0
  %v5116 = vadd.f32 %v5029, 1.0
  %v5117 = vadd.f32 %v5031, 1.0
  %v5118 = vadd.f32 %v5033, 1.0
  %v5119 = vadd.f32 %v5035, 1.0
  %v5120 = vadd.f32 %v5037, 1.0
  %v5121 = vadd.f32 %v5039, 1.0
  %v5122 = vadd.f32 %v5041, 1.0
  %v5123 = vadd.f32 %v5043, 1.0
  %v5124 = vadd.f32 %v5045, 1.0
  %v5125 = vadd.f32 %v5047, 1.0
  %v5126 = vadd.f32 %v5049, 1.0
  %v5127 = vadd.f32 %v5051, 1.0
  %v5128 = vadd.f32 %v5053, 1.0
  %v5129 = vadd.f32 %v5055, 1.0
  %v5130 = vadd.f32 %v5057, 1.0
  %v5131 = vadd.f32 %v5059, 1.0
  %v5132 = vadd.f32 %v5061, 1.0
  %v5133 = vadd.f32 %v5063, 1.0
  %v5134 = vadd.f32 %v5065, 1.0
  %v5135 = vadd.f32 %v5067, 1.0
  %v5136 = vadd.f32 %v5069, 1.0
  %v5137 = vadd.f32 %v5071, 1.0
  %v5138 = vadd.f32 %v5073, 1.0
  %v5139 = vadd.f32 %v5075, 1.0
  %v5140 = vadd.f32 %v5077, 1.0
  %v5141 = vadd.f32 %v5079, 1.0
  %v5142 = vadd.f32 %v5081, 1.0
  %v5143 = vadd.f32 %v5083, 1.0
  %v5144 = vadd.f32 %v5085, 1.0
  %v5145 = vadd.f32 %v5087, 1.0
  %v5146 = vadd.f32 %v5089, 1.0
  %v5147 = vadd.f32 %v5091, 1.0
  %v5148 = vadd.f32 %v5093, 1.0
  %v5149 = vadd.f32 %v5095, 1.0
  %v5150 = vadd.f32 %v5097, 1.0
  %v5151 = vadd.f32 %v5099, 1.0
  %v5152 = vadd.f32 %v5101, 1.0
  %v5153 = vadd.f32 %v5103, 1.0
  %v5154 = vadd.f32 %v5105, 1.0
  %v5155 = vadd.f32 %v5107, 1.0
  %v5156 = vrcp.pop %v5108
  %v5157 = vmul.f32 %v5108, %v5156
  %v5158 = vsub.f32 1.0, %v5157
  %v5159 = vmul.f32 %v5156, %v5158
  %v5160 = vadd.f32 %v5156, %v5159
  %vm5161 = vweird.f32 %v5108
  %vm5162 = vweird.f32 %v5156
  %vm5163 = vmor %vm5161, %vm5162
  %v5164 = vsel %vm5163, %v5156, %v5160
  %v5165 = vand.u32 2147483647, %v5108
  %vm5166 = vcmp.eq.f32.partialorder %v5165, 8.507059e+37
  %v5167 = vand.u32 %v5108, 2147483648
  %v5168 = vor.u32 1.1754944e-38, %v5167
  %v5169 = vsel %vm5166, %v5168, %v5164
  %v5170 = vmul.f32 1.0, %v5169
  %v5171 = vrcp.pop %v5109
  %v5172 = vmul.f32 %v5109, %v5171
  %v5173 = vsub.f32 1.0, %v5172
  %v5174 = vmul.f32 %v5171, %v5173
  %v5175 = vadd.f32 %v5171, %v5174
  %vm5176 = vweird.f32 %v5109
  %vm5177 = vweird.f32 %v5171
  %vm5178 = vmor %vm5176, %vm5177
  %v5179 = vsel %vm5178, %v5171, %v5175
  %v5180 = vand.u32 2147483647, %v5109
  %vm5181 = vcmp.eq.f32.partialorder %v5180, 8.507059e+37
  %v5182 = vand.u32 %v5109, 2147483648
  %v5183 = vor.u32 1.1754944e-38, %v5182
  %v5184 = vsel %vm5181, %v5183, %v5179
  %v5185 = vmul.f32 1.0, %v5184
  %v5186 = vrcp.pop %v5110
  %v5187 = vmul.f32 %v5110, %v5186
  %v5188 = vsub.f32 1.0, %v5187
  %v5189 = vmul.f32 %v5186, %v5188
  %v5190 = vadd.f32 %v5186, %v5189
  %vm5191 = vweird.f32 %v5110
  %vm5192 = vweird.f32 %v5186
  %vm5193 = vmor %vm5191, %vm5192
  %v5194 = vsel %vm5193, %v5186, %v5190
  %v5195 = vand.u32 2147483647, %v5110
  %vm5196 = vcmp.eq.f32.partialorder %v5195, 8.507059e+37
  %v5197 = vand.u32 %v5110, 2147483648
  %v5198 = vor.u32 1.1754944e-38, %v5197
  %v5199 = vsel %vm5196, %v5198, %v5194
  %v5200 = vmul.f32 1.0, %v5199
  %v5201 = vrcp.pop %v5111
  %v5202 = vmul.f32 %v5111, %v5201
  %v5203 = vsub.f32 1.0, %v5202
  %v5204 = vmul.f32 %v5201, %v5203
  %v5205 = vadd.f32 %v5201, %v5204
  %vm5206 = vweird.f32 %v5111
  %vm5207 = vweird.f32 %v5201
  %vm5208 = vmor %vm5206, %vm5207
  %v5209 = vsel %vm5208, %v5201, %v5205
  %v5210 = vand.u32 2147483647, %v5111
  %vm5211 = vcmp.eq.f32.partialorder %v5210, 8.507059e+37
  %v5212 = vand.u32 %v5111, 2147483648
  %v5213 = vor.u32 1.1754944e-38, %v5212
  %v5214 = vsel %vm5211, %v5213, %v5209
  %v5215 = vmul.f32 1.0, %v5214
  %v5216 = vrcp.pop %v5112
  %v5217 = vmul.f32 %v5112, %v5216
  %v5218 = vsub.f32 1.0, %v5217
  %v5219 = vmul.f32 %v5216, %v5218
  %v5220 = vadd.f32 %v5216, %v5219
  %vm5221 = vweird.f32 %v5112
  %vm5222 = vweird.f32 %v5216
  %vm5223 = vmor %vm5221, %vm5222
  %v5224 = vsel %vm5223, %v5216, %v5220
  %v5225 = vand.u32 2147483647, %v5112
  %vm5226 = vcmp.eq.f32.partialorder %v5225, 8.507059e+37
  %v5227 = vand.u32 %v5112, 2147483648
  %v5228 = vor.u32 1.1754944e-38, %v5227
  %v5229 = vsel %vm5226, %v5228, %v5224
  %v5230 = vmul.f32 1.0, %v5229
  %v5231 = vrcp.pop %v5113
  %v5232 = vmul.f32 %v5113, %v5231
  %v5233 = vsub.f32 1.0, %v5232
  %v5234 = vmul.f32 %v5231, %v5233
  %v5235 = vadd.f32 %v5231, %v5234
  %vm5236 = vweird.f32 %v5113
  %vm5237 = vweird.f32 %v5231
  %vm5238 = vmor %vm5236, %vm5237
  %v5239 = vsel %vm5238, %v5231, %v5235
  %v5240 = vand.u32 2147483647, %v5113
  %vm5241 = vcmp.eq.f32.partialorder %v5240, 8.507059e+37
  %v5242 = vand.u32 %v5113, 2147483648
  %v5243 = vor.u32 1.1754944e-38, %v5242
  %v5244 = vsel %vm5241, %v5243, %v5239
  %v5245 = vmul.f32 1.0, %v5244
  %v5246 = vrcp.pop %v5114
  %v5247 = vmul.f32 %v5114, %v5246
  %v5248 = vsub.f32 1.0, %v5247
  %v5249 = vmul.f32 %v5246, %v5248
  %v5250 = vadd.f32 %v5246, %v5249
  %vm5251 = vweird.f32 %v5114
  %vm5252 = vweird.f32 %v5246
  %vm5253 = vmor %vm5251, %vm5252
  %v5254 = vsel %vm5253, %v5246, %v5250
  %v5255 = vand.u32 2147483647, %v5114
  %vm5256 = vcmp.eq.f32.partialorder %v5255, 8.507059e+37
  %v5257 = vand.u32 %v5114, 2147483648
  %v5258 = vor.u32 1.1754944e-38, %v5257
  %v5259 = vsel %vm5256, %v5258, %v5254
  %v5260 = vmul.f32 1.0, %v5259
  %v5261 = vrcp.pop %v5115
  %v5262 = vmul.f32 %v5115, %v5261
  %v5263 = vsub.f32 1.0, %v5262
  %v5264 = vmul.f32 %v5261, %v5263
  %v5265 = vadd.f32 %v5261, %v5264
  %vm5266 = vweird.f32 %v5115
  %vm5267 = vweird.f32 %v5261
  %vm5268 = vmor %vm5266, %vm5267
  %v5269 = vsel %vm5268, %v5261, %v5265
  %v5270 = vand.u32 2147483647, %v5115
  %vm5271 = vcmp.eq.f32.partialorder %v5270, 8.507059e+37
  %v5272 = vand.u32 %v5115, 2147483648
  %v5273 = vor.u32 1.1754944e-38, %v5272
  %v5274 = vsel %vm5271, %v5273, %v5269
  %v5275 = vmul.f32 1.0, %v5274
  %v5276 = vrcp.pop %v5116
  %v5277 = vmul.f32 %v5116, %v5276
  %v5278 = vsub.f32 1.0, %v5277
  %v5279 = vmul.f32 %v5276, %v5278
  %v5280 = vadd.f32 %v5276, %v5279
  %vm5281 = vweird.f32 %v5116
  %vm5282 = vweird.f32 %v5276
  %vm5283 = vmor %vm5281, %vm5282
  %v5284 = vsel %vm5283, %v5276, %v5280
  %v5285 = vand.u32 2147483647, %v5116
  %vm5286 = vcmp.eq.f32.partialorder %v5285, 8.507059e+37
  %v5287 = vand.u32 %v5116, 2147483648
  %v5288 = vor.u32 1.1754944e-38, %v5287
  %v5289 = vsel %vm5286, %v5288, %v5284
  %v5290 = vmul.f32 1.0, %v5289
  %v5291 = vrcp.pop %v5117
  %v5292 = vmul.f32 %v5117, %v5291
  %v5293 = vsub.f32 1.0, %v5292
  %v5294 = vmul.f32 %v5291, %v5293
  %v5295 = vadd.f32 %v5291, %v5294
  %vm5296 = vweird.f32 %v5117
  %vm5297 = vweird.f32 %v5291
  %vm5298 = vmor %vm5296, %vm5297
  %v5299 = vsel %vm5298, %v5291, %v5295
  %v5300 = vand.u32 2147483647, %v5117
  %vm5301 = vcmp.eq.f32.partialorder %v5300, 8.507059e+37
  %v5302 = vand.u32 %v5117, 2147483648
  %v5303 = vor.u32 1.1754944e-38, %v5302
  %v5304 = vsel %vm5301, %v5303, %v5299
  %v5305 = vmul.f32 1.0, %v5304
  %v5306 = vrcp.pop %v5118
  %v5307 = vmul.f32 %v5118, %v5306
  %v5308 = vsub.f32 1.0, %v5307
  %v5309 = vmul.f32 %v5306, %v5308
  %v5310 = vadd.f32 %v5306, %v5309
  %vm5311 = vweird.f32 %v5118
  %vm5312 = vweird.f32 %v5306
  %vm5313 = vmor %vm5311, %vm5312
  %v5314 = vsel %vm5313, %v5306, %v5310
  %v5315 = vand.u32 2147483647, %v5118
  %vm5316 = vcmp.eq.f32.partialorder %v5315, 8.507059e+37
  %v5317 = vand.u32 %v5118, 2147483648
  %v5318 = vor.u32 1.1754944e-38, %v5317
  %v5319 = vsel %vm5316, %v5318, %v5314
  %v5320 = vmul.f32 1.0, %v5319
  %v5321 = vrcp.pop %v5119
  %v5322 = vmul.f32 %v5119, %v5321
  %v5323 = vsub.f32 1.0, %v5322
  %v5324 = vmul.f32 %v5321, %v5323
  %v5325 = vadd.f32 %v5321, %v5324
  %vm5326 = vweird.f32 %v5119
  %vm5327 = vweird.f32 %v5321
  %vm5328 = vmor %vm5326, %vm5327
  %v5329 = vsel %vm5328, %v5321, %v5325
  %v5330 = vand.u32 2147483647, %v5119
  %vm5331 = vcmp.eq.f32.partialorder %v5330, 8.507059e+37
  %v5332 = vand.u32 %v5119, 2147483648
  %v5333 = vor.u32 1.1754944e-38, %v5332
  %v5334 = vsel %vm5331, %v5333, %v5329
  %v5335 = vmul.f32 1.0, %v5334
  %v5336 = vrcp.pop %v5120
  %v5337 = vmul.f32 %v5120, %v5336
  %v5338 = vsub.f32 1.0, %v5337
  %v5339 = vmul.f32 %v5336, %v5338
  %v5340 = vadd.f32 %v5336, %v5339
  %vm5341 = vweird.f32 %v5120
  %vm5342 = vweird.f32 %v5336
  %vm5343 = vmor %vm5341, %vm5342
  %v5344 = vsel %vm5343, %v5336, %v5340
  %v5345 = vand.u32 2147483647, %v5120
  %vm5346 = vcmp.eq.f32.partialorder %v5345, 8.507059e+37
  %v5347 = vand.u32 %v5120, 2147483648
  %v5348 = vor.u32 1.1754944e-38, %v5347
  %v5349 = vsel %vm5346, %v5348, %v5344
  %v5350 = vmul.f32 1.0, %v5349
  %v5351 = vrcp.pop %v5121
  %v5352 = vmul.f32 %v5121, %v5351
  %v5353 = vsub.f32 1.0, %v5352
  %v5354 = vmul.f32 %v5351, %v5353
  %v5355 = vadd.f32 %v5351, %v5354
  %vm5356 = vweird.f32 %v5121
  %vm5357 = vweird.f32 %v5351
  %vm5358 = vmor %vm5356, %vm5357
  %v5359 = vsel %vm5358, %v5351, %v5355
  %v5360 = vand.u32 2147483647, %v5121
  %vm5361 = vcmp.eq.f32.partialorder %v5360, 8.507059e+37
  %v5362 = vand.u32 %v5121, 2147483648
  %v5363 = vor.u32 1.1754944e-38, %v5362
  %v5364 = vsel %vm5361, %v5363, %v5359
  %v5365 = vmul.f32 1.0, %v5364
  %v5366 = vrcp.pop %v5122
  %v5367 = vmul.f32 %v5122, %v5366
  %v5368 = vsub.f32 1.0, %v5367
  %v5369 = vmul.f32 %v5366, %v5368
  %v5370 = vadd.f32 %v5366, %v5369
  %vm5371 = vweird.f32 %v5122
  %vm5372 = vweird.f32 %v5366
  %vm5373 = vmor %vm5371, %vm5372
  %v5374 = vsel %vm5373, %v5366, %v5370
  %v5375 = vand.u32 2147483647, %v5122
  %vm5376 = vcmp.eq.f32.partialorder %v5375, 8.507059e+37
  %v5377 = vand.u32 %v5122, 2147483648
  %v5378 = vor.u32 1.1754944e-38, %v5377
  %v5379 = vsel %vm5376, %v5378, %v5374
  %v5380 = vmul.f32 1.0, %v5379
  %v5381 = vrcp.pop %v5123
  %v5382 = vmul.f32 %v5123, %v5381
  %v5383 = vsub.f32 1.0, %v5382
  %v5384 = vmul.f32 %v5381, %v5383
  %v5385 = vadd.f32 %v5381, %v5384
  %vm5386 = vweird.f32 %v5123
  %vm5387 = vweird.f32 %v5381
  %vm5388 = vmor %vm5386, %vm5387
  %v5389 = vsel %vm5388, %v5381, %v5385
  %v5390 = vand.u32 2147483647, %v5123
  %vm5391 = vcmp.eq.f32.partialorder %v5390, 8.507059e+37
  %v5392 = vand.u32 %v5123, 2147483648
  %v5393 = vor.u32 1.1754944e-38, %v5392
  %v5394 = vsel %vm5391, %v5393, %v5389
  %v5395 = vmul.f32 1.0, %v5394
  %v5396 = vrcp.pop %v5124
  %v5397 = vmul.f32 %v5124, %v5396
  %v5398 = vsub.f32 1.0, %v5397
  %v5399 = vmul.f32 %v5396, %v5398
  %v5400 = vadd.f32 %v5396, %v5399
  %vm5401 = vweird.f32 %v5124
  %vm5402 = vweird.f32 %v5396
  %vm5403 = vmor %vm5401, %vm5402
  %v5404 = vsel %vm5403, %v5396, %v5400
  %v5405 = vand.u32 2147483647, %v5124
  %vm5406 = vcmp.eq.f32.partialorder %v5405, 8.507059e+37
  %v5407 = vand.u32 %v5124, 2147483648
  %v5408 = vor.u32 1.1754944e-38, %v5407
  %v5409 = vsel %vm5406, %v5408, %v5404
  %v5410 = vmul.f32 1.0, %v5409
  %v5411 = vrcp.pop %v5125
  %v5412 = vmul.f32 %v5125, %v5411
  %v5413 = vsub.f32 1.0, %v5412
  %v5414 = vmul.f32 %v5411, %v5413
  %v5415 = vadd.f32 %v5411, %v5414
  %vm5416 = vweird.f32 %v5125
  %vm5417 = vweird.f32 %v5411
  %vm5418 = vmor %vm5416, %vm5417
  %v5419 = vsel %vm5418, %v5411, %v5415
  %v5420 = vand.u32 2147483647, %v5125
  %vm5421 = vcmp.eq.f32.partialorder %v5420, 8.507059e+37
  %v5422 = vand.u32 %v5125, 2147483648
  %v5423 = vor.u32 1.1754944e-38, %v5422
  %v5424 = vsel %vm5421, %v5423, %v5419
  %v5425 = vmul.f32 1.0, %v5424
  %v5426 = vrcp.pop %v5126
  %v5427 = vmul.f32 %v5126, %v5426
  %v5428 = vsub.f32 1.0, %v5427
  %v5429 = vmul.f32 %v5426, %v5428
  %v5430 = vadd.f32 %v5426, %v5429
  %vm5431 = vweird.f32 %v5126
  %vm5432 = vweird.f32 %v5426
  %vm5433 = vmor %vm5431, %vm5432
  %v5434 = vsel %vm5433, %v5426, %v5430
  %v5435 = vand.u32 2147483647, %v5126
  %vm5436 = vcmp.eq.f32.partialorder %v5435, 8.507059e+37
  %v5437 = vand.u32 %v5126, 2147483648
  %v5438 = vor.u32 1.1754944e-38, %v5437
  %v5439 = vsel %vm5436, %v5438, %v5434
  %v5440 = vmul.f32 1.0, %v5439
  %v5441 = vrcp.pop %v5127
  %v5442 = vmul.f32 %v5127, %v5441
  %v5443 = vsub.f32 1.0, %v5442
  %v5444 = vmul.f32 %v5441, %v5443
  %v5445 = vadd.f32 %v5441, %v5444
  %vm5446 = vweird.f32 %v5127
  %vm5447 = vweird.f32 %v5441
  %vm5448 = vmor %vm5446, %vm5447
  %v5449 = vsel %vm5448, %v5441, %v5445
  %v5450 = vand.u32 2147483647, %v5127
  %vm5451 = vcmp.eq.f32.partialorder %v5450, 8.507059e+37
  %v5452 = vand.u32 %v5127, 2147483648
  %v5453 = vor.u32 1.1754944e-38, %v5452
  %v5454 = vsel %vm5451, %v5453, %v5449
  %v5455 = vmul.f32 1.0, %v5454
  %v5456 = vrcp.pop %v5128
  %v5457 = vmul.f32 %v5128, %v5456
  %v5458 = vsub.f32 1.0, %v5457
  %v5459 = vmul.f32 %v5456, %v5458
  %v5460 = vadd.f32 %v5456, %v5459
  %vm5461 = vweird.f32 %v5128
  %vm5462 = vweird.f32 %v5456
  %vm5463 = vmor %vm5461, %vm5462
  %v5464 = vsel %vm5463, %v5456, %v5460
  %v5465 = vand.u32 2147483647, %v5128
  %vm5466 = vcmp.eq.f32.partialorder %v5465, 8.507059e+37
  %v5467 = vand.u32 %v5128, 2147483648
  %v5468 = vor.u32 1.1754944e-38, %v5467
  %v5469 = vsel %vm5466, %v5468, %v5464
  %v5470 = vmul.f32 1.0, %v5469
  %v5471 = vrcp.pop %v5129
  %v5472 = vmul.f32 %v5129, %v5471
  %v5473 = vsub.f32 1.0, %v5472
  %v5474 = vmul.f32 %v5471, %v5473
  %v5475 = vadd.f32 %v5471, %v5474
  %vm5476 = vweird.f32 %v5129
  %vm5477 = vweird.f32 %v5471
  %vm5478 = vmor %vm5476, %vm5477
  %v5479 = vsel %vm5478, %v5471, %v5475
  %v5480 = vand.u32 2147483647, %v5129
  %vm5481 = vcmp.eq.f32.partialorder %v5480, 8.507059e+37
  %v5482 = vand.u32 %v5129, 2147483648
  %v5483 = vor.u32 1.1754944e-38, %v5482
  %v5484 = vsel %vm5481, %v5483, %v5479
  %v5485 = vmul.f32 1.0, %v5484
  %v5486 = vrcp.pop %v5130
  %v5487 = vmul.f32 %v5130, %v5486
  %v5488 = vsub.f32 1.0, %v5487
  %v5489 = vmul.f32 %v5486, %v5488
  %v5490 = vadd.f32 %v5486, %v5489
  %vm5491 = vweird.f32 %v5130
  %vm5492 = vweird.f32 %v5486
  %vm5493 = vmor %vm5491, %vm5492
  %v5494 = vsel %vm5493, %v5486, %v5490
  %v5495 = vand.u32 2147483647, %v5130
  %vm5496 = vcmp.eq.f32.partialorder %v5495, 8.507059e+37
  %v5497 = vand.u32 %v5130, 2147483648
  %v5498 = vor.u32 1.1754944e-38, %v5497
  %v5499 = vsel %vm5496, %v5498, %v5494
  %v5500 = vmul.f32 1.0, %v5499
  %v5501 = vrcp.pop %v5131
  %v5502 = vmul.f32 %v5131, %v5501
  %v5503 = vsub.f32 1.0, %v5502
  %v5504 = vmul.f32 %v5501, %v5503
  %v5505 = vadd.f32 %v5501, %v5504
  %vm5506 = vweird.f32 %v5131
  %vm5507 = vweird.f32 %v5501
  %vm5508 = vmor %vm5506, %vm5507
  %v5509 = vsel %vm5508, %v5501, %v5505
  %v5510 = vand.u32 2147483647, %v5131
  %vm5511 = vcmp.eq.f32.partialorder %v5510, 8.507059e+37
  %v5512 = vand.u32 %v5131, 2147483648
  %v5513 = vor.u32 1.1754944e-38, %v5512
  %v5514 = vsel %vm5511, %v5513, %v5509
  %v5515 = vmul.f32 1.0, %v5514
  %v5516 = vrcp.pop %v5132
  %v5517 = vmul.f32 %v5132, %v5516
  %v5518 = vsub.f32 1.0, %v5517
  %v5519 = vmul.f32 %v5516, %v5518
  %v5520 = vadd.f32 %v5516, %v5519
  %vm5521 = vweird.f32 %v5132
  %vm5522 = vweird.f32 %v5516
  %vm5523 = vmor %vm5521, %vm5522
  %v5524 = vsel %vm5523, %v5516, %v5520
  %v5525 = vand.u32 2147483647, %v5132
  %vm5526 = vcmp.eq.f32.partialorder %v5525, 8.507059e+37
  %v5527 = vand.u32 %v5132, 2147483648
  %v5528 = vor.u32 1.1754944e-38, %v5527
  %v5529 = vsel %vm5526, %v5528, %v5524
  %v5530 = vmul.f32 1.0, %v5529
  %v5531 = vrcp.pop %v5133
  %v5532 = vmul.f32 %v5133, %v5531
  %v5533 = vsub.f32 1.0, %v5532
  %v5534 = vmul.f32 %v5531, %v5533
  %v5535 = vadd.f32 %v5531, %v5534
  %vm5536 = vweird.f32 %v5133
  %vm5537 = vweird.f32 %v5531
  %vm5538 = vmor %vm5536, %vm5537
  %v5539 = vsel %vm5538, %v5531, %v5535
  %v5540 = vand.u32 2147483647, %v5133
  %vm5541 = vcmp.eq.f32.partialorder %v5540, 8.507059e+37
  %v5542 = vand.u32 %v5133, 2147483648
  %v5543 = vor.u32 1.1754944e-38, %v5542
  %v5544 = vsel %vm5541, %v5543, %v5539
  %v5545 = vmul.f32 1.0, %v5544
  %v5546 = vrcp.pop %v5134
  %v5547 = vmul.f32 %v5134, %v5546
  %v5548 = vsub.f32 1.0, %v5547
  %v5549 = vmul.f32 %v5546, %v5548
  %v5550 = vadd.f32 %v5546, %v5549
  %vm5551 = vweird.f32 %v5134
  %vm5552 = vweird.f32 %v5546
  %vm5553 = vmor %vm5551, %vm5552
  %v5554 = vsel %vm5553, %v5546, %v5550
  %v5555 = vand.u32 2147483647, %v5134
  %vm5556 = vcmp.eq.f32.partialorder %v5555, 8.507059e+37
  %v5557 = vand.u32 %v5134, 2147483648
  %v5558 = vor.u32 1.1754944e-38, %v5557
  %v5559 = vsel %vm5556, %v5558, %v5554
  %v5560 = vmul.f32 1.0, %v5559
  %v5561 = vrcp.pop %v5135
  %v5562 = vmul.f32 %v5135, %v5561
  %v5563 = vsub.f32 1.0, %v5562
  %v5564 = vmul.f32 %v5561, %v5563
  %v5565 = vadd.f32 %v5561, %v5564
  %vm5566 = vweird.f32 %v5135
  %vm5567 = vweird.f32 %v5561
  %vm5568 = vmor %vm5566, %vm5567
  %v5569 = vsel %vm5568, %v5561, %v5565
  %v5570 = vand.u32 2147483647, %v5135
  %vm5571 = vcmp.eq.f32.partialorder %v5570, 8.507059e+37
  %v5572 = vand.u32 %v5135, 2147483648
  %v5573 = vor.u32 1.1754944e-38, %v5572
  %v5574 = vsel %vm5571, %v5573, %v5569
  %v5575 = vmul.f32 1.0, %v5574
  %v5576 = vrcp.pop %v5136
  %v5577 = vmul.f32 %v5136, %v5576
  %v5578 = vsub.f32 1.0, %v5577
  %v5579 = vmul.f32 %v5576, %v5578
  %v5580 = vadd.f32 %v5576, %v5579
  %vm5581 = vweird.f32 %v5136
  %vm5582 = vweird.f32 %v5576
  %vm5583 = vmor %vm5581, %vm5582
  %v5584 = vsel %vm5583, %v5576, %v5580
  %v5585 = vand.u32 2147483647, %v5136
  %vm5586 = vcmp.eq.f32.partialorder %v5585, 8.507059e+37
  %v5587 = vand.u32 %v5136, 2147483648
  %v5588 = vor.u32 1.1754944e-38, %v5587
  %v5589 = vsel %vm5586, %v5588, %v5584
  %v5590 = vmul.f32 1.0, %v5589
  %v5591 = vrcp.pop %v5137
  %v5592 = vmul.f32 %v5137, %v5591
  %v5593 = vsub.f32 1.0, %v5592
  %v5594 = vmul.f32 %v5591, %v5593
  %v5595 = vadd.f32 %v5591, %v5594
  %vm5596 = vweird.f32 %v5137
  %vm5597 = vweird.f32 %v5591
  %vm5598 = vmor %vm5596, %vm5597
  %v5599 = vsel %vm5598, %v5591, %v5595
  %v5600 = vand.u32 2147483647, %v5137
  %vm5601 = vcmp.eq.f32.partialorder %v5600, 8.507059e+37
  %v5602 = vand.u32 %v5137, 2147483648
  %v5603 = vor.u32 1.1754944e-38, %v5602
  %v5604 = vsel %vm5601, %v5603, %v5599
  %v5605 = vmul.f32 1.0, %v5604
  %v5606 = vrcp.pop %v5138
  %v5607 = vmul.f32 %v5138, %v5606
  %v5608 = vsub.f32 1.0, %v5607
  %v5609 = vmul.f32 %v5606, %v5608
  %v5610 = vadd.f32 %v5606, %v5609
  %vm5611 = vweird.f32 %v5138
  %vm5612 = vweird.f32 %v5606
  %vm5613 = vmor %vm5611, %vm5612
  %v5614 = vsel %vm5613, %v5606, %v5610
  %v5615 = vand.u32 2147483647, %v5138
  %vm5616 = vcmp.eq.f32.partialorder %v5615, 8.507059e+37
  %v5617 = vand.u32 %v5138, 2147483648
  %v5618 = vor.u32 1.1754944e-38, %v5617
  %v5619 = vsel %vm5616, %v5618, %v5614
  %v5620 = vmul.f32 1.0, %v5619
  %v5621 = vrcp.pop %v5139
  %v5622 = vmul.f32 %v5139, %v5621
  %v5623 = vsub.f32 1.0, %v5622
  %v5624 = vmul.f32 %v5621, %v5623
  %v5625 = vadd.f32 %v5621, %v5624
  %vm5626 = vweird.f32 %v5139
  %vm5627 = vweird.f32 %v5621
  %vm5628 = vmor %vm5626, %vm5627
  %v5629 = vsel %vm5628, %v5621, %v5625
  %v5630 = vand.u32 2147483647, %v5139
  %vm5631 = vcmp.eq.f32.partialorder %v5630, 8.507059e+37
  %v5632 = vand.u32 %v5139, 2147483648
  %v5633 = vor.u32 1.1754944e-38, %v5632
  %v5634 = vsel %vm5631, %v5633, %v5629
  %v5635 = vmul.f32 1.0, %v5634
  %v5636 = vrcp.pop %v5140
  %v5637 = vmul.f32 %v5140, %v5636
  %v5638 = vsub.f32 1.0, %v5637
  %v5639 = vmul.f32 %v5636, %v5638
  %v5640 = vadd.f32 %v5636, %v5639
  %vm5641 = vweird.f32 %v5140
  %vm5642 = vweird.f32 %v5636
  %vm5643 = vmor %vm5641, %vm5642
  %v5644 = vsel %vm5643, %v5636, %v5640
  %v5645 = vand.u32 2147483647, %v5140
  %vm5646 = vcmp.eq.f32.partialorder %v5645, 8.507059e+37
  %v5647 = vand.u32 %v5140, 2147483648
  %v5648 = vor.u32 1.1754944e-38, %v5647
  %v5649 = vsel %vm5646, %v5648, %v5644
  %v5650 = vmul.f32 1.0, %v5649
  %v5651 = vrcp.pop %v5141
  %v5652 = vmul.f32 %v5141, %v5651
  %v5653 = vsub.f32 1.0, %v5652
  %v5654 = vmul.f32 %v5651, %v5653
  %v5655 = vadd.f32 %v5651, %v5654
  %vm5656 = vweird.f32 %v5141
  %vm5657 = vweird.f32 %v5651
  %vm5658 = vmor %vm5656, %vm5657
  %v5659 = vsel %vm5658, %v5651, %v5655
  %v5660 = vand.u32 2147483647, %v5141
  %vm5661 = vcmp.eq.f32.partialorder %v5660, 8.507059e+37
  %v5662 = vand.u32 %v5141, 2147483648
  %v5663 = vor.u32 1.1754944e-38, %v5662
  %v5664 = vsel %vm5661, %v5663, %v5659
  %v5665 = vmul.f32 1.0, %v5664
  %v5666 = vrcp.pop %v5142
  %v5667 = vmul.f32 %v5142, %v5666
  %v5668 = vsub.f32 1.0, %v5667
  %v5669 = vmul.f32 %v5666, %v5668
  %v5670 = vadd.f32 %v5666, %v5669
  %vm5671 = vweird.f32 %v5142
  %vm5672 = vweird.f32 %v5666
  %vm5673 = vmor %vm5671, %vm5672
  %v5674 = vsel %vm5673, %v5666, %v5670
  %v5675 = vand.u32 2147483647, %v5142
  %vm5676 = vcmp.eq.f32.partialorder %v5675, 8.507059e+37
  %v5677 = vand.u32 %v5142, 2147483648
  %v5678 = vor.u32 1.1754944e-38, %v5677
  %v5679 = vsel %vm5676, %v5678, %v5674
  %v5680 = vmul.f32 1.0, %v5679
  %v5681 = vrcp.pop %v5143
  %v5682 = vmul.f32 %v5143, %v5681
  %v5683 = vsub.f32 1.0, %v5682
  %v5684 = vmul.f32 %v5681, %v5683
  %v5685 = vadd.f32 %v5681, %v5684
  %vm5686 = vweird.f32 %v5143
  %vm5687 = vweird.f32 %v5681
  %vm5688 = vmor %vm5686, %vm5687
  %v5689 = vsel %vm5688, %v5681, %v5685
  %v5690 = vand.u32 2147483647, %v5143
  %vm5691 = vcmp.eq.f32.partialorder %v5690, 8.507059e+37
  %v5692 = vand.u32 %v5143, 2147483648
  %v5693 = vor.u32 1.1754944e-38, %v5692
  %v5694 = vsel %vm5691, %v5693, %v5689
  %v5695 = vmul.f32 1.0, %v5694
  %v5696 = vrcp.pop %v5144
  %v5697 = vmul.f32 %v5144, %v5696
  %v5698 = vsub.f32 1.0, %v5697
  %v5699 = vmul.f32 %v5696, %v5698
  %v5700 = vadd.f32 %v5696, %v5699
  %vm5701 = vweird.f32 %v5144
  %vm5702 = vweird.f32 %v5696
  %vm5703 = vmor %vm5701, %vm5702
  %v5704 = vsel %vm5703, %v5696, %v5700
  %v5705 = vand.u32 2147483647, %v5144
  %vm5706 = vcmp.eq.f32.partialorder %v5705, 8.507059e+37
  %v5707 = vand.u32 %v5144, 2147483648
  %v5708 = vor.u32 1.1754944e-38, %v5707
  %v5709 = vsel %vm5706, %v5708, %v5704
  %v5710 = vmul.f32 1.0, %v5709
  %v5711 = vrcp.pop %v5145
  %v5712 = vmul.f32 %v5145, %v5711
  %v5713 = vsub.f32 1.0, %v5712
  %v5714 = vmul.f32 %v5711, %v5713
  %v5715 = vadd.f32 %v5711, %v5714
  %vm5716 = vweird.f32 %v5145
  %vm5717 = vweird.f32 %v5711
  %vm5718 = vmor %vm5716, %vm5717
  %v5719 = vsel %vm5718, %v5711, %v5715
  %v5720 = vand.u32 2147483647, %v5145
  %vm5721 = vcmp.eq.f32.partialorder %v5720, 8.507059e+37
  %v5722 = vand.u32 %v5145, 2147483648
  %v5723 = vor.u32 1.1754944e-38, %v5722
  %v5724 = vsel %vm5721, %v5723, %v5719
  %v5725 = vmul.f32 1.0, %v5724
  %v5726 = vrcp.pop %v5146
  %v5727 = vmul.f32 %v5146, %v5726
  %v5728 = vsub.f32 1.0, %v5727
  %v5729 = vmul.f32 %v5726, %v5728
  %v5730 = vadd.f32 %v5726, %v5729
  %vm5731 = vweird.f32 %v5146
  %vm5732 = vweird.f32 %v5726
  %vm5733 = vmor %vm5731, %vm5732
  %v5734 = vsel %vm5733, %v5726, %v5730
  %v5735 = vand.u32 2147483647, %v5146
  %vm5736 = vcmp.eq.f32.partialorder %v5735, 8.507059e+37
  %v5737 = vand.u32 %v5146, 2147483648
  %v5738 = vor.u32 1.1754944e-38, %v5737
  %v5739 = vsel %vm5736, %v5738, %v5734
  %v5740 = vmul.f32 1.0, %v5739
  %v5741 = vrcp.pop %v5147
  %v5742 = vmul.f32 %v5147, %v5741
  %v5743 = vsub.f32 1.0, %v5742
  %v5744 = vmul.f32 %v5741, %v5743
  %v5745 = vadd.f32 %v5741, %v5744
  %vm5746 = vweird.f32 %v5147
  %vm5747 = vweird.f32 %v5741
  %vm5748 = vmor %vm5746, %vm5747
  %v5749 = vsel %vm5748, %v5741, %v5745
  %v5750 = vand.u32 2147483647, %v5147
  %vm5751 = vcmp.eq.f32.partialorder %v5750, 8.507059e+37
  %v5752 = vand.u32 %v5147, 2147483648
  %v5753 = vor.u32 1.1754944e-38, %v5752
  %v5754 = vsel %vm5751, %v5753, %v5749
  %v5755 = vmul.f32 1.0, %v5754
  %v5756 = vrcp.pop %v5148
  %v5757 = vmul.f32 %v5148, %v5756
  %v5758 = vsub.f32 1.0, %v5757
  %v5759 = vmul.f32 %v5756, %v5758
  %v5760 = vadd.f32 %v5756, %v5759
  %vm5761 = vweird.f32 %v5148
  %vm5762 = vweird.f32 %v5756
  %vm5763 = vmor %vm5761, %vm5762
  %v5764 = vsel %vm5763, %v5756, %v5760
  %v5765 = vand.u32 2147483647, %v5148
  %vm5766 = vcmp.eq.f32.partialorder %v5765, 8.507059e+37
  %v5767 = vand.u32 %v5148, 2147483648
  %v5768 = vor.u32 1.1754944e-38, %v5767
  %v5769 = vsel %vm5766, %v5768, %v5764
  %v5770 = vmul.f32 1.0, %v5769
  %v5771 = vrcp.pop %v5149
  %v5772 = vmul.f32 %v5149, %v5771
  %v5773 = vsub.f32 1.0, %v5772
  %v5774 = vmul.f32 %v5771, %v5773
  %v5775 = vadd.f32 %v5771, %v5774
  %vm5776 = vweird.f32 %v5149
  %vm5777 = vweird.f32 %v5771
  %vm5778 = vmor %vm5776, %vm5777
  %v5779 = vsel %vm5778, %v5771, %v5775
  %v5780 = vand.u32 2147483647, %v5149
  %vm5781 = vcmp.eq.f32.partialorder %v5780, 8.507059e+37
  %v5782 = vand.u32 %v5149, 2147483648
  %v5783 = vor.u32 1.1754944e-38, %v5782
  %v5784 = vsel %vm5781, %v5783, %v5779
  %v5785 = vmul.f32 1.0, %v5784
  %v5786 = vrcp.pop %v5150
  %v5787 = vmul.f32 %v5150, %v5786
  %v5788 = vsub.f32 1.0, %v5787
  %v5789 = vmul.f32 %v5786, %v5788
  %v5790 = vadd.f32 %v5786, %v5789
  %vm5791 = vweird.f32 %v5150
  %vm5792 = vweird.f32 %v5786
  %vm5793 = vmor %vm5791, %vm5792
  %v5794 = vsel %vm5793, %v5786, %v5790
  %v5795 = vand.u32 2147483647, %v5150
  %vm5796 = vcmp.eq.f32.partialorder %v5795, 8.507059e+37
  %v5797 = vand.u32 %v5150, 2147483648
  %v5798 = vor.u32 1.1754944e-38, %v5797
  %v5799 = vsel %vm5796, %v5798, %v5794
  %v5800 = vmul.f32 1.0, %v5799
  %v5801 = vrcp.pop %v5151
  %v5802 = vmul.f32 %v5151, %v5801
  %v5803 = vsub.f32 1.0, %v5802
  %v5804 = vmul.f32 %v5801, %v5803
  %v5805 = vadd.f32 %v5801, %v5804
  %vm5806 = vweird.f32 %v5151
  %vm5807 = vweird.f32 %v5801
  %vm5808 = vmor %vm5806, %vm5807
  %v5809 = vsel %vm5808, %v5801, %v5805
  %v5810 = vand.u32 2147483647, %v5151
  %vm5811 = vcmp.eq.f32.partialorder %v5810, 8.507059e+37
  %v5812 = vand.u32 %v5151, 2147483648
  %v5813 = vor.u32 1.1754944e-38, %v5812
  %v5814 = vsel %vm5811, %v5813, %v5809
  %v5815 = vmul.f32 1.0, %v5814
  %v5816 = vrcp.pop %v5152
  %v5817 = vmul.f32 %v5152, %v5816
  %v5818 = vsub.f32 1.0, %v5817
  %v5819 = vmul.f32 %v5816, %v5818
  %v5820 = vadd.f32 %v5816, %v5819
  %vm5821 = vweird.f32 %v5152
  %vm5822 = vweird.f32 %v5816
  %vm5823 = vmor %vm5821, %vm5822
  %v5824 = vsel %vm5823, %v5816, %v5820
  %v5825 = vand.u32 2147483647, %v5152
  %vm5826 = vcmp.eq.f32.partialorder %v5825, 8.507059e+37
  %v5827 = vand.u32 %v5152, 2147483648
  %v5828 = vor.u32 1.1754944e-38, %v5827
  %v5829 = vsel %vm5826, %v5828, %v5824
  %v5830 = vmul.f32 1.0, %v5829
  %v5831 = vrcp.pop %v5153
  %v5832 = vmul.f32 %v5153, %v5831
  %v5833 = vsub.f32 1.0, %v5832
  %v5834 = vmul.f32 %v5831, %v5833
  %v5835 = vadd.f32 %v5831, %v5834
  %vm5836 = vweird.f32 %v5153
  %vm5837 = vweird.f32 %v5831
  %vm5838 = vmor %vm5836, %vm5837
  %v5839 = vsel %vm5838, %v5831, %v5835
  %v5840 = vand.u32 2147483647, %v5153
  %vm5841 = vcmp.eq.f32.partialorder %v5840, 8.507059e+37
  %v5842 = vand.u32 %v5153, 2147483648
  %v5843 = vor.u32 1.1754944e-38, %v5842
  %v5844 = vsel %vm5841, %v5843, %v5839
  %v5845 = vmul.f32 1.0, %v5844
  %v5846 = vrcp.pop %v5154
  %v5847 = vmul.f32 %v5154, %v5846
  %v5848 = vsub.f32 1.0, %v5847
  %v5849 = vmul.f32 %v5846, %v5848
  %v5850 = vadd.f32 %v5846, %v5849
  %vm5851 = vweird.f32 %v5154
  %vm5852 = vweird.f32 %v5846
  %vm5853 = vmor %vm5851, %vm5852
  %v5854 = vsel %vm5853, %v5846, %v5850
  %v5855 = vand.u32 2147483647, %v5154
  %vm5856 = vcmp.eq.f32.partialorder %v5855, 8.507059e+37
  %v5857 = vand.u32 %v5154, 2147483648
  %v5858 = vor.u32 1.1754944e-38, %v5857
  %v5859 = vsel %vm5856, %v5858, %v5854
  %v5860 = vmul.f32 1.0, %v5859
  %v5861 = vrcp.pop %v5155
  %v5862 = vmul.f32 %v5155, %v5861
  %v5863 = vsub.f32 1.0, %v5862
  %v5864 = vmul.f32 %v5861, %v5863
  %v5865 = vadd.f32 %v5861, %v5864
  %vm5866 = vweird.f32 %v5155
  %vm5867 = vweird.f32 %v5861
  %vm5868 = vmor %vm5866, %vm5867
  %v5869 = vsel %vm5868, %v5861, %v5865
  %v5870 = vand.u32 2147483647, %v5155
  %vm5871 = vcmp.eq.f32.partialorder %v5870, 8.507059e+37
  %v5872 = vand.u32 %v5155, 2147483648
  %v5873 = vor.u32 1.1754944e-38, %v5872
  %v5874 = vsel %vm5871, %v5873, %v5869
  %v5875 = vmul.f32 1.0, %v5874
  %v5876 = vtanh.pop %v4948
  %v5877 = vtanh.pop %v4949
  %v5878 = vtanh.pop %v4950
  %v5879 = vtanh.pop %v4951
  %v5880 = vtanh.pop %v4952
  %v5881 = vtanh.pop %v4953
  %v5882 = vtanh.pop %v4954
  %v5883 = vtanh.pop %v4955
  %v5884 = vtanh.pop %v4956
  %v5885 = vtanh.pop %v4957
  %v5886 = vtanh.pop %v4958
  %v5887 = vtanh.pop %v4959
  %v5888 = vtanh.pop %v4960
  %v5889 = vtanh.pop %v4961
  %v5890 = vtanh.pop %v4962
  %v5891 = vtanh.pop %v4963
  %v5892 = vmul.f32 %v5410, %v82
  %v5893 = vmul.f32 %v5425, %v83
  %v5894 = vmul.f32 %v5440, %v84
  %v5895 = vmul.f32 %v5455, %v85
  %v5896 = vmul.f32 %v5470, %v86
  %v5897 = vmul.f32 %v5485, %v87
  %v5898 = vmul.f32 %v5500, %v88
  %v5899 = vmul.f32 %v5515, %v89
  %v5900 = vmul.f32 %v5530, %v90
  %v5901 = vmul.f32 %v5545, %v91
  %v5902 = vmul.f32 %v5560, %v92
  %v5903 = vmul.f32 %v5575, %v93
  %v5904 = vmul.f32 %v5590, %v94
  %v5905 = vmul.f32 %v5605, %v95
  %v5906 = vmul.f32 %v5620, %v96
  %v5907 = vmul.f32 %v5635, %v97
  %v5908 = vmul.f32 %v5170, %v5876
  %v5909 = vmul.f32 %v5185, %v5877
  %v5910 = vmul.f32 %v5200, %v5878
  %v5911 = vmul.f32 %v5215, %v5879
  %v5912 = vmul.f32 %v5230, %v5880
  %v5913 = vmul.f32 %v5245, %v5881
  %v5914 = vmul.f32 %v5260, %v5882
  %v5915 = vmul.f32 %v5275, %v5883
  %v5916 = vmul.f32 %v5290, %v5884
  %v5917 = vmul.f32 %v5305, %v5885
  %v5918 = vmul.f32 %v5320, %v5886
  %v5919 = vmul.f32 %v5335, %v5887
  %v5920 = vmul.f32 %v5350, %v5888
  %v5921 = vmul.f32 %v5365, %v5889
  %v5922 = vmul.f32 %v5380, %v5890
  %v5923 = vmul.f32 %v5395, %v5891
  %v5924 = vadd.f32 %v5892, %v5908
  %v5925 = vadd.f32 %v5893, %v5909
  %v5926 = vadd.f32 %v5894, %v5910
  %v5927 = vadd.f32 %v5895, %v5911
  %v5928 = vadd.f32 %v5896, %v5912
  %v5929 = vadd.f32 %v5897, %v5913
  %v5930 = vadd.f32 %v5898, %v5914
  %v5931 = vadd.f32 %v5899, %v5915
  %v5932 = vadd.f32 %v5900, %v5916
  %v5933 = vadd.f32 %v5901, %v5917
  %v5934 = vadd.f32 %v5902, %v5918
  %v5935 = vadd.f32 %v5903, %v5919
  %v5936 = vadd.f32 %v5904, %v5920
  %v5937 = vadd.f32 %v5905, %v5921
  %v5938 = vadd.f32 %v5906, %v5922
  %v5939 = vadd.f32 %v5907, %v5923
  %v5940 = vtanh.pop %v5924
  %v5941 = vtanh.pop %v5925
  %v5942 = vtanh.pop %v5926
  %v5943 = vtanh.pop %v5927
  %v5944 = vtanh.pop %v5928
  %v5945 = vtanh.pop %v5929
  %v5946 = vtanh.pop %v5930
  %v5947 = vtanh.pop %v5931
  %v5948 = vtanh.pop %v5932
  %v5949 = vtanh.pop %v5933
  %v5950 = vtanh.pop %v5934
  %v5951 = vtanh.pop %v5935
  %v5952 = vtanh.pop %v5936
  %v5953 = vtanh.pop %v5937
  %v5954 = vtanh.pop %v5938
  %v5955 = vtanh.pop %v5939
  %v5956 = vmul.f32 %v5650, %v5940
  %v5957 = vmul.f32 %v5665, %v5941
  %v5958 = vmul.f32 %v5680, %v5942
  %v5959 = vmul.f32 %v5695, %v5943
  %v5960 = vmul.f32 %v5710, %v5944
  %v5961 = vmul.f32 %v5725, %v5945
  %v5962 = vmul.f32 %v5740, %v5946
  %v5963 = vmul.f32 %v5755, %v5947
  %v5964 = vmul.f32 %v5770, %v5948
  %v5965 = vmul.f32 %v5785, %v5949
  %v5966 = vmul.f32 %v5800, %v5950
  %v5967 = vmul.f32 %v5815, %v5951
  %v5968 = vmul.f32 %v5830, %v5952
  %v5969 = vmul.f32 %v5845, %v5953
  %v5970 = vmul.f32 %v5860, %v5954
  %v5971 = vmul.f32 %v5875, %v5955
  %5972 = vst [vmem:[%s11] sm:$0xff] %v5956
  %5973 = vst [vmem:[%s11 + $0x8] sm:$0xff] %v5957
  %5974 = vst [vmem:[%s11 + $0x10] sm:$0xff] %v5958
  %5975 = vst [vmem:[%s11 + $0x18] sm:$0xff] %v5959
  %5976 = vst [vmem:[%s11 + $0x20] sm:$0xff] %v5960
  %5977 = vst [vmem:[%s11 + $0x28] sm:$0xff] %v5961
  %5978 = vst [vmem:[%s11 + $0x30] sm:$0xff] %v5962
  %5979 = vst [vmem:[%s11 + $0x38] sm:$0xff] %v5963
  %5980 = vst [vmem:[%s11 + $0x40] sm:$0xff] %v5964
  %5981 = vst [vmem:[%s11 + $0x48] sm:$0xff] %v5965
  %5982 = vst [vmem:[%s11 + $0x50] sm:$0xff] %v5966
  %5983 = vst [vmem:[%s11 + $0x58] sm:$0xff] %v5967
  %5984 = vst [vmem:[%s11 + $0x60] sm:$0xff] %v5968
  %5985 = vst [vmem:[%s11 + $0x68] sm:$0xff] %v5969
  %5986 = vst [vmem:[%s11 + $0x70] sm:$0xff] %v5970
  %5987 = vst [vmem:[%s11 + $0x78] sm:$0xff] %v5971
  %5988 = vst [vmem:[%s11 + $0x80] sm:$0xff] %v5924
  %5989 = vst [vmem:[%s11 + $0x88] sm:$0xff] %v5925
  %5990 = vst [vmem:[%s11 + $0x90] sm:$0xff] %v5926
  %5991 = vst [vmem:[%s11 + $0x98] sm:$0xff] %v5927
  %5992 = vst [vmem:[%s11 + $0xa0] sm:$0xff] %v5928
  %5993 = vst [vmem:[%s11 + $0xa8] sm:$0xff] %v5929
  %5994 = vst [vmem:[%s11 + $0xb0] sm:$0xff] %v5930
  %5995 = vst [vmem:[%s11 + $0xb8] sm:$0xff] %v5931
  %5996 = vst [vmem:[%s11 + $0xc0] sm:$0xff] %v5932
  %5997 = vst [vmem:[%s11 + $0xc8] sm:$0xff] %v5933
  %5998 = vst [vmem:[%s11 + $0xd0] sm:$0xff] %v5934
  %5999 = vst [vmem:[%s11 + $0xd8] sm:$0xff] %v5935
  %6000 = vst [vmem:[%s11 + $0xe0] sm:$0xff] %v5936
  %6001 = vst [vmem:[%s11 + $0xe8] sm:$0xff] %v5937
  %6002 = vst [vmem:[%s11 + $0xf0] sm:$0xff] %v5938
  %6003 = vst [vmem:[%s11 + $0xf8] sm:$0xff] %v5939
  %v6004 = vpack.c.bf16 %v5957, %v5956
  %v6005 = vpack.c.bf16 %v5959, %v5958
  %v6006 = vpack.c.bf16 %v5961, %v5960
  %v6007 = vpack.c.bf16 %v5963, %v5962
  %v6008 = vpack.c.bf16 %v5965, %v5964
  %v6009 = vpack.c.bf16 %v5967, %v5966
  %v6010 = vpack.c.bf16 %v5969, %v5968
  %v6011 = vpack.c.bf16 %v5971, %v5970
  %v6012 = vld [vmem:[%s9] sm:$0xff]
  %v6013 = vld [vmem:[%s9 + $0x8] sm:$0xff]
  %v6014 = vld [vmem:[%s9 + $0x10] sm:$0xff]
  %v6015 = vld [vmem:[%s9 + $0x18] sm:$0xff]
  %v6016 = vld [vmem:[%s9 + $0x20] sm:$0xff]
  %v6017 = vld [vmem:[%s9 + $0x28] sm:$0xff]
  %v6018 = vld [vmem:[%s9 + $0x30] sm:$0xff]
  %v6019 = vld [vmem:[%s9 + $0x38] sm:$0xff]
  %v6020 = vld [vmem:[%s9 + $0x40] sm:$0xff]
  %v6021 = vld [vmem:[%s9 + $0x48] sm:$0xff]
  %v6022 = vld [vmem:[%s9 + $0x50] sm:$0xff]
  %v6023 = vld [vmem:[%s9 + $0x58] sm:$0xff]
  %v6024 = vld [vmem:[%s9 + $0x60] sm:$0xff]
  %v6025 = vld [vmem:[%s9 + $0x68] sm:$0xff]
  %v6026 = vld [vmem:[%s9 + $0x70] sm:$0xff]
  %v6027 = vld [vmem:[%s9 + $0x78] sm:$0xff]
  %v6028 = vld [vmem:[%s10] sm:$0xff]
  %v6029 = vld [vmem:[%s10 + $0x8] sm:$0xff]
  %v6030 = vld [vmem:[%s10 + $0x10] sm:$0xff]
  %v6031 = vld [vmem:[%s10 + $0x18] sm:$0xff]
  %v6032 = vld [vmem:[%s10 + $0x20] sm:$0xff]
  %v6033 = vld [vmem:[%s10 + $0x28] sm:$0xff]
  %v6034 = vld [vmem:[%s10 + $0x30] sm:$0xff]
  %v6035 = vld [vmem:[%s10 + $0x38] sm:$0xff]
  %v6036 = vld [vmem:[%s10 + $0x40] sm:$0xff]
  %v6037 = vld [vmem:[%s10 + $0x48] sm:$0xff]
  %v6038 = vld [vmem:[%s10 + $0x50] sm:$0xff]
  %v6039 = vld [vmem:[%s10 + $0x58] sm:$0xff]
  %v6040 = vld [vmem:[%s10 + $0x60] sm:$0xff]
  %v6041 = vld [vmem:[%s10 + $0x68] sm:$0xff]
  %v6042 = vld [vmem:[%s10 + $0x70] sm:$0xff]
  %v6043 = vld [vmem:[%s10 + $0x78] sm:$0xff]
  %6044 = vst [vmem:[#allocation2 + $0x4] sm:$0xff] %v6004
  %6045 = vst [vmem:[#allocation2 + $0xc] sm:$0xff] %v6005
  %6046 = vst [vmem:[#allocation2 + $0x1c] sm:$0xff] %v6006
  %6047 = vst [vmem:[#allocation2 + $0x24] sm:$0xff] %v6007
  %6048 = vst [vmem:[#allocation2 + $0x34] sm:$0xff] %v6008
  %6049 = vst [vmem:[#allocation2 + $0x3c] sm:$0xff] %v6009
  %6050 = vst [vmem:[#allocation2 + $0x4c] sm:$0xff] %v6010
  %6051 = vst [vmem:[#allocation2 + $0x54] sm:$0xff] %v6011
  %v6052 = vpack.c.bf16 %v6013, %v6012
  %v6053 = vpack.c.bf16 %v6015, %v6014
  %v6054 = vpack.c.bf16 %v6017, %v6016
  %v6055 = vpack.c.bf16 %v6019, %v6018
  %v6056 = vpack.c.bf16 %v6021, %v6020
  %v6057 = vpack.c.bf16 %v6023, %v6022
  %v6058 = vpack.c.bf16 %v6025, %v6024
  %v6059 = vpack.c.bf16 %v6027, %v6026
  %6060 = vst [vmem:[#allocation2 + $0x64] sm:$0xff] %v6052
  %6061 = vst [vmem:[#allocation2 + $0x6c] sm:$0xff] %v6053
  %6062 = vst [vmem:[#allocation2 + $0x7c] sm:$0xff] %v6054
  %6063 = vst [vmem:[#allocation2 + $0x84] sm:$0xff] %v6055
  %6064 = vst [vmem:[#allocation2 + $0x94] sm:$0xff] %v6056
  %6065 = vst [vmem:[#allocation2 + $0x9c] sm:$0xff] %v6057
  %6066 = vst [vmem:[#allocation2 + $0xac] sm:$0xff] %v6058
  %6067 = vst [vmem:[#allocation2 + $0xb4] sm:$0xff] %v6059
  %v6068 = vld [vmem:[#allocation2] sm:$0xff]
  %v6069 = vld [vmem:[#allocation2 + $0x8] sm:$0xff]
  %v6070 = vld [vmem:[#allocation2 + $0x10] sm:$0xf]
  %v6071 = vld [vmem:[#allocation2 + $0x18] sm:$0xff]
  %v6072 = vld [vmem:[#allocation2 + $0x20] sm:$0xff]
  %v6073 = vld [vmem:[#allocation2 + $0x28] sm:$0xf]
  %v6074 = vld [vmem:[#allocation2 + $0x30] sm:$0xff]
  %v6075 = vld [vmem:[#allocation2 + $0x38] sm:$0xff]
  %v6076 = vld [vmem:[#allocation2 + $0x40] sm:$0xf]
  %v6077 = vld [vmem:[#allocation2 + $0x48] sm:$0xff]
  %v6078 = vld [vmem:[#allocation2 + $0x50] sm:$0xff]
  %v6079 = vld [vmem:[#allocation2 + $0x58] sm:$0xf]
  %v6080 = vld [vmem:[#allocation2 + $0x60] sm:$0xff]
  %v6081 = vld [vmem:[#allocation2 + $0x68] sm:$0xff]
  %v6082 = vld [vmem:[#allocation2 + $0x70] sm:$0xf]
  %v6083 = vld [vmem:[#allocation2 + $0x78] sm:$0xff]
  %v6084 = vld [vmem:[#allocation2 + $0x80] sm:$0xff]
  %v6085 = vld [vmem:[#allocation2 + $0x88] sm:$0xf]
  %v6086 = vld [vmem:[#allocation2 + $0x90] sm:$0xff]
  %v6087 = vld [vmem:[#allocation2 + $0x98] sm:$0xff]
  %v6088 = vld [vmem:[#allocation2 + $0xa0] sm:$0xf]
  %v6089 = vld [vmem:[#allocation2 + $0xa8] sm:$0xff]
  %v6090 = vld [vmem:[#allocation2 + $0xb0] sm:$0xff]
  %v6091 = vld [vmem:[#allocation2 + $0xb8] sm:$0xf]
  %v6092 = vld [vmem:[%s8] sm:$0xf]
  %6094 = vst [vmem:[#allocation1] ss:$9 sm:$0xff] %v6092
  %v6095 = vld [vmem:[#allocation1] sm:$0xff]
  %v6096 = vld [vmem:[#allocation1 + $0x9] sm:$0xff]
  %v6097 = vld [vmem:[#allocation1 + $0x12] sm:$0xff]
  %v6098 = vld [vmem:[#allocation1 + $0x1b] sm:$0xff]
  %v6099 = vpack.i.b16 %v6095, %v6095
  %v6101 = vperm.slane %v6099, 0
  %v6102 = vpack.i.b16 %v6096, %v6096
  %v6104 = vperm.slane %v6102, 0
  %v6105 = vpack.i.b16 %v6097, %v6097
  %v6107 = vperm.slane %v6105, 0
  %v6108 = vpack.i.b16 %v6098, %v6098
  %v6110 = vperm.slane %v6108, 0
  %v6111 = vunpack.c.l.bf16 %v6068
  %v6112 = vunpack.c.h.bf16 %v6068
  %v6113 = vunpack.c.l.bf16 %v6069
  %v6114 = vunpack.c.h.bf16 %v6069
  %v6115 = vunpack.c.l.bf16 %v6070
  %v6116 = vunpack.c.l.bf16 %v6071
  %v6117 = vunpack.c.h.bf16 %v6071
  %v6118 = vunpack.c.l.bf16 %v6072
  %v6119 = vunpack.c.h.bf16 %v6072
  %v6120 = vunpack.c.l.bf16 %v6073
  %v6121 = vunpack.c.l.bf16 %v6074
  %v6122 = vunpack.c.h.bf16 %v6074
  %v6123 = vunpack.c.l.bf16 %v6075
  %v6124 = vunpack.c.h.bf16 %v6075
  %v6125 = vunpack.c.l.bf16 %v6076
  %v6126 = vunpack.c.l.bf16 %v6077
  %v6127 = vunpack.c.h.bf16 %v6077
  %v6128 = vunpack.c.l.bf16 %v6078
  %v6129 = vunpack.c.h.bf16 %v6078
  %v6130 = vunpack.c.l.bf16 %v6079
  %v6131 = vunpack.c.l.bf16 %v6080
  %v6132 = vunpack.c.h.bf16 %v6080
  %v6133 = vunpack.c.l.bf16 %v6081
  %v6134 = vunpack.c.h.bf16 %v6081
  %v6135 = vunpack.c.l.bf16 %v6082
  %v6136 = vunpack.c.l.bf16 %v6083
  %v6137 = vunpack.c.h.bf16 %v6083
  %v6138 = vunpack.c.l.bf16 %v6084
  %v6139 = vunpack.c.h.bf16 %v6084
  %v6140 = vunpack.c.l.bf16 %v6085
  %v6141 = vunpack.c.l.bf16 %v6086
  %v6142 = vunpack.c.h.bf16 %v6086
  %v6143 = vunpack.c.l.bf16 %v6087
  %v6144 = vunpack.c.h.bf16 %v6087
  %v6145 = vunpack.c.l.bf16 %v6088
  %v6146 = vunpack.c.l.bf16 %v6089
  %v6147 = vunpack.c.h.bf16 %v6089
  %v6148 = vunpack.c.l.bf16 %v6090
  %v6149 = vunpack.c.h.bf16 %v6090
  %v6150 = vunpack.c.l.bf16 %v6091
  %v6151 = vunpack.c.l.bf16 %v6101
  %v6152 = vunpack.c.l.bf16 %v6104
  %v6153 = vunpack.c.l.bf16 %v6107
  %v6154 = vunpack.c.l.bf16 %v6110
  %6159 = vrot.lane.b32.xlu0 %v6151, 111
  %v6160 = vpop.permute.xlu0 %6159
  %6161 = vrot.lane.b32.xlu0 %v6152, 111
  %v6162 = vpop.permute.xlu0 %6161
  %6163 = vrot.lane.b32.xlu0 %v6153, 111
  %v6164 = vpop.permute.xlu0 %6163
  %6165 = vrot.lane.b32.xlu0 %v6154, 111
  %v6166 = vpop.permute.xlu0 %6165
  %v6167 = vsel %vm242, %v6160, %v6162
  %v6168 = vsel %vm242, %v6162, %v6164
  %v6169 = vsel %vm242, %v6164, %v6166
  %v6175 = vmul.f32 %v6111, %v6160
  %v6176 = vmul.f32 %v6112, %v6167
  %v6177 = vmul.f32 %v6113, %v6168
  %v6178 = vmul.f32 %v6114, %v6169
  %v6179 = vmul.f32 %v6115, %v6166
  %v6180 = vmul.f32 %v6116, %v6160
  %v6181 = vmul.f32 %v6117, %v6167
  %v6182 = vmul.f32 %v6118, %v6168
  %v6183 = vmul.f32 %v6119, %v6169
  %v6184 = vmul.f32 %v6120, %v6166
  %v6185 = vmul.f32 %v6121, %v6160
  %v6186 = vmul.f32 %v6122, %v6167
  %v6187 = vmul.f32 %v6123, %v6168
  %v6188 = vmul.f32 %v6124, %v6169
  %v6189 = vmul.f32 %v6125, %v6166
  %v6190 = vmul.f32 %v6126, %v6160
  %v6191 = vmul.f32 %v6127, %v6167
  %v6192 = vmul.f32 %v6128, %v6168
  %v6193 = vmul.f32 %v6129, %v6169
  %v6194 = vmul.f32 %v6130, %v6166
  %v6195 = vmul.f32 %v6131, %v6160
  %v6196 = vmul.f32 %v6132, %v6167
  %v6197 = vmul.f32 %v6133, %v6168
  %v6198 = vmul.f32 %v6134, %v6169
  %v6199 = vmul.f32 %v6135, %v6166
  %v6200 = vmul.f32 %v6136, %v6160
  %v6201 = vmul.f32 %v6137, %v6167
  %v6202 = vmul.f32 %v6138, %v6168
  %v6203 = vmul.f32 %v6139, %v6169
  %v6204 = vmul.f32 %v6140, %v6166
  %v6205 = vmul.f32 %v6141, %v6160
  %v6206 = vmul.f32 %v6142, %v6167
  %v6207 = vmul.f32 %v6143, %v6168
  %v6208 = vmul.f32 %v6144, %v6169
  %v6209 = vmul.f32 %v6145, %v6166
  %v6210 = vmul.f32 %v6146, %v6160
  %v6211 = vmul.f32 %v6147, %v6167
  %v6212 = vmul.f32 %v6148, %v6168
  %v6213 = vmul.f32 %v6149, %v6169
  %v6214 = vmul.f32 %v6150, %v6166
  %v6215 = vpack.c.bf16 %v6180, %v6175
  %v6216 = vpack.c.bf16 %v6181, %v6176
  %v6217 = vpack.c.bf16 %v6182, %v6177
  %v6218 = vpack.c.bf16 %v6183, %v6178
  %v6219 = vpack.c.bf16 %v6184, %v6179
  %v6220 = vpack.c.bf16 %v6190, %v6185
  %v6221 = vpack.c.bf16 %v6191, %v6186
  %v6222 = vpack.c.bf16 %v6192, %v6187
  %v6223 = vpack.c.bf16 %v6193, %v6188
  %v6224 = vpack.c.bf16 %v6194, %v6189
  %v6225 = vpack.c.bf16 %v6200, %v6195
  %v6226 = vpack.c.bf16 %v6201, %v6196
  %v6227 = vpack.c.bf16 %v6202, %v6197
  %v6228 = vpack.c.bf16 %v6203, %v6198
  %v6229 = vpack.c.bf16 %v6204, %v6199
  %v6230 = vpack.c.bf16 %v6210, %v6205
  %v6231 = vpack.c.bf16 %v6211, %v6206
  %v6232 = vpack.c.bf16 %v6212, %v6207
  %v6233 = vpack.c.bf16 %v6213, %v6208
  %v6234 = vpack.c.bf16 %v6214, %v6209
  %v6235 = vld [vmem:[%s6] sm:$0xf]
  %v6236 = vld [vmem:[%s6 + $0x4] sm:$0xf]
  %v6237 = vld [vmem:[%s6 + $0x8] sm:$0xf]
  %v6238 = vld [vmem:[%s6 + $0xc] sm:$0xf]
  %v6239 = vld [vmem:[%s6 + $0x10] sm:$0xf]
  %v6240 = vld [vmem:[%s6 + $0x14] sm:$0xf]
  %v6241 = vld [vmem:[%s6 + $0x18] sm:$0xf]
  %v6242 = vld [vmem:[%s6 + $0x1c] sm:$0xf]
  %v6243 = vld [vmem:[%s6 + $0x20] sm:$0xf]
  %v6244 = vld [vmem:[%s6 + $0x24] sm:$0xf]
  %v6245 = vld [vmem:[%s6 + $0x28] sm:$0xf]
  %v6246 = vld [vmem:[%s6 + $0x2c] sm:$0xf]
  %v6247 = vld [vmem:[%s6 + $0x30] sm:$0xf]
  %v6248 = vld [vmem:[%s6 + $0x34] sm:$0xf]
  %v6249 = vld [vmem:[%s6 + $0x38] sm:$0xf]
  %v6250 = vld [vmem:[%s6 + $0x3c] sm:$0xf]
  %v6251 = vld [vmem:[#allocation2] sm:$0xff]
  %v6252 = vld [vmem:[#allocation2 + $0x8] sm:$0xff]
  %v6253 = vld [vmem:[#allocation2 + $0x10] sm:$0xf]
  %v6254 = vld [vmem:[#allocation2 + $0x18] sm:$0xff]
  %v6255 = vld [vmem:[#allocation2 + $0x20] sm:$0xff]
  %v6256 = vld [vmem:[#allocation2 + $0x28] sm:$0xf]
  %v6257 = vld [vmem:[#allocation2 + $0x30] sm:$0xff]
  %v6258 = vld [vmem:[#allocation2 + $0x38] sm:$0xff]
  %v6259 = vld [vmem:[#allocation2 + $0x40] sm:$0xf]
  %v6260 = vld [vmem:[#allocation2 + $0x48] sm:$0xff]
  %v6261 = vld [vmem:[#allocation2 + $0x50] sm:$0xff]
  %v6262 = vld [vmem:[#allocation2 + $0x58] sm:$0xf]
  %v6263 = vld [vmem:[#allocation2 + $0x60] sm:$0xff]
  %v6264 = vld [vmem:[#allocation2 + $0x68] sm:$0xff]
  %v6265 = vld [vmem:[#allocation2 + $0x70] sm:$0xf]
  %v6266 = vld [vmem:[#allocation2 + $0x78] sm:$0xff]
  %v6267 = vld [vmem:[#allocation2 + $0x80] sm:$0xff]
  %v6268 = vld [vmem:[#allocation2 + $0x88] sm:$0xf]
  %v6269 = vld [vmem:[#allocation2 + $0x90] sm:$0xff]
  %v6270 = vld [vmem:[#allocation2 + $0x98] sm:$0xff]
  %v6271 = vld [vmem:[#allocation2 + $0xa0] sm:$0xf]
  %v6272 = vld [vmem:[#allocation2 + $0xa8] sm:$0xff]
  %v6273 = vld [vmem:[#allocation2 + $0xb0] sm:$0xff]
  %v6274 = vld [vmem:[#allocation2 + $0xb8] sm:$0xf]
  %s6275 = scalar_lea.vmem %s8, 4
  %v6276 = vld [vmem:[%s6275] sm:$0xf]
  %6278 = vst [vmem:[#allocation1] ss:$9 sm:$0xff] %v6276
  %v6279 = vld [vmem:[#allocation1] sm:$0xff]
  %v6280 = vld [vmem:[#allocation1 + $0x9] sm:$0xff]
  %v6281 = vld [vmem:[#allocation1 + $0x12] sm:$0xff]
  %v6282 = vld [vmem:[#allocation1 + $0x1b] sm:$0xff]
  %v6283 = vpack.i.b16 %v6279, %v6279
  %v6285 = vperm.slane %v6283, 0
  %v6286 = vpack.i.b16 %v6280, %v6280
  %v6288 = vperm.slane %v6286, 0
  %v6289 = vpack.i.b16 %v6281, %v6281
  %v6291 = vperm.slane %v6289, 0
  %v6292 = vpack.i.b16 %v6282, %v6282
  %v6294 = vperm.slane %v6292, 0
  %v6295 = vunpack.c.l.bf16 %v6251
  %v6296 = vunpack.c.h.bf16 %v6251
  %v6297 = vunpack.c.l.bf16 %v6252
  %v6298 = vunpack.c.h.bf16 %v6252
  %v6299 = vunpack.c.l.bf16 %v6253
  %v6300 = vunpack.c.l.bf16 %v6254
  %v6301 = vunpack.c.h.bf16 %v6254
  %v6302 = vunpack.c.l.bf16 %v6255
  %v6303 = vunpack.c.h.bf16 %v6255
  %v6304 = vunpack.c.l.bf16 %v6256
  %v6305 = vunpack.c.l.bf16 %v6257
  %v6306 = vunpack.c.h.bf16 %v6257
  %v6307 = vunpack.c.l.bf16 %v6258
  %v6308 = vunpack.c.h.bf16 %v6258
  %v6309 = vunpack.c.l.bf16 %v6259
  %v6310 = vunpack.c.l.bf16 %v6260
  %v6311 = vunpack.c.h.bf16 %v6260
  %v6312 = vunpack.c.l.bf16 %v6261
  %v6313 = vunpack.c.h.bf16 %v6261
  %v6314 = vunpack.c.l.bf16 %v6262
  %v6315 = vunpack.c.l.bf16 %v6263
  %v6316 = vunpack.c.h.bf16 %v6263
  %v6317 = vunpack.c.l.bf16 %v6264
  %v6318 = vunpack.c.h.bf16 %v6264
  %v6319 = vunpack.c.l.bf16 %v6265
  %v6320 = vunpack.c.l.bf16 %v6266
  %v6321 = vunpack.c.h.bf16 %v6266
  %v6322 = vunpack.c.l.bf16 %v6267
  %v6323 = vunpack.c.h.bf16 %v6267
  %v6324 = vunpack.c.l.bf16 %v6268
  %v6325 = vunpack.c.l.bf16 %v6269
  %v6326 = vunpack.c.h.bf16 %v6269
  %v6327 = vunpack.c.l.bf16 %v6270
  %v6328 = vunpack.c.h.bf16 %v6270
  %v6329 = vunpack.c.l.bf16 %v6271
  %v6330 = vunpack.c.l.bf16 %v6272
  %v6331 = vunpack.c.h.bf16 %v6272
  %v6332 = vunpack.c.l.bf16 %v6273
  %v6333 = vunpack.c.h.bf16 %v6273
  %v6334 = vunpack.c.l.bf16 %v6274
  %v6335 = vunpack.c.l.bf16 %v6285
  %v6336 = vunpack.c.l.bf16 %v6288
  %v6337 = vunpack.c.l.bf16 %v6291
  %v6338 = vunpack.c.l.bf16 %v6294
  %6343 = vrot.lane.b32.xlu0 %v6335, 112
  %v6344 = vpop.permute.xlu0 %6343
  %6345 = vrot.lane.b32.xlu0 %v6336, 112
  %v6346 = vpop.permute.xlu0 %6345
  %6347 = vrot.lane.b32.xlu0 %v6337, 112
  %v6348 = vpop.permute.xlu0 %6347
  %6349 = vrot.lane.b32.xlu0 %v6338, 112
  %v6350 = vpop.permute.xlu0 %6349
  %v6351 = vsel %vm383, %v6344, %v6346
  %v6352 = vsel %vm383, %v6346, %v6348
  %v6353 = vsel %vm383, %v6348, %v6350
  %v6359 = vmul.f32 %v6295, %v6344
  %v6360 = vmul.f32 %v6296, %v6351
  %v6361 = vmul.f32 %v6297, %v6352
  %v6362 = vmul.f32 %v6298, %v6353
  %v6363 = vmul.f32 %v6299, %v6350
  %v6364 = vmul.f32 %v6300, %v6344
  %v6365 = vmul.f32 %v6301, %v6351
  %v6366 = vmul.f32 %v6302, %v6352
  %v6367 = vmul.f32 %v6303, %v6353
  %v6368 = vmul.f32 %v6304, %v6350
  %v6369 = vmul.f32 %v6305, %v6344
  %v6370 = vmul.f32 %v6306, %v6351
  %v6371 = vmul.f32 %v6307, %v6352
  %v6372 = vmul.f32 %v6308, %v6353
  %v6373 = vmul.f32 %v6309, %v6350
  %v6374 = vmul.f32 %v6310, %v6344
  %v6375 = vmul.f32 %v6311, %v6351
  %v6376 = vmul.f32 %v6312, %v6352
  %v6377 = vmul.f32 %v6313, %v6353
  %v6378 = vmul.f32 %v6314, %v6350
  %v6379 = vmul.f32 %v6315, %v6344
  %v6380 = vmul.f32 %v6316, %v6351
  %v6381 = vmul.f32 %v6317, %v6352
  %v6382 = vmul.f32 %v6318, %v6353
  %v6383 = vmul.f32 %v6319, %v6350
  %v6384 = vmul.f32 %v6320, %v6344
  %v6385 = vmul.f32 %v6321, %v6351
  %v6386 = vmul.f32 %v6322, %v6352
  %v6387 = vmul.f32 %v6323, %v6353
  %v6388 = vmul.f32 %v6324, %v6350
  %v6389 = vmul.f32 %v6325, %v6344
  %v6390 = vmul.f32 %v6326, %v6351
  %v6391 = vmul.f32 %v6327, %v6352
  %v6392 = vmul.f32 %v6328, %v6353
  %v6393 = vmul.f32 %v6329, %v6350
  %v6394 = vmul.f32 %v6330, %v6344
  %v6395 = vmul.f32 %v6331, %v6351
  %v6396 = vmul.f32 %v6332, %v6352
  %v6397 = vmul.f32 %v6333, %v6353
  %v6398 = vmul.f32 %v6334, %v6350
  %v6399 = vpack.c.bf16 %v6364, %v6359
  %v6400 = vpack.c.bf16 %v6365, %v6360
  %v6401 = vpack.c.bf16 %v6366, %v6361
  %v6402 = vpack.c.bf16 %v6367, %v6362
  %v6403 = vpack.c.bf16 %v6368, %v6363
  %v6404 = vpack.c.bf16 %v6374, %v6369
  %v6405 = vpack.c.bf16 %v6375, %v6370
  %v6406 = vpack.c.bf16 %v6376, %v6371
  %v6407 = vpack.c.bf16 %v6377, %v6372
  %v6408 = vpack.c.bf16 %v6378, %v6373
  %v6409 = vpack.c.bf16 %v6384, %v6379
  %v6410 = vpack.c.bf16 %v6385, %v6380
  %v6411 = vpack.c.bf16 %v6386, %v6381
  %v6412 = vpack.c.bf16 %v6387, %v6382
  %v6413 = vpack.c.bf16 %v6388, %v6383
  %v6414 = vpack.c.bf16 %v6394, %v6389
  %v6415 = vpack.c.bf16 %v6395, %v6390
  %v6416 = vpack.c.bf16 %v6396, %v6391
  %v6417 = vpack.c.bf16 %v6397, %v6392
  %v6418 = vpack.c.bf16 %v6398, %v6393
  %s6419 = scalar_lea.vmem %s6, 64
  %v6420 = vld [vmem:[%s6419] sm:$0xf]
  %v6421 = vld [vmem:[%s6419 + $0x4] sm:$0xf]
  %v6422 = vld [vmem:[%s6419 + $0x8] sm:$0xf]
  %v6423 = vld [vmem:[%s6419 + $0xc] sm:$0xf]
  %v6424 = vld [vmem:[%s6419 + $0x10] sm:$0xf]
  %v6425 = vld [vmem:[%s6419 + $0x14] sm:$0xf]
  %v6426 = vld [vmem:[%s6419 + $0x18] sm:$0xf]
  %v6427 = vld [vmem:[%s6419 + $0x1c] sm:$0xf]
  %v6428 = vld [vmem:[%s6419 + $0x20] sm:$0xf]
  %v6429 = vld [vmem:[%s6419 + $0x24] sm:$0xf]
  %v6430 = vld [vmem:[%s6419 + $0x28] sm:$0xf]
  %v6431 = vld [vmem:[%s6419 + $0x2c] sm:$0xf]
  %v6432 = vld [vmem:[%s6419 + $0x30] sm:$0xf]
  %v6433 = vld [vmem:[%s6419 + $0x34] sm:$0xf]
  %v6434 = vld [vmem:[%s6419 + $0x38] sm:$0xf]
  %v6435 = vld [vmem:[%s6419 + $0x3c] sm:$0xf]
  %v6452 = vunpack.c.l.b16 %v6420
  %v6453 = vunpack.c.l.b16 %v6421
  %v6454 = vunpack.c.l.b16 %v6422
  %v6455 = vunpack.c.l.b16 %v6423
  %v6456 = vunpack.c.l.b16 %v6424
  %v6457 = vunpack.c.l.b16 %v6425
  %v6458 = vunpack.c.l.b16 %v6426
  %v6459 = vunpack.c.l.b16 %v6427
  %v6460 = vunpack.c.l.b16 %v6428
  %v6461 = vunpack.c.l.b16 %v6429
  %v6462 = vunpack.c.l.b16 %v6430
  %v6463 = vunpack.c.l.b16 %v6431
  %v6464 = vunpack.c.l.b16 %v6432
  %v6465 = vunpack.c.l.b16 %v6433
  %v6466 = vunpack.c.l.b16 %v6434
  %v6467 = vunpack.c.l.b16 %v6435
  %v6468 = vpack.c.b16 %v6453, %v6452
  %v6469 = vpack.c.b16 %v6455, %v6454
  %v6470 = vpack.c.b16 %v6457, %v6456
  %v6471 = vpack.c.b16 %v6459, %v6458
  %v6472 = vpack.c.b16 %v6461, %v6460
  %v6473 = vpack.c.b16 %v6463, %v6462
  %v6474 = vpack.c.b16 %v6465, %v6464
  %v6475 = vpack.c.b16 %v6467, %v6466
  %6496 = vrot.lane.b32.xlu0 %v6399, 16
  %v6497 = vpop.permute.xlu0 %6496
  %6498 = vrot.lane.b32.xlu0 %v6400, 16
  %v6499 = vpop.permute.xlu0 %6498
  %6500 = vrot.lane.b32.xlu0 %v6401, 16
  %v6501 = vpop.permute.xlu0 %6500
  %6502 = vrot.lane.b32.xlu0 %v6402, 16
  %v6503 = vpop.permute.xlu0 %6502
  %6504 = vrot.lane.b32.xlu0 %v6403, 16
  %v6505 = vpop.permute.xlu0 %6504
  %6506 = vrot.lane.b32.xlu0 %v6404, 16
  %v6507 = vpop.permute.xlu0 %6506
  %6508 = vrot.lane.b32.xlu0 %v6405, 16
  %v6509 = vpop.permute.xlu0 %6508
  %6510 = vrot.lane.b32.xlu0 %v6406, 16
  %v6511 = vpop.permute.xlu0 %6510
  %6512 = vrot.lane.b32.xlu0 %v6407, 16
  %v6513 = vpop.permute.xlu0 %6512
  %6514 = vrot.lane.b32.xlu0 %v6408, 16
  %v6515 = vpop.permute.xlu0 %6514
  %6516 = vrot.lane.b32.xlu0 %v6409, 16
  %v6517 = vpop.permute.xlu0 %6516
  %6518 = vrot.lane.b32.xlu0 %v6410, 16
  %v6519 = vpop.permute.xlu0 %6518
  %6520 = vrot.lane.b32.xlu0 %v6411, 16
  %v6521 = vpop.permute.xlu0 %6520
  %6522 = vrot.lane.b32.xlu0 %v6412, 16
  %v6523 = vpop.permute.xlu0 %6522
  %6524 = vrot.lane.b32.xlu0 %v6413, 16
  %v6525 = vpop.permute.xlu0 %6524
  %6526 = vrot.lane.b32.xlu0 %v6414, 16
  %v6527 = vpop.permute.xlu0 %6526
  %6528 = vrot.lane.b32.xlu0 %v6415, 16
  %v6529 = vpop.permute.xlu0 %6528
  %6530 = vrot.lane.b32.xlu0 %v6416, 16
  %v6531 = vpop.permute.xlu0 %6530
  %6532 = vrot.lane.b32.xlu0 %v6417, 16
  %v6533 = vpop.permute.xlu0 %6532
  %6534 = vrot.lane.b32.xlu0 %v6418, 16
  %v6535 = vpop.permute.xlu0 %6534
  %v6536 = vsel %vm534, %v6497, %v6499
  %v6537 = vsel %vm534, %v6499, %v6501
  %v6538 = vsel %vm534, %v6501, %v6503
  %v6539 = vsel %vm534, %v6503, %v6505
  %v6540 = vsel %vm534, %v6507, %v6509
  %v6541 = vsel %vm534, %v6509, %v6511
  %v6542 = vsel %vm534, %v6511, %v6513
  %v6543 = vsel %vm534, %v6513, %v6515
  %v6544 = vsel %vm534, %v6517, %v6519
  %v6545 = vsel %vm534, %v6519, %v6521
  %v6546 = vsel %vm534, %v6521, %v6523
  %v6547 = vsel %vm534, %v6523, %v6525
  %v6548 = vsel %vm534, %v6527, %v6529
  %v6549 = vsel %vm534, %v6529, %v6531
  %v6550 = vsel %vm534, %v6531, %v6533
  %v6551 = vsel %vm534, %v6533, %v6535
  %vm6568 = vcmask 523264
  %v6570 = vsel %vm6568, %v6468, 0
  %v6573 = vsel %vm6568, %v6469, 0
  %v6576 = vsel %vm6568, %v6470, 0
  %v6579 = vsel %vm6568, %v6471, 0
  %v6582 = vsel %vm6568, %v6472, 0
  %v6585 = vsel %vm6568, %v6473, 0
  %v6588 = vsel %vm6568, %v6474, 0
  %v6591 = vsel %vm6568, %v6475, 0
  %6593 = vmatpush.bf16.msra.mxu0 0
  %6594 = vmatpush.bf16.msra.mxu0 0
  %6595 = vmatpush.bf16.msra.mxu0 0
  %6596 = vmatpush.bf16.msra.mxu0 0
  %6597 = vmatpush.bf16.msra.mxu0 %v6548
  %6598 = vmatpush.bf16.msra.mxu0 %v6544
  %6599 = vmatpush.bf16.msra.mxu0 %v6540
  %6600 = vmatpush.bf16.msra.mxu0 %v6536
  %6601 = vmatmul.bf16.gmra.mxu0 %v6570
  %v6602 = vpop.f32.mrf.mxu0
  %v6603 = vadd.f32 0.0, %v6602
  %v6604 = vpop.f32.mrf.mxu0
  %v6605 = vadd.f32 0.0, %v6604
  %6606 = vmatmul.bf16.gmra.mxu0 %v6573
  %v6607 = vpop.f32.mrf.mxu0
  %v6608 = vadd.f32 0.0, %v6607
  %v6609 = vpop.f32.mrf.mxu0
  %v6610 = vadd.f32 0.0, %v6609
  %6611 = vmatmul.bf16.gmra.mxu0 %v6576
  %v6612 = vpop.f32.mrf.mxu0
  %v6613 = vadd.f32 0.0, %v6612
  %v6614 = vpop.f32.mrf.mxu0
  %v6615 = vadd.f32 0.0, %v6614
  %6616 = vmatmul.bf16.gmra.mxu0 %v6579
  %v6617 = vpop.f32.mrf.mxu0
  %v6618 = vadd.f32 0.0, %v6617
  %v6619 = vpop.f32.mrf.mxu0
  %v6620 = vadd.f32 0.0, %v6619
  %6621 = vmatmul.bf16.gmra.mxu0 %v6582
  %v6622 = vpop.f32.mrf.mxu0
  %v6623 = vadd.f32 0.0, %v6622
  %v6624 = vpop.f32.mrf.mxu0
  %v6625 = vadd.f32 0.0, %v6624
  %6626 = vmatmul.bf16.gmra.mxu0 %v6585
  %v6627 = vpop.f32.mrf.mxu0
  %v6628 = vadd.f32 0.0, %v6627
  %v6629 = vpop.f32.mrf.mxu0
  %v6630 = vadd.f32 0.0, %v6629
  %6631 = vmatmul.bf16.gmra.mxu0 %v6588
  %v6632 = vpop.f32.mrf.mxu0
  %v6633 = vadd.f32 0.0, %v6632
  %v6634 = vpop.f32.mrf.mxu0
  %v6635 = vadd.f32 0.0, %v6634
  %6636 = vmatmul.bf16.gmra.mxu0 %v6591
  %v6637 = vpop.f32.mrf.mxu0
  %v6638 = vadd.f32 0.0, %v6637
  %v6639 = vpop.f32.mrf.mxu0
  %v6640 = vadd.f32 0.0, %v6639
  %6641 = vdwg.mxu0
  %6642 = vmatpush.bf16.msra.mxu0 0
  %6643 = vmatpush.bf16.msra.mxu0 0
  %6644 = vmatpush.bf16.msra.mxu0 0
  %6645 = vmatpush.bf16.msra.mxu0 0
  %6646 = vmatpush.bf16.msra.mxu0 %v6549
  %6647 = vmatpush.bf16.msra.mxu0 %v6545
  %6648 = vmatpush.bf16.msra.mxu0 %v6541
  %6649 = vmatpush.bf16.msra.mxu0 %v6537
  %6650 = vmatmul.bf16.gmra.mxu0 %v6570
  %v6651 = vpop.f32.mrf.mxu0
  %v6652 = vadd.f32 0.0, %v6651
  %v6653 = vpop.f32.mrf.mxu0
  %v6654 = vadd.f32 0.0, %v6653
  %6655 = vmatmul.bf16.gmra.mxu0 %v6573
  %v6656 = vpop.f32.mrf.mxu0
  %v6657 = vadd.f32 0.0, %v6656
  %v6658 = vpop.f32.mrf.mxu0
  %v6659 = vadd.f32 0.0, %v6658
  %6660 = vmatmul.bf16.gmra.mxu0 %v6576
  %v6661 = vpop.f32.mrf.mxu0
  %v6662 = vadd.f32 0.0, %v6661
  %v6663 = vpop.f32.mrf.mxu0
  %v6664 = vadd.f32 0.0, %v6663
  %6665 = vmatmul.bf16.gmra.mxu0 %v6579
  %v6666 = vpop.f32.mrf.mxu0
  %v6667 = vadd.f32 0.0, %v6666
  %v6668 = vpop.f32.mrf.mxu0
  %v6669 = vadd.f32 0.0, %v6668
  %6670 = vmatmul.bf16.gmra.mxu0 %v6582
  %v6671 = vpop.f32.mrf.mxu0
  %v6672 = vadd.f32 0.0, %v6671
  %v6673 = vpop.f32.mrf.mxu0
  %v6674 = vadd.f32 0.0, %v6673
  %6675 = vmatmul.bf16.gmra.mxu0 %v6585
  %v6676 = vpop.f32.mrf.mxu0
  %v6677 = vadd.f32 0.0, %v6676
  %v6678 = vpop.f32.mrf.mxu0
  %v6679 = vadd.f32 0.0, %v6678
  %6680 = vmatmul.bf16.gmra.mxu0 %v6588
  %v6681 = vpop.f32.mrf.mxu0
  %v6682 = vadd.f32 0.0, %v6681
  %v6683 = vpop.f32.mrf.mxu0
  %v6684 = vadd.f32 0.0, %v6683
  %6685 = vmatmul.bf16.gmra.mxu0 %v6591
  %v6686 = vpop.f32.mrf.mxu0
  %v6687 = vadd.f32 0.0, %v6686
  %v6688 = vpop.f32.mrf.mxu0
  %v6689 = vadd.f32 0.0, %v6688
  %6690 = vdwg.mxu0
  %6691 = vmatpush.bf16.msra.mxu0 0
  %6692 = vmatpush.bf16.msra.mxu0 0
  %6693 = vmatpush.bf16.msra.mxu0 0
  %6694 = vmatpush.bf16.msra.mxu0 0
  %6695 = vmatpush.bf16.msra.mxu0 %v6550
  %6696 = vmatpush.bf16.msra.mxu0 %v6546
  %6697 = vmatpush.bf16.msra.mxu0 %v6542
  %6698 = vmatpush.bf16.msra.mxu0 %v6538
  %6699 = vmatmul.bf16.gmra.mxu0 %v6570
  %v6700 = vpop.f32.mrf.mxu0
  %v6701 = vadd.f32 0.0, %v6700
  %v6702 = vpop.f32.mrf.mxu0
  %v6703 = vadd.f32 0.0, %v6702
  %6704 = vmatmul.bf16.gmra.mxu0 %v6573
  %v6705 = vpop.f32.mrf.mxu0
  %v6706 = vadd.f32 0.0, %v6705
  %v6707 = vpop.f32.mrf.mxu0
  %v6708 = vadd.f32 0.0, %v6707
  %6709 = vmatmul.bf16.gmra.mxu0 %v6576
  %v6710 = vpop.f32.mrf.mxu0
  %v6711 = vadd.f32 0.0, %v6710
  %v6712 = vpop.f32.mrf.mxu0
  %v6713 = vadd.f32 0.0, %v6712
  %6714 = vmatmul.bf16.gmra.mxu0 %v6579
  %v6715 = vpop.f32.mrf.mxu0
  %v6716 = vadd.f32 0.0, %v6715
  %v6717 = vpop.f32.mrf.mxu0
  %v6718 = vadd.f32 0.0, %v6717
  %6719 = vmatmul.bf16.gmra.mxu0 %v6582
  %v6720 = vpop.f32.mrf.mxu0
  %v6721 = vadd.f32 0.0, %v6720
  %v6722 = vpop.f32.mrf.mxu0
  %v6723 = vadd.f32 0.0, %v6722
  %6724 = vmatmul.bf16.gmra.mxu0 %v6585
  %v6725 = vpop.f32.mrf.mxu0
  %v6726 = vadd.f32 0.0, %v6725
  %v6727 = vpop.f32.mrf.mxu0
  %v6728 = vadd.f32 0.0, %v6727
  %6729 = vmatmul.bf16.gmra.mxu0 %v6588
  %v6730 = vpop.f32.mrf.mxu0
  %v6731 = vadd.f32 0.0, %v6730
  %v6732 = vpop.f32.mrf.mxu0
  %v6733 = vadd.f32 0.0, %v6732
  %6734 = vmatmul.bf16.gmra.mxu0 %v6591
  %v6735 = vpop.f32.mrf.mxu0
  %v6736 = vadd.f32 0.0, %v6735
  %v6737 = vpop.f32.mrf.mxu0
  %v6738 = vadd.f32 0.0, %v6737
  %6739 = vdwg.mxu0
  %6740 = vmatpush.bf16.msra.mxu0 0
  %6741 = vmatpush.bf16.msra.mxu0 0
  %6742 = vmatpush.bf16.msra.mxu0 0
  %6743 = vmatpush.bf16.msra.mxu0 0
  %6744 = vmatpush.bf16.msra.mxu0 %v6551
  %6745 = vmatpush.bf16.msra.mxu0 %v6547
  %6746 = vmatpush.bf16.msra.mxu0 %v6543
  %6747 = vmatpush.bf16.msra.mxu0 %v6539
  %6748 = vmatmul.bf16.gmra.mxu0 %v6570
  %v6749 = vpop.f32.mrf.mxu0
  %v6750 = vadd.f32 0.0, %v6749
  %v6751 = vpop.f32.mrf.mxu0
  %v6752 = vadd.f32 0.0, %v6751
  %6753 = vmatmul.bf16.gmra.mxu0 %v6573
  %v6754 = vpop.f32.mrf.mxu0
  %v6755 = vadd.f32 0.0, %v6754
  %v6756 = vpop.f32.mrf.mxu0
  %v6757 = vadd.f32 0.0, %v6756
  %6758 = vmatmul.bf16.gmra.mxu0 %v6576
  %v6759 = vpop.f32.mrf.mxu0
  %v6760 = vadd.f32 0.0, %v6759
  %v6761 = vpop.f32.mrf.mxu0
  %v6762 = vadd.f32 0.0, %v6761
  %6763 = vmatmul.bf16.gmra.mxu0 %v6579
  %v6764 = vpop.f32.mrf.mxu0
  %v6765 = vadd.f32 0.0, %v6764
  %v6766 = vpop.f32.mrf.mxu0
  %v6767 = vadd.f32 0.0, %v6766
  %6768 = vmatmul.bf16.gmra.mxu0 %v6582
  %v6769 = vpop.f32.mrf.mxu0
  %v6770 = vadd.f32 0.0, %v6769
  %v6771 = vpop.f32.mrf.mxu0
  %v6772 = vadd.f32 0.0, %v6771
  %6773 = vmatmul.bf16.gmra.mxu0 %v6585
  %v6774 = vpop.f32.mrf.mxu0
  %v6775 = vadd.f32 0.0, %v6774
  %v6776 = vpop.f32.mrf.mxu0
  %v6777 = vadd.f32 0.0, %v6776
  %6778 = vmatmul.bf16.gmra.mxu0 %v6588
  %v6779 = vpop.f32.mrf.mxu0
  %v6780 = vadd.f32 0.0, %v6779
  %v6781 = vpop.f32.mrf.mxu0
  %v6782 = vadd.f32 0.0, %v6781
  %6783 = vmatmul.bf16.gmra.mxu0 %v6591
  %v6784 = vpop.f32.mrf.mxu0
  %v6785 = vadd.f32 0.0, %v6784
  %v6786 = vpop.f32.mrf.mxu0
  %v6787 = vadd.f32 0.0, %v6786
  %6788 = vdwg.mxu0
  %v6805 = vunpack.c.l.b16 %v6235
  %v6806 = vunpack.c.l.b16 %v6236
  %v6807 = vunpack.c.l.b16 %v6237
  %v6808 = vunpack.c.l.b16 %v6238
  %v6809 = vunpack.c.l.b16 %v6239
  %v6810 = vunpack.c.l.b16 %v6240
  %v6811 = vunpack.c.l.b16 %v6241
  %v6812 = vunpack.c.l.b16 %v6242
  %v6813 = vunpack.c.l.b16 %v6243
  %v6814 = vunpack.c.l.b16 %v6244
  %v6815 = vunpack.c.l.b16 %v6245
  %v6816 = vunpack.c.l.b16 %v6246
  %v6817 = vunpack.c.l.b16 %v6247
  %v6818 = vunpack.c.l.b16 %v6248
  %v6819 = vunpack.c.l.b16 %v6249
  %v6820 = vunpack.c.l.b16 %v6250
  %v6821 = vpack.c.b16 %v6806, %v6805
  %v6822 = vpack.c.b16 %v6808, %v6807
  %v6823 = vpack.c.b16 %v6810, %v6809
  %v6824 = vpack.c.b16 %v6812, %v6811
  %v6825 = vpack.c.b16 %v6814, %v6813
  %v6826 = vpack.c.b16 %v6816, %v6815
  %v6827 = vpack.c.b16 %v6818, %v6817
  %v6828 = vpack.c.b16 %v6820, %v6819
  %6849 = vrot.lane.b32.xlu0 %v6215, 17
  %v6850 = vpop.permute.xlu0 %6849
  %6851 = vrot.lane.b32.xlu0 %v6216, 17
  %v6852 = vpop.permute.xlu0 %6851
  %6853 = vrot.lane.b32.xlu0 %v6217, 17
  %v6854 = vpop.permute.xlu0 %6853
  %6855 = vrot.lane.b32.xlu0 %v6218, 17
  %v6856 = vpop.permute.xlu0 %6855
  %6857 = vrot.lane.b32.xlu0 %v6219, 17
  %v6858 = vpop.permute.xlu0 %6857
  %6859 = vrot.lane.b32.xlu0 %v6220, 17
  %v6860 = vpop.permute.xlu0 %6859
  %6861 = vrot.lane.b32.xlu0 %v6221, 17
  %v6862 = vpop.permute.xlu0 %6861
  %6863 = vrot.lane.b32.xlu0 %v6222, 17
  %v6864 = vpop.permute.xlu0 %6863
  %6865 = vrot.lane.b32.xlu0 %v6223, 17
  %v6866 = vpop.permute.xlu0 %6865
  %6867 = vrot.lane.b32.xlu0 %v6224, 17
  %v6868 = vpop.permute.xlu0 %6867
  %6869 = vrot.lane.b32.xlu0 %v6225, 17
  %v6870 = vpop.permute.xlu0 %6869
  %6871 = vrot.lane.b32.xlu0 %v6226, 17
  %v6872 = vpop.permute.xlu0 %6871
  %6873 = vrot.lane.b32.xlu0 %v6227, 17
  %v6874 = vpop.permute.xlu0 %6873
  %6875 = vrot.lane.b32.xlu0 %v6228, 17
  %v6876 = vpop.permute.xlu0 %6875
  %6877 = vrot.lane.b32.xlu0 %v6229, 17
  %v6878 = vpop.permute.xlu0 %6877
  %6879 = vrot.lane.b32.xlu0 %v6230, 17
  %v6880 = vpop.permute.xlu0 %6879
  %6881 = vrot.lane.b32.xlu0 %v6231, 17
  %v6882 = vpop.permute.xlu0 %6881
  %6883 = vrot.lane.b32.xlu0 %v6232, 17
  %v6884 = vpop.permute.xlu0 %6883
  %6885 = vrot.lane.b32.xlu0 %v6233, 17
  %v6886 = vpop.permute.xlu0 %6885
  %6887 = vrot.lane.b32.xlu0 %v6234, 17
  %v6888 = vpop.permute.xlu0 %6887
  %v6889 = vsel %vm874, %v6850, %v6852
  %v6890 = vsel %vm874, %v6852, %v6854
  %v6891 = vsel %vm874, %v6854, %v6856
  %v6892 = vsel %vm874, %v6856, %v6858
  %v6893 = vsel %vm874, %v6860, %v6862
  %v6894 = vsel %vm874, %v6862, %v6864
  %v6895 = vsel %vm874, %v6864, %v6866
  %v6896 = vsel %vm874, %v6866, %v6868
  %v6897 = vsel %vm874, %v6870, %v6872
  %v6898 = vsel %vm874, %v6872, %v6874
  %v6899 = vsel %vm874, %v6874, %v6876
  %v6900 = vsel %vm874, %v6876, %v6878
  %v6901 = vsel %vm874, %v6880, %v6882
  %v6902 = vsel %vm874, %v6882, %v6884
  %v6903 = vsel %vm874, %v6884, %v6886
  %v6904 = vsel %vm874, %v6886, %v6888
  %v6922 = vsel %vm6568, %v6821, 0
  %v6925 = vsel %vm6568, %v6822, 0
  %v6928 = vsel %vm6568, %v6823, 0
  %v6931 = vsel %vm6568, %v6824, 0
  %v6934 = vsel %vm6568, %v6825, 0
  %v6937 = vsel %vm6568, %v6826, 0
  %v6940 = vsel %vm6568, %v6827, 0
  %v6943 = vsel %vm6568, %v6828, 0
  %6945 = vmatpush.bf16.msra.mxu0 0
  %6946 = vmatpush.bf16.msra.mxu0 0
  %6947 = vmatpush.bf16.msra.mxu0 0
  %6948 = vmatpush.bf16.msra.mxu0 0
  %6949 = vmatpush.bf16.msra.mxu0 %v6901
  %6950 = vmatpush.bf16.msra.mxu0 %v6897
  %6951 = vmatpush.bf16.msra.mxu0 %v6893
  %6952 = vmatpush.bf16.msra.mxu0 %v6889
  %6953 = vmatmul.bf16.gmra.mxu0 %v6922
  %v6954 = vpop.f32.mrf.mxu0
  %v6955 = vadd.f32 %v6603, %v6954
  %v6956 = vpop.f32.mrf.mxu0
  %v6957 = vadd.f32 %v6605, %v6956
  %6958 = vmatmul.bf16.gmra.mxu0 %v6925
  %v6959 = vpop.f32.mrf.mxu0
  %v6960 = vadd.f32 %v6608, %v6959
  %v6961 = vpop.f32.mrf.mxu0
  %v6962 = vadd.f32 %v6610, %v6961
  %6963 = vmatmul.bf16.gmra.mxu0 %v6928
  %v6964 = vpop.f32.mrf.mxu0
  %v6965 = vadd.f32 %v6613, %v6964
  %v6966 = vpop.f32.mrf.mxu0
  %v6967 = vadd.f32 %v6615, %v6966
  %6968 = vmatmul.bf16.gmra.mxu0 %v6931
  %v6969 = vpop.f32.mrf.mxu0
  %v6970 = vadd.f32 %v6618, %v6969
  %v6971 = vpop.f32.mrf.mxu0
  %v6972 = vadd.f32 %v6620, %v6971
  %6973 = vmatmul.bf16.gmra.mxu0 %v6934
  %v6974 = vpop.f32.mrf.mxu0
  %v6975 = vadd.f32 %v6623, %v6974
  %v6976 = vpop.f32.mrf.mxu0
  %v6977 = vadd.f32 %v6625, %v6976
  %6978 = vmatmul.bf16.gmra.mxu0 %v6937
  %v6979 = vpop.f32.mrf.mxu0
  %v6980 = vadd.f32 %v6628, %v6979
  %v6981 = vpop.f32.mrf.mxu0
  %v6982 = vadd.f32 %v6630, %v6981
  %6983 = vmatmul.bf16.gmra.mxu0 %v6940
  %v6984 = vpop.f32.mrf.mxu0
  %v6985 = vadd.f32 %v6633, %v6984
  %v6986 = vpop.f32.mrf.mxu0
  %v6987 = vadd.f32 %v6635, %v6986
  %6988 = vmatmul.bf16.gmra.mxu0 %v6943
  %v6989 = vpop.f32.mrf.mxu0
  %v6990 = vadd.f32 %v6638, %v6989
  %v6991 = vpop.f32.mrf.mxu0
  %v6992 = vadd.f32 %v6640, %v6991
  %6993 = vdwg.mxu0
  %6994 = vmatpush.bf16.msra.mxu0 0
  %6995 = vmatpush.bf16.msra.mxu0 0
  %6996 = vmatpush.bf16.msra.mxu0 0
  %6997 = vmatpush.bf16.msra.mxu0 0
  %6998 = vmatpush.bf16.msra.mxu0 %v6902
  %6999 = vmatpush.bf16.msra.mxu0 %v6898
  %7000 = vmatpush.bf16.msra.mxu0 %v6894
  %7001 = vmatpush.bf16.msra.mxu0 %v6890
  %7002 = vmatmul.bf16.gmra.mxu0 %v6922
  %v7003 = vpop.f32.mrf.mxu0
  %v7004 = vadd.f32 %v6652, %v7003
  %v7005 = vpop.f32.mrf.mxu0
  %v7006 = vadd.f32 %v6654, %v7005
  %7007 = vmatmul.bf16.gmra.mxu0 %v6925
  %v7008 = vpop.f32.mrf.mxu0
  %v7009 = vadd.f32 %v6657, %v7008
  %v7010 = vpop.f32.mrf.mxu0
  %v7011 = vadd.f32 %v6659, %v7010
  %7012 = vmatmul.bf16.gmra.mxu0 %v6928
  %v7013 = vpop.f32.mrf.mxu0
  %v7014 = vadd.f32 %v6662, %v7013
  %v7015 = vpop.f32.mrf.mxu0
  %v7016 = vadd.f32 %v6664, %v7015
  %7017 = vmatmul.bf16.gmra.mxu0 %v6931
  %v7018 = vpop.f32.mrf.mxu0
  %v7019 = vadd.f32 %v6667, %v7018
  %v7020 = vpop.f32.mrf.mxu0
  %v7021 = vadd.f32 %v6669, %v7020
  %7022 = vmatmul.bf16.gmra.mxu0 %v6934
  %v7023 = vpop.f32.mrf.mxu0
  %v7024 = vadd.f32 %v6672, %v7023
  %v7025 = vpop.f32.mrf.mxu0
  %v7026 = vadd.f32 %v6674, %v7025
  %7027 = vmatmul.bf16.gmra.mxu0 %v6937
  %v7028 = vpop.f32.mrf.mxu0
  %v7029 = vadd.f32 %v6677, %v7028
  %v7030 = vpop.f32.mrf.mxu0
  %v7031 = vadd.f32 %v6679, %v7030
  %7032 = vmatmul.bf16.gmra.mxu0 %v6940
  %v7033 = vpop.f32.mrf.mxu0
  %v7034 = vadd.f32 %v6682, %v7033
  %v7035 = vpop.f32.mrf.mxu0
  %v7036 = vadd.f32 %v6684, %v7035
  %7037 = vmatmul.bf16.gmra.mxu0 %v6943
  %v7038 = vpop.f32.mrf.mxu0
  %v7039 = vadd.f32 %v6687, %v7038
  %v7040 = vpop.f32.mrf.mxu0
  %v7041 = vadd.f32 %v6689, %v7040
  %7042 = vdwg.mxu0
  %7043 = vmatpush.bf16.msra.mxu0 0
  %7044 = vmatpush.bf16.msra.mxu0 0
  %7045 = vmatpush.bf16.msra.mxu0 0
  %7046 = vmatpush.bf16.msra.mxu0 0
  %7047 = vmatpush.bf16.msra.mxu0 %v6903
  %7048 = vmatpush.bf16.msra.mxu0 %v6899
  %7049 = vmatpush.bf16.msra.mxu0 %v6895
  %7050 = vmatpush.bf16.msra.mxu0 %v6891
  %7051 = vmatmul.bf16.gmra.mxu0 %v6922
  %v7052 = vpop.f32.mrf.mxu0
  %v7053 = vadd.f32 %v6701, %v7052
  %v7054 = vpop.f32.mrf.mxu0
  %v7055 = vadd.f32 %v6703, %v7054
  %7056 = vmatmul.bf16.gmra.mxu0 %v6925
  %v7057 = vpop.f32.mrf.mxu0
  %v7058 = vadd.f32 %v6706, %v7057
  %v7059 = vpop.f32.mrf.mxu0
  %v7060 = vadd.f32 %v6708, %v7059
  %7061 = vmatmul.bf16.gmra.mxu0 %v6928
  %v7062 = vpop.f32.mrf.mxu0
  %v7063 = vadd.f32 %v6711, %v7062
  %v7064 = vpop.f32.mrf.mxu0
  %v7065 = vadd.f32 %v6713, %v7064
  %7066 = vmatmul.bf16.gmra.mxu0 %v6931
  %v7067 = vpop.f32.mrf.mxu0
  %v7068 = vadd.f32 %v6716, %v7067
  %v7069 = vpop.f32.mrf.mxu0
  %v7070 = vadd.f32 %v6718, %v7069
  %7071 = vmatmul.bf16.gmra.mxu0 %v6934
  %v7072 = vpop.f32.mrf.mxu0
  %v7073 = vadd.f32 %v6721, %v7072
  %v7074 = vpop.f32.mrf.mxu0
  %v7075 = vadd.f32 %v6723, %v7074
  %7076 = vmatmul.bf16.gmra.mxu0 %v6937
  %v7077 = vpop.f32.mrf.mxu0
  %v7078 = vadd.f32 %v6726, %v7077
  %v7079 = vpop.f32.mrf.mxu0
  %v7080 = vadd.f32 %v6728, %v7079
  %7081 = vmatmul.bf16.gmra.mxu0 %v6940
  %v7082 = vpop.f32.mrf.mxu0
  %v7083 = vadd.f32 %v6731, %v7082
  %v7084 = vpop.f32.mrf.mxu0
  %v7085 = vadd.f32 %v6733, %v7084
  %7086 = vmatmul.bf16.gmra.mxu0 %v6943
  %v7087 = vpop.f32.mrf.mxu0
  %v7088 = vadd.f32 %v6736, %v7087
  %v7089 = vpop.f32.mrf.mxu0
  %v7090 = vadd.f32 %v6738, %v7089
  %7091 = vdwg.mxu0
  %7092 = vmatpush.bf16.msra.mxu0 0
  %7093 = vmatpush.bf16.msra.mxu0 0
  %7094 = vmatpush.bf16.msra.mxu0 0
  %7095 = vmatpush.bf16.msra.mxu0 0
  %7096 = vmatpush.bf16.msra.mxu0 %v6904
  %7097 = vmatpush.bf16.msra.mxu0 %v6900
  %7098 = vmatpush.bf16.msra.mxu0 %v6896
  %7099 = vmatpush.bf16.msra.mxu0 %v6892
  %7100 = vmatmul.bf16.gmra.mxu0 %v6922
  %v7101 = vpop.f32.mrf.mxu0
  %v7102 = vadd.f32 %v6750, %v7101
  %v7103 = vpop.f32.mrf.mxu0
  %v7104 = vadd.f32 %v6752, %v7103
  %7105 = vmatmul.bf16.gmra.mxu0 %v6925
  %v7106 = vpop.f32.mrf.mxu0
  %v7107 = vadd.f32 %v6755, %v7106
  %v7108 = vpop.f32.mrf.mxu0
  %v7109 = vadd.f32 %v6757, %v7108
  %7110 = vmatmul.bf16.gmra.mxu0 %v6928
  %v7111 = vpop.f32.mrf.mxu0
  %v7112 = vadd.f32 %v6760, %v7111
  %v7113 = vpop.f32.mrf.mxu0
  %v7114 = vadd.f32 %v6762, %v7113
  %7115 = vmatmul.bf16.gmra.mxu0 %v6931
  %v7116 = vpop.f32.mrf.mxu0
  %v7117 = vadd.f32 %v6765, %v7116
  %v7118 = vpop.f32.mrf.mxu0
  %v7119 = vadd.f32 %v6767, %v7118
  %7120 = vmatmul.bf16.gmra.mxu0 %v6934
  %v7121 = vpop.f32.mrf.mxu0
  %v7122 = vadd.f32 %v6770, %v7121
  %v7123 = vpop.f32.mrf.mxu0
  %v7124 = vadd.f32 %v6772, %v7123
  %7125 = vmatmul.bf16.gmra.mxu0 %v6937
  %v7126 = vpop.f32.mrf.mxu0
  %v7127 = vadd.f32 %v6775, %v7126
  %v7128 = vpop.f32.mrf.mxu0
  %v7129 = vadd.f32 %v6777, %v7128
  %7130 = vmatmul.bf16.gmra.mxu0 %v6940
  %v7131 = vpop.f32.mrf.mxu0
  %v7132 = vadd.f32 %v6780, %v7131
  %v7133 = vpop.f32.mrf.mxu0
  %v7134 = vadd.f32 %v6782, %v7133
  %7135 = vmatmul.bf16.gmra.mxu0 %v6943
  %v7136 = vpop.f32.mrf.mxu0
  %v7137 = vadd.f32 %v6785, %v7136
  %v7138 = vpop.f32.mrf.mxu0
  %v7139 = vadd.f32 %v6787, %v7138
  %7140 = vdwg.mxu0
  %v7141 = vld [vmem:[#allocation2] sm:$0xff]
  %v7142 = vld [vmem:[#allocation2 + $0x8] sm:$0xff]
  %v7143 = vld [vmem:[#allocation2 + $0x10] sm:$0xf]
  %v7144 = vld [vmem:[#allocation2 + $0x18] sm:$0xff]
  %v7145 = vld [vmem:[#allocation2 + $0x20] sm:$0xff]
  %v7146 = vld [vmem:[#allocation2 + $0x28] sm:$0xf]
  %v7147 = vld [vmem:[#allocation2 + $0x30] sm:$0xff]
  %v7148 = vld [vmem:[#allocation2 + $0x38] sm:$0xff]
  %v7149 = vld [vmem:[#allocation2 + $0x40] sm:$0xf]
  %v7150 = vld [vmem:[#allocation2 + $0x48] sm:$0xff]
  %v7151 = vld [vmem:[#allocation2 + $0x50] sm:$0xff]
  %v7152 = vld [vmem:[#allocation2 + $0x58] sm:$0xf]
  %v7153 = vld [vmem:[#allocation2 + $0x60] sm:$0xff]
  %v7154 = vld [vmem:[#allocation2 + $0x68] sm:$0xff]
  %v7155 = vld [vmem:[#allocation2 + $0x70] sm:$0xf]
  %v7156 = vld [vmem:[#allocation2 + $0x78] sm:$0xff]
  %v7157 = vld [vmem:[#allocation2 + $0x80] sm:$0xff]
  %v7158 = vld [vmem:[#allocation2 + $0x88] sm:$0xf]
  %v7159 = vld [vmem:[#allocation2 + $0x90] sm:$0xff]
  %v7160 = vld [vmem:[#allocation2 + $0x98] sm:$0xff]
  %v7161 = vld [vmem:[#allocation2 + $0xa0] sm:$0xf]
  %v7162 = vld [vmem:[#allocation2 + $0xa8] sm:$0xff]
  %v7163 = vld [vmem:[#allocation2 + $0xb0] sm:$0xff]
  %v7164 = vld [vmem:[#allocation2 + $0xb8] sm:$0xf]
  %s7165 = scalar_lea.vmem %s8, 8
  %v7166 = vld [vmem:[%s7165] sm:$0xf]
  %7168 = vst [vmem:[#allocation1] ss:$9 sm:$0xff] %v7166
  %v7169 = vld [vmem:[#allocation1] sm:$0xff]
  %v7170 = vld [vmem:[#allocation1 + $0x9] sm:$0xff]
  %v7171 = vld [vmem:[#allocation1 + $0x12] sm:$0xff]
  %v7172 = vld [vmem:[#allocation1 + $0x1b] sm:$0xff]
  %v7173 = vpack.i.b16 %v7169, %v7169
  %v7175 = vperm.slane %v7173, 0
  %v7176 = vpack.i.b16 %v7170, %v7170
  %v7178 = vperm.slane %v7176, 0
  %v7179 = vpack.i.b16 %v7171, %v7171
  %v7181 = vperm.slane %v7179, 0
  %v7182 = vpack.i.b16 %v7172, %v7172
  %v7184 = vperm.slane %v7182, 0
  %v7185 = vunpack.c.l.bf16 %v7141
  %v7186 = vunpack.c.h.bf16 %v7141
  %v7187 = vunpack.c.l.bf16 %v7142
  %v7188 = vunpack.c.h.bf16 %v7142
  %v7189 = vunpack.c.l.bf16 %v7143
  %v7190 = vunpack.c.l.bf16 %v7144
  %v7191 = vunpack.c.h.bf16 %v7144
  %v7192 = vunpack.c.l.bf16 %v7145
  %v7193 = vunpack.c.h.bf16 %v7145
  %v7194 = vunpack.c.l.bf16 %v7146
  %v7195 = vunpack.c.l.bf16 %v7147
  %v7196 = vunpack.c.h.bf16 %v7147
  %v7197 = vunpack.c.l.bf16 %v7148
  %v7198 = vunpack.c.h.bf16 %v7148
  %v7199 = vunpack.c.l.bf16 %v7149
  %v7200 = vunpack.c.l.bf16 %v7150
  %v7201 = vunpack.c.h.bf16 %v7150
  %v7202 = vunpack.c.l.bf16 %v7151
  %v7203 = vunpack.c.h.bf16 %v7151
  %v7204 = vunpack.c.l.bf16 %v7152
  %v7205 = vunpack.c.l.bf16 %v7153
  %v7206 = vunpack.c.h.bf16 %v7153
  %v7207 = vunpack.c.l.bf16 %v7154
  %v7208 = vunpack.c.h.bf16 %v7154
  %v7209 = vunpack.c.l.bf16 %v7155
  %v7210 = vunpack.c.l.bf16 %v7156
  %v7211 = vunpack.c.h.bf16 %v7156
  %v7212 = vunpack.c.l.bf16 %v7157
  %v7213 = vunpack.c.h.bf16 %v7157
  %v7214 = vunpack.c.l.bf16 %v7158
  %v7215 = vunpack.c.l.bf16 %v7159
  %v7216 = vunpack.c.h.bf16 %v7159
  %v7217 = vunpack.c.l.bf16 %v7160
  %v7218 = vunpack.c.h.bf16 %v7160
  %v7219 = vunpack.c.l.bf16 %v7161
  %v7220 = vunpack.c.l.bf16 %v7162
  %v7221 = vunpack.c.h.bf16 %v7162
  %v7222 = vunpack.c.l.bf16 %v7163
  %v7223 = vunpack.c.h.bf16 %v7163
  %v7224 = vunpack.c.l.bf16 %v7164
  %v7225 = vunpack.c.l.bf16 %v7175
  %v7226 = vunpack.c.l.bf16 %v7178
  %v7227 = vunpack.c.l.bf16 %v7181
  %v7228 = vunpack.c.l.bf16 %v7184
  %7233 = vrot.lane.b32.xlu0 %v7225, 113
  %v7234 = vpop.permute.xlu0 %7233
  %7235 = vrot.lane.b32.xlu0 %v7226, 113
  %v7236 = vpop.permute.xlu0 %7235
  %7237 = vrot.lane.b32.xlu0 %v7227, 113
  %v7238 = vpop.permute.xlu0 %7237
  %7239 = vrot.lane.b32.xlu0 %v7228, 113
  %v7240 = vpop.permute.xlu0 %7239
  %v7241 = vsel %vm1203, %v7234, %v7236
  %v7242 = vsel %vm1203, %v7236, %v7238
  %v7243 = vsel %vm1203, %v7238, %v7240
  %v7249 = vmul.f32 %v7185, %v7234
  %v7250 = vmul.f32 %v7186, %v7241
  %v7251 = vmul.f32 %v7187, %v7242
  %v7252 = vmul.f32 %v7188, %v7243
  %v7253 = vmul.f32 %v7189, %v7240
  %v7254 = vmul.f32 %v7190, %v7234
  %v7255 = vmul.f32 %v7191, %v7241
  %v7256 = vmul.f32 %v7192, %v7242
  %v7257 = vmul.f32 %v7193, %v7243
  %v7258 = vmul.f32 %v7194, %v7240
  %v7259 = vmul.f32 %v7195, %v7234
  %v7260 = vmul.f32 %v7196, %v7241
  %v7261 = vmul.f32 %v7197, %v7242
  %v7262 = vmul.f32 %v7198, %v7243
  %v7263 = vmul.f32 %v7199, %v7240
  %v7264 = vmul.f32 %v7200, %v7234
  %v7265 = vmul.f32 %v7201, %v7241
  %v7266 = vmul.f32 %v7202, %v7242
  %v7267 = vmul.f32 %v7203, %v7243
  %v7268 = vmul.f32 %v7204, %v7240
  %v7269 = vmul.f32 %v7205, %v7234
  %v7270 = vmul.f32 %v7206, %v7241
  %v7271 = vmul.f32 %v7207, %v7242
  %v7272 = vmul.f32 %v7208, %v7243
  %v7273 = vmul.f32 %v7209, %v7240
  %v7274 = vmul.f32 %v7210, %v7234
  %v7275 = vmul.f32 %v7211, %v7241
  %v7276 = vmul.f32 %v7212, %v7242
  %v7277 = vmul.f32 %v7213, %v7243
  %v7278 = vmul.f32 %v7214, %v7240
  %v7279 = vmul.f32 %v7215, %v7234
  %v7280 = vmul.f32 %v7216, %v7241
  %v7281 = vmul.f32 %v7217, %v7242
  %v7282 = vmul.f32 %v7218, %v7243
  %v7283 = vmul.f32 %v7219, %v7240
  %v7284 = vmul.f32 %v7220, %v7234
  %v7285 = vmul.f32 %v7221, %v7241
  %v7286 = vmul.f32 %v7222, %v7242
  %v7287 = vmul.f32 %v7223, %v7243
  %v7288 = vmul.f32 %v7224, %v7240
  %v7289 = vpack.c.bf16 %v7254, %v7249
  %v7290 = vpack.c.bf16 %v7255, %v7250
  %v7291 = vpack.c.bf16 %v7256, %v7251
  %v7292 = vpack.c.bf16 %v7257, %v7252
  %v7293 = vpack.c.bf16 %v7258, %v7253
  %v7294 = vpack.c.bf16 %v7264, %v7259
  %v7295 = vpack.c.bf16 %v7265, %v7260
  %v7296 = vpack.c.bf16 %v7266, %v7261
  %v7297 = vpack.c.bf16 %v7267, %v7262
  %v7298 = vpack.c.bf16 %v7268, %v7263
  %v7299 = vpack.c.bf16 %v7274, %v7269
  %v7300 = vpack.c.bf16 %v7275, %v7270
  %v7301 = vpack.c.bf16 %v7276, %v7271
  %v7302 = vpack.c.bf16 %v7277, %v7272
  %v7303 = vpack.c.bf16 %v7278, %v7273
  %v7304 = vpack.c.bf16 %v7284, %v7279
  %v7305 = vpack.c.bf16 %v7285, %v7280
  %v7306 = vpack.c.bf16 %v7286, %v7281
  %v7307 = vpack.c.bf16 %v7287, %v7282
  %v7308 = vpack.c.bf16 %v7288, %v7283
  %s7309 = scalar_lea.vmem %s6, 128
  %v7310 = vld [vmem:[%s7309] sm:$0xf]
  %v7311 = vld [vmem:[%s7309 + $0x4] sm:$0xf]
  %v7312 = vld [vmem:[%s7309 + $0x8] sm:$0xf]
  %v7313 = vld [vmem:[%s7309 + $0xc] sm:$0xf]
  %v7314 = vld [vmem:[%s7309 + $0x10] sm:$0xf]
  %v7315 = vld [vmem:[%s7309 + $0x14] sm:$0xf]
  %v7316 = vld [vmem:[%s7309 + $0x18] sm:$0xf]
  %v7317 = vld [vmem:[%s7309 + $0x1c] sm:$0xf]
  %v7318 = vld [vmem:[%s7309 + $0x20] sm:$0xf]
  %v7319 = vld [vmem:[%s7309 + $0x24] sm:$0xf]
  %v7320 = vld [vmem:[%s7309 + $0x28] sm:$0xf]
  %v7321 = vld [vmem:[%s7309 + $0x2c] sm:$0xf]
  %v7322 = vld [vmem:[%s7309 + $0x30] sm:$0xf]
  %v7323 = vld [vmem:[%s7309 + $0x34] sm:$0xf]
  %v7324 = vld [vmem:[%s7309 + $0x38] sm:$0xf]
  %v7325 = vld [vmem:[%s7309 + $0x3c] sm:$0xf]
  %v7342 = vunpack.c.l.b16 %v7310
  %v7343 = vunpack.c.l.b16 %v7311
  %v7344 = vunpack.c.l.b16 %v7312
  %v7345 = vunpack.c.l.b16 %v7313
  %v7346 = vunpack.c.l.b16 %v7314
  %v7347 = vunpack.c.l.b16 %v7315
  %v7348 = vunpack.c.l.b16 %v7316
  %v7349 = vunpack.c.l.b16 %v7317
  %v7350 = vunpack.c.l.b16 %v7318
  %v7351 = vunpack.c.l.b16 %v7319
  %v7352 = vunpack.c.l.b16 %v7320
  %v7353 = vunpack.c.l.b16 %v7321
  %v7354 = vunpack.c.l.b16 %v7322
  %v7355 = vunpack.c.l.b16 %v7323
  %v7356 = vunpack.c.l.b16 %v7324
  %v7357 = vunpack.c.l.b16 %v7325
  %v7358 = vpack.c.b16 %v7343, %v7342
  %v7359 = vpack.c.b16 %v7345, %v7344
  %v7360 = vpack.c.b16 %v7347, %v7346
  %v7361 = vpack.c.b16 %v7349, %v7348
  %v7362 = vpack.c.b16 %v7351, %v7350
  %v7363 = vpack.c.b16 %v7353, %v7352
  %v7364 = vpack.c.b16 %v7355, %v7354
  %v7365 = vpack.c.b16 %v7357, %v7356
  %7386 = vrot.lane.b32.xlu0 %v7289, 15
  %v7387 = vpop.permute.xlu0 %7386
  %7388 = vrot.lane.b32.xlu0 %v7290, 15
  %v7389 = vpop.permute.xlu0 %7388
  %7390 = vrot.lane.b32.xlu0 %v7291, 15
  %v7391 = vpop.permute.xlu0 %7390
  %7392 = vrot.lane.b32.xlu0 %v7292, 15
  %v7393 = vpop.permute.xlu0 %7392
  %7394 = vrot.lane.b32.xlu0 %v7293, 15
  %v7395 = vpop.permute.xlu0 %7394
  %7396 = vrot.lane.b32.xlu0 %v7294, 15
  %v7397 = vpop.permute.xlu0 %7396
  %7398 = vrot.lane.b32.xlu0 %v7295, 15
  %v7399 = vpop.permute.xlu0 %7398
  %7400 = vrot.lane.b32.xlu0 %v7296, 15
  %v7401 = vpop.permute.xlu0 %7400
  %7402 = vrot.lane.b32.xlu0 %v7297, 15
  %v7403 = vpop.permute.xlu0 %7402
  %7404 = vrot.lane.b32.xlu0 %v7298, 15
  %v7405 = vpop.permute.xlu0 %7404
  %7406 = vrot.lane.b32.xlu0 %v7299, 15
  %v7407 = vpop.permute.xlu0 %7406
  %7408 = vrot.lane.b32.xlu0 %v7300, 15
  %v7409 = vpop.permute.xlu0 %7408
  %7410 = vrot.lane.b32.xlu0 %v7301, 15
  %v7411 = vpop.permute.xlu0 %7410
  %7412 = vrot.lane.b32.xlu0 %v7302, 15
  %v7413 = vpop.permute.xlu0 %7412
  %7414 = vrot.lane.b32.xlu0 %v7303, 15
  %v7415 = vpop.permute.xlu0 %7414
  %7416 = vrot.lane.b32.xlu0 %v7304, 15
  %v7417 = vpop.permute.xlu0 %7416
  %7418 = vrot.lane.b32.xlu0 %v7305, 15
  %v7419 = vpop.permute.xlu0 %7418
  %7420 = vrot.lane.b32.xlu0 %v7306, 15
  %v7421 = vpop.permute.xlu0 %7420
  %7422 = vrot.lane.b32.xlu0 %v7307, 15
  %v7423 = vpop.permute.xlu0 %7422
  %7424 = vrot.lane.b32.xlu0 %v7308, 15
  %v7425 = vpop.permute.xlu0 %7424
  %v7426 = vsel %vm1354, %v7387, %v7389
  %v7427 = vsel %vm1354, %v7389, %v7391
  %v7428 = vsel %vm1354, %v7391, %v7393
  %v7429 = vsel %vm1354, %v7393, %v7395
  %v7430 = vsel %vm1354, %v7397, %v7399
  %v7431 = vsel %vm1354, %v7399, %v7401
  %v7432 = vsel %vm1354, %v7401, %v7403
  %v7433 = vsel %vm1354, %v7403, %v7405
  %v7434 = vsel %vm1354, %v7407, %v7409
  %v7435 = vsel %vm1354, %v7409, %v7411
  %v7436 = vsel %vm1354, %v7411, %v7413
  %v7437 = vsel %vm1354, %v7413, %v7415
  %v7438 = vsel %vm1354, %v7417, %v7419
  %v7439 = vsel %vm1354, %v7419, %v7421
  %v7440 = vsel %vm1354, %v7421, %v7423
  %v7441 = vsel %vm1354, %v7423, %v7425
  %v7459 = vsel %vm6568, %v7358, 0
  %v7462 = vsel %vm6568, %v7359, 0
  %v7465 = vsel %vm6568, %v7360, 0
  %v7468 = vsel %vm6568, %v7361, 0
  %v7471 = vsel %vm6568, %v7362, 0
  %v7474 = vsel %vm6568, %v7363, 0
  %v7477 = vsel %vm6568, %v7364, 0
  %v7480 = vsel %vm6568, %v7365, 0
  %7482 = vmatpush.bf16.msra.mxu0 0
  %7483 = vmatpush.bf16.msra.mxu0 0
  %7484 = vmatpush.bf16.msra.mxu0 0
  %7485 = vmatpush.bf16.msra.mxu0 0
  %7486 = vmatpush.bf16.msra.mxu0 %v7438
  %7487 = vmatpush.bf16.msra.mxu0 %v7434
  %7488 = vmatpush.bf16.msra.mxu0 %v7430
  %7489 = vmatpush.bf16.msra.mxu0 %v7426
  %7490 = vmatmul.bf16.gmra.mxu0 %v7459
  %v7491 = vpop.f32.mrf.mxu0
  %v7492 = vadd.f32 0.0, %v7491
  %v7493 = vpop.f32.mrf.mxu0
  %v7494 = vadd.f32 0.0, %v7493
  %7495 = vmatmul.bf16.gmra.mxu0 %v7462
  %v7496 = vpop.f32.mrf.mxu0
  %v7497 = vadd.f32 0.0, %v7496
  %v7498 = vpop.f32.mrf.mxu0
  %v7499 = vadd.f32 0.0, %v7498
  %7500 = vmatmul.bf16.gmra.mxu0 %v7465
  %v7501 = vpop.f32.mrf.mxu0
  %v7502 = vadd.f32 0.0, %v7501
  %v7503 = vpop.f32.mrf.mxu0
  %v7504 = vadd.f32 0.0, %v7503
  %7505 = vmatmul.bf16.gmra.mxu0 %v7468
  %v7506 = vpop.f32.mrf.mxu0
  %v7507 = vadd.f32 0.0, %v7506
  %v7508 = vpop.f32.mrf.mxu0
  %v7509 = vadd.f32 0.0, %v7508
  %7510 = vmatmul.bf16.gmra.mxu0 %v7471
  %v7511 = vpop.f32.mrf.mxu0
  %v7512 = vadd.f32 0.0, %v7511
  %v7513 = vpop.f32.mrf.mxu0
  %v7514 = vadd.f32 0.0, %v7513
  %7515 = vmatmul.bf16.gmra.mxu0 %v7474
  %v7516 = vpop.f32.mrf.mxu0
  %v7517 = vadd.f32 0.0, %v7516
  %v7518 = vpop.f32.mrf.mxu0
  %v7519 = vadd.f32 0.0, %v7518
  %7520 = vmatmul.bf16.gmra.mxu0 %v7477
  %v7521 = vpop.f32.mrf.mxu0
  %v7522 = vadd.f32 0.0, %v7521
  %v7523 = vpop.f32.mrf.mxu0
  %v7524 = vadd.f32 0.0, %v7523
  %7525 = vmatmul.bf16.gmra.mxu0 %v7480
  %v7526 = vpop.f32.mrf.mxu0
  %v7527 = vadd.f32 0.0, %v7526
  %v7528 = vpop.f32.mrf.mxu0
  %v7529 = vadd.f32 0.0, %v7528
  %7530 = vdwg.mxu0
  %7531 = vmatpush.bf16.msra.mxu0 0
  %7532 = vmatpush.bf16.msra.mxu0 0
  %7533 = vmatpush.bf16.msra.mxu0 0
  %7534 = vmatpush.bf16.msra.mxu0 0
  %7535 = vmatpush.bf16.msra.mxu0 %v7439
  %7536 = vmatpush.bf16.msra.mxu0 %v7435
  %7537 = vmatpush.bf16.msra.mxu0 %v7431
  %7538 = vmatpush.bf16.msra.mxu0 %v7427
  %7539 = vmatmul.bf16.gmra.mxu0 %v7459
  %v7540 = vpop.f32.mrf.mxu0
  %v7541 = vadd.f32 0.0, %v7540
  %v7542 = vpop.f32.mrf.mxu0
  %v7543 = vadd.f32 0.0, %v7542
  %7544 = vmatmul.bf16.gmra.mxu0 %v7462
  %v7545 = vpop.f32.mrf.mxu0
  %v7546 = vadd.f32 0.0, %v7545
  %v7547 = vpop.f32.mrf.mxu0
  %v7548 = vadd.f32 0.0, %v7547
  %7549 = vmatmul.bf16.gmra.mxu0 %v7465
  %v7550 = vpop.f32.mrf.mxu0
  %v7551 = vadd.f32 0.0, %v7550
  %v7552 = vpop.f32.mrf.mxu0
  %v7553 = vadd.f32 0.0, %v7552
  %7554 = vmatmul.bf16.gmra.mxu0 %v7468
  %v7555 = vpop.f32.mrf.mxu0
  %v7556 = vadd.f32 0.0, %v7555
  %v7557 = vpop.f32.mrf.mxu0
  %v7558 = vadd.f32 0.0, %v7557
  %7559 = vmatmul.bf16.gmra.mxu0 %v7471
  %v7560 = vpop.f32.mrf.mxu0
  %v7561 = vadd.f32 0.0, %v7560
  %v7562 = vpop.f32.mrf.mxu0
  %v7563 = vadd.f32 0.0, %v7562
  %7564 = vmatmul.bf16.gmra.mxu0 %v7474
  %v7565 = vpop.f32.mrf.mxu0
  %v7566 = vadd.f32 0.0, %v7565
  %v7567 = vpop.f32.mrf.mxu0
  %v7568 = vadd.f32 0.0, %v7567
  %7569 = vmatmul.bf16.gmra.mxu0 %v7477
  %v7570 = vpop.f32.mrf.mxu0
  %v7571 = vadd.f32 0.0, %v7570
  %v7572 = vpop.f32.mrf.mxu0
  %v7573 = vadd.f32 0.0, %v7572
  %7574 = vmatmul.bf16.gmra.mxu0 %v7480
  %v7575 = vpop.f32.mrf.mxu0
  %v7576 = vadd.f32 0.0, %v7575
  %v7577 = vpop.f32.mrf.mxu0
  %v7578 = vadd.f32 0.0, %v7577
  %7579 = vdwg.mxu0
  %7580 = vmatpush.bf16.msra.mxu0 0
  %7581 = vmatpush.bf16.msra.mxu0 0
  %7582 = vmatpush.bf16.msra.mxu0 0
  %7583 = vmatpush.bf16.msra.mxu0 0
  %7584 = vmatpush.bf16.msra.mxu0 %v7440
  %7585 = vmatpush.bf16.msra.mxu0 %v7436
  %7586 = vmatpush.bf16.msra.mxu0 %v7432
  %7587 = vmatpush.bf16.msra.mxu0 %v7428
  %7588 = vmatmul.bf16.gmra.mxu0 %v7459
  %v7589 = vpop.f32.mrf.mxu0
  %v7590 = vadd.f32 0.0, %v7589
  %v7591 = vpop.f32.mrf.mxu0
  %v7592 = vadd.f32 0.0, %v7591
  %7593 = vmatmul.bf16.gmra.mxu0 %v7462
  %v7594 = vpop.f32.mrf.mxu0
  %v7595 = vadd.f32 0.0, %v7594
  %v7596 = vpop.f32.mrf.mxu0
  %v7597 = vadd.f32 0.0, %v7596
  %7598 = vmatmul.bf16.gmra.mxu0 %v7465
  %v7599 = vpop.f32.mrf.mxu0
  %v7600 = vadd.f32 0.0, %v7599
  %v7601 = vpop.f32.mrf.mxu0
  %v7602 = vadd.f32 0.0, %v7601
  %7603 = vmatmul.bf16.gmra.mxu0 %v7468
  %v7604 = vpop.f32.mrf.mxu0
  %v7605 = vadd.f32 0.0, %v7604
  %v7606 = vpop.f32.mrf.mxu0
  %v7607 = vadd.f32 0.0, %v7606
  %7608 = vmatmul.bf16.gmra.mxu0 %v7471
  %v7609 = vpop.f32.mrf.mxu0
  %v7610 = vadd.f32 0.0, %v7609
  %v7611 = vpop.f32.mrf.mxu0
  %v7612 = vadd.f32 0.0, %v7611
  %7613 = vmatmul.bf16.gmra.mxu0 %v7474
  %v7614 = vpop.f32.mrf.mxu0
  %v7615 = vadd.f32 0.0, %v7614
  %v7616 = vpop.f32.mrf.mxu0
  %v7617 = vadd.f32 0.0, %v7616
  %7618 = vmatmul.bf16.gmra.mxu0 %v7477
  %v7619 = vpop.f32.mrf.mxu0
  %v7620 = vadd.f32 0.0, %v7619
  %v7621 = vpop.f32.mrf.mxu0
  %v7622 = vadd.f32 0.0, %v7621
  %7623 = vmatmul.bf16.gmra.mxu0 %v7480
  %v7624 = vpop.f32.mrf.mxu0
  %v7625 = vadd.f32 0.0, %v7624
  %v7626 = vpop.f32.mrf.mxu0
  %v7627 = vadd.f32 0.0, %v7626
  %7628 = vdwg.mxu0
  %7629 = vmatpush.bf16.msra.mxu0 0
  %7630 = vmatpush.bf16.msra.mxu0 0
  %7631 = vmatpush.bf16.msra.mxu0 0
  %7632 = vmatpush.bf16.msra.mxu0 0
  %7633 = vmatpush.bf16.msra.mxu0 %v7441
  %7634 = vmatpush.bf16.msra.mxu0 %v7437
  %7635 = vmatpush.bf16.msra.mxu0 %v7433
  %7636 = vmatpush.bf16.msra.mxu0 %v7429
  %7637 = vmatmul.bf16.gmra.mxu0 %v7459
  %v7638 = vpop.f32.mrf.mxu0
  %v7639 = vadd.f32 0.0, %v7638
  %v7640 = vpop.f32.mrf.mxu0
  %v7641 = vadd.f32 0.0, %v7640
  %7642 = vmatmul.bf16.gmra.mxu0 %v7462
  %v7643 = vpop.f32.mrf.mxu0
  %v7644 = vadd.f32 0.0, %v7643
  %v7645 = vpop.f32.mrf.mxu0
  %v7646 = vadd.f32 0.0, %v7645
  %7647 = vmatmul.bf16.gmra.mxu0 %v7465
  %v7648 = vpop.f32.mrf.mxu0
  %v7649 = vadd.f32 0.0, %v7648
  %v7650 = vpop.f32.mrf.mxu0
  %v7651 = vadd.f32 0.0, %v7650
  %7652 = vmatmul.bf16.gmra.mxu0 %v7468
  %v7653 = vpop.f32.mrf.mxu0
  %v7654 = vadd.f32 0.0, %v7653
  %v7655 = vpop.f32.mrf.mxu0
  %v7656 = vadd.f32 0.0, %v7655
  %7657 = vmatmul.bf16.gmra.mxu0 %v7471
  %v7658 = vpop.f32.mrf.mxu0
  %v7659 = vadd.f32 0.0, %v7658
  %v7660 = vpop.f32.mrf.mxu0
  %v7661 = vadd.f32 0.0, %v7660
  %7662 = vmatmul.bf16.gmra.mxu0 %v7474
  %v7663 = vpop.f32.mrf.mxu0
  %v7664 = vadd.f32 0.0, %v7663
  %v7665 = vpop.f32.mrf.mxu0
  %v7666 = vadd.f32 0.0, %v7665
  %7667 = vmatmul.bf16.gmra.mxu0 %v7477
  %v7668 = vpop.f32.mrf.mxu0
  %v7669 = vadd.f32 0.0, %v7668
  %v7670 = vpop.f32.mrf.mxu0
  %v7671 = vadd.f32 0.0, %v7670
  %7672 = vmatmul.bf16.gmra.mxu0 %v7480
  %v7673 = vpop.f32.mrf.mxu0
  %v7674 = vadd.f32 0.0, %v7673
  %v7675 = vpop.f32.mrf.mxu0
  %v7676 = vadd.f32 0.0, %v7675
  %7677 = vdwg.mxu0
  %v7678 = vadd.f32 %v6955, %v7492
  %v7679 = vadd.f32 %v7004, %v7541
  %v7680 = vadd.f32 %v7053, %v7590
  %v7681 = vadd.f32 %v7102, %v7639
  %v7682 = vadd.f32 %v6957, %v7494
  %v7683 = vadd.f32 %v7006, %v7543
  %v7684 = vadd.f32 %v7055, %v7592
  %v7685 = vadd.f32 %v7104, %v7641
  %v7686 = vadd.f32 %v6960, %v7497
  %v7687 = vadd.f32 %v7009, %v7546
  %v7688 = vadd.f32 %v7058, %v7595
  %v7689 = vadd.f32 %v7107, %v7644
  %v7690 = vadd.f32 %v6962, %v7499
  %v7691 = vadd.f32 %v7011, %v7548
  %v7692 = vadd.f32 %v7060, %v7597
  %v7693 = vadd.f32 %v7109, %v7646
  %v7694 = vadd.f32 %v6965, %v7502
  %v7695 = vadd.f32 %v7014, %v7551
  %v7696 = vadd.f32 %v7063, %v7600
  %v7697 = vadd.f32 %v7112, %v7649
  %v7698 = vadd.f32 %v6967, %v7504
  %v7699 = vadd.f32 %v7016, %v7553
  %v7700 = vadd.f32 %v7065, %v7602
  %v7701 = vadd.f32 %v7114, %v7651
  %v7702 = vadd.f32 %v6970, %v7507
  %v7703 = vadd.f32 %v7019, %v7556
  %v7704 = vadd.f32 %v7068, %v7605
  %v7705 = vadd.f32 %v7117, %v7654
  %v7706 = vadd.f32 %v6972, %v7509
  %v7707 = vadd.f32 %v7021, %v7558
  %v7708 = vadd.f32 %v7070, %v7607
  %v7709 = vadd.f32 %v7119, %v7656
  %v7710 = vadd.f32 %v6975, %v7512
  %v7711 = vadd.f32 %v7024, %v7561
  %v7712 = vadd.f32 %v7073, %v7610
  %v7713 = vadd.f32 %v7122, %v7659
  %v7714 = vadd.f32 %v6977, %v7514
  %v7715 = vadd.f32 %v7026, %v7563
  %v7716 = vadd.f32 %v7075, %v7612
  %v7717 = vadd.f32 %v7124, %v7661
  %v7718 = vadd.f32 %v6980, %v7517
  %v7719 = vadd.f32 %v7029, %v7566
  %v7720 = vadd.f32 %v7078, %v7615
  %v7721 = vadd.f32 %v7127, %v7664
  %v7722 = vadd.f32 %v6982, %v7519
  %v7723 = vadd.f32 %v7031, %v7568
  %v7724 = vadd.f32 %v7080, %v7617
  %v7725 = vadd.f32 %v7129, %v7666
  %v7726 = vadd.f32 %v6985, %v7522
  %v7727 = vadd.f32 %v7034, %v7571
  %v7728 = vadd.f32 %v7083, %v7620
  %v7729 = vadd.f32 %v7132, %v7669
  %v7730 = vadd.f32 %v6987, %v7524
  %v7731 = vadd.f32 %v7036, %v7573
  %v7732 = vadd.f32 %v7085, %v7622
  %v7733 = vadd.f32 %v7134, %v7671
  %v7734 = vadd.f32 %v6990, %v7527
  %v7735 = vadd.f32 %v7039, %v7576
  %v7736 = vadd.f32 %v7088, %v7625
  %v7737 = vadd.f32 %v7137, %v7674
  %v7738 = vadd.f32 %v6992, %v7529
  %v7739 = vadd.f32 %v7041, %v7578
  %v7740 = vadd.f32 %v7090, %v7627
  %v7741 = vadd.f32 %v7139, %v7676
  %v7742 = vld [vmem:[#allocation2] sm:$0xff]
  %v7743 = vld [vmem:[#allocation2 + $0x8] sm:$0xff]
  %v7744 = vld [vmem:[#allocation2 + $0x10] sm:$0xf]
  %v7745 = vld [vmem:[#allocation2 + $0x18] sm:$0xff]
  %v7746 = vld [vmem:[#allocation2 + $0x20] sm:$0xff]
  %v7747 = vld [vmem:[#allocation2 + $0x28] sm:$0xf]
  %v7748 = vld [vmem:[#allocation2 + $0x30] sm:$0xff]
  %v7749 = vld [vmem:[#allocation2 + $0x38] sm:$0xff]
  %v7750 = vld [vmem:[#allocation2 + $0x40] sm:$0xf]
  %v7751 = vld [vmem:[#allocation2 + $0x48] sm:$0xff]
  %v7752 = vld [vmem:[#allocation2 + $0x50] sm:$0xff]
  %v7753 = vld [vmem:[#allocation2 + $0x58] sm:$0xf]
  %v7754 = vld [vmem:[#allocation2 + $0x60] sm:$0xff]
  %v7755 = vld [vmem:[#allocation2 + $0x68] sm:$0xff]
  %v7756 = vld [vmem:[#allocation2 + $0x70] sm:$0xf]
  %v7757 = vld [vmem:[#allocation2 + $0x78] sm:$0xff]
  %v7758 = vld [vmem:[#allocation2 + $0x80] sm:$0xff]
  %v7759 = vld [vmem:[#allocation2 + $0x88] sm:$0xf]
  %v7760 = vld [vmem:[#allocation2 + $0x90] sm:$0xff]
  %v7761 = vld [vmem:[#allocation2 + $0x98] sm:$0xff]
  %v7762 = vld [vmem:[#allocation2 + $0xa0] sm:$0xf]
  %v7763 = vld [vmem:[#allocation2 + $0xa8] sm:$0xff]
  %v7764 = vld [vmem:[#allocation2 + $0xb0] sm:$0xff]
  %v7765 = vld [vmem:[#allocation2 + $0xb8] sm:$0xf]
  %s7766 = scalar_lea.vmem %s8, 12
  %v7767 = vld [vmem:[%s7766] sm:$0xf]
  %7769 = vst [vmem:[#allocation1] ss:$9 sm:$0xff] %v7767
  %v7770 = vld [vmem:[#allocation1] sm:$0xff]
  %v7771 = vld [vmem:[#allocation1 + $0x9] sm:$0xff]
  %v7772 = vld [vmem:[#allocation1 + $0x12] sm:$0xff]
  %v7773 = vld [vmem:[#allocation1 + $0x1b] sm:$0xff]
  %v7774 = vpack.i.b16 %v7770, %v7770
  %v7776 = vperm.slane %v7774, 0
  %v7777 = vpack.i.b16 %v7771, %v7771
  %v7779 = vperm.slane %v7777, 0
  %v7780 = vpack.i.b16 %v7772, %v7772
  %v7782 = vperm.slane %v7780, 0
  %v7783 = vpack.i.b16 %v7773, %v7773
  %v7785 = vperm.slane %v7783, 0
  %v7786 = vunpack.c.l.bf16 %v7742
  %v7787 = vunpack.c.h.bf16 %v7742
  %v7788 = vunpack.c.l.bf16 %v7743
  %v7789 = vunpack.c.h.bf16 %v7743
  %v7790 = vunpack.c.l.bf16 %v7744
  %v7791 = vunpack.c.l.bf16 %v7745
  %v7792 = vunpack.c.h.bf16 %v7745
  %v7793 = vunpack.c.l.bf16 %v7746
  %v7794 = vunpack.c.h.bf16 %v7746
  %v7795 = vunpack.c.l.bf16 %v7747
  %v7796 = vunpack.c.l.bf16 %v7748
  %v7797 = vunpack.c.h.bf16 %v7748
  %v7798 = vunpack.c.l.bf16 %v7749
  %v7799 = vunpack.c.h.bf16 %v7749
  %v7800 = vunpack.c.l.bf16 %v7750
  %v7801 = vunpack.c.l.bf16 %v7751
  %v7802 = vunpack.c.h.bf16 %v7751
  %v7803 = vunpack.c.l.bf16 %v7752
  %v7804 = vunpack.c.h.bf16 %v7752
  %v7805 = vunpack.c.l.bf16 %v7753
  %v7806 = vunpack.c.l.bf16 %v7754
  %v7807 = vunpack.c.h.bf16 %v7754
  %v7808 = vunpack.c.l.bf16 %v7755
  %v7809 = vunpack.c.h.bf16 %v7755
  %v7810 = vunpack.c.l.bf16 %v7756
  %v7811 = vunpack.c.l.bf16 %v7757
  %v7812 = vunpack.c.h.bf16 %v7757
  %v7813 = vunpack.c.l.bf16 %v7758
  %v7814 = vunpack.c.h.bf16 %v7758
  %v7815 = vunpack.c.l.bf16 %v7759
  %v7816 = vunpack.c.l.bf16 %v7760
  %v7817 = vunpack.c.h.bf16 %v7760
  %v7818 = vunpack.c.l.bf16 %v7761
  %v7819 = vunpack.c.h.bf16 %v7761
  %v7820 = vunpack.c.l.bf16 %v7762
  %v7821 = vunpack.c.l.bf16 %v7763
  %v7822 = vunpack.c.h.bf16 %v7763
  %v7823 = vunpack.c.l.bf16 %v7764
  %v7824 = vunpack.c.h.bf16 %v7764
  %v7825 = vunpack.c.l.bf16 %v7765
  %v7826 = vunpack.c.l.bf16 %v7776
  %v7827 = vunpack.c.l.bf16 %v7779
  %v7828 = vunpack.c.l.bf16 %v7782
  %v7829 = vunpack.c.l.bf16 %v7785
  %7834 = vrot.lane.b32.xlu0 %v7826, 127
  %v7835 = vpop.permute.xlu0 %7834
  %7836 = vrot.lane.b32.xlu0 %v7827, 127
  %v7837 = vpop.permute.xlu0 %7836
  %7838 = vrot.lane.b32.xlu0 %v7828, 127
  %v7839 = vpop.permute.xlu0 %7838
  %7840 = vrot.lane.b32.xlu0 %v7829, 127
  %v7841 = vpop.permute.xlu0 %7840
  %v7842 = vsel %vm1747, %v7835, %v7837
  %v7843 = vsel %vm1747, %v7837, %v7839
  %v7844 = vsel %vm1747, %v7839, %v7841
  %v7850 = vmul.f32 %v7786, %v7835
  %v7851 = vmul.f32 %v7787, %v7842
  %v7852 = vmul.f32 %v7788, %v7843
  %v7853 = vmul.f32 %v7789, %v7844
  %v7854 = vmul.f32 %v7790, %v7841
  %v7855 = vmul.f32 %v7791, %v7835
  %v7856 = vmul.f32 %v7792, %v7842
  %v7857 = vmul.f32 %v7793, %v7843
  %v7858 = vmul.f32 %v7794, %v7844
  %v7859 = vmul.f32 %v7795, %v7841
  %v7860 = vmul.f32 %v7796, %v7835
  %v7861 = vmul.f32 %v7797, %v7842
  %v7862 = vmul.f32 %v7798, %v7843
  %v7863 = vmul.f32 %v7799, %v7844
  %v7864 = vmul.f32 %v7800, %v7841
  %v7865 = vmul.f32 %v7801, %v7835
  %v7866 = vmul.f32 %v7802, %v7842
  %v7867 = vmul.f32 %v7803, %v7843
  %v7868 = vmul.f32 %v7804, %v7844
  %v7869 = vmul.f32 %v7805, %v7841
  %v7870 = vmul.f32 %v7806, %v7835
  %v7871 = vmul.f32 %v7807, %v7842
  %v7872 = vmul.f32 %v7808, %v7843
  %v7873 = vmul.f32 %v7809, %v7844
  %v7874 = vmul.f32 %v7810, %v7841
  %v7875 = vmul.f32 %v7811, %v7835
  %v7876 = vmul.f32 %v7812, %v7842
  %v7877 = vmul.f32 %v7813, %v7843
  %v7878 = vmul.f32 %v7814, %v7844
  %v7879 = vmul.f32 %v7815, %v7841
  %v7880 = vmul.f32 %v7816, %v7835
  %v7881 = vmul.f32 %v7817, %v7842
  %v7882 = vmul.f32 %v7818, %v7843
  %v7883 = vmul.f32 %v7819, %v7844
  %v7884 = vmul.f32 %v7820, %v7841
  %v7885 = vmul.f32 %v7821, %v7835
  %v7886 = vmul.f32 %v7822, %v7842
  %v7887 = vmul.f32 %v7823, %v7843
  %v7888 = vmul.f32 %v7824, %v7844
  %v7889 = vmul.f32 %v7825, %v7841
  %v7890 = vpack.c.bf16 %v7855, %v7850
  %v7891 = vpack.c.bf16 %v7856, %v7851
  %v7892 = vpack.c.bf16 %v7857, %v7852
  %v7893 = vpack.c.bf16 %v7858, %v7853
  %v7894 = vpack.c.bf16 %v7859, %v7854
  %v7895 = vpack.c.bf16 %v7865, %v7860
  %v7896 = vpack.c.bf16 %v7866, %v7861
  %v7897 = vpack.c.bf16 %v7867, %v7862
  %v7898 = vpack.c.bf16 %v7868, %v7863
  %v7899 = vpack.c.bf16 %v7869, %v7864
  %v7900 = vpack.c.bf16 %v7875, %v7870
  %v7901 = vpack.c.bf16 %v7876, %v7871
  %v7902 = vpack.c.bf16 %v7877, %v7872
  %v7903 = vpack.c.bf16 %v7878, %v7873
  %v7904 = vpack.c.bf16 %v7879, %v7874
  %v7905 = vpack.c.bf16 %v7885, %v7880
  %v7906 = vpack.c.bf16 %v7886, %v7881
  %v7907 = vpack.c.bf16 %v7887, %v7882
  %v7908 = vpack.c.bf16 %v7888, %v7883
  %v7909 = vpack.c.bf16 %v7889, %v7884
  %s7910 = scalar_lea.vmem %s6, 192
  %v7911 = vld [vmem:[%s7910] sm:$0xf]
  %v7912 = vld [vmem:[%s7910 + $0x4] sm:$0xf]
  %v7913 = vld [vmem:[%s7910 + $0x8] sm:$0xf]
  %v7914 = vld [vmem:[%s7910 + $0xc] sm:$0xf]
  %v7915 = vld [vmem:[%s7910 + $0x10] sm:$0xf]
  %v7916 = vld [vmem:[%s7910 + $0x14] sm:$0xf]
  %v7917 = vld [vmem:[%s7910 + $0x18] sm:$0xf]
  %v7918 = vld [vmem:[%s7910 + $0x1c] sm:$0xf]
  %v7919 = vld [vmem:[%s7910 + $0x20] sm:$0xf]
  %v7920 = vld [vmem:[%s7910 + $0x24] sm:$0xf]
  %v7921 = vld [vmem:[%s7910 + $0x28] sm:$0xf]
  %v7922 = vld [vmem:[%s7910 + $0x2c] sm:$0xf]
  %v7923 = vld [vmem:[%s7910 + $0x30] sm:$0xf]
  %v7924 = vld [vmem:[%s7910 + $0x34] sm:$0xf]
  %v7925 = vld [vmem:[%s7910 + $0x38] sm:$0xf]
  %v7926 = vld [vmem:[%s7910 + $0x3c] sm:$0xf]
  %v7943 = vunpack.c.l.b16 %v7911
  %v7944 = vunpack.c.l.b16 %v7912
  %v7945 = vunpack.c.l.b16 %v7913
  %v7946 = vunpack.c.l.b16 %v7914
  %v7947 = vunpack.c.l.b16 %v7915
  %v7948 = vunpack.c.l.b16 %v7916
  %v7949 = vunpack.c.l.b16 %v7917
  %v7950 = vunpack.c.l.b16 %v7918
  %v7951 = vunpack.c.l.b16 %v7919
  %v7952 = vunpack.c.l.b16 %v7920
  %v7953 = vunpack.c.l.b16 %v7921
  %v7954 = vunpack.c.l.b16 %v7922
  %v7955 = vunpack.c.l.b16 %v7923
  %v7956 = vunpack.c.l.b16 %v7924
  %v7957 = vunpack.c.l.b16 %v7925
  %v7958 = vunpack.c.l.b16 %v7926
  %v7959 = vpack.c.b16 %v7944, %v7943
  %v7960 = vpack.c.b16 %v7946, %v7945
  %v7961 = vpack.c.b16 %v7948, %v7947
  %v7962 = vpack.c.b16 %v7950, %v7949
  %v7963 = vpack.c.b16 %v7952, %v7951
  %v7964 = vpack.c.b16 %v7954, %v7953
  %v7965 = vpack.c.b16 %v7956, %v7955
  %v7966 = vpack.c.b16 %v7958, %v7957
  %7987 = vrot.lane.b32.xlu0 %v7890, 1
  %v7988 = vpop.permute.xlu0 %7987
  %7989 = vrot.lane.b32.xlu0 %v7891, 1
  %v7990 = vpop.permute.xlu0 %7989
  %7991 = vrot.lane.b32.xlu0 %v7892, 1
  %v7992 = vpop.permute.xlu0 %7991
  %7993 = vrot.lane.b32.xlu0 %v7893, 1
  %v7994 = vpop.permute.xlu0 %7993
  %7995 = vrot.lane.b32.xlu0 %v7894, 1
  %v7996 = vpop.permute.xlu0 %7995
  %7997 = vrot.lane.b32.xlu0 %v7895, 1
  %v7998 = vpop.permute.xlu0 %7997
  %7999 = vrot.lane.b32.xlu0 %v7896, 1
  %v8000 = vpop.permute.xlu0 %7999
  %8001 = vrot.lane.b32.xlu0 %v7897, 1
  %v8002 = vpop.permute.xlu0 %8001
  %8003 = vrot.lane.b32.xlu0 %v7898, 1
  %v8004 = vpop.permute.xlu0 %8003
  %8005 = vrot.lane.b32.xlu0 %v7899, 1
  %v8006 = vpop.permute.xlu0 %8005
  %8007 = vrot.lane.b32.xlu0 %v7900, 1
  %v8008 = vpop.permute.xlu0 %8007
  %8009 = vrot.lane.b32.xlu0 %v7901, 1
  %v8010 = vpop.permute.xlu0 %8009
  %8011 = vrot.lane.b32.xlu0 %v7902, 1
  %v8012 = vpop.permute.xlu0 %8011
  %8013 = vrot.lane.b32.xlu0 %v7903, 1
  %v8014 = vpop.permute.xlu0 %8013
  %8015 = vrot.lane.b32.xlu0 %v7904, 1
  %v8016 = vpop.permute.xlu0 %8015
  %8017 = vrot.lane.b32.xlu0 %v7905, 1
  %v8018 = vpop.permute.xlu0 %8017
  %8019 = vrot.lane.b32.xlu0 %v7906, 1
  %v8020 = vpop.permute.xlu0 %8019
  %8021 = vrot.lane.b32.xlu0 %v7907, 1
  %v8022 = vpop.permute.xlu0 %8021
  %8023 = vrot.lane.b32.xlu0 %v7908, 1
  %v8024 = vpop.permute.xlu0 %8023
  %8025 = vrot.lane.b32.xlu0 %v7909, 1
  %v8026 = vpop.permute.xlu0 %8025
  %v8027 = vsel %vm1898, %v7988, %v7990
  %v8028 = vsel %vm1898, %v7990, %v7992
  %v8029 = vsel %vm1898, %v7992, %v7994
  %v8030 = vsel %vm1898, %v7994, %v7996
  %v8031 = vsel %vm1898, %v7998, %v8000
  %v8032 = vsel %vm1898, %v8000, %v8002
  %v8033 = vsel %vm1898, %v8002, %v8004
  %v8034 = vsel %vm1898, %v8004, %v8006
  %v8035 = vsel %vm1898, %v8008, %v8010
  %v8036 = vsel %vm1898, %v8010, %v8012
  %v8037 = vsel %vm1898, %v8012, %v8014
  %v8038 = vsel %vm1898, %v8014, %v8016
  %v8039 = vsel %vm1898, %v8018, %v8020
  %v8040 = vsel %vm1898, %v8020, %v8022
  %v8041 = vsel %vm1898, %v8022, %v8024
  %v8042 = vsel %vm1898, %v8024, %v8026
  %v8060 = vsel %vm6568, %v7959, 0
  %v8063 = vsel %vm6568, %v7960, 0
  %v8066 = vsel %vm6568, %v7961, 0
  %v8069 = vsel %vm6568, %v7962, 0
  %v8072 = vsel %vm6568, %v7963, 0
  %v8075 = vsel %vm6568, %v7964, 0
  %v8078 = vsel %vm6568, %v7965, 0
  %v8081 = vsel %vm6568, %v7966, 0
  %8083 = vmatpush.bf16.msra.mxu0 0
  %8084 = vmatpush.bf16.msra.mxu0 0
  %8085 = vmatpush.bf16.msra.mxu0 0
  %8086 = vmatpush.bf16.msra.mxu0 0
  %8087 = vmatpush.bf16.msra.mxu0 %v8039
  %8088 = vmatpush.bf16.msra.mxu0 %v8035
  %8089 = vmatpush.bf16.msra.mxu0 %v8031
  %8090 = vmatpush.bf16.msra.mxu0 %v8027
  %8091 = vmatmul.bf16.gmra.mxu0 %v8060
  %v8092 = vpop.f32.mrf.mxu0
  %v8093 = vadd.f32 0.0, %v8092
  %v8094 = vpop.f32.mrf.mxu0
  %v8095 = vadd.f32 0.0, %v8094
  %8096 = vmatmul.bf16.gmra.mxu0 %v8063
  %v8097 = vpop.f32.mrf.mxu0
  %v8098 = vadd.f32 0.0, %v8097
  %v8099 = vpop.f32.mrf.mxu0
  %v8100 = vadd.f32 0.0, %v8099
  %8101 = vmatmul.bf16.gmra.mxu0 %v8066
  %v8102 = vpop.f32.mrf.mxu0
  %v8103 = vadd.f32 0.0, %v8102
  %v8104 = vpop.f32.mrf.mxu0
  %v8105 = vadd.f32 0.0, %v8104
  %8106 = vmatmul.bf16.gmra.mxu0 %v8069
  %v8107 = vpop.f32.mrf.mxu0
  %v8108 = vadd.f32 0.0, %v8107
  %v8109 = vpop.f32.mrf.mxu0
  %v8110 = vadd.f32 0.0, %v8109
  %8111 = vmatmul.bf16.gmra.mxu0 %v8072
  %v8112 = vpop.f32.mrf.mxu0
  %v8113 = vadd.f32 0.0, %v8112
  %v8114 = vpop.f32.mrf.mxu0
  %v8115 = vadd.f32 0.0, %v8114
  %8116 = vmatmul.bf16.gmra.mxu0 %v8075
  %v8117 = vpop.f32.mrf.mxu0
  %v8118 = vadd.f32 0.0, %v8117
  %v8119 = vpop.f32.mrf.mxu0
  %v8120 = vadd.f32 0.0, %v8119
  %8121 = vmatmul.bf16.gmra.mxu0 %v8078
  %v8122 = vpop.f32.mrf.mxu0
  %v8123 = vadd.f32 0.0, %v8122
  %v8124 = vpop.f32.mrf.mxu0
  %v8125 = vadd.f32 0.0, %v8124
  %8126 = vmatmul.bf16.gmra.mxu0 %v8081
  %v8127 = vpop.f32.mrf.mxu0
  %v8128 = vadd.f32 0.0, %v8127
  %v8129 = vpop.f32.mrf.mxu0
  %v8130 = vadd.f32 0.0, %v8129
  %8131 = vdwg.mxu0
  %8132 = vmatpush.bf16.msra.mxu0 0
  %8133 = vmatpush.bf16.msra.mxu0 0
  %8134 = vmatpush.bf16.msra.mxu0 0
  %8135 = vmatpush.bf16.msra.mxu0 0
  %8136 = vmatpush.bf16.msra.mxu0 %v8040
  %8137 = vmatpush.bf16.msra.mxu0 %v8036
  %8138 = vmatpush.bf16.msra.mxu0 %v8032
  %8139 = vmatpush.bf16.msra.mxu0 %v8028
  %8140 = vmatmul.bf16.gmra.mxu0 %v8060
  %v8141 = vpop.f32.mrf.mxu0
  %v8142 = vadd.f32 0.0, %v8141
  %v8143 = vpop.f32.mrf.mxu0
  %v8144 = vadd.f32 0.0, %v8143
  %8145 = vmatmul.bf16.gmra.mxu0 %v8063
  %v8146 = vpop.f32.mrf.mxu0
  %v8147 = vadd.f32 0.0, %v8146
  %v8148 = vpop.f32.mrf.mxu0
  %v8149 = vadd.f32 0.0, %v8148
  %8150 = vmatmul.bf16.gmra.mxu0 %v8066
  %v8151 = vpop.f32.mrf.mxu0
  %v8152 = vadd.f32 0.0, %v8151
  %v8153 = vpop.f32.mrf.mxu0
  %v8154 = vadd.f32 0.0, %v8153
  %8155 = vmatmul.bf16.gmra.mxu0 %v8069
  %v8156 = vpop.f32.mrf.mxu0
  %v8157 = vadd.f32 0.0, %v8156
  %v8158 = vpop.f32.mrf.mxu0
  %v8159 = vadd.f32 0.0, %v8158
  %8160 = vmatmul.bf16.gmra.mxu0 %v8072
  %v8161 = vpop.f32.mrf.mxu0
  %v8162 = vadd.f32 0.0, %v8161
  %v8163 = vpop.f32.mrf.mxu0
  %v8164 = vadd.f32 0.0, %v8163
  %8165 = vmatmul.bf16.gmra.mxu0 %v8075
  %v8166 = vpop.f32.mrf.mxu0
  %v8167 = vadd.f32 0.0, %v8166
  %v8168 = vpop.f32.mrf.mxu0
  %v8169 = vadd.f32 0.0, %v8168
  %8170 = vmatmul.bf16.gmra.mxu0 %v8078
  %v8171 = vpop.f32.mrf.mxu0
  %v8172 = vadd.f32 0.0, %v8171
  %v8173 = vpop.f32.mrf.mxu0
  %v8174 = vadd.f32 0.0, %v8173
  %8175 = vmatmul.bf16.gmra.mxu0 %v8081
  %v8176 = vpop.f32.mrf.mxu0
  %v8177 = vadd.f32 0.0, %v8176
  %v8178 = vpop.f32.mrf.mxu0
  %v8179 = vadd.f32 0.0, %v8178
  %8180 = vdwg.mxu0
  %8181 = vmatpush.bf16.msra.mxu0 0
  %8182 = vmatpush.bf16.msra.mxu0 0
  %8183 = vmatpush.bf16.msra.mxu0 0
  %8184 = vmatpush.bf16.msra.mxu0 0
  %8185 = vmatpush.bf16.msra.mxu0 %v8041
  %8186 = vmatpush.bf16.msra.mxu0 %v8037
  %8187 = vmatpush.bf16.msra.mxu0 %v8033
  %8188 = vmatpush.bf16.msra.mxu0 %v8029
  %8189 = vmatmul.bf16.gmra.mxu0 %v8060
  %v8190 = vpop.f32.mrf.mxu0
  %v8191 = vadd.f32 0.0, %v8190
  %v8192 = vpop.f32.mrf.mxu0
  %v8193 = vadd.f32 0.0, %v8192
  %8194 = vmatmul.bf16.gmra.mxu0 %v8063
  %v8195 = vpop.f32.mrf.mxu0
  %v8196 = vadd.f32 0.0, %v8195
  %v8197 = vpop.f32.mrf.mxu0
  %v8198 = vadd.f32 0.0, %v8197
  %8199 = vmatmul.bf16.gmra.mxu0 %v8066
  %v8200 = vpop.f32.mrf.mxu0
  %v8201 = vadd.f32 0.0, %v8200
  %v8202 = vpop.f32.mrf.mxu0
  %v8203 = vadd.f32 0.0, %v8202
  %8204 = vmatmul.bf16.gmra.mxu0 %v8069
  %v8205 = vpop.f32.mrf.mxu0
  %v8206 = vadd.f32 0.0, %v8205
  %v8207 = vpop.f32.mrf.mxu0
  %v8208 = vadd.f32 0.0, %v8207
  %8209 = vmatmul.bf16.gmra.mxu0 %v8072
  %v8210 = vpop.f32.mrf.mxu0
  %v8211 = vadd.f32 0.0, %v8210
  %v8212 = vpop.f32.mrf.mxu0
  %v8213 = vadd.f32 0.0, %v8212
  %8214 = vmatmul.bf16.gmra.mxu0 %v8075
  %v8215 = vpop.f32.mrf.mxu0
  %v8216 = vadd.f32 0.0, %v8215
  %v8217 = vpop.f32.mrf.mxu0
  %v8218 = vadd.f32 0.0, %v8217
  %8219 = vmatmul.bf16.gmra.mxu0 %v8078
  %v8220 = vpop.f32.mrf.mxu0
  %v8221 = vadd.f32 0.0, %v8220
  %v8222 = vpop.f32.mrf.mxu0
  %v8223 = vadd.f32 0.0, %v8222
  %8224 = vmatmul.bf16.gmra.mxu0 %v8081
  %v8225 = vpop.f32.mrf.mxu0
  %v8226 = vadd.f32 0.0, %v8225
  %v8227 = vpop.f32.mrf.mxu0
  %v8228 = vadd.f32 0.0, %v8227
  %8229 = vdwg.mxu0
  %8230 = vmatpush.bf16.msra.mxu0 0
  %8231 = vmatpush.bf16.msra.mxu0 0
  %8232 = vmatpush.bf16.msra.mxu0 0
  %8233 = vmatpush.bf16.msra.mxu0 0
  %8234 = vmatpush.bf16.msra.mxu0 %v8042
  %8235 = vmatpush.bf16.msra.mxu0 %v8038
  %8236 = vmatpush.bf16.msra.mxu0 %v8034
  %8237 = vmatpush.bf16.msra.mxu0 %v8030
  %8238 = vmatmul.bf16.gmra.mxu0 %v8060
  %v8239 = vpop.f32.mrf.mxu0
  %v8240 = vadd.f32 0.0, %v8239
  %v8241 = vpop.f32.mrf.mxu0
  %v8242 = vadd.f32 0.0, %v8241
  %8243 = vmatmul.bf16.gmra.mxu0 %v8063
  %v8244 = vpop.f32.mrf.mxu0
  %v8245 = vadd.f32 0.0, %v8244
  %v8246 = vpop.f32.mrf.mxu0
  %v8247 = vadd.f32 0.0, %v8246
  %8248 = vmatmul.bf16.gmra.mxu0 %v8066
  %v8249 = vpop.f32.mrf.mxu0
  %v8250 = vadd.f32 0.0, %v8249
  %v8251 = vpop.f32.mrf.mxu0
  %v8252 = vadd.f32 0.0, %v8251
  %8253 = vmatmul.bf16.gmra.mxu0 %v8069
  %v8254 = vpop.f32.mrf.mxu0
  %v8255 = vadd.f32 0.0, %v8254
  %v8256 = vpop.f32.mrf.mxu0
  %v8257 = vadd.f32 0.0, %v8256
  %8258 = vmatmul.bf16.gmra.mxu0 %v8072
  %v8259 = vpop.f32.mrf.mxu0
  %v8260 = vadd.f32 0.0, %v8259
  %v8261 = vpop.f32.mrf.mxu0
  %v8262 = vadd.f32 0.0, %v8261
  %8263 = vmatmul.bf16.gmra.mxu0 %v8075
  %v8264 = vpop.f32.mrf.mxu0
  %v8265 = vadd.f32 0.0, %v8264
  %v8266 = vpop.f32.mrf.mxu0
  %v8267 = vadd.f32 0.0, %v8266
  %8268 = vmatmul.bf16.gmra.mxu0 %v8078
  %v8269 = vpop.f32.mrf.mxu0
  %v8270 = vadd.f32 0.0, %v8269
  %v8271 = vpop.f32.mrf.mxu0
  %v8272 = vadd.f32 0.0, %v8271
  %8273 = vmatmul.bf16.gmra.mxu0 %v8081
  %v8274 = vpop.f32.mrf.mxu0
  %v8275 = vadd.f32 0.0, %v8274
  %v8276 = vpop.f32.mrf.mxu0
  %v8277 = vadd.f32 0.0, %v8276
  %8278 = vdwg.mxu0
  %v8279 = vadd.f32 %v7678, %v8093
  %v8280 = vadd.f32 %v7679, %v8142
  %v8281 = vadd.f32 %v7680, %v8191
  %v8282 = vadd.f32 %v7681, %v8240
  %v8283 = vadd.f32 %v7682, %v8095
  %v8284 = vadd.f32 %v7683, %v8144
  %v8285 = vadd.f32 %v7684, %v8193
  %v8286 = vadd.f32 %v7685, %v8242
  %v8287 = vadd.f32 %v7686, %v8098
  %v8288 = vadd.f32 %v7687, %v8147
  %v8289 = vadd.f32 %v7688, %v8196
  %v8290 = vadd.f32 %v7689, %v8245
  %v8291 = vadd.f32 %v7690, %v8100
  %v8292 = vadd.f32 %v7691, %v8149
  %v8293 = vadd.f32 %v7692, %v8198
  %v8294 = vadd.f32 %v7693, %v8247
  %v8295 = vadd.f32 %v7694, %v8103
  %v8296 = vadd.f32 %v7695, %v8152
  %v8297 = vadd.f32 %v7696, %v8201
  %v8298 = vadd.f32 %v7697, %v8250
  %v8299 = vadd.f32 %v7698, %v8105
  %v8300 = vadd.f32 %v7699, %v8154
  %v8301 = vadd.f32 %v7700, %v8203
  %v8302 = vadd.f32 %v7701, %v8252
  %v8303 = vadd.f32 %v7702, %v8108
  %v8304 = vadd.f32 %v7703, %v8157
  %v8305 = vadd.f32 %v7704, %v8206
  %v8306 = vadd.f32 %v7705, %v8255
  %v8307 = vadd.f32 %v7706, %v8110
  %v8308 = vadd.f32 %v7707, %v8159
  %v8309 = vadd.f32 %v7708, %v8208
  %v8310 = vadd.f32 %v7709, %v8257
  %v8311 = vadd.f32 %v7710, %v8113
  %v8312 = vadd.f32 %v7711, %v8162
  %v8313 = vadd.f32 %v7712, %v8211
  %v8314 = vadd.f32 %v7713, %v8260
  %v8315 = vadd.f32 %v7714, %v8115
  %v8316 = vadd.f32 %v7715, %v8164
  %v8317 = vadd.f32 %v7716, %v8213
  %v8318 = vadd.f32 %v7717, %v8262
  %v8319 = vadd.f32 %v7718, %v8118
  %v8320 = vadd.f32 %v7719, %v8167
  %v8321 = vadd.f32 %v7720, %v8216
  %v8322 = vadd.f32 %v7721, %v8265
  %v8323 = vadd.f32 %v7722, %v8120
  %v8324 = vadd.f32 %v7723, %v8169
  %v8325 = vadd.f32 %v7724, %v8218
  %v8326 = vadd.f32 %v7725, %v8267
  %v8327 = vadd.f32 %v7726, %v8123
  %v8328 = vadd.f32 %v7727, %v8172
  %v8329 = vadd.f32 %v7728, %v8221
  %v8330 = vadd.f32 %v7729, %v8270
  %v8331 = vadd.f32 %v7730, %v8125
  %v8332 = vadd.f32 %v7731, %v8174
  %v8333 = vadd.f32 %v7732, %v8223
  %v8334 = vadd.f32 %v7733, %v8272
  %v8335 = vadd.f32 %v7734, %v8128
  %v8336 = vadd.f32 %v7735, %v8177
  %v8337 = vadd.f32 %v7736, %v8226
  %v8338 = vadd.f32 %v7737, %v8275
  %v8339 = vadd.f32 %v7738, %v8130
  %v8340 = vadd.f32 %v7739, %v8179
  %v8341 = vadd.f32 %v7740, %v8228
  %v8342 = vadd.f32 %v7741, %v8277
  %v8343 = vld [vmem:[#allocation2 + $0x4] sm:$0xff]
  %v8344 = vld [vmem:[#allocation2 + $0xc] sm:$0xff]
  %v8345 = vld [vmem:[#allocation2 + $0x1c] sm:$0xff]
  %v8346 = vld [vmem:[#allocation2 + $0x24] sm:$0xff]
  %v8347 = vld [vmem:[#allocation2 + $0x34] sm:$0xff]
  %v8348 = vld [vmem:[#allocation2 + $0x3c] sm:$0xff]
  %v8349 = vld [vmem:[#allocation2 + $0x4c] sm:$0xff]
  %v8350 = vld [vmem:[#allocation2 + $0x54] sm:$0xff]
  %v8351 = vld [vmem:[#allocation2 + $0x64] sm:$0xff]
  %v8352 = vld [vmem:[#allocation2 + $0x6c] sm:$0xff]
  %v8353 = vld [vmem:[#allocation2 + $0x7c] sm:$0xff]
  %v8354 = vld [vmem:[#allocation2 + $0x84] sm:$0xff]
  %v8355 = vld [vmem:[#allocation2 + $0x94] sm:$0xff]
  %v8356 = vld [vmem:[#allocation2 + $0x9c] sm:$0xff]
  %v8357 = vld [vmem:[#allocation2 + $0xac] sm:$0xff]
  %v8358 = vld [vmem:[#allocation2 + $0xb4] sm:$0xff]
  %s8359 = scalar_lea.vmem %s6, 256
  %v8360 = vld [vmem:[%s8359] sm:$0xf]
  %v8361 = vld [vmem:[%s8359 + $0x4] sm:$0xf]
  %v8362 = vld [vmem:[%s8359 + $0x8] sm:$0xf]
  %v8363 = vld [vmem:[%s8359 + $0xc] sm:$0xf]
  %v8364 = vld [vmem:[%s8359 + $0x10] sm:$0xf]
  %v8365 = vld [vmem:[%s8359 + $0x14] sm:$0xf]
  %v8366 = vld [vmem:[%s8359 + $0x18] sm:$0xf]
  %v8367 = vld [vmem:[%s8359 + $0x1c] sm:$0xf]
  %v8368 = vld [vmem:[%s8359 + $0x20] sm:$0xf]
  %v8369 = vld [vmem:[%s8359 + $0x24] sm:$0xf]
  %v8370 = vld [vmem:[%s8359 + $0x28] sm:$0xf]
  %v8371 = vld [vmem:[%s8359 + $0x2c] sm:$0xf]
  %v8372 = vld [vmem:[%s8359 + $0x30] sm:$0xf]
  %v8373 = vld [vmem:[%s8359 + $0x34] sm:$0xf]
  %v8374 = vld [vmem:[%s8359 + $0x38] sm:$0xf]
  %v8375 = vld [vmem:[%s8359 + $0x3c] sm:$0xf]
  %v8392 = vunpack.c.l.b16 %v8360
  %v8393 = vunpack.c.l.b16 %v8361
  %v8394 = vunpack.c.l.b16 %v8362
  %v8395 = vunpack.c.l.b16 %v8363
  %v8396 = vunpack.c.l.b16 %v8364
  %v8397 = vunpack.c.l.b16 %v8365
  %v8398 = vunpack.c.l.b16 %v8366
  %v8399 = vunpack.c.l.b16 %v8367
  %v8400 = vunpack.c.l.b16 %v8368
  %v8401 = vunpack.c.l.b16 %v8369
  %v8402 = vunpack.c.l.b16 %v8370
  %v8403 = vunpack.c.l.b16 %v8371
  %v8404 = vunpack.c.l.b16 %v8372
  %v8405 = vunpack.c.l.b16 %v8373
  %v8406 = vunpack.c.l.b16 %v8374
  %v8407 = vunpack.c.l.b16 %v8375
  %v8408 = vpack.c.b16 %v8393, %v8392
  %v8409 = vpack.c.b16 %v8395, %v8394
  %v8410 = vpack.c.b16 %v8397, %v8396
  %v8411 = vpack.c.b16 %v8399, %v8398
  %v8412 = vpack.c.b16 %v8401, %v8400
  %v8413 = vpack.c.b16 %v8403, %v8402
  %v8414 = vpack.c.b16 %v8405, %v8404
  %v8415 = vpack.c.b16 %v8407, %v8406
  %v8432 = vunpack.c.l.b16 %v8343
  %v8433 = vunpack.c.h.b16 %v8343
  %v8434 = vunpack.c.l.b16 %v8344
  %v8435 = vunpack.c.h.b16 %v8344
  %v8436 = vunpack.c.l.b16 %v8345
  %v8437 = vunpack.c.h.b16 %v8345
  %v8438 = vunpack.c.l.b16 %v8346
  %v8439 = vunpack.c.h.b16 %v8346
  %v8440 = vunpack.c.l.b16 %v8347
  %v8441 = vunpack.c.h.b16 %v8347
  %v8442 = vunpack.c.l.b16 %v8348
  %v8443 = vunpack.c.h.b16 %v8348
  %v8444 = vunpack.c.l.b16 %v8349
  %v8445 = vunpack.c.h.b16 %v8349
  %v8446 = vunpack.c.l.b16 %v8350
  %v8447 = vunpack.c.h.b16 %v8350
  %v8448 = vunpack.c.l.b16 %v8351
  %v8449 = vunpack.c.h.b16 %v8351
  %v8450 = vunpack.c.l.b16 %v8352
  %v8451 = vunpack.c.h.b16 %v8352
  %v8452 = vunpack.c.l.b16 %v8353
  %v8453 = vunpack.c.h.b16 %v8353
  %v8454 = vunpack.c.l.b16 %v8354
  %v8455 = vunpack.c.h.b16 %v8354
  %v8456 = vunpack.c.l.b16 %v8355
  %v8457 = vunpack.c.h.b16 %v8355
  %v8458 = vunpack.c.l.b16 %v8356
  %v8459 = vunpack.c.h.b16 %v8356
  %v8460 = vunpack.c.l.b16 %v8357
  %v8461 = vunpack.c.h.b16 %v8357
  %v8462 = vunpack.c.l.b16 %v8358
  %v8463 = vunpack.c.h.b16 %v8358
  %v8464 = vpack.c.b16 %v8436, %v8432
  %v8465 = vpack.c.b16 %v8437, %v8433
  %v8466 = vpack.c.b16 %v8438, %v8434
  %v8467 = vpack.c.b16 %v8439, %v8435
  %v8468 = vpack.c.b16 %v8444, %v8440
  %v8469 = vpack.c.b16 %v8445, %v8441
  %v8470 = vpack.c.b16 %v8446, %v8442
  %v8471 = vpack.c.b16 %v8447, %v8443
  %v8472 = vpack.c.b16 %v8452, %v8448
  %v8473 = vpack.c.b16 %v8453, %v8449
  %v8474 = vpack.c.b16 %v8454, %v8450
  %v8475 = vpack.c.b16 %v8455, %v8451
  %v8476 = vpack.c.b16 %v8460, %v8456
  %v8477 = vpack.c.b16 %v8461, %v8457
  %v8478 = vpack.c.b16 %v8462, %v8458
  %v8479 = vpack.c.b16 %v8463, %v8459
  %v8497 = vsel %vm6568, %v8408, 0
  %v8500 = vsel %vm6568, %v8409, 0
  %v8503 = vsel %vm6568, %v8410, 0
  %v8506 = vsel %vm6568, %v8411, 0
  %v8509 = vsel %vm6568, %v8412, 0
  %v8512 = vsel %vm6568, %v8413, 0
  %v8515 = vsel %vm6568, %v8414, 0
  %v8518 = vsel %vm6568, %v8415, 0
  %8520 = vmatpush.bf16.msra.mxu0 0
  %8521 = vmatpush.bf16.msra.mxu0 0
  %8522 = vmatpush.bf16.msra.mxu0 0
  %8523 = vmatpush.bf16.msra.mxu0 0
  %8524 = vmatpush.bf16.msra.mxu0 %v8476
  %8525 = vmatpush.bf16.msra.mxu0 %v8472
  %8526 = vmatpush.bf16.msra.mxu0 %v8468
  %8527 = vmatpush.bf16.msra.mxu0 %v8464
  %8528 = vmatmul.bf16.gmra.mxu0 %v8497
  %v8529 = vpop.f32.mrf.mxu0
  %v8530 = vadd.f32 0.0, %v8529
  %v8531 = vpop.f32.mrf.mxu0
  %v8532 = vadd.f32 0.0, %v8531
  %8533 = vmatmul.bf16.gmra.mxu0 %v8500
  %v8534 = vpop.f32.mrf.mxu0
  %v8535 = vadd.f32 0.0, %v8534
  %v8536 = vpop.f32.mrf.mxu0
  %v8537 = vadd.f32 0.0, %v8536
  %8538 = vmatmul.bf16.gmra.mxu0 %v8503
  %v8539 = vpop.f32.mrf.mxu0
  %v8540 = vadd.f32 0.0, %v8539
  %v8541 = vpop.f32.mrf.mxu0
  %v8542 = vadd.f32 0.0, %v8541
  %8543 = vmatmul.bf16.gmra.mxu0 %v8506
  %v8544 = vpop.f32.mrf.mxu0
  %v8545 = vadd.f32 0.0, %v8544
  %v8546 = vpop.f32.mrf.mxu0
  %v8547 = vadd.f32 0.0, %v8546
  %8548 = vmatmul.bf16.gmra.mxu0 %v8509
  %v8549 = vpop.f32.mrf.mxu0
  %v8550 = vadd.f32 0.0, %v8549
  %v8551 = vpop.f32.mrf.mxu0
  %v8552 = vadd.f32 0.0, %v8551
  %8553 = vmatmul.bf16.gmra.mxu0 %v8512
  %v8554 = vpop.f32.mrf.mxu0
  %v8555 = vadd.f32 0.0, %v8554
  %v8556 = vpop.f32.mrf.mxu0
  %v8557 = vadd.f32 0.0, %v8556
  %8558 = vmatmul.bf16.gmra.mxu0 %v8515
  %v8559 = vpop.f32.mrf.mxu0
  %v8560 = vadd.f32 0.0, %v8559
  %v8561 = vpop.f32.mrf.mxu0
  %v8562 = vadd.f32 0.0, %v8561
  %8563 = vmatmul.bf16.gmra.mxu0 %v8518
  %v8564 = vpop.f32.mrf.mxu0
  %v8565 = vadd.f32 0.0, %v8564
  %v8566 = vpop.f32.mrf.mxu0
  %v8567 = vadd.f32 0.0, %v8566
  %8568 = vdwg.mxu0
  %8569 = vmatpush.bf16.msra.mxu0 0
  %8570 = vmatpush.bf16.msra.mxu0 0
  %8571 = vmatpush.bf16.msra.mxu0 0
  %8572 = vmatpush.bf16.msra.mxu0 0
  %8573 = vmatpush.bf16.msra.mxu0 %v8477
  %8574 = vmatpush.bf16.msra.mxu0 %v8473
  %8575 = vmatpush.bf16.msra.mxu0 %v8469
  %8576 = vmatpush.bf16.msra.mxu0 %v8465
  %8577 = vmatmul.bf16.gmra.mxu0 %v8497
  %v8578 = vpop.f32.mrf.mxu0
  %v8579 = vadd.f32 0.0, %v8578
  %v8580 = vpop.f32.mrf.mxu0
  %v8581 = vadd.f32 0.0, %v8580
  %8582 = vmatmul.bf16.gmra.mxu0 %v8500
  %v8583 = vpop.f32.mrf.mxu0
  %v8584 = vadd.f32 0.0, %v8583
  %v8585 = vpop.f32.mrf.mxu0
  %v8586 = vadd.f32 0.0, %v8585
  %8587 = vmatmul.bf16.gmra.mxu0 %v8503
  %v8588 = vpop.f32.mrf.mxu0
  %v8589 = vadd.f32 0.0, %v8588
  %v8590 = vpop.f32.mrf.mxu0
  %v8591 = vadd.f32 0.0, %v8590
  %8592 = vmatmul.bf16.gmra.mxu0 %v8506
  %v8593 = vpop.f32.mrf.mxu0
  %v8594 = vadd.f32 0.0, %v8593
  %v8595 = vpop.f32.mrf.mxu0
  %v8596 = vadd.f32 0.0, %v8595
  %8597 = vmatmul.bf16.gmra.mxu0 %v8509
  %v8598 = vpop.f32.mrf.mxu0
  %v8599 = vadd.f32 0.0, %v8598
  %v8600 = vpop.f32.mrf.mxu0
  %v8601 = vadd.f32 0.0, %v8600
  %8602 = vmatmul.bf16.gmra.mxu0 %v8512
  %v8603 = vpop.f32.mrf.mxu0
  %v8604 = vadd.f32 0.0, %v8603
  %v8605 = vpop.f32.mrf.mxu0
  %v8606 = vadd.f32 0.0, %v8605
  %8607 = vmatmul.bf16.gmra.mxu0 %v8515
  %v8608 = vpop.f32.mrf.mxu0
  %v8609 = vadd.f32 0.0, %v8608
  %v8610 = vpop.f32.mrf.mxu0
  %v8611 = vadd.f32 0.0, %v8610
  %8612 = vmatmul.bf16.gmra.mxu0 %v8518
  %v8613 = vpop.f32.mrf.mxu0
  %v8614 = vadd.f32 0.0, %v8613
  %v8615 = vpop.f32.mrf.mxu0
  %v8616 = vadd.f32 0.0, %v8615
  %8617 = vdwg.mxu0
  %8618 = vmatpush.bf16.msra.mxu0 0
  %8619 = vmatpush.bf16.msra.mxu0 0
  %8620 = vmatpush.bf16.msra.mxu0 0
  %8621 = vmatpush.bf16.msra.mxu0 0
  %8622 = vmatpush.bf16.msra.mxu0 %v8478
  %8623 = vmatpush.bf16.msra.mxu0 %v8474
  %8624 = vmatpush.bf16.msra.mxu0 %v8470
  %8625 = vmatpush.bf16.msra.mxu0 %v8466
  %8626 = vmatmul.bf16.gmra.mxu0 %v8497
  %v8627 = vpop.f32.mrf.mxu0
  %v8628 = vadd.f32 0.0, %v8627
  %v8629 = vpop.f32.mrf.mxu0
  %v8630 = vadd.f32 0.0, %v8629
  %8631 = vmatmul.bf16.gmra.mxu0 %v8500
  %v8632 = vpop.f32.mrf.mxu0
  %v8633 = vadd.f32 0.0, %v8632
  %v8634 = vpop.f32.mrf.mxu0
  %v8635 = vadd.f32 0.0, %v8634
  %8636 = vmatmul.bf16.gmra.mxu0 %v8503
  %v8637 = vpop.f32.mrf.mxu0
  %v8638 = vadd.f32 0.0, %v8637
  %v8639 = vpop.f32.mrf.mxu0
  %v8640 = vadd.f32 0.0, %v8639
  %8641 = vmatmul.bf16.gmra.mxu0 %v8506
  %v8642 = vpop.f32.mrf.mxu0
  %v8643 = vadd.f32 0.0, %v8642
  %v8644 = vpop.f32.mrf.mxu0
  %v8645 = vadd.f32 0.0, %v8644
  %8646 = vmatmul.bf16.gmra.mxu0 %v8509
  %v8647 = vpop.f32.mrf.mxu0
  %v8648 = vadd.f32 0.0, %v8647
  %v8649 = vpop.f32.mrf.mxu0
  %v8650 = vadd.f32 0.0, %v8649
  %8651 = vmatmul.bf16.gmra.mxu0 %v8512
  %v8652 = vpop.f32.mrf.mxu0
  %v8653 = vadd.f32 0.0, %v8652
  %v8654 = vpop.f32.mrf.mxu0
  %v8655 = vadd.f32 0.0, %v8654
  %8656 = vmatmul.bf16.gmra.mxu0 %v8515
  %v8657 = vpop.f32.mrf.mxu0
  %v8658 = vadd.f32 0.0, %v8657
  %v8659 = vpop.f32.mrf.mxu0
  %v8660 = vadd.f32 0.0, %v8659
  %8661 = vmatmul.bf16.gmra.mxu0 %v8518
  %v8662 = vpop.f32.mrf.mxu0
  %v8663 = vadd.f32 0.0, %v8662
  %v8664 = vpop.f32.mrf.mxu0
  %v8665 = vadd.f32 0.0, %v8664
  %8666 = vdwg.mxu0
  %8667 = vmatpush.bf16.msra.mxu0 0
  %8668 = vmatpush.bf16.msra.mxu0 0
  %8669 = vmatpush.bf16.msra.mxu0 0
  %8670 = vmatpush.bf16.msra.mxu0 0
  %8671 = vmatpush.bf16.msra.mxu0 %v8479
  %8672 = vmatpush.bf16.msra.mxu0 %v8475
  %8673 = vmatpush.bf16.msra.mxu0 %v8471
  %8674 = vmatpush.bf16.msra.mxu0 %v8467
  %8675 = vmatmul.bf16.gmra.mxu0 %v8497
  %v8676 = vpop.f32.mrf.mxu0
  %v8677 = vadd.f32 0.0, %v8676
  %v8678 = vpop.f32.mrf.mxu0
  %v8679 = vadd.f32 0.0, %v8678
  %8680 = vmatmul.bf16.gmra.mxu0 %v8500
  %v8681 = vpop.f32.mrf.mxu0
  %v8682 = vadd.f32 0.0, %v8681
  %v8683 = vpop.f32.mrf.mxu0
  %v8684 = vadd.f32 0.0, %v8683
  %8685 = vmatmul.bf16.gmra.mxu0 %v8503
  %v8686 = vpop.f32.mrf.mxu0
  %v8687 = vadd.f32 0.0, %v8686
  %v8688 = vpop.f32.mrf.mxu0
  %v8689 = vadd.f32 0.0, %v8688
  %8690 = vmatmul.bf16.gmra.mxu0 %v8506
  %v8691 = vpop.f32.mrf.mxu0
  %v8692 = vadd.f32 0.0, %v8691
  %v8693 = vpop.f32.mrf.mxu0
  %v8694 = vadd.f32 0.0, %v8693
  %8695 = vmatmul.bf16.gmra.mxu0 %v8509
  %v8696 = vpop.f32.mrf.mxu0
  %v8697 = vadd.f32 0.0, %v8696
  %v8698 = vpop.f32.mrf.mxu0
  %v8699 = vadd.f32 0.0, %v8698
  %8700 = vmatmul.bf16.gmra.mxu0 %v8512
  %v8701 = vpop.f32.mrf.mxu0
  %v8702 = vadd.f32 0.0, %v8701
  %v8703 = vpop.f32.mrf.mxu0
  %v8704 = vadd.f32 0.0, %v8703
  %8705 = vmatmul.bf16.gmra.mxu0 %v8515
  %v8706 = vpop.f32.mrf.mxu0
  %v8707 = vadd.f32 0.0, %v8706
  %v8708 = vpop.f32.mrf.mxu0
  %v8709 = vadd.f32 0.0, %v8708
  %8710 = vmatmul.bf16.gmra.mxu0 %v8518
  %v8711 = vpop.f32.mrf.mxu0
  %v8712 = vadd.f32 0.0, %v8711
  %v8713 = vpop.f32.mrf.mxu0
  %v8714 = vadd.f32 0.0, %v8713
  %8715 = vdwg.mxu0
  %v8716 = vadd.f32 %v8279, %v8530
  %v8717 = vadd.f32 %v8280, %v8579
  %v8718 = vadd.f32 %v8281, %v8628
  %v8719 = vadd.f32 %v8282, %v8677
  %v8720 = vadd.f32 %v8283, %v8532
  %v8721 = vadd.f32 %v8284, %v8581
  %v8722 = vadd.f32 %v8285, %v8630
  %v8723 = vadd.f32 %v8286, %v8679
  %v8724 = vadd.f32 %v8287, %v8535
  %v8725 = vadd.f32 %v8288, %v8584
  %v8726 = vadd.f32 %v8289, %v8633
  %v8727 = vadd.f32 %v8290, %v8682
  %v8728 = vadd.f32 %v8291, %v8537
  %v8729 = vadd.f32 %v8292, %v8586
  %v8730 = vadd.f32 %v8293, %v8635
  %v8731 = vadd.f32 %v8294, %v8684
  %v8732 = vadd.f32 %v8295, %v8540
  %v8733 = vadd.f32 %v8296, %v8589
  %v8734 = vadd.f32 %v8297, %v8638
  %v8735 = vadd.f32 %v8298, %v8687
  %v8736 = vadd.f32 %v8299, %v8542
  %v8737 = vadd.f32 %v8300, %v8591
  %v8738 = vadd.f32 %v8301, %v8640
  %v8739 = vadd.f32 %v8302, %v8689
  %v8740 = vadd.f32 %v8303, %v8545
  %v8741 = vadd.f32 %v8304, %v8594
  %v8742 = vadd.f32 %v8305, %v8643
  %v8743 = vadd.f32 %v8306, %v8692
  %v8744 = vadd.f32 %v8307, %v8547
  %v8745 = vadd.f32 %v8308, %v8596
  %v8746 = vadd.f32 %v8309, %v8645
  %v8747 = vadd.f32 %v8310, %v8694
  %v8748 = vadd.f32 %v8311, %v8550
  %v8749 = vadd.f32 %v8312, %v8599
  %v8750 = vadd.f32 %v8313, %v8648
  %v8751 = vadd.f32 %v8314, %v8697
  %v8752 = vadd.f32 %v8315, %v8552
  %v8753 = vadd.f32 %v8316, %v8601
  %v8754 = vadd.f32 %v8317, %v8650
  %v8755 = vadd.f32 %v8318, %v8699
  %v8756 = vadd.f32 %v8319, %v8555
  %v8757 = vadd.f32 %v8320, %v8604
  %v8758 = vadd.f32 %v8321, %v8653
  %v8759 = vadd.f32 %v8322, %v8702
  %v8760 = vadd.f32 %v8323, %v8557
  %v8761 = vadd.f32 %v8324, %v8606
  %v8762 = vadd.f32 %v8325, %v8655
  %v8763 = vadd.f32 %v8326, %v8704
  %v8764 = vadd.f32 %v8327, %v8560
  %v8765 = vadd.f32 %v8328, %v8609
  %v8766 = vadd.f32 %v8329, %v8658
  %v8767 = vadd.f32 %v8330, %v8707
  %v8768 = vadd.f32 %v8331, %v8562
  %v8769 = vadd.f32 %v8332, %v8611
  %v8770 = vadd.f32 %v8333, %v8660
  %v8771 = vadd.f32 %v8334, %v8709
  %v8772 = vadd.f32 %v8335, %v8565
  %v8773 = vadd.f32 %v8336, %v8614
  %v8774 = vadd.f32 %v8337, %v8663
  %v8775 = vadd.f32 %v8338, %v8712
  %v8776 = vadd.f32 %v8339, %v8567
  %v8777 = vadd.f32 %v8340, %v8616
  %v8778 = vadd.f32 %v8341, %v8665
  %v8779 = vadd.f32 %v8342, %v8714
  %v8780 = vld [vmem:[#allocation2 + $0x4] sm:$0xff]
  %v8781 = vld [vmem:[#allocation2 + $0xc] sm:$0xff]
  %v8782 = vld [vmem:[#allocation2 + $0x14] sm:$0xf]
  %v8783 = vld [vmem:[#allocation2 + $0x1c] sm:$0xff]
  %v8784 = vld [vmem:[#allocation2 + $0x24] sm:$0xff]
  %v8785 = vld [vmem:[#allocation2 + $0x2c] sm:$0xf]
  %v8786 = vld [vmem:[#allocation2 + $0x34] sm:$0xff]
  %v8787 = vld [vmem:[#allocation2 + $0x3c] sm:$0xff]
  %v8788 = vld [vmem:[#allocation2 + $0x44] sm:$0xf]
  %v8789 = vld [vmem:[#allocation2 + $0x4c] sm:$0xff]
  %v8790 = vld [vmem:[#allocation2 + $0x54] sm:$0xff]
  %v8791 = vld [vmem:[#allocation2 + $0x5c] sm:$0xf]
  %v8792 = vld [vmem:[#allocation2 + $0x64] sm:$0xff]
  %v8793 = vld [vmem:[#allocation2 + $0x6c] sm:$0xff]
  %v8794 = vld [vmem:[#allocation2 + $0x74] sm:$0xf]
  %v8795 = vld [vmem:[#allocation2 + $0x7c] sm:$0xff]
  %v8796 = vld [vmem:[#allocation2 + $0x84] sm:$0xff]
  %v8797 = vld [vmem:[#allocation2 + $0x8c] sm:$0xf]
  %v8798 = vld [vmem:[#allocation2 + $0x94] sm:$0xff]
  %v8799 = vld [vmem:[#allocation2 + $0x9c] sm:$0xff]
  %v8800 = vld [vmem:[#allocation2 + $0xa4] sm:$0xf]
  %v8801 = vld [vmem:[#allocation2 + $0xac] sm:$0xff]
  %v8802 = vld [vmem:[#allocation2 + $0xb4] sm:$0xff]
  %v8803 = vld [vmem:[#allocation2 + $0xbc] sm:$0xf]
  %s8804 = scalar_lea.vmem %s8, 20
  %v8805 = vld [vmem:[%s8804] sm:$0xf]
  %8807 = vst [vmem:[#allocation1] ss:$9 sm:$0xff] %v8805
  %v8808 = vld [vmem:[#allocation1] sm:$0xff]
  %v8809 = vld [vmem:[#allocation1 + $0x9] sm:$0xff]
  %v8810 = vld [vmem:[#allocation1 + $0x12] sm:$0xff]
  %v8811 = vld [vmem:[#allocation1 + $0x1b] sm:$0xff]
  %v8812 = vpack.i.b16 %v8808, %v8808
  %v8814 = vperm.slane %v8812, 0
  %v8815 = vpack.i.b16 %v8809, %v8809
  %v8817 = vperm.slane %v8815, 0
  %v8818 = vpack.i.b16 %v8810, %v8810
  %v8820 = vperm.slane %v8818, 0
  %v8821 = vpack.i.b16 %v8811, %v8811
  %v8823 = vperm.slane %v8821, 0
  %v8824 = vunpack.c.l.bf16 %v8780
  %v8825 = vunpack.c.h.bf16 %v8780
  %v8826 = vunpack.c.l.bf16 %v8781
  %v8827 = vunpack.c.h.bf16 %v8781
  %v8828 = vunpack.c.l.bf16 %v8782
  %v8829 = vunpack.c.l.bf16 %v8783
  %v8830 = vunpack.c.h.bf16 %v8783
  %v8831 = vunpack.c.l.bf16 %v8784
  %v8832 = vunpack.c.h.bf16 %v8784
  %v8833 = vunpack.c.l.bf16 %v8785
  %v8834 = vunpack.c.l.bf16 %v8786
  %v8835 = vunpack.c.h.bf16 %v8786
  %v8836 = vunpack.c.l.bf16 %v8787
  %v8837 = vunpack.c.h.bf16 %v8787
  %v8838 = vunpack.c.l.bf16 %v8788
  %v8839 = vunpack.c.l.bf16 %v8789
  %v8840 = vunpack.c.h.bf16 %v8789
  %v8841 = vunpack.c.l.bf16 %v8790
  %v8842 = vunpack.c.h.bf16 %v8790
  %v8843 = vunpack.c.l.bf16 %v8791
  %v8844 = vunpack.c.l.bf16 %v8792
  %v8845 = vunpack.c.h.bf16 %v8792
  %v8846 = vunpack.c.l.bf16 %v8793
  %v8847 = vunpack.c.h.bf16 %v8793
  %v8848 = vunpack.c.l.bf16 %v8794
  %v8849 = vunpack.c.l.bf16 %v8795
  %v8850 = vunpack.c.h.bf16 %v8795
  %v8851 = vunpack.c.l.bf16 %v8796
  %v8852 = vunpack.c.h.bf16 %v8796
  %v8853 = vunpack.c.l.bf16 %v8797
  %v8854 = vunpack.c.l.bf16 %v8798
  %v8855 = vunpack.c.h.bf16 %v8798
  %v8856 = vunpack.c.l.bf16 %v8799
  %v8857 = vunpack.c.h.bf16 %v8799
  %v8858 = vunpack.c.l.bf16 %v8800
  %v8859 = vunpack.c.l.bf16 %v8801
  %v8860 = vunpack.c.h.bf16 %v8801
  %v8861 = vunpack.c.l.bf16 %v8802
  %v8862 = vunpack.c.h.bf16 %v8802
  %v8863 = vunpack.c.l.bf16 %v8803
  %v8864 = vunpack.c.l.bf16 %v8814
  %v8865 = vunpack.c.l.bf16 %v8817
  %v8866 = vunpack.c.l.bf16 %v8820
  %v8867 = vunpack.c.l.bf16 %v8823
  %8872 = vrot.lane.b32.xlu0 %v8864, 1
  %v8873 = vpop.permute.xlu0 %8872
  %8874 = vrot.lane.b32.xlu0 %v8865, 1
  %v8875 = vpop.permute.xlu0 %8874
  %8876 = vrot.lane.b32.xlu0 %v8866, 1
  %v8877 = vpop.permute.xlu0 %8876
  %8878 = vrot.lane.b32.xlu0 %v8867, 1
  %v8879 = vpop.permute.xlu0 %8878
  %v8880 = vsel %vm2704, %v8873, %v8875
  %v8881 = vsel %vm2704, %v8875, %v8877
  %v8882 = vsel %vm2704, %v8877, %v8879
  %v8888 = vmul.f32 %v8824, %v8873
  %v8889 = vmul.f32 %v8825, %v8880
  %v8890 = vmul.f32 %v8826, %v8881
  %v8891 = vmul.f32 %v8827, %v8882
  %v8892 = vmul.f32 %v8828, %v8879
  %v8893 = vmul.f32 %v8829, %v8873
  %v8894 = vmul.f32 %v8830, %v8880
  %v8895 = vmul.f32 %v8831, %v8881
  %v8896 = vmul.f32 %v8832, %v8882
  %v8897 = vmul.f32 %v8833, %v8879
  %v8898 = vmul.f32 %v8834, %v8873
  %v8899 = vmul.f32 %v8835, %v8880
  %v8900 = vmul.f32 %v8836, %v8881
  %v8901 = vmul.f32 %v8837, %v8882
  %v8902 = vmul.f32 %v8838, %v8879
  %v8903 = vmul.f32 %v8839, %v8873
  %v8904 = vmul.f32 %v8840, %v8880
  %v8905 = vmul.f32 %v8841, %v8881
  %v8906 = vmul.f32 %v8842, %v8882
  %v8907 = vmul.f32 %v8843, %v8879
  %v8908 = vmul.f32 %v8844, %v8873
  %v8909 = vmul.f32 %v8845, %v8880
  %v8910 = vmul.f32 %v8846, %v8881
  %v8911 = vmul.f32 %v8847, %v8882
  %v8912 = vmul.f32 %v8848, %v8879
  %v8913 = vmul.f32 %v8849, %v8873
  %v8914 = vmul.f32 %v8850, %v8880
  %v8915 = vmul.f32 %v8851, %v8881
  %v8916 = vmul.f32 %v8852, %v8882
  %v8917 = vmul.f32 %v8853, %v8879
  %v8918 = vmul.f32 %v8854, %v8873
  %v8919 = vmul.f32 %v8855, %v8880
  %v8920 = vmul.f32 %v8856, %v8881
  %v8921 = vmul.f32 %v8857, %v8882
  %v8922 = vmul.f32 %v8858, %v8879
  %v8923 = vmul.f32 %v8859, %v8873
  %v8924 = vmul.f32 %v8860, %v8880
  %v8925 = vmul.f32 %v8861, %v8881
  %v8926 = vmul.f32 %v8862, %v8882
  %v8927 = vmul.f32 %v8863, %v8879
  %v8928 = vpack.c.bf16 %v8893, %v8888
  %v8929 = vpack.c.bf16 %v8894, %v8889
  %v8930 = vpack.c.bf16 %v8895, %v8890
  %v8931 = vpack.c.bf16 %v8896, %v8891
  %v8932 = vpack.c.bf16 %v8897, %v8892
  %v8933 = vpack.c.bf16 %v8903, %v8898
  %v8934 = vpack.c.bf16 %v8904, %v8899
  %v8935 = vpack.c.bf16 %v8905, %v8900
  %v8936 = vpack.c.bf16 %v8906, %v8901
  %v8937 = vpack.c.bf16 %v8907, %v8902
  %v8938 = vpack.c.bf16 %v8913, %v8908
  %v8939 = vpack.c.bf16 %v8914, %v8909
  %v8940 = vpack.c.bf16 %v8915, %v8910
  %v8941 = vpack.c.bf16 %v8916, %v8911
  %v8942 = vpack.c.bf16 %v8917, %v8912
  %v8943 = vpack.c.bf16 %v8923, %v8918
  %v8944 = vpack.c.bf16 %v8924, %v8919
  %v8945 = vpack.c.bf16 %v8925, %v8920
  %v8946 = vpack.c.bf16 %v8926, %v8921
  %v8947 = vpack.c.bf16 %v8927, %v8922
  %s8948 = scalar_lea.vmem %s6, 320
  %v8949 = vld [vmem:[%s8948] sm:$0xf]
  %v8950 = vld [vmem:[%s8948 + $0x4] sm:$0xf]
  %v8951 = vld [vmem:[%s8948 + $0x8] sm:$0xf]
  %v8952 = vld [vmem:[%s8948 + $0xc] sm:$0xf]
  %v8953 = vld [vmem:[%s8948 + $0x10] sm:$0xf]
  %v8954 = vld [vmem:[%s8948 + $0x14] sm:$0xf]
  %v8955 = vld [vmem:[%s8948 + $0x18] sm:$0xf]
  %v8956 = vld [vmem:[%s8948 + $0x1c] sm:$0xf]
  %v8957 = vld [vmem:[%s8948 + $0x20] sm:$0xf]
  %v8958 = vld [vmem:[%s8948 + $0x24] sm:$0xf]
  %v8959 = vld [vmem:[%s8948 + $0x28] sm:$0xf]
  %v8960 = vld [vmem:[%s8948 + $0x2c] sm:$0xf]
  %v8961 = vld [vmem:[%s8948 + $0x30] sm:$0xf]
  %v8962 = vld [vmem:[%s8948 + $0x34] sm:$0xf]
  %v8963 = vld [vmem:[%s8948 + $0x38] sm:$0xf]
  %v8964 = vld [vmem:[%s8948 + $0x3c] sm:$0xf]
  %v8981 = vunpack.c.l.b16 %v8949
  %v8982 = vunpack.c.l.b16 %v8950
  %v8983 = vunpack.c.l.b16 %v8951
  %v8984 = vunpack.c.l.b16 %v8952
  %v8985 = vunpack.c.l.b16 %v8953
  %v8986 = vunpack.c.l.b16 %v8954
  %v8987 = vunpack.c.l.b16 %v8955
  %v8988 = vunpack.c.l.b16 %v8956
  %v8989 = vunpack.c.l.b16 %v8957
  %v8990 = vunpack.c.l.b16 %v8958
  %v8991 = vunpack.c.l.b16 %v8959
  %v8992 = vunpack.c.l.b16 %v8960
  %v8993 = vunpack.c.l.b16 %v8961
  %v8994 = vunpack.c.l.b16 %v8962
  %v8995 = vunpack.c.l.b16 %v8963
  %v8996 = vunpack.c.l.b16 %v8964
  %v8997 = vpack.c.b16 %v8982, %v8981
  %v8998 = vpack.c.b16 %v8984, %v8983
  %v8999 = vpack.c.b16 %v8986, %v8985
  %v9000 = vpack.c.b16 %v8988, %v8987
  %v9001 = vpack.c.b16 %v8990, %v8989
  %v9002 = vpack.c.b16 %v8992, %v8991
  %v9003 = vpack.c.b16 %v8994, %v8993
  %v9004 = vpack.c.b16 %v8996, %v8995
  %9025 = vrot.lane.b32.xlu0 %v8928, 127
  %v9026 = vpop.permute.xlu0 %9025
  %9027 = vrot.lane.b32.xlu0 %v8929, 127
  %v9028 = vpop.permute.xlu0 %9027
  %9029 = vrot.lane.b32.xlu0 %v8930, 127
  %v9030 = vpop.permute.xlu0 %9029
  %9031 = vrot.lane.b32.xlu0 %v8931, 127
  %v9032 = vpop.permute.xlu0 %9031
  %9033 = vrot.lane.b32.xlu0 %v8932, 127
  %v9034 = vpop.permute.xlu0 %9033
  %9035 = vrot.lane.b32.xlu0 %v8933, 127
  %v9036 = vpop.permute.xlu0 %9035
  %9037 = vrot.lane.b32.xlu0 %v8934, 127
  %v9038 = vpop.permute.xlu0 %9037
  %9039 = vrot.lane.b32.xlu0 %v8935, 127
  %v9040 = vpop.permute.xlu0 %9039
  %9041 = vrot.lane.b32.xlu0 %v8936, 127
  %v9042 = vpop.permute.xlu0 %9041
  %9043 = vrot.lane.b32.xlu0 %v8937, 127
  %v9044 = vpop.permute.xlu0 %9043
  %9045 = vrot.lane.b32.xlu0 %v8938, 127
  %v9046 = vpop.permute.xlu0 %9045
  %9047 = vrot.lane.b32.xlu0 %v8939, 127
  %v9048 = vpop.permute.xlu0 %9047
  %9049 = vrot.lane.b32.xlu0 %v8940, 127
  %v9050 = vpop.permute.xlu0 %9049
  %9051 = vrot.lane.b32.xlu0 %v8941, 127
  %v9052 = vpop.permute.xlu0 %9051
  %9053 = vrot.lane.b32.xlu0 %v8942, 127
  %v9054 = vpop.permute.xlu0 %9053
  %9055 = vrot.lane.b32.xlu0 %v8943, 127
  %v9056 = vpop.permute.xlu0 %9055
  %9057 = vrot.lane.b32.xlu0 %v8944, 127
  %v9058 = vpop.permute.xlu0 %9057
  %9059 = vrot.lane.b32.xlu0 %v8945, 127
  %v9060 = vpop.permute.xlu0 %9059
  %9061 = vrot.lane.b32.xlu0 %v8946, 127
  %v9062 = vpop.permute.xlu0 %9061
  %9063 = vrot.lane.b32.xlu0 %v8947, 127
  %v9064 = vpop.permute.xlu0 %9063
  %v9065 = vsel %vm2855, %v9026, %v9028
  %v9066 = vsel %vm2855, %v9028, %v9030
  %v9067 = vsel %vm2855, %v9030, %v9032
  %v9068 = vsel %vm2855, %v9032, %v9034
  %v9069 = vsel %vm2855, %v9036, %v9038
  %v9070 = vsel %vm2855, %v9038, %v9040
  %v9071 = vsel %vm2855, %v9040, %v9042
  %v9072 = vsel %vm2855, %v9042, %v9044
  %v9073 = vsel %vm2855, %v9046, %v9048
  %v9074 = vsel %vm2855, %v9048, %v9050
  %v9075 = vsel %vm2855, %v9050, %v9052
  %v9076 = vsel %vm2855, %v9052, %v9054
  %v9077 = vsel %vm2855, %v9056, %v9058
  %v9078 = vsel %vm2855, %v9058, %v9060
  %v9079 = vsel %vm2855, %v9060, %v9062
  %v9080 = vsel %vm2855, %v9062, %v9064
  %v9098 = vsel %vm6568, %v8997, 0
  %v9101 = vsel %vm6568, %v8998, 0
  %v9104 = vsel %vm6568, %v8999, 0
  %v9107 = vsel %vm6568, %v9000, 0
  %v9110 = vsel %vm6568, %v9001, 0
  %v9113 = vsel %vm6568, %v9002, 0
  %v9116 = vsel %vm6568, %v9003, 0
  %v9119 = vsel %vm6568, %v9004, 0
  %9121 = vmatpush.bf16.msra.mxu0 0
  %9122 = vmatpush.bf16.msra.mxu0 0
  %9123 = vmatpush.bf16.msra.mxu0 0
  %9124 = vmatpush.bf16.msra.mxu0 0
  %9125 = vmatpush.bf16.msra.mxu0 %v9077
  %9126 = vmatpush.bf16.msra.mxu0 %v9073
  %9127 = vmatpush.bf16.msra.mxu0 %v9069
  %9128 = vmatpush.bf16.msra.mxu0 %v9065
  %9129 = vmatmul.bf16.gmra.mxu0 %v9098
  %v9130 = vpop.f32.mrf.mxu0
  %v9131 = vadd.f32 0.0, %v9130
  %v9132 = vpop.f32.mrf.mxu0
  %v9133 = vadd.f32 0.0, %v9132
  %9134 = vmatmul.bf16.gmra.mxu0 %v9101
  %v9135 = vpop.f32.mrf.mxu0
  %v9136 = vadd.f32 0.0, %v9135
  %v9137 = vpop.f32.mrf.mxu0
  %v9138 = vadd.f32 0.0, %v9137
  %9139 = vmatmul.bf16.gmra.mxu0 %v9104
  %v9140 = vpop.f32.mrf.mxu0
  %v9141 = vadd.f32 0.0, %v9140
  %v9142 = vpop.f32.mrf.mxu0
  %v9143 = vadd.f32 0.0, %v9142
  %9144 = vmatmul.bf16.gmra.mxu0 %v9107
  %v9145 = vpop.f32.mrf.mxu0
  %v9146 = vadd.f32 0.0, %v9145
  %v9147 = vpop.f32.mrf.mxu0
  %v9148 = vadd.f32 0.0, %v9147
  %9149 = vmatmul.bf16.gmra.mxu0 %v9110
  %v9150 = vpop.f32.mrf.mxu0
  %v9151 = vadd.f32 0.0, %v9150
  %v9152 = vpop.f32.mrf.mxu0
  %v9153 = vadd.f32 0.0, %v9152
  %9154 = vmatmul.bf16.gmra.mxu0 %v9113
  %v9155 = vpop.f32.mrf.mxu0
  %v9156 = vadd.f32 0.0, %v9155
  %v9157 = vpop.f32.mrf.mxu0
  %v9158 = vadd.f32 0.0, %v9157
  %9159 = vmatmul.bf16.gmra.mxu0 %v9116
  %v9160 = vpop.f32.mrf.mxu0
  %v9161 = vadd.f32 0.0, %v9160
  %v9162 = vpop.f32.mrf.mxu0
  %v9163 = vadd.f32 0.0, %v9162
  %9164 = vmatmul.bf16.gmra.mxu0 %v9119
  %v9165 = vpop.f32.mrf.mxu0
  %v9166 = vadd.f32 0.0, %v9165
  %v9167 = vpop.f32.mrf.mxu0
  %v9168 = vadd.f32 0.0, %v9167
  %9169 = vdwg.mxu0
  %9170 = vmatpush.bf16.msra.mxu0 0
  %9171 = vmatpush.bf16.msra.mxu0 0
  %9172 = vmatpush.bf16.msra.mxu0 0
  %9173 = vmatpush.bf16.msra.mxu0 0
  %9174 = vmatpush.bf16.msra.mxu0 %v9078
  %9175 = vmatpush.bf16.msra.mxu0 %v9074
  %9176 = vmatpush.bf16.msra.mxu0 %v9070
  %9177 = vmatpush.bf16.msra.mxu0 %v9066
  %9178 = vmatmul.bf16.gmra.mxu0 %v9098
  %v9179 = vpop.f32.mrf.mxu0
  %v9180 = vadd.f32 0.0, %v9179
  %v9181 = vpop.f32.mrf.mxu0
  %v9182 = vadd.f32 0.0, %v9181
  %9183 = vmatmul.bf16.gmra.mxu0 %v9101
  %v9184 = vpop.f32.mrf.mxu0
  %v9185 = vadd.f32 0.0, %v9184
  %v9186 = vpop.f32.mrf.mxu0
  %v9187 = vadd.f32 0.0, %v9186
  %9188 = vmatmul.bf16.gmra.mxu0 %v9104
  %v9189 = vpop.f32.mrf.mxu0
  %v9190 = vadd.f32 0.0, %v9189
  %v9191 = vpop.f32.mrf.mxu0
  %v9192 = vadd.f32 0.0, %v9191
  %9193 = vmatmul.bf16.gmra.mxu0 %v9107
  %v9194 = vpop.f32.mrf.mxu0
  %v9195 = vadd.f32 0.0, %v9194
  %v9196 = vpop.f32.mrf.mxu0
  %v9197 = vadd.f32 0.0, %v9196
  %9198 = vmatmul.bf16.gmra.mxu0 %v9110
  %v9199 = vpop.f32.mrf.mxu0
  %v9200 = vadd.f32 0.0, %v9199
  %v9201 = vpop.f32.mrf.mxu0
  %v9202 = vadd.f32 0.0, %v9201
  %9203 = vmatmul.bf16.gmra.mxu0 %v9113
  %v9204 = vpop.f32.mrf.mxu0
  %v9205 = vadd.f32 0.0, %v9204
  %v9206 = vpop.f32.mrf.mxu0
  %v9207 = vadd.f32 0.0, %v9206
  %9208 = vmatmul.bf16.gmra.mxu0 %v9116
  %v9209 = vpop.f32.mrf.mxu0
  %v9210 = vadd.f32 0.0, %v9209
  %v9211 = vpop.f32.mrf.mxu0
  %v9212 = vadd.f32 0.0, %v9211
  %9213 = vmatmul.bf16.gmra.mxu0 %v9119
  %v9214 = vpop.f32.mrf.mxu0
  %v9215 = vadd.f32 0.0, %v9214
  %v9216 = vpop.f32.mrf.mxu0
  %v9217 = vadd.f32 0.0, %v9216
  %9218 = vdwg.mxu0
  %9219 = vmatpush.bf16.msra.mxu0 0
  %9220 = vmatpush.bf16.msra.mxu0 0
  %9221 = vmatpush.bf16.msra.mxu0 0
  %9222 = vmatpush.bf16.msra.mxu0 0
  %9223 = vmatpush.bf16.msra.mxu0 %v9079
  %9224 = vmatpush.bf16.msra.mxu0 %v9075
  %9225 = vmatpush.bf16.msra.mxu0 %v9071
  %9226 = vmatpush.bf16.msra.mxu0 %v9067
  %9227 = vmatmul.bf16.gmra.mxu0 %v9098
  %v9228 = vpop.f32.mrf.mxu0
  %v9229 = vadd.f32 0.0, %v9228
  %v9230 = vpop.f32.mrf.mxu0
  %v9231 = vadd.f32 0.0, %v9230
  %9232 = vmatmul.bf16.gmra.mxu0 %v9101
  %v9233 = vpop.f32.mrf.mxu0
  %v9234 = vadd.f32 0.0, %v9233
  %v9235 = vpop.f32.mrf.mxu0
  %v9236 = vadd.f32 0.0, %v9235
  %9237 = vmatmul.bf16.gmra.mxu0 %v9104
  %v9238 = vpop.f32.mrf.mxu0
  %v9239 = vadd.f32 0.0, %v9238
  %v9240 = vpop.f32.mrf.mxu0
  %v9241 = vadd.f32 0.0, %v9240
  %9242 = vmatmul.bf16.gmra.mxu0 %v9107
  %v9243 = vpop.f32.mrf.mxu0
  %v9244 = vadd.f32 0.0, %v9243
  %v9245 = vpop.f32.mrf.mxu0
  %v9246 = vadd.f32 0.0, %v9245
  %9247 = vmatmul.bf16.gmra.mxu0 %v9110
  %v9248 = vpop.f32.mrf.mxu0
  %v9249 = vadd.f32 0.0, %v9248
  %v9250 = vpop.f32.mrf.mxu0
  %v9251 = vadd.f32 0.0, %v9250
  %9252 = vmatmul.bf16.gmra.mxu0 %v9113
  %v9253 = vpop.f32.mrf.mxu0
  %v9254 = vadd.f32 0.0, %v9253
  %v9255 = vpop.f32.mrf.mxu0
  %v9256 = vadd.f32 0.0, %v9255
  %9257 = vmatmul.bf16.gmra.mxu0 %v9116
  %v9258 = vpop.f32.mrf.mxu0
  %v9259 = vadd.f32 0.0, %v9258
  %v9260 = vpop.f32.mrf.mxu0
  %v9261 = vadd.f32 0.0, %v9260
  %9262 = vmatmul.bf16.gmra.mxu0 %v9119
  %v9263 = vpop.f32.mrf.mxu0
  %v9264 = vadd.f32 0.0, %v9263
  %v9265 = vpop.f32.mrf.mxu0
  %v9266 = vadd.f32 0.0, %v9265
  %9267 = vdwg.mxu0
  %9268 = vmatpush.bf16.msra.mxu0 0
  %9269 = vmatpush.bf16.msra.mxu0 0
  %9270 = vmatpush.bf16.msra.mxu0 0
  %9271 = vmatpush.bf16.msra.mxu0 0
  %9272 = vmatpush.bf16.msra.mxu0 %v9080
  %9273 = vmatpush.bf16.msra.mxu0 %v9076
  %9274 = vmatpush.bf16.msra.mxu0 %v9072
  %9275 = vmatpush.bf16.msra.mxu0 %v9068
  %9276 = vmatmul.bf16.gmra.mxu0 %v9098
  %v9277 = vpop.f32.mrf.mxu0
  %v9278 = vadd.f32 0.0, %v9277
  %v9279 = vpop.f32.mrf.mxu0
  %v9280 = vadd.f32 0.0, %v9279
  %9281 = vmatmul.bf16.gmra.mxu0 %v9101
  %v9282 = vpop.f32.mrf.mxu0
  %v9283 = vadd.f32 0.0, %v9282
  %v9284 = vpop.f32.mrf.mxu0
  %v9285 = vadd.f32 0.0, %v9284
  %9286 = vmatmul.bf16.gmra.mxu0 %v9104
  %v9287 = vpop.f32.mrf.mxu0
  %v9288 = vadd.f32 0.0, %v9287
  %v9289 = vpop.f32.mrf.mxu0
  %v9290 = vadd.f32 0.0, %v9289
  %9291 = vmatmul.bf16.gmra.mxu0 %v9107
  %v9292 = vpop.f32.mrf.mxu0
  %v9293 = vadd.f32 0.0, %v9292
  %v9294 = vpop.f32.mrf.mxu0
  %v9295 = vadd.f32 0.0, %v9294
  %9296 = vmatmul.bf16.gmra.mxu0 %v9110
  %v9297 = vpop.f32.mrf.mxu0
  %v9298 = vadd.f32 0.0, %v9297
  %v9299 = vpop.f32.mrf.mxu0
  %v9300 = vadd.f32 0.0, %v9299
  %9301 = vmatmul.bf16.gmra.mxu0 %v9113
  %v9302 = vpop.f32.mrf.mxu0
  %v9303 = vadd.f32 0.0, %v9302
  %v9304 = vpop.f32.mrf.mxu0
  %v9305 = vadd.f32 0.0, %v9304
  %9306 = vmatmul.bf16.gmra.mxu0 %v9116
  %v9307 = vpop.f32.mrf.mxu0
  %v9308 = vadd.f32 0.0, %v9307
  %v9309 = vpop.f32.mrf.mxu0
  %v9310 = vadd.f32 0.0, %v9309
  %9311 = vmatmul.bf16.gmra.mxu0 %v9119
  %v9312 = vpop.f32.mrf.mxu0
  %v9313 = vadd.f32 0.0, %v9312
  %v9314 = vpop.f32.mrf.mxu0
  %v9315 = vadd.f32 0.0, %v9314
  %9316 = vdwg.mxu0
  %v9317 = vadd.f32 %v8716, %v9131
  %v9318 = vadd.f32 %v8717, %v9180
  %v9319 = vadd.f32 %v8718, %v9229
  %v9320 = vadd.f32 %v8719, %v9278
  %v9321 = vadd.f32 %v8720, %v9133
  %v9322 = vadd.f32 %v8721, %v9182
  %v9323 = vadd.f32 %v8722, %v9231
  %v9324 = vadd.f32 %v8723, %v9280
  %v9325 = vadd.f32 %v8724, %v9136
  %v9326 = vadd.f32 %v8725, %v9185
  %v9327 = vadd.f32 %v8726, %v9234
  %v9328 = vadd.f32 %v8727, %v9283
  %v9329 = vadd.f32 %v8728, %v9138
  %v9330 = vadd.f32 %v8729, %v9187
  %v9331 = vadd.f32 %v8730, %v9236
  %v9332 = vadd.f32 %v8731, %v9285
  %v9333 = vadd.f32 %v8732, %v9141
  %v9334 = vadd.f32 %v8733, %v9190
  %v9335 = vadd.f32 %v8734, %v9239
  %v9336 = vadd.f32 %v8735, %v9288
  %v9337 = vadd.f32 %v8736, %v9143
  %v9338 = vadd.f32 %v8737, %v9192
  %v9339 = vadd.f32 %v8738, %v9241
  %v9340 = vadd.f32 %v8739, %v9290
  %v9341 = vadd.f32 %v8740, %v9146
  %v9342 = vadd.f32 %v8741, %v9195
  %v9343 = vadd.f32 %v8742, %v9244
  %v9344 = vadd.f32 %v8743, %v9293
  %v9345 = vadd.f32 %v8744, %v9148
  %v9346 = vadd.f32 %v8745, %v9197
  %v9347 = vadd.f32 %v8746, %v9246
  %v9348 = vadd.f32 %v8747, %v9295
  %v9349 = vadd.f32 %v8748, %v9151
  %v9350 = vadd.f32 %v8749, %v9200
  %v9351 = vadd.f32 %v8750, %v9249
  %v9352 = vadd.f32 %v8751, %v9298
  %v9353 = vadd.f32 %v8752, %v9153
  %v9354 = vadd.f32 %v8753, %v9202
  %v9355 = vadd.f32 %v8754, %v9251
  %v9356 = vadd.f32 %v8755, %v9300
  %v9357 = vadd.f32 %v8756, %v9156
  %v9358 = vadd.f32 %v8757, %v9205
  %v9359 = vadd.f32 %v8758, %v9254
  %v9360 = vadd.f32 %v8759, %v9303
  %v9361 = vadd.f32 %v8760, %v9158
  %v9362 = vadd.f32 %v8761, %v9207
  %v9363 = vadd.f32 %v8762, %v9256
  %v9364 = vadd.f32 %v8763, %v9305
  %v9365 = vadd.f32 %v8764, %v9161
  %v9366 = vadd.f32 %v8765, %v9210
  %v9367 = vadd.f32 %v8766, %v9259
  %v9368 = vadd.f32 %v8767, %v9308
  %v9369 = vadd.f32 %v8768, %v9163
  %v9370 = vadd.f32 %v8769, %v9212
  %v9371 = vadd.f32 %v8770, %v9261
  %v9372 = vadd.f32 %v8771, %v9310
  %v9373 = vadd.f32 %v8772, %v9166
  %v9374 = vadd.f32 %v8773, %v9215
  %v9375 = vadd.f32 %v8774, %v9264
  %v9376 = vadd.f32 %v8775, %v9313
  %v9377 = vadd.f32 %v8776, %v9168
  %v9378 = vadd.f32 %v8777, %v9217
  %v9379 = vadd.f32 %v8778, %v9266
  %v9380 = vadd.f32 %v8779, %v9315
  %v9381 = vld [vmem:[#allocation2 + $0x4] sm:$0xff]
  %v9382 = vld [vmem:[#allocation2 + $0xc] sm:$0xff]
  %v9383 = vld [vmem:[#allocation2 + $0x14] sm:$0xf]
  %v9384 = vld [vmem:[#allocation2 + $0x1c] sm:$0xff]
  %v9385 = vld [vmem:[#allocation2 + $0x24] sm:$0xff]
  %v9386 = vld [vmem:[#allocation2 + $0x2c] sm:$0xf]
  %v9387 = vld [vmem:[#allocation2 + $0x34] sm:$0xff]
  %v9388 = vld [vmem:[#allocation2 + $0x3c] sm:$0xff]
  %v9389 = vld [vmem:[#allocation2 + $0x44] sm:$0xf]
  %v9390 = vld [vmem:[#allocation2 + $0x4c] sm:$0xff]
  %v9391 = vld [vmem:[#allocation2 + $0x54] sm:$0xff]
  %v9392 = vld [vmem:[#allocation2 + $0x5c] sm:$0xf]
  %v9393 = vld [vmem:[#allocation2 + $0x64] sm:$0xff]
  %v9394 = vld [vmem:[#allocation2 + $0x6c] sm:$0xff]
  %v9395 = vld [vmem:[#allocation2 + $0x74] sm:$0xf]
  %v9396 = vld [vmem:[#allocation2 + $0x7c] sm:$0xff]
  %v9397 = vld [vmem:[#allocation2 + $0x84] sm:$0xff]
  %v9398 = vld [vmem:[#allocation2 + $0x8c] sm:$0xf]
  %v9399 = vld [vmem:[#allocation2 + $0x94] sm:$0xff]
  %v9400 = vld [vmem:[#allocation2 + $0x9c] sm:$0xff]
  %v9401 = vld [vmem:[#allocation2 + $0xa4] sm:$0xf]
  %v9402 = vld [vmem:[#allocation2 + $0xac] sm:$0xff]
  %v9403 = vld [vmem:[#allocation2 + $0xb4] sm:$0xff]
  %v9404 = vld [vmem:[#allocation2 + $0xbc] sm:$0xf]
  %s9405 = scalar_lea.vmem %s8, 24
  %v9406 = vld [vmem:[%s9405] sm:$0xf]
  %9408 = vst [vmem:[#allocation1] ss:$9 sm:$0xff] %v9406
  %v9409 = vld [vmem:[#allocation1] sm:$0xff]
  %v9410 = vld [vmem:[#allocation1 + $0x9] sm:$0xff]
  %v9411 = vld [vmem:[#allocation1 + $0x12] sm:$0xff]
  %v9412 = vld [vmem:[#allocation1 + $0x1b] sm:$0xff]
  %v9413 = vpack.i.b16 %v9409, %v9409
  %v9415 = vperm.slane %v9413, 0
  %v9416 = vpack.i.b16 %v9410, %v9410
  %v9418 = vperm.slane %v9416, 0
  %v9419 = vpack.i.b16 %v9411, %v9411
  %v9421 = vperm.slane %v9419, 0
  %v9422 = vpack.i.b16 %v9412, %v9412
  %v9424 = vperm.slane %v9422, 0
  %v9425 = vunpack.c.l.bf16 %v9381
  %v9426 = vunpack.c.h.bf16 %v9381
  %v9427 = vunpack.c.l.bf16 %v9382
  %v9428 = vunpack.c.h.bf16 %v9382
  %v9429 = vunpack.c.l.bf16 %v9383
  %v9430 = vunpack.c.l.bf16 %v9384
  %v9431 = vunpack.c.h.bf16 %v9384
  %v9432 = vunpack.c.l.bf16 %v9385
  %v9433 = vunpack.c.h.bf16 %v9385
  %v9434 = vunpack.c.l.bf16 %v9386
  %v9435 = vunpack.c.l.bf16 %v9387
  %v9436 = vunpack.c.h.bf16 %v9387
  %v9437 = vunpack.c.l.bf16 %v9388
  %v9438 = vunpack.c.h.bf16 %v9388
  %v9439 = vunpack.c.l.bf16 %v9389
  %v9440 = vunpack.c.l.bf16 %v9390
  %v9441 = vunpack.c.h.bf16 %v9390
  %v9442 = vunpack.c.l.bf16 %v9391
  %v9443 = vunpack.c.h.bf16 %v9391
  %v9444 = vunpack.c.l.bf16 %v9392
  %v9445 = vunpack.c.l.bf16 %v9393
  %v9446 = vunpack.c.h.bf16 %v9393
  %v9447 = vunpack.c.l.bf16 %v9394
  %v9448 = vunpack.c.h.bf16 %v9394
  %v9449 = vunpack.c.l.bf16 %v9395
  %v9450 = vunpack.c.l.bf16 %v9396
  %v9451 = vunpack.c.h.bf16 %v9396
  %v9452 = vunpack.c.l.bf16 %v9397
  %v9453 = vunpack.c.h.bf16 %v9397
  %v9454 = vunpack.c.l.bf16 %v9398
  %v9455 = vunpack.c.l.bf16 %v9399
  %v9456 = vunpack.c.h.bf16 %v9399
  %v9457 = vunpack.c.l.bf16 %v9400
  %v9458 = vunpack.c.h.bf16 %v9400
  %v9459 = vunpack.c.l.bf16 %v9401
  %v9460 = vunpack.c.l.bf16 %v9402
  %v9461 = vunpack.c.h.bf16 %v9402
  %v9462 = vunpack.c.l.bf16 %v9403
  %v9463 = vunpack.c.h.bf16 %v9403
  %v9464 = vunpack.c.l.bf16 %v9404
  %v9465 = vunpack.c.l.bf16 %v9415
  %v9466 = vunpack.c.l.bf16 %v9418
  %v9467 = vunpack.c.l.bf16 %v9421
  %v9468 = vunpack.c.l.bf16 %v9424
  %9473 = vrot.lane.b32.xlu0 %v9465, 15
  %v9474 = vpop.permute.xlu0 %9473
  %9475 = vrot.lane.b32.xlu0 %v9466, 15
  %v9476 = vpop.permute.xlu0 %9475
  %9477 = vrot.lane.b32.xlu0 %v9467, 15
  %v9478 = vpop.permute.xlu0 %9477
  %9479 = vrot.lane.b32.xlu0 %v9468, 15
  %v9480 = vpop.permute.xlu0 %9479
  %v9481 = vsel %vm3248, %v9474, %v9476
  %v9482 = vsel %vm3248, %v9476, %v9478
  %v9483 = vsel %vm3248, %v9478, %v9480
  %v9489 = vmul.f32 %v9425, %v9474
  %v9490 = vmul.f32 %v9426, %v9481
  %v9491 = vmul.f32 %v9427, %v9482
  %v9492 = vmul.f32 %v9428, %v9483
  %v9493 = vmul.f32 %v9429, %v9480
  %v9494 = vmul.f32 %v9430, %v9474
  %v9495 = vmul.f32 %v9431, %v9481
  %v9496 = vmul.f32 %v9432, %v9482
  %v9497 = vmul.f32 %v9433, %v9483
  %v9498 = vmul.f32 %v9434, %v9480
  %v9499 = vmul.f32 %v9435, %v9474
  %v9500 = vmul.f32 %v9436, %v9481
  %v9501 = vmul.f32 %v9437, %v9482
  %v9502 = vmul.f32 %v9438, %v9483
  %v9503 = vmul.f32 %v9439, %v9480
  %v9504 = vmul.f32 %v9440, %v9474
  %v9505 = vmul.f32 %v9441, %v9481
  %v9506 = vmul.f32 %v9442, %v9482
  %v9507 = vmul.f32 %v9443, %v9483
  %v9508 = vmul.f32 %v9444, %v9480
  %v9509 = vmul.f32 %v9445, %v9474
  %v9510 = vmul.f32 %v9446, %v9481
  %v9511 = vmul.f32 %v9447, %v9482
  %v9512 = vmul.f32 %v9448, %v9483
  %v9513 = vmul.f32 %v9449, %v9480
  %v9514 = vmul.f32 %v9450, %v9474
  %v9515 = vmul.f32 %v9451, %v9481
  %v9516 = vmul.f32 %v9452, %v9482
  %v9517 = vmul.f32 %v9453, %v9483
  %v9518 = vmul.f32 %v9454, %v9480
  %v9519 = vmul.f32 %v9455, %v9474
  %v9520 = vmul.f32 %v9456, %v9481
  %v9521 = vmul.f32 %v9457, %v9482
  %v9522 = vmul.f32 %v9458, %v9483
  %v9523 = vmul.f32 %v9459, %v9480
  %v9524 = vmul.f32 %v9460, %v9474
  %v9525 = vmul.f32 %v9461, %v9481
  %v9526 = vmul.f32 %v9462, %v9482
  %v9527 = vmul.f32 %v9463, %v9483
  %v9528 = vmul.f32 %v9464, %v9480
  %v9529 = vpack.c.bf16 %v9494, %v9489
  %v9530 = vpack.c.bf16 %v9495, %v9490
  %v9531 = vpack.c.bf16 %v9496, %v9491
  %v9532 = vpack.c.bf16 %v9497, %v9492
  %v9533 = vpack.c.bf16 %v9498, %v9493
  %v9534 = vpack.c.bf16 %v9504, %v9499
  %v9535 = vpack.c.bf16 %v9505, %v9500
  %v9536 = vpack.c.bf16 %v9506, %v9501
  %v9537 = vpack.c.bf16 %v9507, %v9502
  %v9538 = vpack.c.bf16 %v9508, %v9503
  %v9539 = vpack.c.bf16 %v9514, %v9509
  %v9540 = vpack.c.bf16 %v9515, %v9510
  %v9541 = vpack.c.bf16 %v9516, %v9511
  %v9542 = vpack.c.bf16 %v9517, %v9512
  %v9543 = vpack.c.bf16 %v9518, %v9513
  %v9544 = vpack.c.bf16 %v9524, %v9519
  %v9545 = vpack.c.bf16 %v9525, %v9520
  %v9546 = vpack.c.bf16 %v9526, %v9521
  %v9547 = vpack.c.bf16 %v9527, %v9522
  %v9548 = vpack.c.bf16 %v9528, %v9523
  %s9549 = scalar_lea.vmem %s6, 384
  %v9550 = vld [vmem:[%s9549] sm:$0xf]
  %v9551 = vld [vmem:[%s9549 + $0x4] sm:$0xf]
  %v9552 = vld [vmem:[%s9549 + $0x8] sm:$0xf]
  %v9553 = vld [vmem:[%s9549 + $0xc] sm:$0xf]
  %v9554 = vld [vmem:[%s9549 + $0x10] sm:$0xf]
  %v9555 = vld [vmem:[%s9549 + $0x14] sm:$0xf]
  %v9556 = vld [vmem:[%s9549 + $0x18] sm:$0xf]
  %v9557 = vld [vmem:[%s9549 + $0x1c] sm:$0xf]
  %v9558 = vld [vmem:[%s9549 + $0x20] sm:$0xf]
  %v9559 = vld [vmem:[%s9549 + $0x24] sm:$0xf]
  %v9560 = vld [vmem:[%s9549 + $0x28] sm:$0xf]
  %v9561 = vld [vmem:[%s9549 + $0x2c] sm:$0xf]
  %v9562 = vld [vmem:[%s9549 + $0x30] sm:$0xf]
  %v9563 = vld [vmem:[%s9549 + $0x34] sm:$0xf]
  %v9564 = vld [vmem:[%s9549 + $0x38] sm:$0xf]
  %v9565 = vld [vmem:[%s9549 + $0x3c] sm:$0xf]
  %v9582 = vunpack.c.l.b16 %v9550
  %v9583 = vunpack.c.l.b16 %v9551
  %v9584 = vunpack.c.l.b16 %v9552
  %v9585 = vunpack.c.l.b16 %v9553
  %v9586 = vunpack.c.l.b16 %v9554
  %v9587 = vunpack.c.l.b16 %v9555
  %v9588 = vunpack.c.l.b16 %v9556
  %v9589 = vunpack.c.l.b16 %v9557
  %v9590 = vunpack.c.l.b16 %v9558
  %v9591 = vunpack.c.l.b16 %v9559
  %v9592 = vunpack.c.l.b16 %v9560
  %v9593 = vunpack.c.l.b16 %v9561
  %v9594 = vunpack.c.l.b16 %v9562
  %v9595 = vunpack.c.l.b16 %v9563
  %v9596 = vunpack.c.l.b16 %v9564
  %v9597 = vunpack.c.l.b16 %v9565
  %v9598 = vpack.c.b16 %v9583, %v9582
  %v9599 = vpack.c.b16 %v9585, %v9584
  %v9600 = vpack.c.b16 %v9587, %v9586
  %v9601 = vpack.c.b16 %v9589, %v9588
  %v9602 = vpack.c.b16 %v9591, %v9590
  %v9603 = vpack.c.b16 %v9593, %v9592
  %v9604 = vpack.c.b16 %v9595, %v9594
  %v9605 = vpack.c.b16 %v9597, %v9596
  %9626 = vrot.lane.b32.xlu0 %v9529, 113
  %v9627 = vpop.permute.xlu0 %9626
  %9628 = vrot.lane.b32.xlu0 %v9530, 113
  %v9629 = vpop.permute.xlu0 %9628
  %9630 = vrot.lane.b32.xlu0 %v9531, 113
  %v9631 = vpop.permute.xlu0 %9630
  %9632 = vrot.lane.b32.xlu0 %v9532, 113
  %v9633 = vpop.permute.xlu0 %9632
  %9634 = vrot.lane.b32.xlu0 %v9533, 113
  %v9635 = vpop.permute.xlu0 %9634
  %9636 = vrot.lane.b32.xlu0 %v9534, 113
  %v9637 = vpop.permute.xlu0 %9636
  %9638 = vrot.lane.b32.xlu0 %v9535, 113
  %v9639 = vpop.permute.xlu0 %9638
  %9640 = vrot.lane.b32.xlu0 %v9536, 113
  %v9641 = vpop.permute.xlu0 %9640
  %9642 = vrot.lane.b32.xlu0 %v9537, 113
  %v9643 = vpop.permute.xlu0 %9642
  %9644 = vrot.lane.b32.xlu0 %v9538, 113
  %v9645 = vpop.permute.xlu0 %9644
  %9646 = vrot.lane.b32.xlu0 %v9539, 113
  %v9647 = vpop.permute.xlu0 %9646
  %9648 = vrot.lane.b32.xlu0 %v9540, 113
  %v9649 = vpop.permute.xlu0 %9648
  %9650 = vrot.lane.b32.xlu0 %v9541, 113
  %v9651 = vpop.permute.xlu0 %9650
  %9652 = vrot.lane.b32.xlu0 %v9542, 113
  %v9653 = vpop.permute.xlu0 %9652
  %9654 = vrot.lane.b32.xlu0 %v9543, 113
  %v9655 = vpop.permute.xlu0 %9654
  %9656 = vrot.lane.b32.xlu0 %v9544, 113
  %v9657 = vpop.permute.xlu0 %9656
  %9658 = vrot.lane.b32.xlu0 %v9545, 113
  %v9659 = vpop.permute.xlu0 %9658
  %9660 = vrot.lane.b32.xlu0 %v9546, 113
  %v9661 = vpop.permute.xlu0 %9660
  %9662 = vrot.lane.b32.xlu0 %v9547, 113
  %v9663 = vpop.permute.xlu0 %9662
  %9664 = vrot.lane.b32.xlu0 %v9548, 113
  %v9665 = vpop.permute.xlu0 %9664
  %v9666 = vsel %vm3399, %v9627, %v9629
  %v9667 = vsel %vm3399, %v9629, %v9631
  %v9668 = vsel %vm3399, %v9631, %v9633
  %v9669 = vsel %vm3399, %v9633, %v9635
  %v9670 = vsel %vm3399, %v9637, %v9639
  %v9671 = vsel %vm3399, %v9639, %v9641
  %v9672 = vsel %vm3399, %v9641, %v9643
  %v9673 = vsel %vm3399, %v9643, %v9645
  %v9674 = vsel %vm3399, %v9647, %v9649
  %v9675 = vsel %vm3399, %v9649, %v9651
  %v9676 = vsel %vm3399, %v9651, %v9653
  %v9677 = vsel %vm3399, %v9653, %v9655
  %v9678 = vsel %vm3399, %v9657, %v9659
  %v9679 = vsel %vm3399, %v9659, %v9661
  %v9680 = vsel %vm3399, %v9661, %v9663
  %v9681 = vsel %vm3399, %v9663, %v9665
  %v9699 = vsel %vm6568, %v9598, 0
  %v9702 = vsel %vm6568, %v9599, 0
  %v9705 = vsel %vm6568, %v9600, 0
  %v9708 = vsel %vm6568, %v9601, 0
  %v9711 = vsel %vm6568, %v9602, 0
  %v9714 = vsel %vm6568, %v9603, 0
  %v9717 = vsel %vm6568, %v9604, 0
  %v9720 = vsel %vm6568, %v9605, 0
  %9722 = vmatpush.bf16.msra.mxu0 0
  %9723 = vmatpush.bf16.msra.mxu0 0
  %9724 = vmatpush.bf16.msra.mxu0 0
  %9725 = vmatpush.bf16.msra.mxu0 0
  %9726 = vmatpush.bf16.msra.mxu0 %v9678
  %9727 = vmatpush.bf16.msra.mxu0 %v9674
  %9728 = vmatpush.bf16.msra.mxu0 %v9670
  %9729 = vmatpush.bf16.msra.mxu0 %v9666
  %9730 = vmatmul.bf16.gmra.mxu0 %v9699
  %v9731 = vpop.f32.mrf.mxu0
  %v9732 = vadd.f32 0.0, %v9731
  %v9733 = vpop.f32.mrf.mxu0
  %v9734 = vadd.f32 0.0, %v9733
  %9735 = vmatmul.bf16.gmra.mxu0 %v9702
  %v9736 = vpop.f32.mrf.mxu0
  %v9737 = vadd.f32 0.0, %v9736
  %v9738 = vpop.f32.mrf.mxu0
  %v9739 = vadd.f32 0.0, %v9738
  %9740 = vmatmul.bf16.gmra.mxu0 %v9705
  %v9741 = vpop.f32.mrf.mxu0
  %v9742 = vadd.f32 0.0, %v9741
  %v9743 = vpop.f32.mrf.mxu0
  %v9744 = vadd.f32 0.0, %v9743
  %9745 = vmatmul.bf16.gmra.mxu0 %v9708
  %v9746 = vpop.f32.mrf.mxu0
  %v9747 = vadd.f32 0.0, %v9746
  %v9748 = vpop.f32.mrf.mxu0
  %v9749 = vadd.f32 0.0, %v9748
  %9750 = vmatmul.bf16.gmra.mxu0 %v9711
  %v9751 = vpop.f32.mrf.mxu0
  %v9752 = vadd.f32 0.0, %v9751
  %v9753 = vpop.f32.mrf.mxu0
  %v9754 = vadd.f32 0.0, %v9753
  %9755 = vmatmul.bf16.gmra.mxu0 %v9714
  %v9756 = vpop.f32.mrf.mxu0
  %v9757 = vadd.f32 0.0, %v9756
  %v9758 = vpop.f32.mrf.mxu0
  %v9759 = vadd.f32 0.0, %v9758
  %9760 = vmatmul.bf16.gmra.mxu0 %v9717
  %v9761 = vpop.f32.mrf.mxu0
  %v9762 = vadd.f32 0.0, %v9761
  %v9763 = vpop.f32.mrf.mxu0
  %v9764 = vadd.f32 0.0, %v9763
  %9765 = vmatmul.bf16.gmra.mxu0 %v9720
  %v9766 = vpop.f32.mrf.mxu0
  %v9767 = vadd.f32 0.0, %v9766
  %v9768 = vpop.f32.mrf.mxu0
  %v9769 = vadd.f32 0.0, %v9768
  %9770 = vdwg.mxu0
  %9771 = vmatpush.bf16.msra.mxu0 0
  %9772 = vmatpush.bf16.msra.mxu0 0
  %9773 = vmatpush.bf16.msra.mxu0 0
  %9774 = vmatpush.bf16.msra.mxu0 0
  %9775 = vmatpush.bf16.msra.mxu0 %v9679
  %9776 = vmatpush.bf16.msra.mxu0 %v9675
  %9777 = vmatpush.bf16.msra.mxu0 %v9671
  %9778 = vmatpush.bf16.msra.mxu0 %v9667
  %9779 = vmatmul.bf16.gmra.mxu0 %v9699
  %v9780 = vpop.f32.mrf.mxu0
  %v9781 = vadd.f32 0.0, %v9780
  %v9782 = vpop.f32.mrf.mxu0
  %v9783 = vadd.f32 0.0, %v9782
  %9784 = vmatmul.bf16.gmra.mxu0 %v9702
  %v9785 = vpop.f32.mrf.mxu0
  %v9786 = vadd.f32 0.0, %v9785
  %v9787 = vpop.f32.mrf.mxu0
  %v9788 = vadd.f32 0.0, %v9787
  %9789 = vmatmul.bf16.gmra.mxu0 %v9705
  %v9790 = vpop.f32.mrf.mxu0
  %v9791 = vadd.f32 0.0, %v9790
  %v9792 = vpop.f32.mrf.mxu0
  %v9793 = vadd.f32 0.0, %v9792
  %9794 = vmatmul.bf16.gmra.mxu0 %v9708
  %v9795 = vpop.f32.mrf.mxu0
  %v9796 = vadd.f32 0.0, %v9795
  %v9797 = vpop.f32.mrf.mxu0
  %v9798 = vadd.f32 0.0, %v9797
  %9799 = vmatmul.bf16.gmra.mxu0 %v9711
  %v9800 = vpop.f32.mrf.mxu0
  %v9801 = vadd.f32 0.0, %v9800
  %v9802 = vpop.f32.mrf.mxu0
  %v9803 = vadd.f32 0.0, %v9802
  %9804 = vmatmul.bf16.gmra.mxu0 %v9714
  %v9805 = vpop.f32.mrf.mxu0
  %v9806 = vadd.f32 0.0, %v9805
  %v9807 = vpop.f32.mrf.mxu0
  %v9808 = vadd.f32 0.0, %v9807
  %9809 = vmatmul.bf16.gmra.mxu0 %v9717
  %v9810 = vpop.f32.mrf.mxu0
  %v9811 = vadd.f32 0.0, %v9810
  %v9812 = vpop.f32.mrf.mxu0
  %v9813 = vadd.f32 0.0, %v9812
  %9814 = vmatmul.bf16.gmra.mxu0 %v9720
  %v9815 = vpop.f32.mrf.mxu0
  %v9816 = vadd.f32 0.0, %v9815
  %v9817 = vpop.f32.mrf.mxu0
  %v9818 = vadd.f32 0.0, %v9817
  %9819 = vdwg.mxu0
  %9820 = vmatpush.bf16.msra.mxu0 0
  %9821 = vmatpush.bf16.msra.mxu0 0
  %9822 = vmatpush.bf16.msra.mxu0 0
  %9823 = vmatpush.bf16.msra.mxu0 0
  %9824 = vmatpush.bf16.msra.mxu0 %v9680
  %9825 = vmatpush.bf16.msra.mxu0 %v9676
  %9826 = vmatpush.bf16.msra.mxu0 %v9672
  %9827 = vmatpush.bf16.msra.mxu0 %v9668
  %9828 = vmatmul.bf16.gmra.mxu0 %v9699
  %v9829 = vpop.f32.mrf.mxu0
  %v9830 = vadd.f32 0.0, %v9829
  %v9831 = vpop.f32.mrf.mxu0
  %v9832 = vadd.f32 0.0, %v9831
  %9833 = vmatmul.bf16.gmra.mxu0 %v9702
  %v9834 = vpop.f32.mrf.mxu0
  %v9835 = vadd.f32 0.0, %v9834
  %v9836 = vpop.f32.mrf.mxu0
  %v9837 = vadd.f32 0.0, %v9836
  %9838 = vmatmul.bf16.gmra.mxu0 %v9705
  %v9839 = vpop.f32.mrf.mxu0
  %v9840 = vadd.f32 0.0, %v9839
  %v9841 = vpop.f32.mrf.mxu0
  %v9842 = vadd.f32 0.0, %v9841
  %9843 = vmatmul.bf16.gmra.mxu0 %v9708
  %v9844 = vpop.f32.mrf.mxu0
  %v9845 = vadd.f32 0.0, %v9844
  %v9846 = vpop.f32.mrf.mxu0
  %v9847 = vadd.f32 0.0, %v9846
  %9848 = vmatmul.bf16.gmra.mxu0 %v9711
  %v9849 = vpop.f32.mrf.mxu0
  %v9850 = vadd.f32 0.0, %v9849
  %v9851 = vpop.f32.mrf.mxu0
  %v9852 = vadd.f32 0.0, %v9851
  %9853 = vmatmul.bf16.gmra.mxu0 %v9714
  %v9854 = vpop.f32.mrf.mxu0
  %v9855 = vadd.f32 0.0, %v9854
  %v9856 = vpop.f32.mrf.mxu0
  %v9857 = vadd.f32 0.0, %v9856
  %9858 = vmatmul.bf16.gmra.mxu0 %v9717
  %v9859 = vpop.f32.mrf.mxu0
  %v9860 = vadd.f32 0.0, %v9859
  %v9861 = vpop.f32.mrf.mxu0
  %v9862 = vadd.f32 0.0, %v9861
  %9863 = vmatmul.bf16.gmra.mxu0 %v9720
  %v9864 = vpop.f32.mrf.mxu0
  %v9865 = vadd.f32 0.0, %v9864
  %v9866 = vpop.f32.mrf.mxu0
  %v9867 = vadd.f32 0.0, %v9866
  %9868 = vdwg.mxu0
  %9869 = vmatpush.bf16.msra.mxu0 0
  %9870 = vmatpush.bf16.msra.mxu0 0
  %9871 = vmatpush.bf16.msra.mxu0 0
  %9872 = vmatpush.bf16.msra.mxu0 0
  %9873 = vmatpush.bf16.msra.mxu0 %v9681
  %9874 = vmatpush.bf16.msra.mxu0 %v9677
  %9875 = vmatpush.bf16.msra.mxu0 %v9673
  %9876 = vmatpush.bf16.msra.mxu0 %v9669
  %9877 = vmatmul.bf16.gmra.mxu0 %v9699
  %v9878 = vpop.f32.mrf.mxu0
  %v9879 = vadd.f32 0.0, %v9878
  %v9880 = vpop.f32.mrf.mxu0
  %v9881 = vadd.f32 0.0, %v9880
  %9882 = vmatmul.bf16.gmra.mxu0 %v9702
  %v9883 = vpop.f32.mrf.mxu0
  %v9884 = vadd.f32 0.0, %v9883
  %v9885 = vpop.f32.mrf.mxu0
  %v9886 = vadd.f32 0.0, %v9885
  %9887 = vmatmul.bf16.gmra.mxu0 %v9705
  %v9888 = vpop.f32.mrf.mxu0
  %v9889 = vadd.f32 0.0, %v9888
  %v9890 = vpop.f32.mrf.mxu0
  %v9891 = vadd.f32 0.0, %v9890
  %9892 = vmatmul.bf16.gmra.mxu0 %v9708
  %v9893 = vpop.f32.mrf.mxu0
  %v9894 = vadd.f32 0.0, %v9893
  %v9895 = vpop.f32.mrf.mxu0
  %v9896 = vadd.f32 0.0, %v9895
  %9897 = vmatmul.bf16.gmra.mxu0 %v9711
  %v9898 = vpop.f32.mrf.mxu0
  %v9899 = vadd.f32 0.0, %v9898
  %v9900 = vpop.f32.mrf.mxu0
  %v9901 = vadd.f32 0.0, %v9900
  %9902 = vmatmul.bf16.gmra.mxu0 %v9714
  %v9903 = vpop.f32.mrf.mxu0
  %v9904 = vadd.f32 0.0, %v9903
  %v9905 = vpop.f32.mrf.mxu0
  %v9906 = vadd.f32 0.0, %v9905
  %9907 = vmatmul.bf16.gmra.mxu0 %v9717
  %v9908 = vpop.f32.mrf.mxu0
  %v9909 = vadd.f32 0.0, %v9908
  %v9910 = vpop.f32.mrf.mxu0
  %v9911 = vadd.f32 0.0, %v9910
  %9912 = vmatmul.bf16.gmra.mxu0 %v9720
  %v9913 = vpop.f32.mrf.mxu0
  %v9914 = vadd.f32 0.0, %v9913
  %v9915 = vpop.f32.mrf.mxu0
  %v9916 = vadd.f32 0.0, %v9915
  %9917 = vdwg.mxu0
  %v9918 = vadd.f32 %v9317, %v9732
  %v9919 = vadd.f32 %v9318, %v9781
  %v9920 = vadd.f32 %v9319, %v9830
  %v9921 = vadd.f32 %v9320, %v9879
  %v9922 = vadd.f32 %v9321, %v9734
  %v9923 = vadd.f32 %v9322, %v9783
  %v9924 = vadd.f32 %v9323, %v9832
  %v9925 = vadd.f32 %v9324, %v9881
  %v9926 = vadd.f32 %v9325, %v9737
  %v9927 = vadd.f32 %v9326, %v9786
  %v9928 = vadd.f32 %v9327, %v9835
  %v9929 = vadd.f32 %v9328, %v9884
  %v9930 = vadd.f32 %v9329, %v9739
  %v9931 = vadd.f32 %v9330, %v9788
  %v9932 = vadd.f32 %v9331, %v9837
  %v9933 = vadd.f32 %v9332, %v9886
  %v9934 = vadd.f32 %v9333, %v9742
  %v9935 = vadd.f32 %v9334, %v9791
  %v9936 = vadd.f32 %v9335, %v9840
  %v9937 = vadd.f32 %v9336, %v9889
  %v9938 = vadd.f32 %v9337, %v9744
  %v9939 = vadd.f32 %v9338, %v9793
  %v9940 = vadd.f32 %v9339, %v9842
  %v9941 = vadd.f32 %v9340, %v9891
  %v9942 = vadd.f32 %v9341, %v9747
  %v9943 = vadd.f32 %v9342, %v9796
  %v9944 = vadd.f32 %v9343, %v9845
  %v9945 = vadd.f32 %v9344, %v9894
  %v9946 = vadd.f32 %v9345, %v9749
  %v9947 = vadd.f32 %v9346, %v9798
  %v9948 = vadd.f32 %v9347, %v9847
  %v9949 = vadd.f32 %v9348, %v9896
  %v9950 = vadd.f32 %v9349, %v9752
  %v9951 = vadd.f32 %v9350, %v9801
  %v9952 = vadd.f32 %v9351, %v9850
  %v9953 = vadd.f32 %v9352, %v9899
  %v9954 = vadd.f32 %v9353, %v9754
  %v9955 = vadd.f32 %v9354, %v9803
  %v9956 = vadd.f32 %v9355, %v9852
  %v9957 = vadd.f32 %v9356, %v9901
  %v9958 = vadd.f32 %v9357, %v9757
  %v9959 = vadd.f32 %v9358, %v9806
  %v9960 = vadd.f32 %v9359, %v9855
  %v9961 = vadd.f32 %v9360, %v9904
  %v9962 = vadd.f32 %v9361, %v9759
  %v9963 = vadd.f32 %v9362, %v9808
  %v9964 = vadd.f32 %v9363, %v9857
  %v9965 = vadd.f32 %v9364, %v9906
  %v9966 = vadd.f32 %v9365, %v9762
  %v9967 = vadd.f32 %v9366, %v9811
  %v9968 = vadd.f32 %v9367, %v9860
  %v9969 = vadd.f32 %v9368, %v9909
  %v9970 = vadd.f32 %v9369, %v9764
  %v9971 = vadd.f32 %v9370, %v9813
  %v9972 = vadd.f32 %v9371, %v9862
  %v9973 = vadd.f32 %v9372, %v9911
  %v9974 = vadd.f32 %v9373, %v9767
  %v9975 = vadd.f32 %v9374, %v9816
  %v9976 = vadd.f32 %v9375, %v9865
  %v9977 = vadd.f32 %v9376, %v9914
  %v9978 = vadd.f32 %v9377, %v9769
  %v9979 = vadd.f32 %v9378, %v9818
  %v9980 = vadd.f32 %v9379, %v9867
  %v9981 = vadd.f32 %v9380, %v9916
  %v9982 = vld [vmem:[#allocation2 + $0x4] sm:$0xff]
  %v9983 = vld [vmem:[#allocation2 + $0xc] sm:$0xff]
  %v9984 = vld [vmem:[#allocation2 + $0x14] sm:$0xf]
  %v9985 = vld [vmem:[#allocation2 + $0x1c] sm:$0xff]
  %v9986 = vld [vmem:[#allocation2 + $0x24] sm:$0xff]
  %v9987 = vld [vmem:[#allocation2 + $0x2c] sm:$0xf]
  %v9988 = vld [vmem:[#allocation2 + $0x34] sm:$0xff]
  %v9989 = vld [vmem:[#allocation2 + $0x3c] sm:$0xff]
  %v9990 = vld [vmem:[#allocation2 + $0x44] sm:$0xf]
  %v9991 = vld [vmem:[#allocation2 + $0x4c] sm:$0xff]
  %v9992 = vld [vmem:[#allocation2 + $0x54] sm:$0xff]
  %v9993 = vld [vmem:[#allocation2 + $0x5c] sm:$0xf]
  %v9994 = vld [vmem:[#allocation2 + $0x64] sm:$0xff]
  %v9995 = vld [vmem:[#allocation2 + $0x6c] sm:$0xff]
  %v9996 = vld [vmem:[#allocation2 + $0x74] sm:$0xf]
  %v9997 = vld [vmem:[#allocation2 + $0x7c] sm:$0xff]
  %v9998 = vld [vmem:[#allocation2 + $0x84] sm:$0xff]
  %v9999 = vld [vmem:[#allocation2 + $0x8c] sm:$0xf]
  %v10000 = vld [vmem:[#allocation2 + $0x94] sm:$0xff]
  %v10001 = vld [vmem:[#allocation2 + $0x9c] sm:$0xff]
  %v10002 = vld [vmem:[#allocation2 + $0xa4] sm:$0xf]
  %v10003 = vld [vmem:[#allocation2 + $0xac] sm:$0xff]
  %v10004 = vld [vmem:[#allocation2 + $0xb4] sm:$0xff]
  %v10005 = vld [vmem:[#allocation2 + $0xbc] sm:$0xf]
  %s10006 = scalar_lea.vmem %s8, 28
  %v10007 = vld [vmem:[%s10006] sm:$0xf]
  %10009 = vst [vmem:[#allocation1] ss:$9 sm:$0xff] %v10007
  %v10010 = vld [vmem:[#allocation1] sm:$0xff]
  %v10011 = vld [vmem:[#allocation1 + $0x9] sm:$0xff]
  %v10012 = vld [vmem:[#allocation1 + $0x12] sm:$0xff]
  %v10013 = vld [vmem:[#allocation1 + $0x1b] sm:$0xff]
  %v10014 = vpack.i.b16 %v10010, %v10010
  %v10016 = vperm.slane %v10014, 0
  %v10017 = vpack.i.b16 %v10011, %v10011
  %v10019 = vperm.slane %v10017, 0
  %v10020 = vpack.i.b16 %v10012, %v10012
  %v10022 = vperm.slane %v10020, 0
  %v10023 = vpack.i.b16 %v10013, %v10013
  %v10025 = vperm.slane %v10023, 0
  %v10026 = vunpack.c.l.bf16 %v9982
  %v10027 = vunpack.c.h.bf16 %v9982
  %v10028 = vunpack.c.l.bf16 %v9983
  %v10029 = vunpack.c.h.bf16 %v9983
  %v10030 = vunpack.c.l.bf16 %v9984
  %v10031 = vunpack.c.l.bf16 %v9985
  %v10032 = vunpack.c.h.bf16 %v9985
  %v10033 = vunpack.c.l.bf16 %v9986
  %v10034 = vunpack.c.h.bf16 %v9986
  %v10035 = vunpack.c.l.bf16 %v9987
  %v10036 = vunpack.c.l.bf16 %v9988
  %v10037 = vunpack.c.h.bf16 %v9988
  %v10038 = vunpack.c.l.bf16 %v9989
  %v10039 = vunpack.c.h.bf16 %v9989
  %v10040 = vunpack.c.l.bf16 %v9990
  %v10041 = vunpack.c.l.bf16 %v9991
  %v10042 = vunpack.c.h.bf16 %v9991
  %v10043 = vunpack.c.l.bf16 %v9992
  %v10044 = vunpack.c.h.bf16 %v9992
  %v10045 = vunpack.c.l.bf16 %v9993
  %v10046 = vunpack.c.l.bf16 %v9994
  %v10047 = vunpack.c.h.bf16 %v9994
  %v10048 = vunpack.c.l.bf16 %v9995
  %v10049 = vunpack.c.h.bf16 %v9995
  %v10050 = vunpack.c.l.bf16 %v9996
  %v10051 = vunpack.c.l.bf16 %v9997
  %v10052 = vunpack.c.h.bf16 %v9997
  %v10053 = vunpack.c.l.bf16 %v9998
  %v10054 = vunpack.c.h.bf16 %v9998
  %v10055 = vunpack.c.l.bf16 %v9999
  %v10056 = vunpack.c.l.bf16 %v10000
  %v10057 = vunpack.c.h.bf16 %v10000
  %v10058 = vunpack.c.l.bf16 %v10001
  %v10059 = vunpack.c.h.bf16 %v10001
  %v10060 = vunpack.c.l.bf16 %v10002
  %v10061 = vunpack.c.l.bf16 %v10003
  %v10062 = vunpack.c.h.bf16 %v10003
  %v10063 = vunpack.c.l.bf16 %v10004
  %v10064 = vunpack.c.h.bf16 %v10004
  %v10065 = vunpack.c.l.bf16 %v10005
  %v10066 = vunpack.c.l.bf16 %v10016
  %v10067 = vunpack.c.l.bf16 %v10019
  %v10068 = vunpack.c.l.bf16 %v10022
  %v10069 = vunpack.c.l.bf16 %v10025
  %10074 = vrot.lane.b32.xlu0 %v10066, 16
  %v10075 = vpop.permute.xlu0 %10074
  %10076 = vrot.lane.b32.xlu0 %v10067, 16
  %v10077 = vpop.permute.xlu0 %10076
  %10078 = vrot.lane.b32.xlu0 %v10068, 16
  %v10079 = vpop.permute.xlu0 %10078
  %10080 = vrot.lane.b32.xlu0 %v10069, 16
  %v10081 = vpop.permute.xlu0 %10080
  %v10082 = vsel %vm3792, %v10075, %v10077
  %v10083 = vsel %vm3792, %v10077, %v10079
  %v10084 = vsel %vm3792, %v10079, %v10081
  %v10090 = vmul.f32 %v10026, %v10075
  %v10091 = vmul.f32 %v10027, %v10082
  %v10092 = vmul.f32 %v10028, %v10083
  %v10093 = vmul.f32 %v10029, %v10084
  %v10094 = vmul.f32 %v10030, %v10081
  %v10095 = vmul.f32 %v10031, %v10075
  %v10096 = vmul.f32 %v10032, %v10082
  %v10097 = vmul.f32 %v10033, %v10083
  %v10098 = vmul.f32 %v10034, %v10084
  %v10099 = vmul.f32 %v10035, %v10081
  %v10100 = vmul.f32 %v10036, %v10075
  %v10101 = vmul.f32 %v10037, %v10082
  %v10102 = vmul.f32 %v10038, %v10083
  %v10103 = vmul.f32 %v10039, %v10084
  %v10104 = vmul.f32 %v10040, %v10081
  %v10105 = vmul.f32 %v10041, %v10075
  %v10106 = vmul.f32 %v10042, %v10082
  %v10107 = vmul.f32 %v10043, %v10083
  %v10108 = vmul.f32 %v10044, %v10084
  %v10109 = vmul.f32 %v10045, %v10081
  %v10110 = vmul.f32 %v10046, %v10075
  %v10111 = vmul.f32 %v10047, %v10082
  %v10112 = vmul.f32 %v10048, %v10083
  %v10113 = vmul.f32 %v10049, %v10084
  %v10114 = vmul.f32 %v10050, %v10081
  %v10115 = vmul.f32 %v10051, %v10075
  %v10116 = vmul.f32 %v10052, %v10082
  %v10117 = vmul.f32 %v10053, %v10083
  %v10118 = vmul.f32 %v10054, %v10084
  %v10119 = vmul.f32 %v10055, %v10081
  %v10120 = vmul.f32 %v10056, %v10075
  %v10121 = vmul.f32 %v10057, %v10082
  %v10122 = vmul.f32 %v10058, %v10083
  %v10123 = vmul.f32 %v10059, %v10084
  %v10124 = vmul.f32 %v10060, %v10081
  %v10125 = vmul.f32 %v10061, %v10075
  %v10126 = vmul.f32 %v10062, %v10082
  %v10127 = vmul.f32 %v10063, %v10083
  %v10128 = vmul.f32 %v10064, %v10084
  %v10129 = vmul.f32 %v10065, %v10081
  %v10130 = vpack.c.bf16 %v10095, %v10090
  %v10131 = vpack.c.bf16 %v10096, %v10091
  %v10132 = vpack.c.bf16 %v10097, %v10092
  %v10133 = vpack.c.bf16 %v10098, %v10093
  %v10134 = vpack.c.bf16 %v10099, %v10094
  %v10135 = vpack.c.bf16 %v10105, %v10100
  %v10136 = vpack.c.bf16 %v10106, %v10101
  %v10137 = vpack.c.bf16 %v10107, %v10102
  %v10138 = vpack.c.bf16 %v10108, %v10103
  %v10139 = vpack.c.bf16 %v10109, %v10104
  %v10140 = vpack.c.bf16 %v10115, %v10110
  %v10141 = vpack.c.bf16 %v10116, %v10111
  %v10142 = vpack.c.bf16 %v10117, %v10112
  %v10143 = vpack.c.bf16 %v10118, %v10113
  %v10144 = vpack.c.bf16 %v10119, %v10114
  %v10145 = vpack.c.bf16 %v10125, %v10120
  %v10146 = vpack.c.bf16 %v10126, %v10121
  %v10147 = vpack.c.bf16 %v10127, %v10122
  %v10148 = vpack.c.bf16 %v10128, %v10123
  %v10149 = vpack.c.bf16 %v10129, %v10124
  %s10150 = scalar_lea.vmem %s6, 448
  %v10151 = vld [vmem:[%s10150] sm:$0xf]
  %v10152 = vld [vmem:[%s10150 + $0x4] sm:$0xf]
  %v10153 = vld [vmem:[%s10150 + $0x8] sm:$0xf]
  %v10154 = vld [vmem:[%s10150 + $0xc] sm:$0xf]
  %v10155 = vld [vmem:[%s10150 + $0x10] sm:$0xf]
  %v10156 = vld [vmem:[%s10150 + $0x14] sm:$0xf]
  %v10157 = vld [vmem:[%s10150 + $0x18] sm:$0xf]
  %v10158 = vld [vmem:[%s10150 + $0x1c] sm:$0xf]
  %v10159 = vld [vmem:[%s10150 + $0x20] sm:$0xf]
  %v10160 = vld [vmem:[%s10150 + $0x24] sm:$0xf]
  %v10161 = vld [vmem:[%s10150 + $0x28] sm:$0xf]
  %v10162 = vld [vmem:[%s10150 + $0x2c] sm:$0xf]
  %v10163 = vld [vmem:[%s10150 + $0x30] sm:$0xf]
  %v10164 = vld [vmem:[%s10150 + $0x34] sm:$0xf]
  %v10165 = vld [vmem:[%s10150 + $0x38] sm:$0xf]
  %v10166 = vld [vmem:[%s10150 + $0x3c] sm:$0xf]
  %v10183 = vunpack.c.l.b16 %v10151
  %v10184 = vunpack.c.l.b16 %v10152
  %v10185 = vunpack.c.l.b16 %v10153
  %v10186 = vunpack.c.l.b16 %v10154
  %v10187 = vunpack.c.l.b16 %v10155
  %v10188 = vunpack.c.l.b16 %v10156
  %v10189 = vunpack.c.l.b16 %v10157
  %v10190 = vunpack.c.l.b16 %v10158
  %v10191 = vunpack.c.l.b16 %v10159
  %v10192 = vunpack.c.l.b16 %v10160
  %v10193 = vunpack.c.l.b16 %v10161
  %v10194 = vunpack.c.l.b16 %v10162
  %v10195 = vunpack.c.l.b16 %v10163
  %v10196 = vunpack.c.l.b16 %v10164
  %v10197 = vunpack.c.l.b16 %v10165
  %v10198 = vunpack.c.l.b16 %v10166
  %v10199 = vpack.c.b16 %v10184, %v10183
  %v10200 = vpack.c.b16 %v10186, %v10185
  %v10201 = vpack.c.b16 %v10188, %v10187
  %v10202 = vpack.c.b16 %v10190, %v10189
  %v10203 = vpack.c.b16 %v10192, %v10191
  %v10204 = vpack.c.b16 %v10194, %v10193
  %v10205 = vpack.c.b16 %v10196, %v10195
  %v10206 = vpack.c.b16 %v10198, %v10197
  %10227 = vrot.lane.b32.xlu0 %v10130, 112
  %v10228 = vpop.permute.xlu0 %10227
  %10229 = vrot.lane.b32.xlu0 %v10131, 112
  %v10230 = vpop.permute.xlu0 %10229
  %10231 = vrot.lane.b32.xlu0 %v10132, 112
  %v10232 = vpop.permute.xlu0 %10231
  %10233 = vrot.lane.b32.xlu0 %v10133, 112
  %v10234 = vpop.permute.xlu0 %10233
  %10235 = vrot.lane.b32.xlu0 %v10134, 112
  %v10236 = vpop.permute.xlu0 %10235
  %10237 = vrot.lane.b32.xlu0 %v10135, 112
  %v10238 = vpop.permute.xlu0 %10237
  %10239 = vrot.lane.b32.xlu0 %v10136, 112
  %v10240 = vpop.permute.xlu0 %10239
  %10241 = vrot.lane.b32.xlu0 %v10137, 112
  %v10242 = vpop.permute.xlu0 %10241
  %10243 = vrot.lane.b32.xlu0 %v10138, 112
  %v10244 = vpop.permute.xlu0 %10243
  %10245 = vrot.lane.b32.xlu0 %v10139, 112
  %v10246 = vpop.permute.xlu0 %10245
  %10247 = vrot.lane.b32.xlu0 %v10140, 112
  %v10248 = vpop.permute.xlu0 %10247
  %10249 = vrot.lane.b32.xlu0 %v10141, 112
  %v10250 = vpop.permute.xlu0 %10249
  %10251 = vrot.lane.b32.xlu0 %v10142, 112
  %v10252 = vpop.permute.xlu0 %10251
  %10253 = vrot.lane.b32.xlu0 %v10143, 112
  %v10254 = vpop.permute.xlu0 %10253
  %10255 = vrot.lane.b32.xlu0 %v10144, 112
  %v10256 = vpop.permute.xlu0 %10255
  %10257 = vrot.lane.b32.xlu0 %v10145, 112
  %v10258 = vpop.permute.xlu0 %10257
  %10259 = vrot.lane.b32.xlu0 %v10146, 112
  %v10260 = vpop.permute.xlu0 %10259
  %10261 = vrot.lane.b32.xlu0 %v10147, 112
  %v10262 = vpop.permute.xlu0 %10261
  %10263 = vrot.lane.b32.xlu0 %v10148, 112
  %v10264 = vpop.permute.xlu0 %10263
  %10265 = vrot.lane.b32.xlu0 %v10149, 112
  %v10266 = vpop.permute.xlu0 %10265
  %v10267 = vsel %vm3943, %v10228, %v10230
  %v10268 = vsel %vm3943, %v10230, %v10232
  %v10269 = vsel %vm3943, %v10232, %v10234
  %v10270 = vsel %vm3943, %v10234, %v10236
  %v10271 = vsel %vm3943, %v10238, %v10240
  %v10272 = vsel %vm3943, %v10240, %v10242
  %v10273 = vsel %vm3943, %v10242, %v10244
  %v10274 = vsel %vm3943, %v10244, %v10246
  %v10275 = vsel %vm3943, %v10248, %v10250
  %v10276 = vsel %vm3943, %v10250, %v10252
  %v10277 = vsel %vm3943, %v10252, %v10254
  %v10278 = vsel %vm3943, %v10254, %v10256
  %v10279 = vsel %vm3943, %v10258, %v10260
  %v10280 = vsel %vm3943, %v10260, %v10262
  %v10281 = vsel %vm3943, %v10262, %v10264
  %v10282 = vsel %vm3943, %v10264, %v10266
  %v10300 = vsel %vm6568, %v10199, 0
  %v10303 = vsel %vm6568, %v10200, 0
  %v10306 = vsel %vm6568, %v10201, 0
  %v10309 = vsel %vm6568, %v10202, 0
  %v10312 = vsel %vm6568, %v10203, 0
  %v10315 = vsel %vm6568, %v10204, 0
  %v10318 = vsel %vm6568, %v10205, 0
  %v10321 = vsel %vm6568, %v10206, 0
  %10323 = vmatpush.bf16.msra.mxu0 0
  %10324 = vmatpush.bf16.msra.mxu0 0
  %10325 = vmatpush.bf16.msra.mxu0 0
  %10326 = vmatpush.bf16.msra.mxu0 0
  %10327 = vmatpush.bf16.msra.mxu0 %v10279
  %10328 = vmatpush.bf16.msra.mxu0 %v10275
  %10329 = vmatpush.bf16.msra.mxu0 %v10271
  %10330 = vmatpush.bf16.msra.mxu0 %v10267
  %10331 = vmatmul.bf16.gmra.mxu0 %v10300
  %v10332 = vpop.f32.mrf.mxu0
  %v10333 = vadd.f32 0.0, %v10332
  %v10334 = vpop.f32.mrf.mxu0
  %v10335 = vadd.f32 0.0, %v10334
  %10336 = vmatmul.bf16.gmra.mxu0 %v10303
  %v10337 = vpop.f32.mrf.mxu0
  %v10338 = vadd.f32 0.0, %v10337
  %v10339 = vpop.f32.mrf.mxu0
  %v10340 = vadd.f32 0.0, %v10339
  %10341 = vmatmul.bf16.gmra.mxu0 %v10306
  %v10342 = vpop.f32.mrf.mxu0
  %v10343 = vadd.f32 0.0, %v10342
  %v10344 = vpop.f32.mrf.mxu0
  %v10345 = vadd.f32 0.0, %v10344
  %10346 = vmatmul.bf16.gmra.mxu0 %v10309
  %v10347 = vpop.f32.mrf.mxu0
  %v10348 = vadd.f32 0.0, %v10347
  %v10349 = vpop.f32.mrf.mxu0
  %v10350 = vadd.f32 0.0, %v10349
  %10351 = vmatmul.bf16.gmra.mxu0 %v10312
  %v10352 = vpop.f32.mrf.mxu0
  %v10353 = vadd.f32 0.0, %v10352
  %v10354 = vpop.f32.mrf.mxu0
  %v10355 = vadd.f32 0.0, %v10354
  %10356 = vmatmul.bf16.gmra.mxu0 %v10315
  %v10357 = vpop.f32.mrf.mxu0
  %v10358 = vadd.f32 0.0, %v10357
  %v10359 = vpop.f32.mrf.mxu0
  %v10360 = vadd.f32 0.0, %v10359
  %10361 = vmatmul.bf16.gmra.mxu0 %v10318
  %v10362 = vpop.f32.mrf.mxu0
  %v10363 = vadd.f32 0.0, %v10362
  %v10364 = vpop.f32.mrf.mxu0
  %v10365 = vadd.f32 0.0, %v10364
  %10366 = vmatmul.bf16.gmra.mxu0 %v10321
  %v10367 = vpop.f32.mrf.mxu0
  %v10368 = vadd.f32 0.0, %v10367
  %v10369 = vpop.f32.mrf.mxu0
  %v10370 = vadd.f32 0.0, %v10369
  %10371 = vdwg.mxu0
  %10372 = vmatpush.bf16.msra.mxu0 0
  %10373 = vmatpush.bf16.msra.mxu0 0
  %10374 = vmatpush.bf16.msra.mxu0 0
  %10375 = vmatpush.bf16.msra.mxu0 0
  %10376 = vmatpush.bf16.msra.mxu0 %v10280
  %10377 = vmatpush.bf16.msra.mxu0 %v10276
  %10378 = vmatpush.bf16.msra.mxu0 %v10272
  %10379 = vmatpush.bf16.msra.mxu0 %v10268
  %10380 = vmatmul.bf16.gmra.mxu0 %v10300
  %v10381 = vpop.f32.mrf.mxu0
  %v10382 = vadd.f32 0.0, %v10381
  %v10383 = vpop.f32.mrf.mxu0
  %v10384 = vadd.f32 0.0, %v10383
  %10385 = vmatmul.bf16.gmra.mxu0 %v10303
  %v10386 = vpop.f32.mrf.mxu0
  %v10387 = vadd.f32 0.0, %v10386
  %v10388 = vpop.f32.mrf.mxu0
  %v10389 = vadd.f32 0.0, %v10388
  %10390 = vmatmul.bf16.gmra.mxu0 %v10306
  %v10391 = vpop.f32.mrf.mxu0
  %v10392 = vadd.f32 0.0, %v10391
  %v10393 = vpop.f32.mrf.mxu0
  %v10394 = vadd.f32 0.0, %v10393
  %10395 = vmatmul.bf16.gmra.mxu0 %v10309
  %v10396 = vpop.f32.mrf.mxu0
  %v10397 = vadd.f32 0.0, %v10396
  %v10398 = vpop.f32.mrf.mxu0
  %v10399 = vadd.f32 0.0, %v10398
  %10400 = vmatmul.bf16.gmra.mxu0 %v10312
  %v10401 = vpop.f32.mrf.mxu0
  %v10402 = vadd.f32 0.0, %v10401
  %v10403 = vpop.f32.mrf.mxu0
  %v10404 = vadd.f32 0.0, %v10403
  %10405 = vmatmul.bf16.gmra.mxu0 %v10315
  %v10406 = vpop.f32.mrf.mxu0
  %v10407 = vadd.f32 0.0, %v10406
  %v10408 = vpop.f32.mrf.mxu0
  %v10409 = vadd.f32 0.0, %v10408
  %10410 = vmatmul.bf16.gmra.mxu0 %v10318
  %v10411 = vpop.f32.mrf.mxu0
  %v10412 = vadd.f32 0.0, %v10411
  %v10413 = vpop.f32.mrf.mxu0
  %v10414 = vadd.f32 0.0, %v10413
  %10415 = vmatmul.bf16.gmra.mxu0 %v10321
  %v10416 = vpop.f32.mrf.mxu0
  %v10417 = vadd.f32 0.0, %v10416
  %v10418 = vpop.f32.mrf.mxu0
  %v10419 = vadd.f32 0.0, %v10418
  %10420 = vdwg.mxu0
  %10421 = vmatpush.bf16.msra.mxu0 0
  %10422 = vmatpush.bf16.msra.mxu0 0
  %10423 = vmatpush.bf16.msra.mxu0 0
  %10424 = vmatpush.bf16.msra.mxu0 0
  %10425 = vmatpush.bf16.msra.mxu0 %v10281
  %10426 = vmatpush.bf16.msra.mxu0 %v10277
  %10427 = vmatpush.bf16.msra.mxu0 %v10273
  %10428 = vmatpush.bf16.msra.mxu0 %v10269
  %10429 = vmatmul.bf16.gmra.mxu0 %v10300
  %v10430 = vpop.f32.mrf.mxu0
  %v10431 = vadd.f32 0.0, %v10430
  %v10432 = vpop.f32.mrf.mxu0
  %v10433 = vadd.f32 0.0, %v10432
  %10434 = vmatmul.bf16.gmra.mxu0 %v10303
  %v10435 = vpop.f32.mrf.mxu0
  %v10436 = vadd.f32 0.0, %v10435
  %v10437 = vpop.f32.mrf.mxu0
  %v10438 = vadd.f32 0.0, %v10437
  %10439 = vmatmul.bf16.gmra.mxu0 %v10306
  %v10440 = vpop.f32.mrf.mxu0
  %v10441 = vadd.f32 0.0, %v10440
  %v10442 = vpop.f32.mrf.mxu0
  %v10443 = vadd.f32 0.0, %v10442
  %10444 = vmatmul.bf16.gmra.mxu0 %v10309
  %v10445 = vpop.f32.mrf.mxu0
  %v10446 = vadd.f32 0.0, %v10445
  %v10447 = vpop.f32.mrf.mxu0
  %v10448 = vadd.f32 0.0, %v10447
  %10449 = vmatmul.bf16.gmra.mxu0 %v10312
  %v10450 = vpop.f32.mrf.mxu0
  %v10451 = vadd.f32 0.0, %v10450
  %v10452 = vpop.f32.mrf.mxu0
  %v10453 = vadd.f32 0.0, %v10452
  %10454 = vmatmul.bf16.gmra.mxu0 %v10315
  %v10455 = vpop.f32.mrf.mxu0
  %v10456 = vadd.f32 0.0, %v10455
  %v10457 = vpop.f32.mrf.mxu0
  %v10458 = vadd.f32 0.0, %v10457
  %10459 = vmatmul.bf16.gmra.mxu0 %v10318
  %v10460 = vpop.f32.mrf.mxu0
  %v10461 = vadd.f32 0.0, %v10460
  %v10462 = vpop.f32.mrf.mxu0
  %v10463 = vadd.f32 0.0, %v10462
  %10464 = vmatmul.bf16.gmra.mxu0 %v10321
  %v10465 = vpop.f32.mrf.mxu0
  %v10466 = vadd.f32 0.0, %v10465
  %v10467 = vpop.f32.mrf.mxu0
  %v10468 = vadd.f32 0.0, %v10467
  %10469 = vdwg.mxu0
  %10470 = vmatpush.bf16.msra.mxu0 0
  %10471 = vmatpush.bf16.msra.mxu0 0
  %10472 = vmatpush.bf16.msra.mxu0 0
  %10473 = vmatpush.bf16.msra.mxu0 0
  %10474 = vmatpush.bf16.msra.mxu0 %v10282
  %10475 = vmatpush.bf16.msra.mxu0 %v10278
  %10476 = vmatpush.bf16.msra.mxu0 %v10274
  %10477 = vmatpush.bf16.msra.mxu0 %v10270
  %10478 = vmatmul.bf16.gmra.mxu0 %v10300
  %v10479 = vpop.f32.mrf.mxu0
  %v10480 = vadd.f32 0.0, %v10479
  %v10481 = vpop.f32.mrf.mxu0
  %v10482 = vadd.f32 0.0, %v10481
  %10483 = vmatmul.bf16.gmra.mxu0 %v10303
  %v10484 = vpop.f32.mrf.mxu0
  %v10485 = vadd.f32 0.0, %v10484
  %v10486 = vpop.f32.mrf.mxu0
  %v10487 = vadd.f32 0.0, %v10486
  %10488 = vmatmul.bf16.gmra.mxu0 %v10306
  %v10489 = vpop.f32.mrf.mxu0
  %v10490 = vadd.f32 0.0, %v10489
  %v10491 = vpop.f32.mrf.mxu0
  %v10492 = vadd.f32 0.0, %v10491
  %10493 = vmatmul.bf16.gmra.mxu0 %v10309
  %v10494 = vpop.f32.mrf.mxu0
  %v10495 = vadd.f32 0.0, %v10494
  %v10496 = vpop.f32.mrf.mxu0
  %v10497 = vadd.f32 0.0, %v10496
  %10498 = vmatmul.bf16.gmra.mxu0 %v10312
  %v10499 = vpop.f32.mrf.mxu0
  %v10500 = vadd.f32 0.0, %v10499
  %v10501 = vpop.f32.mrf.mxu0
  %v10502 = vadd.f32 0.0, %v10501
  %10503 = vmatmul.bf16.gmra.mxu0 %v10315
  %v10504 = vpop.f32.mrf.mxu0
  %v10505 = vadd.f32 0.0, %v10504
  %v10506 = vpop.f32.mrf.mxu0
  %v10507 = vadd.f32 0.0, %v10506
  %10508 = vmatmul.bf16.gmra.mxu0 %v10318
  %v10509 = vpop.f32.mrf.mxu0
  %v10510 = vadd.f32 0.0, %v10509
  %v10511 = vpop.f32.mrf.mxu0
  %v10512 = vadd.f32 0.0, %v10511
  %10513 = vmatmul.bf16.gmra.mxu0 %v10321
  %v10514 = vpop.f32.mrf.mxu0
  %v10515 = vadd.f32 0.0, %v10514
  %v10516 = vpop.f32.mrf.mxu0
  %v10517 = vadd.f32 0.0, %v10516
  %10518 = vdwg.mxu0
  %v10519 = vadd.f32 %v9918, %v10333
  %v10520 = vadd.f32 %v9919, %v10382
  %v10521 = vadd.f32 %v9920, %v10431
  %v10522 = vadd.f32 %v9921, %v10480
  %v10523 = vadd.f32 %v9922, %v10335
  %v10524 = vadd.f32 %v9923, %v10384
  %v10525 = vadd.f32 %v9924, %v10433
  %v10526 = vadd.f32 %v9925, %v10482
  %v10527 = vadd.f32 %v9926, %v10338
  %v10528 = vadd.f32 %v9927, %v10387
  %v10529 = vadd.f32 %v9928, %v10436
  %v10530 = vadd.f32 %v9929, %v10485
  %v10531 = vadd.f32 %v9930, %v10340
  %v10532 = vadd.f32 %v9931, %v10389
  %v10533 = vadd.f32 %v9932, %v10438
  %v10534 = vadd.f32 %v9933, %v10487
  %v10535 = vadd.f32 %v9934, %v10343
  %v10536 = vadd.f32 %v9935, %v10392
  %v10537 = vadd.f32 %v9936, %v10441
  %v10538 = vadd.f32 %v9937, %v10490
  %v10539 = vadd.f32 %v9938, %v10345
  %v10540 = vadd.f32 %v9939, %v10394
  %v10541 = vadd.f32 %v9940, %v10443
  %v10542 = vadd.f32 %v9941, %v10492
  %v10543 = vadd.f32 %v9942, %v10348
  %v10544 = vadd.f32 %v9943, %v10397
  %v10545 = vadd.f32 %v9944, %v10446
  %v10546 = vadd.f32 %v9945, %v10495
  %v10547 = vadd.f32 %v9946, %v10350
  %v10548 = vadd.f32 %v9947, %v10399
  %v10549 = vadd.f32 %v9948, %v10448
  %v10550 = vadd.f32 %v9949, %v10497
  %v10551 = vadd.f32 %v9950, %v10353
  %v10552 = vadd.f32 %v9951, %v10402
  %v10553 = vadd.f32 %v9952, %v10451
  %v10554 = vadd.f32 %v9953, %v10500
  %v10555 = vadd.f32 %v9954, %v10355
  %v10556 = vadd.f32 %v9955, %v10404
  %v10557 = vadd.f32 %v9956, %v10453
  %v10558 = vadd.f32 %v9957, %v10502
  %v10559 = vadd.f32 %v9958, %v10358
  %v10560 = vadd.f32 %v9959, %v10407
  %v10561 = vadd.f32 %v9960, %v10456
  %v10562 = vadd.f32 %v9961, %v10505
  %v10563 = vadd.f32 %v9962, %v10360
  %v10564 = vadd.f32 %v9963, %v10409
  %v10565 = vadd.f32 %v9964, %v10458
  %v10566 = vadd.f32 %v9965, %v10507
  %v10567 = vadd.f32 %v9966, %v10363
  %v10568 = vadd.f32 %v9967, %v10412
  %v10569 = vadd.f32 %v9968, %v10461
  %v10570 = vadd.f32 %v9969, %v10510
  %v10571 = vadd.f32 %v9970, %v10365
  %v10572 = vadd.f32 %v9971, %v10414
  %v10573 = vadd.f32 %v9972, %v10463
  %v10574 = vadd.f32 %v9973, %v10512
  %v10575 = vadd.f32 %v9974, %v10368
  %v10576 = vadd.f32 %v9975, %v10417
  %v10577 = vadd.f32 %v9976, %v10466
  %v10578 = vadd.f32 %v9977, %v10515
  %v10579 = vadd.f32 %v9978, %v10370
  %v10580 = vadd.f32 %v9979, %v10419
  %v10581 = vadd.f32 %v9980, %v10468
  %v10582 = vadd.f32 %v9981, %v10517
  %v10583 = vld [vmem:[#allocation2 + $0x4] sm:$0xff]
  %v10584 = vld [vmem:[#allocation2 + $0xc] sm:$0xff]
  %v10585 = vld [vmem:[#allocation2 + $0x14] sm:$0xf]
  %v10586 = vld [vmem:[#allocation2 + $0x1c] sm:$0xff]
  %v10587 = vld [vmem:[#allocation2 + $0x24] sm:$0xff]
  %v10588 = vld [vmem:[#allocation2 + $0x2c] sm:$0xf]
  %v10589 = vld [vmem:[#allocation2 + $0x34] sm:$0xff]
  %v10590 = vld [vmem:[#allocation2 + $0x3c] sm:$0xff]
  %v10591 = vld [vmem:[#allocation2 + $0x44] sm:$0xf]
  %v10592 = vld [vmem:[#allocation2 + $0x4c] sm:$0xff]
  %v10593 = vld [vmem:[#allocation2 + $0x54] sm:$0xff]
  %v10594 = vld [vmem:[#allocation2 + $0x5c] sm:$0xf]
  %v10595 = vld [vmem:[#allocation2 + $0x64] sm:$0xff]
  %v10596 = vld [vmem:[#allocation2 + $0x6c] sm:$0xff]
  %v10597 = vld [vmem:[#allocation2 + $0x74] sm:$0xf]
  %v10598 = vld [vmem:[#allocation2 + $0x7c] sm:$0xff]
  %v10599 = vld [vmem:[#allocation2 + $0x84] sm:$0xff]
  %v10600 = vld [vmem:[#allocation2 + $0x8c] sm:$0xf]
  %v10601 = vld [vmem:[#allocation2 + $0x94] sm:$0xff]
  %v10602 = vld [vmem:[#allocation2 + $0x9c] sm:$0xff]
  %v10603 = vld [vmem:[#allocation2 + $0xa4] sm:$0xf]
  %v10604 = vld [vmem:[#allocation2 + $0xac] sm:$0xff]
  %v10605 = vld [vmem:[#allocation2 + $0xb4] sm:$0xff]
  %v10606 = vld [vmem:[#allocation2 + $0xbc] sm:$0xf]
  %s10607 = scalar_lea.vmem %s8, 32
  %v10608 = vld [vmem:[%s10607] sm:$0xf]
  %10610 = vst [vmem:[#allocation1] ss:$9 sm:$0xff] %v10608
  %v10611 = vld [vmem:[#allocation1] sm:$0xff]
  %v10612 = vld [vmem:[#allocation1 + $0x9] sm:$0xff]
  %v10613 = vld [vmem:[#allocation1 + $0x12] sm:$0xff]
  %v10614 = vld [vmem:[#allocation1 + $0x1b] sm:$0xff]
  %v10615 = vpack.i.b16 %v10611, %v10611
  %v10617 = vperm.slane %v10615, 0
  %v10618 = vpack.i.b16 %v10612, %v10612
  %v10620 = vperm.slane %v10618, 0
  %v10621 = vpack.i.b16 %v10613, %v10613
  %v10623 = vperm.slane %v10621, 0
  %v10624 = vpack.i.b16 %v10614, %v10614
  %v10626 = vperm.slane %v10624, 0
  %v10627 = vunpack.c.l.bf16 %v10583
  %v10628 = vunpack.c.h.bf16 %v10583
  %v10629 = vunpack.c.l.bf16 %v10584
  %v10630 = vunpack.c.h.bf16 %v10584
  %v10631 = vunpack.c.l.bf16 %v10585
  %v10632 = vunpack.c.l.bf16 %v10586
  %v10633 = vunpack.c.h.bf16 %v10586
  %v10634 = vunpack.c.l.bf16 %v10587
  %v10635 = vunpack.c.h.bf16 %v10587
  %v10636 = vunpack.c.l.bf16 %v10588
  %v10637 = vunpack.c.l.bf16 %v10589
  %v10638 = vunpack.c.h.bf16 %v10589
  %v10639 = vunpack.c.l.bf16 %v10590
  %v10640 = vunpack.c.h.bf16 %v10590
  %v10641 = vunpack.c.l.bf16 %v10591
  %v10642 = vunpack.c.l.bf16 %v10592
  %v10643 = vunpack.c.h.bf16 %v10592
  %v10644 = vunpack.c.l.bf16 %v10593
  %v10645 = vunpack.c.h.bf16 %v10593
  %v10646 = vunpack.c.l.bf16 %v10594
  %v10647 = vunpack.c.l.bf16 %v10595
  %v10648 = vunpack.c.h.bf16 %v10595
  %v10649 = vunpack.c.l.bf16 %v10596
  %v10650 = vunpack.c.h.bf16 %v10596
  %v10651 = vunpack.c.l.bf16 %v10597
  %v10652 = vunpack.c.l.bf16 %v10598
  %v10653 = vunpack.c.h.bf16 %v10598
  %v10654 = vunpack.c.l.bf16 %v10599
  %v10655 = vunpack.c.h.bf16 %v10599
  %v10656 = vunpack.c.l.bf16 %v10600
  %v10657 = vunpack.c.l.bf16 %v10601
  %v10658 = vunpack.c.h.bf16 %v10601
  %v10659 = vunpack.c.l.bf16 %v10602
  %v10660 = vunpack.c.h.bf16 %v10602
  %v10661 = vunpack.c.l.bf16 %v10603
  %v10662 = vunpack.c.l.bf16 %v10604
  %v10663 = vunpack.c.h.bf16 %v10604
  %v10664 = vunpack.c.l.bf16 %v10605
  %v10665 = vunpack.c.h.bf16 %v10605
  %v10666 = vunpack.c.l.bf16 %v10606
  %v10667 = vunpack.c.l.bf16 %v10617
  %v10668 = vunpack.c.l.bf16 %v10620
  %v10669 = vunpack.c.l.bf16 %v10623
  %v10670 = vunpack.c.l.bf16 %v10626
  %10675 = vrot.lane.b32.xlu0 %v10667, 17
  %v10676 = vpop.permute.xlu0 %10675
  %10677 = vrot.lane.b32.xlu0 %v10668, 17
  %v10678 = vpop.permute.xlu0 %10677
  %10679 = vrot.lane.b32.xlu0 %v10669, 17
  %v10680 = vpop.permute.xlu0 %10679
  %10681 = vrot.lane.b32.xlu0 %v10670, 17
  %v10682 = vpop.permute.xlu0 %10681
  %v10683 = vsel %vm4336, %v10676, %v10678
  %v10684 = vsel %vm4336, %v10678, %v10680
  %v10685 = vsel %vm4336, %v10680, %v10682
  %v10691 = vmul.f32 %v10627, %v10676
  %v10692 = vmul.f32 %v10628, %v10683
  %v10693 = vmul.f32 %v10629, %v10684
  %v10694 = vmul.f32 %v10630, %v10685
  %v10695 = vmul.f32 %v10631, %v10682
  %v10696 = vmul.f32 %v10632, %v10676
  %v10697 = vmul.f32 %v10633, %v10683
  %v10698 = vmul.f32 %v10634, %v10684
  %v10699 = vmul.f32 %v10635, %v10685
  %v10700 = vmul.f32 %v10636, %v10682
  %v10701 = vmul.f32 %v10637, %v10676
  %v10702 = vmul.f32 %v10638, %v10683
  %v10703 = vmul.f32 %v10639, %v10684
  %v10704 = vmul.f32 %v10640, %v10685
  %v10705 = vmul.f32 %v10641, %v10682
  %v10706 = vmul.f32 %v10642, %v10676
  %v10707 = vmul.f32 %v10643, %v10683
  %v10708 = vmul.f32 %v10644, %v10684
  %v10709 = vmul.f32 %v10645, %v10685
  %v10710 = vmul.f32 %v10646, %v10682
  %v10711 = vmul.f32 %v10647, %v10676
  %v10712 = vmul.f32 %v10648, %v10683
  %v10713 = vmul.f32 %v10649, %v10684
  %v10714 = vmul.f32 %v10650, %v10685
  %v10715 = vmul.f32 %v10651, %v10682
  %v10716 = vmul.f32 %v10652, %v10676
  %v10717 = vmul.f32 %v10653, %v10683
  %v10718 = vmul.f32 %v10654, %v10684
  %v10719 = vmul.f32 %v10655, %v10685
  %v10720 = vmul.f32 %v10656, %v10682
  %v10721 = vmul.f32 %v10657, %v10676
  %v10722 = vmul.f32 %v10658, %v10683
  %v10723 = vmul.f32 %v10659, %v10684
  %v10724 = vmul.f32 %v10660, %v10685
  %v10725 = vmul.f32 %v10661, %v10682
  %v10726 = vmul.f32 %v10662, %v10676
  %v10727 = vmul.f32 %v10663, %v10683
  %v10728 = vmul.f32 %v10664, %v10684
  %v10729 = vmul.f32 %v10665, %v10685
  %v10730 = vmul.f32 %v10666, %v10682
  %v10731 = vpack.c.bf16 %v10696, %v10691
  %v10732 = vpack.c.bf16 %v10697, %v10692
  %v10733 = vpack.c.bf16 %v10698, %v10693
  %v10734 = vpack.c.bf16 %v10699, %v10694
  %v10735 = vpack.c.bf16 %v10700, %v10695
  %v10736 = vpack.c.bf16 %v10706, %v10701
  %v10737 = vpack.c.bf16 %v10707, %v10702
  %v10738 = vpack.c.bf16 %v10708, %v10703
  %v10739 = vpack.c.bf16 %v10709, %v10704
  %v10740 = vpack.c.bf16 %v10710, %v10705
  %v10741 = vpack.c.bf16 %v10716, %v10711
  %v10742 = vpack.c.bf16 %v10717, %v10712
  %v10743 = vpack.c.bf16 %v10718, %v10713
  %v10744 = vpack.c.bf16 %v10719, %v10714
  %v10745 = vpack.c.bf16 %v10720, %v10715
  %v10746 = vpack.c.bf16 %v10726, %v10721
  %v10747 = vpack.c.bf16 %v10727, %v10722
  %v10748 = vpack.c.bf16 %v10728, %v10723
  %v10749 = vpack.c.bf16 %v10729, %v10724
  %v10750 = vpack.c.bf16 %v10730, %v10725
  %s10751 = scalar_lea.vmem %s6, 512
  %v10752 = vld [vmem:[%s10751] sm:$0xf]
  %v10753 = vld [vmem:[%s10751 + $0x4] sm:$0xf]
  %v10754 = vld [vmem:[%s10751 + $0x8] sm:$0xf]
  %v10755 = vld [vmem:[%s10751 + $0xc] sm:$0xf]
  %v10756 = vld [vmem:[%s10751 + $0x10] sm:$0xf]
  %v10757 = vld [vmem:[%s10751 + $0x14] sm:$0xf]
  %v10758 = vld [vmem:[%s10751 + $0x18] sm:$0xf]
  %v10759 = vld [vmem:[%s10751 + $0x1c] sm:$0xf]
  %v10760 = vld [vmem:[%s10751 + $0x20] sm:$0xf]
  %v10761 = vld [vmem:[%s10751 + $0x24] sm:$0xf]
  %v10762 = vld [vmem:[%s10751 + $0x28] sm:$0xf]
  %v10763 = vld [vmem:[%s10751 + $0x2c] sm:$0xf]
  %v10764 = vld [vmem:[%s10751 + $0x30] sm:$0xf]
  %v10765 = vld [vmem:[%s10751 + $0x34] sm:$0xf]
  %v10766 = vld [vmem:[%s10751 + $0x38] sm:$0xf]
  %v10767 = vld [vmem:[%s10751 + $0x3c] sm:$0xf]
  %v10784 = vunpack.c.l.b16 %v10752
  %v10785 = vunpack.c.l.b16 %v10753
  %v10786 = vunpack.c.l.b16 %v10754
  %v10787 = vunpack.c.l.b16 %v10755
  %v10788 = vunpack.c.l.b16 %v10756
  %v10789 = vunpack.c.l.b16 %v10757
  %v10790 = vunpack.c.l.b16 %v10758
  %v10791 = vunpack.c.l.b16 %v10759
  %v10792 = vunpack.c.l.b16 %v10760
  %v10793 = vunpack.c.l.b16 %v10761
  %v10794 = vunpack.c.l.b16 %v10762
  %v10795 = vunpack.c.l.b16 %v10763
  %v10796 = vunpack.c.l.b16 %v10764
  %v10797 = vunpack.c.l.b16 %v10765
  %v10798 = vunpack.c.l.b16 %v10766
  %v10799 = vunpack.c.l.b16 %v10767
  %v10800 = vpack.c.b16 %v10785, %v10784
  %v10801 = vpack.c.b16 %v10787, %v10786
  %v10802 = vpack.c.b16 %v10789, %v10788
  %v10803 = vpack.c.b16 %v10791, %v10790
  %v10804 = vpack.c.b16 %v10793, %v10792
  %v10805 = vpack.c.b16 %v10795, %v10794
  %v10806 = vpack.c.b16 %v10797, %v10796
  %v10807 = vpack.c.b16 %v10799, %v10798
  %10828 = vrot.lane.b32.xlu0 %v10731, 111
  %v10829 = vpop.permute.xlu0 %10828
  %10830 = vrot.lane.b32.xlu0 %v10732, 111
  %v10831 = vpop.permute.xlu0 %10830
  %10832 = vrot.lane.b32.xlu0 %v10733, 111
  %v10833 = vpop.permute.xlu0 %10832
  %10834 = vrot.lane.b32.xlu0 %v10734, 111
  %v10835 = vpop.permute.xlu0 %10834
  %10836 = vrot.lane.b32.xlu0 %v10735, 111
  %v10837 = vpop.permute.xlu0 %10836
  %10838 = vrot.lane.b32.xlu0 %v10736, 111
  %v10839 = vpop.permute.xlu0 %10838
  %10840 = vrot.lane.b32.xlu0 %v10737, 111
  %v10841 = vpop.permute.xlu0 %10840
  %10842 = vrot.lane.b32.xlu0 %v10738, 111
  %v10843 = vpop.permute.xlu0 %10842
  %10844 = vrot.lane.b32.xlu0 %v10739, 111
  %v10845 = vpop.permute.xlu0 %10844
  %10846 = vrot.lane.b32.xlu0 %v10740, 111
  %v10847 = vpop.permute.xlu0 %10846
  %10848 = vrot.lane.b32.xlu0 %v10741, 111
  %v10849 = vpop.permute.xlu0 %10848
  %10850 = vrot.lane.b32.xlu0 %v10742, 111
  %v10851 = vpop.permute.xlu0 %10850
  %10852 = vrot.lane.b32.xlu0 %v10743, 111
  %v10853 = vpop.permute.xlu0 %10852
  %10854 = vrot.lane.b32.xlu0 %v10744, 111
  %v10855 = vpop.permute.xlu0 %10854
  %10856 = vrot.lane.b32.xlu0 %v10745, 111
  %v10857 = vpop.permute.xlu0 %10856
  %10858 = vrot.lane.b32.xlu0 %v10746, 111
  %v10859 = vpop.permute.xlu0 %10858
  %10860 = vrot.lane.b32.xlu0 %v10747, 111
  %v10861 = vpop.permute.xlu0 %10860
  %10862 = vrot.lane.b32.xlu0 %v10748, 111
  %v10863 = vpop.permute.xlu0 %10862
  %10864 = vrot.lane.b32.xlu0 %v10749, 111
  %v10865 = vpop.permute.xlu0 %10864
  %10866 = vrot.lane.b32.xlu0 %v10750, 111
  %v10867 = vpop.permute.xlu0 %10866
  %v10868 = vsel %vm4487, %v10829, %v10831
  %v10869 = vsel %vm4487, %v10831, %v10833
  %v10870 = vsel %vm4487, %v10833, %v10835
  %v10871 = vsel %vm4487, %v10835, %v10837
  %v10872 = vsel %vm4487, %v10839, %v10841
  %v10873 = vsel %vm4487, %v10841, %v10843
  %v10874 = vsel %vm4487, %v10843, %v10845
  %v10875 = vsel %vm4487, %v10845, %v10847
  %v10876 = vsel %vm4487, %v10849, %v10851
  %v10877 = vsel %vm4487, %v10851, %v10853
  %v10878 = vsel %vm4487, %v10853, %v10855
  %v10879 = vsel %vm4487, %v10855, %v10857
  %v10880 = vsel %vm4487, %v10859, %v10861
  %v10881 = vsel %vm4487, %v10861, %v10863
  %v10882 = vsel %vm4487, %v10863, %v10865
  %v10883 = vsel %vm4487, %v10865, %v10867
  %v10901 = vsel %vm6568, %v10800, 0
  %v10904 = vsel %vm6568, %v10801, 0
  %v10907 = vsel %vm6568, %v10802, 0
  %v10910 = vsel %vm6568, %v10803, 0
  %v10913 = vsel %vm6568, %v10804, 0
  %v10916 = vsel %vm6568, %v10805, 0
  %v10919 = vsel %vm6568, %v10806, 0
  %v10922 = vsel %vm6568, %v10807, 0
  %10924 = vmatpush.bf16.msra.mxu0 0
  %10925 = vmatpush.bf16.msra.mxu0 0
  %10926 = vmatpush.bf16.msra.mxu0 0
  %10927 = vmatpush.bf16.msra.mxu0 0
  %10928 = vmatpush.bf16.msra.mxu0 %v10880
  %10929 = vmatpush.bf16.msra.mxu0 %v10876
  %10930 = vmatpush.bf16.msra.mxu0 %v10872
  %10931 = vmatpush.bf16.msra.mxu0 %v10868
  %10932 = vmatmul.bf16.gmra.mxu0 %v10901
  %v10933 = vpop.f32.mrf.mxu0
  %v10934 = vadd.f32 0.0, %v10933
  %v10935 = vpop.f32.mrf.mxu0
  %v10936 = vadd.f32 0.0, %v10935
  %10937 = vmatmul.bf16.gmra.mxu0 %v10904
  %v10938 = vpop.f32.mrf.mxu0
  %v10939 = vadd.f32 0.0, %v10938
  %v10940 = vpop.f32.mrf.mxu0
  %v10941 = vadd.f32 0.0, %v10940
  %10942 = vmatmul.bf16.gmra.mxu0 %v10907
  %v10943 = vpop.f32.mrf.mxu0
  %v10944 = vadd.f32 0.0, %v10943
  %v10945 = vpop.f32.mrf.mxu0
  %v10946 = vadd.f32 0.0, %v10945
  %10947 = vmatmul.bf16.gmra.mxu0 %v10910
  %v10948 = vpop.f32.mrf.mxu0
  %v10949 = vadd.f32 0.0, %v10948
  %v10950 = vpop.f32.mrf.mxu0
  %v10951 = vadd.f32 0.0, %v10950
  %10952 = vmatmul.bf16.gmra.mxu0 %v10913
  %v10953 = vpop.f32.mrf.mxu0
  %v10954 = vadd.f32 0.0, %v10953
  %v10955 = vpop.f32.mrf.mxu0
  %v10956 = vadd.f32 0.0, %v10955
  %10957 = vmatmul.bf16.gmra.mxu0 %v10916
  %v10958 = vpop.f32.mrf.mxu0
  %v10959 = vadd.f32 0.0, %v10958
  %v10960 = vpop.f32.mrf.mxu0
  %v10961 = vadd.f32 0.0, %v10960
  %10962 = vmatmul.bf16.gmra.mxu0 %v10919
  %v10963 = vpop.f32.mrf.mxu0
  %v10964 = vadd.f32 0.0, %v10963
  %v10965 = vpop.f32.mrf.mxu0
  %v10966 = vadd.f32 0.0, %v10965
  %10967 = vmatmul.bf16.gmra.mxu0 %v10922
  %v10968 = vpop.f32.mrf.mxu0
  %v10969 = vadd.f32 0.0, %v10968
  %v10970 = vpop.f32.mrf.mxu0
  %v10971 = vadd.f32 0.0, %v10970
  %10972 = vdwg.mxu0
  %10973 = vmatpush.bf16.msra.mxu0 0
  %10974 = vmatpush.bf16.msra.mxu0 0
  %10975 = vmatpush.bf16.msra.mxu0 0
  %10976 = vmatpush.bf16.msra.mxu0 0
  %10977 = vmatpush.bf16.msra.mxu0 %v10881
  %10978 = vmatpush.bf16.msra.mxu0 %v10877
  %10979 = vmatpush.bf16.msra.mxu0 %v10873
  %10980 = vmatpush.bf16.msra.mxu0 %v10869
  %10981 = vmatmul.bf16.gmra.mxu0 %v10901
  %v10982 = vpop.f32.mrf.mxu0
  %v10983 = vadd.f32 0.0, %v10982
  %v10984 = vpop.f32.mrf.mxu0
  %v10985 = vadd.f32 0.0, %v10984
  %10986 = vmatmul.bf16.gmra.mxu0 %v10904
  %v10987 = vpop.f32.mrf.mxu0
  %v10988 = vadd.f32 0.0, %v10987
  %v10989 = vpop.f32.mrf.mxu0
  %v10990 = vadd.f32 0.0, %v10989
  %10991 = vmatmul.bf16.gmra.mxu0 %v10907
  %v10992 = vpop.f32.mrf.mxu0
  %v10993 = vadd.f32 0.0, %v10992
  %v10994 = vpop.f32.mrf.mxu0
  %v10995 = vadd.f32 0.0, %v10994
  %10996 = vmatmul.bf16.gmra.mxu0 %v10910
  %v10997 = vpop.f32.mrf.mxu0
  %v10998 = vadd.f32 0.0, %v10997
  %v10999 = vpop.f32.mrf.mxu0
  %v11000 = vadd.f32 0.0, %v10999
  %11001 = vmatmul.bf16.gmra.mxu0 %v10913
  %v11002 = vpop.f32.mrf.mxu0
  %v11003 = vadd.f32 0.0, %v11002
  %v11004 = vpop.f32.mrf.mxu0
  %v11005 = vadd.f32 0.0, %v11004
  %11006 = vmatmul.bf16.gmra.mxu0 %v10916
  %v11007 = vpop.f32.mrf.mxu0
  %v11008 = vadd.f32 0.0, %v11007
  %v11009 = vpop.f32.mrf.mxu0
  %v11010 = vadd.f32 0.0, %v11009
  %11011 = vmatmul.bf16.gmra.mxu0 %v10919
  %v11012 = vpop.f32.mrf.mxu0
  %v11013 = vadd.f32 0.0, %v11012
  %v11014 = vpop.f32.mrf.mxu0
  %v11015 = vadd.f32 0.0, %v11014
  %11016 = vmatmul.bf16.gmra.mxu0 %v10922
  %v11017 = vpop.f32.mrf.mxu0
  %v11018 = vadd.f32 0.0, %v11017
  %v11019 = vpop.f32.mrf.mxu0
  %v11020 = vadd.f32 0.0, %v11019
  %11021 = vdwg.mxu0
  %11022 = vmatpush.bf16.msra.mxu0 0
  %11023 = vmatpush.bf16.msra.mxu0 0
  %11024 = vmatpush.bf16.msra.mxu0 0
  %11025 = vmatpush.bf16.msra.mxu0 0
  %11026 = vmatpush.bf16.msra.mxu0 %v10882
  %11027 = vmatpush.bf16.msra.mxu0 %v10878
  %11028 = vmatpush.bf16.msra.mxu0 %v10874
  %11029 = vmatpush.bf16.msra.mxu0 %v10870
  %11030 = vmatmul.bf16.gmra.mxu0 %v10901
  %v11031 = vpop.f32.mrf.mxu0
  %v11032 = vadd.f32 0.0, %v11031
  %v11033 = vpop.f32.mrf.mxu0
  %v11034 = vadd.f32 0.0, %v11033
  %11035 = vmatmul.bf16.gmra.mxu0 %v10904
  %v11036 = vpop.f32.mrf.mxu0
  %v11037 = vadd.f32 0.0, %v11036
  %v11038 = vpop.f32.mrf.mxu0
  %v11039 = vadd.f32 0.0, %v11038
  %11040 = vmatmul.bf16.gmra.mxu0 %v10907
  %v11041 = vpop.f32.mrf.mxu0
  %v11042 = vadd.f32 0.0, %v11041
  %v11043 = vpop.f32.mrf.mxu0
  %v11044 = vadd.f32 0.0, %v11043
  %11045 = vmatmul.bf16.gmra.mxu0 %v10910
  %v11046 = vpop.f32.mrf.mxu0
  %v11047 = vadd.f32 0.0, %v11046
  %v11048 = vpop.f32.mrf.mxu0
  %v11049 = vadd.f32 0.0, %v11048
  %11050 = vmatmul.bf16.gmra.mxu0 %v10913
  %v11051 = vpop.f32.mrf.mxu0
  %v11052 = vadd.f32 0.0, %v11051
  %v11053 = vpop.f32.mrf.mxu0
  %v11054 = vadd.f32 0.0, %v11053
  %11055 = vmatmul.bf16.gmra.mxu0 %v10916
  %v11056 = vpop.f32.mrf.mxu0
  %v11057 = vadd.f32 0.0, %v11056
  %v11058 = vpop.f32.mrf.mxu0
  %v11059 = vadd.f32 0.0, %v11058
  %11060 = vmatmul.bf16.gmra.mxu0 %v10919
  %v11061 = vpop.f32.mrf.mxu0
  %v11062 = vadd.f32 0.0, %v11061
  %v11063 = vpop.f32.mrf.mxu0
  %v11064 = vadd.f32 0.0, %v11063
  %11065 = vmatmul.bf16.gmra.mxu0 %v10922
  %v11066 = vpop.f32.mrf.mxu0
  %v11067 = vadd.f32 0.0, %v11066
  %v11068 = vpop.f32.mrf.mxu0
  %v11069 = vadd.f32 0.0, %v11068
  %11070 = vdwg.mxu0
  %11071 = vmatpush.bf16.msra.mxu0 0
  %11072 = vmatpush.bf16.msra.mxu0 0
  %11073 = vmatpush.bf16.msra.mxu0 0
  %11074 = vmatpush.bf16.msra.mxu0 0
  %11075 = vmatpush.bf16.msra.mxu0 %v10883
  %11076 = vmatpush.bf16.msra.mxu0 %v10879
  %11077 = vmatpush.bf16.msra.mxu0 %v10875
  %11078 = vmatpush.bf16.msra.mxu0 %v10871
  %11079 = vmatmul.bf16.gmra.mxu0 %v10901
  %v11080 = vpop.f32.mrf.mxu0
  %v11081 = vadd.f32 0.0, %v11080
  %v11082 = vpop.f32.mrf.mxu0
  %v11083 = vadd.f32 0.0, %v11082
  %11084 = vmatmul.bf16.gmra.mxu0 %v10904
  %v11085 = vpop.f32.mrf.mxu0
  %v11086 = vadd.f32 0.0, %v11085
  %v11087 = vpop.f32.mrf.mxu0
  %v11088 = vadd.f32 0.0, %v11087
  %11089 = vmatmul.bf16.gmra.mxu0 %v10907
  %v11090 = vpop.f32.mrf.mxu0
  %v11091 = vadd.f32 0.0, %v11090
  %v11092 = vpop.f32.mrf.mxu0
  %v11093 = vadd.f32 0.0, %v11092
  %11094 = vmatmul.bf16.gmra.mxu0 %v10910
  %v11095 = vpop.f32.mrf.mxu0
  %v11096 = vadd.f32 0.0, %v11095
  %v11097 = vpop.f32.mrf.mxu0
  %v11098 = vadd.f32 0.0, %v11097
  %11099 = vmatmul.bf16.gmra.mxu0 %v10913
  %v11100 = vpop.f32.mrf.mxu0
  %v11101 = vadd.f32 0.0, %v11100
  %v11102 = vpop.f32.mrf.mxu0
  %v11103 = vadd.f32 0.0, %v11102
  %11104 = vmatmul.bf16.gmra.mxu0 %v10916
  %v11105 = vpop.f32.mrf.mxu0
  %v11106 = vadd.f32 0.0, %v11105
  %v11107 = vpop.f32.mrf.mxu0
  %v11108 = vadd.f32 0.0, %v11107
  %11109 = vmatmul.bf16.gmra.mxu0 %v10919
  %v11110 = vpop.f32.mrf.mxu0
  %v11111 = vadd.f32 0.0, %v11110
  %v11112 = vpop.f32.mrf.mxu0
  %v11113 = vadd.f32 0.0, %v11112
  %11114 = vmatmul.bf16.gmra.mxu0 %v10922
  %v11115 = vpop.f32.mrf.mxu0
  %v11116 = vadd.f32 0.0, %v11115
  %v11117 = vpop.f32.mrf.mxu0
  %v11118 = vadd.f32 0.0, %v11117
  %11119 = vdwg.mxu0
  %v11120 = vadd.f32 %v10519, %v10934
  %v11121 = vadd.f32 %v10520, %v10983
  %v11122 = vadd.f32 %v10521, %v11032
  %v11123 = vadd.f32 %v10522, %v11081
  %v11124 = vadd.f32 %v10523, %v10936
  %v11125 = vadd.f32 %v10524, %v10985
  %v11126 = vadd.f32 %v10525, %v11034
  %v11127 = vadd.f32 %v10526, %v11083
  %v11128 = vadd.f32 %v10527, %v10939
  %v11129 = vadd.f32 %v10528, %v10988
  %v11130 = vadd.f32 %v10529, %v11037
  %v11131 = vadd.f32 %v10530, %v11086
  %v11132 = vadd.f32 %v10531, %v10941
  %v11133 = vadd.f32 %v10532, %v10990
  %v11134 = vadd.f32 %v10533, %v11039
  %v11135 = vadd.f32 %v10534, %v11088
  %v11136 = vadd.f32 %v10535, %v10944
  %v11137 = vadd.f32 %v10536, %v10993
  %v11138 = vadd.f32 %v10537, %v11042
  %v11139 = vadd.f32 %v10538, %v11091
  %v11140 = vadd.f32 %v10539, %v10946
  %v11141 = vadd.f32 %v10540, %v10995
  %v11142 = vadd.f32 %v10541, %v11044
  %v11143 = vadd.f32 %v10542, %v11093
  %v11144 = vadd.f32 %v10543, %v10949
  %v11145 = vadd.f32 %v10544, %v10998
  %v11146 = vadd.f32 %v10545, %v11047
  %v11147 = vadd.f32 %v10546, %v11096
  %v11148 = vadd.f32 %v10547, %v10951
  %v11149 = vadd.f32 %v10548, %v11000
  %v11150 = vadd.f32 %v10549, %v11049
  %v11151 = vadd.f32 %v10550, %v11098
  %v11152 = vadd.f32 %v10551, %v10954
  %v11153 = vadd.f32 %v10552, %v11003
  %v11154 = vadd.f32 %v10553, %v11052
  %v11155 = vadd.f32 %v10554, %v11101
  %v11156 = vadd.f32 %v10555, %v10956
  %v11157 = vadd.f32 %v10556, %v11005
  %v11158 = vadd.f32 %v10557, %v11054
  %v11159 = vadd.f32 %v10558, %v11103
  %v11160 = vadd.f32 %v10559, %v10959
  %v11161 = vadd.f32 %v10560, %v11008
  %v11162 = vadd.f32 %v10561, %v11057
  %v11163 = vadd.f32 %v10562, %v11106
  %v11164 = vadd.f32 %v10563, %v10961
  %v11165 = vadd.f32 %v10564, %v11010
  %v11166 = vadd.f32 %v10565, %v11059
  %v11167 = vadd.f32 %v10566, %v11108
  %v11168 = vadd.f32 %v10567, %v10964
  %v11169 = vadd.f32 %v10568, %v11013
  %v11170 = vadd.f32 %v10569, %v11062
  %v11171 = vadd.f32 %v10570, %v11111
  %v11172 = vadd.f32 %v10571, %v10966
  %v11173 = vadd.f32 %v10572, %v11015
  %v11174 = vadd.f32 %v10573, %v11064
  %v11175 = vadd.f32 %v10574, %v11113
  %v11176 = vadd.f32 %v10575, %v10969
  %v11177 = vadd.f32 %v10576, %v11018
  %v11178 = vadd.f32 %v10577, %v11067
  %v11179 = vadd.f32 %v10578, %v11116
  %v11180 = vadd.f32 %v10579, %v10971
  %v11181 = vadd.f32 %v10580, %v11020
  %v11182 = vadd.f32 %v10581, %v11069
  %v11183 = vadd.f32 %v10582, %v11118
  %v11184 = vld [vmem:[%s7] sm:$0xff]
  %v11185 = vld [vmem:[%s7 + $0x8] sm:$0xff]
  %v11186 = vld [vmem:[%s7 + $0x10] sm:$0xff]
  %v11187 = vld [vmem:[%s7 + $0x18] sm:$0xff]
  %v11188 = vld [vmem:[%s7 + $0x20] sm:$0xff]
  %v11189 = vld [vmem:[%s7 + $0x28] sm:$0xff]
  %v11190 = vld [vmem:[%s7 + $0x30] sm:$0xff]
  %v11191 = vld [vmem:[%s7 + $0x38] sm:$0xff]
  %v11192 = vld [vmem:[%s7 + $0x40] sm:$0xff]
  %v11193 = vld [vmem:[%s7 + $0x48] sm:$0xff]
  %v11194 = vld [vmem:[%s7 + $0x50] sm:$0xff]
  %v11195 = vld [vmem:[%s7 + $0x58] sm:$0xff]
  %v11196 = vld [vmem:[%s7 + $0x60] sm:$0xff]
  %v11197 = vld [vmem:[%s7 + $0x68] sm:$0xff]
  %v11198 = vld [vmem:[%s7 + $0x70] sm:$0xff]
  %v11199 = vld [vmem:[%s7 + $0x78] sm:$0xff]
  %11201 = vset.pattern.permute.xlu0 0
  %11202 = vperm.xlu0 %11201, %v11184
  %v11203 = vpop.permute.xlu0 %11202
  %11206 = vset.pattern.permute.xlu0 0
  %11207 = vperm.xlu0 %11206, %v11185
  %v11208 = vpop.permute.xlu0 %11207
  %11211 = vset.pattern.permute.xlu0 0
  %11212 = vperm.xlu0 %11211, %v11186
  %v11213 = vpop.permute.xlu0 %11212
  %11216 = vset.pattern.permute.xlu0 0
  %11217 = vperm.xlu0 %11216, %v11187
  %v11218 = vpop.permute.xlu0 %11217
  %11221 = vset.pattern.permute.xlu0 0
  %11222 = vperm.xlu0 %11221, %v11188
  %v11223 = vpop.permute.xlu0 %11222
  %11226 = vset.pattern.permute.xlu0 0
  %11227 = vperm.xlu0 %11226, %v11189
  %v11228 = vpop.permute.xlu0 %11227
  %11231 = vset.pattern.permute.xlu0 0
  %11232 = vperm.xlu0 %11231, %v11190
  %v11233 = vpop.permute.xlu0 %11232
  %11236 = vset.pattern.permute.xlu0 0
  %11237 = vperm.xlu0 %11236, %v11191
  %v11238 = vpop.permute.xlu0 %11237
  %11241 = vset.pattern.permute.xlu0 0
  %11242 = vperm.xlu0 %11241, %v11192
  %v11243 = vpop.permute.xlu0 %11242
  %11246 = vset.pattern.permute.xlu0 0
  %11247 = vperm.xlu0 %11246, %v11193
  %v11248 = vpop.permute.xlu0 %11247
  %11251 = vset.pattern.permute.xlu0 0
  %11252 = vperm.xlu0 %11251, %v11194
  %v11253 = vpop.permute.xlu0 %11252
  %11256 = vset.pattern.permute.xlu0 0
  %11257 = vperm.xlu0 %11256, %v11195
  %v11258 = vpop.permute.xlu0 %11257
  %11261 = vset.pattern.permute.xlu0 0
  %11262 = vperm.xlu0 %11261, %v11196
  %v11263 = vpop.permute.xlu0 %11262
  %11266 = vset.pattern.permute.xlu0 0
  %11267 = vperm.xlu0 %11266, %v11197
  %v11268 = vpop.permute.xlu0 %11267
  %11271 = vset.pattern.permute.xlu0 0
  %11272 = vperm.xlu0 %11271, %v11198
  %v11273 = vpop.permute.xlu0 %11272
  %11276 = vset.pattern.permute.xlu0 0
  %11277 = vperm.xlu0 %11276, %v11199
  %v11278 = vpop.permute.xlu0 %11277
  %v11280 = vadd.f32 %v11120, %v11203
  %v11281 = vadd.f32 %v11121, %v11203
  %v11282 = vadd.f32 %v11122, %v11203
  %v11283 = vadd.f32 %v11123, %v11203
  %v11284 = vadd.f32 %v11124, %v11208
  %v11285 = vadd.f32 %v11125, %v11208
  %v11286 = vadd.f32 %v11126, %v11208
  %v11287 = vadd.f32 %v11127, %v11208
  %v11288 = vadd.f32 %v11128, %v11213
  %v11289 = vadd.f32 %v11129, %v11213
  %v11290 = vadd.f32 %v11130, %v11213
  %v11291 = vadd.f32 %v11131, %v11213
  %v11292 = vadd.f32 %v11132, %v11218
  %v11293 = vadd.f32 %v11133, %v11218
  %v11294 = vadd.f32 %v11134, %v11218
  %v11295 = vadd.f32 %v11135, %v11218
  %v11296 = vadd.f32 %v11136, %v11223
  %v11297 = vadd.f32 %v11137, %v11223
  %v11298 = vadd.f32 %v11138, %v11223
  %v11299 = vadd.f32 %v11139, %v11223
  %v11300 = vadd.f32 %v11140, %v11228
  %v11301 = vadd.f32 %v11141, %v11228
  %v11302 = vadd.f32 %v11142, %v11228
  %v11303 = vadd.f32 %v11143, %v11228
  %v11304 = vadd.f32 %v11144, %v11233
  %v11305 = vadd.f32 %v11145, %v11233
  %v11306 = vadd.f32 %v11146, %v11233
  %v11307 = vadd.f32 %v11147, %v11233
  %v11308 = vadd.f32 %v11148, %v11238
  %v11309 = vadd.f32 %v11149, %v11238
  %v11310 = vadd.f32 %v11150, %v11238
  %v11311 = vadd.f32 %v11151, %v11238
  %v11312 = vadd.f32 %v11152, %v11243
  %v11313 = vadd.f32 %v11153, %v11243
  %v11314 = vadd.f32 %v11154, %v11243
  %v11315 = vadd.f32 %v11155, %v11243
  %v11316 = vadd.f32 %v11156, %v11248
  %v11317 = vadd.f32 %v11157, %v11248
  %v11318 = vadd.f32 %v11158, %v11248
  %v11319 = vadd.f32 %v11159, %v11248
  %v11320 = vadd.f32 %v11160, %v11253
  %v11321 = vadd.f32 %v11161, %v11253
  %v11322 = vadd.f32 %v11162, %v11253
  %v11323 = vadd.f32 %v11163, %v11253
  %v11324 = vadd.f32 %v11164, %v11258
  %v11325 = vadd.f32 %v11165, %v11258
  %v11326 = vadd.f32 %v11166, %v11258
  %v11327 = vadd.f32 %v11167, %v11258
  %v11328 = vadd.f32 %v11168, %v11263
  %v11329 = vadd.f32 %v11169, %v11263
  %v11330 = vadd.f32 %v11170, %v11263
  %v11331 = vadd.f32 %v11171, %v11263
  %v11332 = vadd.f32 %v11172, %v11268
  %v11333 = vadd.f32 %v11173, %v11268
  %v11334 = vadd.f32 %v11174, %v11268
  %v11335 = vadd.f32 %v11175, %v11268
  %v11336 = vadd.f32 %v11176, %v11273
  %v11337 = vadd.f32 %v11177, %v11273
  %v11338 = vadd.f32 %v11178, %v11273
  %v11339 = vadd.f32 %v11179, %v11273
  %v11340 = vadd.f32 %v11180, %v11278
  %v11341 = vadd.f32 %v11181, %v11278
  %v11342 = vadd.f32 %v11182, %v11278
  %v11343 = vadd.f32 %v11183, %v11278
  %v11344 = vxor.u32 %v11280, 2147483648
  %v11345 = vxor.u32 %v11281, 2147483648
  %v11346 = vxor.u32 %v11282, 2147483648
  %v11347 = vxor.u32 %v11283, 2147483648
  %v11348 = vxor.u32 %v11284, 2147483648
  %v11349 = vxor.u32 %v11285, 2147483648
  %v11350 = vxor.u32 %v11286, 2147483648
  %v11351 = vxor.u32 %v11287, 2147483648
  %v11352 = vxor.u32 %v11288, 2147483648
  %v11353 = vxor.u32 %v11289, 2147483648
  %v11354 = vxor.u32 %v11290, 2147483648
  %v11355 = vxor.u32 %v11291, 2147483648
  %v11356 = vxor.u32 %v11292, 2147483648
  %v11357 = vxor.u32 %v11293, 2147483648
  %v11358 = vxor.u32 %v11294, 2147483648
  %v11359 = vxor.u32 %v11295, 2147483648
  %v11360 = vxor.u32 %v11296, 2147483648
  %v11361 = vxor.u32 %v11297, 2147483648
  %v11362 = vxor.u32 %v11298, 2147483648
  %v11363 = vxor.u32 %v11299, 2147483648
  %v11364 = vxor.u32 %v11300, 2147483648
  %v11365 = vxor.u32 %v11301, 2147483648
  %v11366 = vxor.u32 %v11302, 2147483648
  %v11367 = vxor.u32 %v11303, 2147483648
  %v11368 = vxor.u32 %v11304, 2147483648
  %v11369 = vxor.u32 %v11305, 2147483648
  %v11370 = vxor.u32 %v11306, 2147483648
  %v11371 = vxor.u32 %v11307, 2147483648
  %v11372 = vxor.u32 %v11308, 2147483648
  %v11373 = vxor.u32 %v11309, 2147483648
  %v11374 = vxor.u32 %v11310, 2147483648
  %v11375 = vxor.u32 %v11311, 2147483648
  %v11376 = vxor.u32 %v11312, 2147483648
  %v11377 = vxor.u32 %v11313, 2147483648
  %v11378 = vxor.u32 %v11314, 2147483648
  %v11379 = vxor.u32 %v11315, 2147483648
  %v11380 = vxor.u32 %v11316, 2147483648
  %v11381 = vxor.u32 %v11317, 2147483648
  %v11382 = vxor.u32 %v11318, 2147483648
  %v11383 = vxor.u32 %v11319, 2147483648
  %v11384 = vxor.u32 %v11320, 2147483648
  %v11385 = vxor.u32 %v11321, 2147483648
  %v11386 = vxor.u32 %v11322, 2147483648
  %v11387 = vxor.u32 %v11323, 2147483648
  %v11388 = vxor.u32 %v11324, 2147483648
  %v11389 = vxor.u32 %v11325, 2147483648
  %v11390 = vxor.u32 %v11326, 2147483648
  %v11391 = vxor.u32 %v11327, 2147483648
  %v11392 = vmul.f32 %v11344, 1.442695
  %v11393 = vpow.pop %v11392
  %v11394 = vmul.f32 %v11345, 1.442695
  %v11395 = vpow.pop %v11394
  %v11396 = vmul.f32 %v11346, 1.442695
  %v11397 = vpow.pop %v11396
  %v11398 = vmul.f32 %v11347, 1.442695
  %v11399 = vpow.pop %v11398
  %v11400 = vmul.f32 %v11348, 1.442695
  %v11401 = vpow.pop %v11400
  %v11402 = vmul.f32 %v11349, 1.442695
  %v11403 = vpow.pop %v11402
  %v11404 = vmul.f32 %v11350, 1.442695
  %v11405 = vpow.pop %v11404
  %v11406 = vmul.f32 %v11351, 1.442695
  %v11407 = vpow.pop %v11406
  %v11408 = vmul.f32 %v11352, 1.442695
  %v11409 = vpow.pop %v11408
  %v11410 = vmul.f32 %v11353, 1.442695
  %v11411 = vpow.pop %v11410
  %v11412 = vmul.f32 %v11354, 1.442695
  %v11413 = vpow.pop %v11412
  %v11414 = vmul.f32 %v11355, 1.442695
  %v11415 = vpow.pop %v11414
  %v11416 = vmul.f32 %v11356, 1.442695
  %v11417 = vpow.pop %v11416
  %v11418 = vmul.f32 %v11357, 1.442695
  %v11419 = vpow.pop %v11418
  %v11420 = vmul.f32 %v11358, 1.442695
  %v11421 = vpow.pop %v11420
  %v11422 = vmul.f32 %v11359, 1.442695
  %v11423 = vpow.pop %v11422
  %v11424 = vmul.f32 %v11360, 1.442695
  %v11425 = vpow.pop %v11424
  %v11426 = vmul.f32 %v11361, 1.442695
  %v11427 = vpow.pop %v11426
  %v11428 = vmul.f32 %v11362, 1.442695
  %v11429 = vpow.pop %v11428
  %v11430 = vmul.f32 %v11363, 1.442695
  %v11431 = vpow.pop %v11430
  %v11432 = vmul.f32 %v11364, 1.442695
  %v11433 = vpow.pop %v11432
  %v11434 = vmul.f32 %v11365, 1.442695
  %v11435 = vpow.pop %v11434
  %v11436 = vmul.f32 %v11366, 1.442695
  %v11437 = vpow.pop %v11436
  %v11438 = vmul.f32 %v11367, 1.442695
  %v11439 = vpow.pop %v11438
  %v11440 = vmul.f32 %v11368, 1.442695
  %v11441 = vpow.pop %v11440
  %v11442 = vmul.f32 %v11369, 1.442695
  %v11443 = vpow.pop %v11442
  %v11444 = vmul.f32 %v11370, 1.442695
  %v11445 = vpow.pop %v11444
  %v11446 = vmul.f32 %v11371, 1.442695
  %v11447 = vpow.pop %v11446
  %v11448 = vmul.f32 %v11372, 1.442695
  %v11449 = vpow.pop %v11448
  %v11450 = vmul.f32 %v11373, 1.442695
  %v11451 = vpow.pop %v11450
  %v11452 = vmul.f32 %v11374, 1.442695
  %v11453 = vpow.pop %v11452
  %v11454 = vmul.f32 %v11375, 1.442695
  %v11455 = vpow.pop %v11454
  %v11456 = vmul.f32 %v11376, 1.442695
  %v11457 = vpow.pop %v11456
  %v11458 = vmul.f32 %v11377, 1.442695
  %v11459 = vpow.pop %v11458
  %v11460 = vmul.f32 %v11378, 1.442695
  %v11461 = vpow.pop %v11460
  %v11462 = vmul.f32 %v11379, 1.442695
  %v11463 = vpow.pop %v11462
  %v11464 = vmul.f32 %v11380, 1.442695
  %v11465 = vpow.pop %v11464
  %v11466 = vmul.f32 %v11381, 1.442695
  %v11467 = vpow.pop %v11466
  %v11468 = vmul.f32 %v11382, 1.442695
  %v11469 = vpow.pop %v11468
  %v11470 = vmul.f32 %v11383, 1.442695
  %v11471 = vpow.pop %v11470
  %v11472 = vmul.f32 %v11384, 1.442695
  %v11473 = vpow.pop %v11472
  %v11474 = vmul.f32 %v11385, 1.442695
  %v11475 = vpow.pop %v11474
  %v11476 = vmul.f32 %v11386, 1.442695
  %v11477 = vpow.pop %v11476
  %v11478 = vmul.f32 %v11387, 1.442695
  %v11479 = vpow.pop %v11478
  %v11480 = vmul.f32 %v11388, 1.442695
  %v11481 = vpow.pop %v11480
  %v11482 = vmul.f32 %v11389, 1.442695
  %v11483 = vpow.pop %v11482
  %v11484 = vmul.f32 %v11390, 1.442695
  %v11485 = vpow.pop %v11484
  %v11486 = vmul.f32 %v11391, 1.442695
  %v11487 = vpow.pop %v11486
  %v11488 = vadd.f32 %v11393, 1.0
  %v11489 = vadd.f32 %v11395, 1.0
  %v11490 = vadd.f32 %v11397, 1.0
  %v11491 = vadd.f32 %v11399, 1.0
  %v11492 = vadd.f32 %v11401, 1.0
  %v11493 = vadd.f32 %v11403, 1.0
  %v11494 = vadd.f32 %v11405, 1.0
  %v11495 = vadd.f32 %v11407, 1.0
  %v11496 = vadd.f32 %v11409, 1.0
  %v11497 = vadd.f32 %v11411, 1.0
  %v11498 = vadd.f32 %v11413, 1.0
  %v11499 = vadd.f32 %v11415, 1.0
  %v11500 = vadd.f32 %v11417, 1.0
  %v11501 = vadd.f32 %v11419, 1.0
  %v11502 = vadd.f32 %v11421, 1.0
  %v11503 = vadd.f32 %v11423, 1.0
  %v11504 = vadd.f32 %v11425, 1.0
  %v11505 = vadd.f32 %v11427, 1.0
  %v11506 = vadd.f32 %v11429, 1.0
  %v11507 = vadd.f32 %v11431, 1.0
  %v11508 = vadd.f32 %v11433, 1.0
  %v11509 = vadd.f32 %v11435, 1.0
  %v11510 = vadd.f32 %v11437, 1.0
  %v11511 = vadd.f32 %v11439, 1.0
  %v11512 = vadd.f32 %v11441, 1.0
  %v11513 = vadd.f32 %v11443, 1.0
  %v11514 = vadd.f32 %v11445, 1.0
  %v11515 = vadd.f32 %v11447, 1.0
  %v11516 = vadd.f32 %v11449, 1.0
  %v11517 = vadd.f32 %v11451, 1.0
  %v11518 = vadd.f32 %v11453, 1.0
  %v11519 = vadd.f32 %v11455, 1.0
  %v11520 = vadd.f32 %v11457, 1.0
  %v11521 = vadd.f32 %v11459, 1.0
  %v11522 = vadd.f32 %v11461, 1.0
  %v11523 = vadd.f32 %v11463, 1.0
  %v11524 = vadd.f32 %v11465, 1.0
  %v11525 = vadd.f32 %v11467, 1.0
  %v11526 = vadd.f32 %v11469, 1.0
  %v11527 = vadd.f32 %v11471, 1.0
  %v11528 = vadd.f32 %v11473, 1.0
  %v11529 = vadd.f32 %v11475, 1.0
  %v11530 = vadd.f32 %v11477, 1.0
  %v11531 = vadd.f32 %v11479, 1.0
  %v11532 = vadd.f32 %v11481, 1.0
  %v11533 = vadd.f32 %v11483, 1.0
  %v11534 = vadd.f32 %v11485, 1.0
  %v11535 = vadd.f32 %v11487, 1.0
  %v11536 = vrcp.pop %v11488
  %v11537 = vmul.f32 %v11488, %v11536
  %v11538 = vsub.f32 1.0, %v11537
  %v11539 = vmul.f32 %v11536, %v11538
  %v11540 = vadd.f32 %v11536, %v11539
  %vm11541 = vweird.f32 %v11488
  %vm11542 = vweird.f32 %v11536
  %vm11543 = vmor %vm11541, %vm11542
  %v11544 = vsel %vm11543, %v11536, %v11540
  %v11545 = vand.u32 2147483647, %v11488
  %vm11546 = vcmp.eq.f32.partialorder %v11545, 8.507059e+37
  %v11547 = vand.u32 %v11488, 2147483648
  %v11548 = vor.u32 1.1754944e-38, %v11547
  %v11549 = vsel %vm11546, %v11548, %v11544
  %v11550 = vmul.f32 1.0, %v11549
  %v11551 = vrcp.pop %v11489
  %v11552 = vmul.f32 %v11489, %v11551
  %v11553 = vsub.f32 1.0, %v11552
  %v11554 = vmul.f32 %v11551, %v11553
  %v11555 = vadd.f32 %v11551, %v11554
  %vm11556 = vweird.f32 %v11489
  %vm11557 = vweird.f32 %v11551
  %vm11558 = vmor %vm11556, %vm11557
  %v11559 = vsel %vm11558, %v11551, %v11555
  %v11560 = vand.u32 2147483647, %v11489
  %vm11561 = vcmp.eq.f32.partialorder %v11560, 8.507059e+37
  %v11562 = vand.u32 %v11489, 2147483648
  %v11563 = vor.u32 1.1754944e-38, %v11562
  %v11564 = vsel %vm11561, %v11563, %v11559
  %v11565 = vmul.f32 1.0, %v11564
  %v11566 = vrcp.pop %v11490
  %v11567 = vmul.f32 %v11490, %v11566
  %v11568 = vsub.f32 1.0, %v11567
  %v11569 = vmul.f32 %v11566, %v11568
  %v11570 = vadd.f32 %v11566, %v11569
  %vm11571 = vweird.f32 %v11490
  %vm11572 = vweird.f32 %v11566
  %vm11573 = vmor %vm11571, %vm11572
  %v11574 = vsel %vm11573, %v11566, %v11570
  %v11575 = vand.u32 2147483647, %v11490
  %vm11576 = vcmp.eq.f32.partialorder %v11575, 8.507059e+37
  %v11577 = vand.u32 %v11490, 2147483648
  %v11578 = vor.u32 1.1754944e-38, %v11577
  %v11579 = vsel %vm11576, %v11578, %v11574
  %v11580 = vmul.f32 1.0, %v11579
  %v11581 = vrcp.pop %v11491
  %v11582 = vmul.f32 %v11491, %v11581
  %v11583 = vsub.f32 1.0, %v11582
  %v11584 = vmul.f32 %v11581, %v11583
  %v11585 = vadd.f32 %v11581, %v11584
  %vm11586 = vweird.f32 %v11491
  %vm11587 = vweird.f32 %v11581
  %vm11588 = vmor %vm11586, %vm11587
  %v11589 = vsel %vm11588, %v11581, %v11585
  %v11590 = vand.u32 2147483647, %v11491
  %vm11591 = vcmp.eq.f32.partialorder %v11590, 8.507059e+37
  %v11592 = vand.u32 %v11491, 2147483648
  %v11593 = vor.u32 1.1754944e-38, %v11592
  %v11594 = vsel %vm11591, %v11593, %v11589
  %v11595 = vmul.f32 1.0, %v11594
  %v11596 = vrcp.pop %v11492
  %v11597 = vmul.f32 %v11492, %v11596
  %v11598 = vsub.f32 1.0, %v11597
  %v11599 = vmul.f32 %v11596, %v11598
  %v11600 = vadd.f32 %v11596, %v11599
  %vm11601 = vweird.f32 %v11492
  %vm11602 = vweird.f32 %v11596
  %vm11603 = vmor %vm11601, %vm11602
  %v11604 = vsel %vm11603, %v11596, %v11600
  %v11605 = vand.u32 2147483647, %v11492
  %vm11606 = vcmp.eq.f32.partialorder %v11605, 8.507059e+37
  %v11607 = vand.u32 %v11492, 2147483648
  %v11608 = vor.u32 1.1754944e-38, %v11607
  %v11609 = vsel %vm11606, %v11608, %v11604
  %v11610 = vmul.f32 1.0, %v11609
  %v11611 = vrcp.pop %v11493
  %v11612 = vmul.f32 %v11493, %v11611
  %v11613 = vsub.f32 1.0, %v11612
  %v11614 = vmul.f32 %v11611, %v11613
  %v11615 = vadd.f32 %v11611, %v11614
  %vm11616 = vweird.f32 %v11493
  %vm11617 = vweird.f32 %v11611
  %vm11618 = vmor %vm11616, %vm11617
  %v11619 = vsel %vm11618, %v11611, %v11615
  %v11620 = vand.u32 2147483647, %v11493
  %vm11621 = vcmp.eq.f32.partialorder %v11620, 8.507059e+37
  %v11622 = vand.u32 %v11493, 2147483648
  %v11623 = vor.u32 1.1754944e-38, %v11622
  %v11624 = vsel %vm11621, %v11623, %v11619
  %v11625 = vmul.f32 1.0, %v11624
  %v11626 = vrcp.pop %v11494
  %v11627 = vmul.f32 %v11494, %v11626
  %v11628 = vsub.f32 1.0, %v11627
  %v11629 = vmul.f32 %v11626, %v11628
  %v11630 = vadd.f32 %v11626, %v11629
  %vm11631 = vweird.f32 %v11494
  %vm11632 = vweird.f32 %v11626
  %vm11633 = vmor %vm11631, %vm11632
  %v11634 = vsel %vm11633, %v11626, %v11630
  %v11635 = vand.u32 2147483647, %v11494
  %vm11636 = vcmp.eq.f32.partialorder %v11635, 8.507059e+37
  %v11637 = vand.u32 %v11494, 2147483648
  %v11638 = vor.u32 1.1754944e-38, %v11637
  %v11639 = vsel %vm11636, %v11638, %v11634
  %v11640 = vmul.f32 1.0, %v11639
  %v11641 = vrcp.pop %v11495
  %v11642 = vmul.f32 %v11495, %v11641
  %v11643 = vsub.f32 1.0, %v11642
  %v11644 = vmul.f32 %v11641, %v11643
  %v11645 = vadd.f32 %v11641, %v11644
  %vm11646 = vweird.f32 %v11495
  %vm11647 = vweird.f32 %v11641
  %vm11648 = vmor %vm11646, %vm11647
  %v11649 = vsel %vm11648, %v11641, %v11645
  %v11650 = vand.u32 2147483647, %v11495
  %vm11651 = vcmp.eq.f32.partialorder %v11650, 8.507059e+37
  %v11652 = vand.u32 %v11495, 2147483648
  %v11653 = vor.u32 1.1754944e-38, %v11652
  %v11654 = vsel %vm11651, %v11653, %v11649
  %v11655 = vmul.f32 1.0, %v11654
  %v11656 = vrcp.pop %v11496
  %v11657 = vmul.f32 %v11496, %v11656
  %v11658 = vsub.f32 1.0, %v11657
  %v11659 = vmul.f32 %v11656, %v11658
  %v11660 = vadd.f32 %v11656, %v11659
  %vm11661 = vweird.f32 %v11496
  %vm11662 = vweird.f32 %v11656
  %vm11663 = vmor %vm11661, %vm11662
  %v11664 = vsel %vm11663, %v11656, %v11660
  %v11665 = vand.u32 2147483647, %v11496
  %vm11666 = vcmp.eq.f32.partialorder %v11665, 8.507059e+37
  %v11667 = vand.u32 %v11496, 2147483648
  %v11668 = vor.u32 1.1754944e-38, %v11667
  %v11669 = vsel %vm11666, %v11668, %v11664
  %v11670 = vmul.f32 1.0, %v11669
  %v11671 = vrcp.pop %v11497
  %v11672 = vmul.f32 %v11497, %v11671
  %v11673 = vsub.f32 1.0, %v11672
  %v11674 = vmul.f32 %v11671, %v11673
  %v11675 = vadd.f32 %v11671, %v11674
  %vm11676 = vweird.f32 %v11497
  %vm11677 = vweird.f32 %v11671
  %vm11678 = vmor %vm11676, %vm11677
  %v11679 = vsel %vm11678, %v11671, %v11675
  %v11680 = vand.u32 2147483647, %v11497
  %vm11681 = vcmp.eq.f32.partialorder %v11680, 8.507059e+37
  %v11682 = vand.u32 %v11497, 2147483648
  %v11683 = vor.u32 1.1754944e-38, %v11682
  %v11684 = vsel %vm11681, %v11683, %v11679
  %v11685 = vmul.f32 1.0, %v11684
  %v11686 = vrcp.pop %v11498
  %v11687 = vmul.f32 %v11498, %v11686
  %v11688 = vsub.f32 1.0, %v11687
  %v11689 = vmul.f32 %v11686, %v11688
  %v11690 = vadd.f32 %v11686, %v11689
  %vm11691 = vweird.f32 %v11498
  %vm11692 = vweird.f32 %v11686
  %vm11693 = vmor %vm11691, %vm11692
  %v11694 = vsel %vm11693, %v11686, %v11690
  %v11695 = vand.u32 2147483647, %v11498
  %vm11696 = vcmp.eq.f32.partialorder %v11695, 8.507059e+37
  %v11697 = vand.u32 %v11498, 2147483648
  %v11698 = vor.u32 1.1754944e-38, %v11697
  %v11699 = vsel %vm11696, %v11698, %v11694
  %v11700 = vmul.f32 1.0, %v11699
  %v11701 = vrcp.pop %v11499
  %v11702 = vmul.f32 %v11499, %v11701
  %v11703 = vsub.f32 1.0, %v11702
  %v11704 = vmul.f32 %v11701, %v11703
  %v11705 = vadd.f32 %v11701, %v11704
  %vm11706 = vweird.f32 %v11499
  %vm11707 = vweird.f32 %v11701
  %vm11708 = vmor %vm11706, %vm11707
  %v11709 = vsel %vm11708, %v11701, %v11705
  %v11710 = vand.u32 2147483647, %v11499
  %vm11711 = vcmp.eq.f32.partialorder %v11710, 8.507059e+37
  %v11712 = vand.u32 %v11499, 2147483648
  %v11713 = vor.u32 1.1754944e-38, %v11712
  %v11714 = vsel %vm11711, %v11713, %v11709
  %v11715 = vmul.f32 1.0, %v11714
  %v11716 = vrcp.pop %v11500
  %v11717 = vmul.f32 %v11500, %v11716
  %v11718 = vsub.f32 1.0, %v11717
  %v11719 = vmul.f32 %v11716, %v11718
  %v11720 = vadd.f32 %v11716, %v11719
  %vm11721 = vweird.f32 %v11500
  %vm11722 = vweird.f32 %v11716
  %vm11723 = vmor %vm11721, %vm11722
  %v11724 = vsel %vm11723, %v11716, %v11720
  %v11725 = vand.u32 2147483647, %v11500
  %vm11726 = vcmp.eq.f32.partialorder %v11725, 8.507059e+37
  %v11727 = vand.u32 %v11500, 2147483648
  %v11728 = vor.u32 1.1754944e-38, %v11727
  %v11729 = vsel %vm11726, %v11728, %v11724
  %v11730 = vmul.f32 1.0, %v11729
  %v11731 = vrcp.pop %v11501
  %v11732 = vmul.f32 %v11501, %v11731
  %v11733 = vsub.f32 1.0, %v11732
  %v11734 = vmul.f32 %v11731, %v11733
  %v11735 = vadd.f32 %v11731, %v11734
  %vm11736 = vweird.f32 %v11501
  %vm11737 = vweird.f32 %v11731
  %vm11738 = vmor %vm11736, %vm11737
  %v11739 = vsel %vm11738, %v11731, %v11735
  %v11740 = vand.u32 2147483647, %v11501
  %vm11741 = vcmp.eq.f32.partialorder %v11740, 8.507059e+37
  %v11742 = vand.u32 %v11501, 2147483648
  %v11743 = vor.u32 1.1754944e-38, %v11742
  %v11744 = vsel %vm11741, %v11743, %v11739
  %v11745 = vmul.f32 1.0, %v11744
  %v11746 = vrcp.pop %v11502
  %v11747 = vmul.f32 %v11502, %v11746
  %v11748 = vsub.f32 1.0, %v11747
  %v11749 = vmul.f32 %v11746, %v11748
  %v11750 = vadd.f32 %v11746, %v11749
  %vm11751 = vweird.f32 %v11502
  %vm11752 = vweird.f32 %v11746
  %vm11753 = vmor %vm11751, %vm11752
  %v11754 = vsel %vm11753, %v11746, %v11750
  %v11755 = vand.u32 2147483647, %v11502
  %vm11756 = vcmp.eq.f32.partialorder %v11755, 8.507059e+37
  %v11757 = vand.u32 %v11502, 2147483648
  %v11758 = vor.u32 1.1754944e-38, %v11757
  %v11759 = vsel %vm11756, %v11758, %v11754
  %v11760 = vmul.f32 1.0, %v11759
  %v11761 = vrcp.pop %v11503
  %v11762 = vmul.f32 %v11503, %v11761
  %v11763 = vsub.f32 1.0, %v11762
  %v11764 = vmul.f32 %v11761, %v11763
  %v11765 = vadd.f32 %v11761, %v11764
  %vm11766 = vweird.f32 %v11503
  %vm11767 = vweird.f32 %v11761
  %vm11768 = vmor %vm11766, %vm11767
  %v11769 = vsel %vm11768, %v11761, %v11765
  %v11770 = vand.u32 2147483647, %v11503
  %vm11771 = vcmp.eq.f32.partialorder %v11770, 8.507059e+37
  %v11772 = vand.u32 %v11503, 2147483648
  %v11773 = vor.u32 1.1754944e-38, %v11772
  %v11774 = vsel %vm11771, %v11773, %v11769
  %v11775 = vmul.f32 1.0, %v11774
  %v11776 = vrcp.pop %v11504
  %v11777 = vmul.f32 %v11504, %v11776
  %v11778 = vsub.f32 1.0, %v11777
  %v11779 = vmul.f32 %v11776, %v11778
  %v11780 = vadd.f32 %v11776, %v11779
  %vm11781 = vweird.f32 %v11504
  %vm11782 = vweird.f32 %v11776
  %vm11783 = vmor %vm11781, %vm11782
  %v11784 = vsel %vm11783, %v11776, %v11780
  %v11785 = vand.u32 2147483647, %v11504
  %vm11786 = vcmp.eq.f32.partialorder %v11785, 8.507059e+37
  %v11787 = vand.u32 %v11504, 2147483648
  %v11788 = vor.u32 1.1754944e-38, %v11787
  %v11789 = vsel %vm11786, %v11788, %v11784
  %v11790 = vmul.f32 1.0, %v11789
  %v11791 = vrcp.pop %v11505
  %v11792 = vmul.f32 %v11505, %v11791
  %v11793 = vsub.f32 1.0, %v11792
  %v11794 = vmul.f32 %v11791, %v11793
  %v11795 = vadd.f32 %v11791, %v11794
  %vm11796 = vweird.f32 %v11505
  %vm11797 = vweird.f32 %v11791
  %vm11798 = vmor %vm11796, %vm11797
  %v11799 = vsel %vm11798, %v11791, %v11795
  %v11800 = vand.u32 2147483647, %v11505
  %vm11801 = vcmp.eq.f32.partialorder %v11800, 8.507059e+37
  %v11802 = vand.u32 %v11505, 2147483648
  %v11803 = vor.u32 1.1754944e-38, %v11802
  %v11804 = vsel %vm11801, %v11803, %v11799
  %v11805 = vmul.f32 1.0, %v11804
  %v11806 = vrcp.pop %v11506
  %v11807 = vmul.f32 %v11506, %v11806
  %v11808 = vsub.f32 1.0, %v11807
  %v11809 = vmul.f32 %v11806, %v11808
  %v11810 = vadd.f32 %v11806, %v11809
  %vm11811 = vweird.f32 %v11506
  %vm11812 = vweird.f32 %v11806
  %vm11813 = vmor %vm11811, %vm11812
  %v11814 = vsel %vm11813, %v11806, %v11810
  %v11815 = vand.u32 2147483647, %v11506
  %vm11816 = vcmp.eq.f32.partialorder %v11815, 8.507059e+37
  %v11817 = vand.u32 %v11506, 2147483648
  %v11818 = vor.u32 1.1754944e-38, %v11817
  %v11819 = vsel %vm11816, %v11818, %v11814
  %v11820 = vmul.f32 1.0, %v11819
  %v11821 = vrcp.pop %v11507
  %v11822 = vmul.f32 %v11507, %v11821
  %v11823 = vsub.f32 1.0, %v11822
  %v11824 = vmul.f32 %v11821, %v11823
  %v11825 = vadd.f32 %v11821, %v11824
  %vm11826 = vweird.f32 %v11507
  %vm11827 = vweird.f32 %v11821
  %vm11828 = vmor %vm11826, %vm11827
  %v11829 = vsel %vm11828, %v11821, %v11825
  %v11830 = vand.u32 2147483647, %v11507
  %vm11831 = vcmp.eq.f32.partialorder %v11830, 8.507059e+37
  %v11832 = vand.u32 %v11507, 2147483648
  %v11833 = vor.u32 1.1754944e-38, %v11832
  %v11834 = vsel %vm11831, %v11833, %v11829
  %v11835 = vmul.f32 1.0, %v11834
  %v11836 = vrcp.pop %v11508
  %v11837 = vmul.f32 %v11508, %v11836
  %v11838 = vsub.f32 1.0, %v11837
  %v11839 = vmul.f32 %v11836, %v11838
  %v11840 = vadd.f32 %v11836, %v11839
  %vm11841 = vweird.f32 %v11508
  %vm11842 = vweird.f32 %v11836
  %vm11843 = vmor %vm11841, %vm11842
  %v11844 = vsel %vm11843, %v11836, %v11840
  %v11845 = vand.u32 2147483647, %v11508
  %vm11846 = vcmp.eq.f32.partialorder %v11845, 8.507059e+37
  %v11847 = vand.u32 %v11508, 2147483648
  %v11848 = vor.u32 1.1754944e-38, %v11847
  %v11849 = vsel %vm11846, %v11848, %v11844
  %v11850 = vmul.f32 1.0, %v11849
  %v11851 = vrcp.pop %v11509
  %v11852 = vmul.f32 %v11509, %v11851
  %v11853 = vsub.f32 1.0, %v11852
  %v11854 = vmul.f32 %v11851, %v11853
  %v11855 = vadd.f32 %v11851, %v11854
  %vm11856 = vweird.f32 %v11509
  %vm11857 = vweird.f32 %v11851
  %vm11858 = vmor %vm11856, %vm11857
  %v11859 = vsel %vm11858, %v11851, %v11855
  %v11860 = vand.u32 2147483647, %v11509
  %vm11861 = vcmp.eq.f32.partialorder %v11860, 8.507059e+37
  %v11862 = vand.u32 %v11509, 2147483648
  %v11863 = vor.u32 1.1754944e-38, %v11862
  %v11864 = vsel %vm11861, %v11863, %v11859
  %v11865 = vmul.f32 1.0, %v11864
  %v11866 = vrcp.pop %v11510
  %v11867 = vmul.f32 %v11510, %v11866
  %v11868 = vsub.f32 1.0, %v11867
  %v11869 = vmul.f32 %v11866, %v11868
  %v11870 = vadd.f32 %v11866, %v11869
  %vm11871 = vweird.f32 %v11510
  %vm11872 = vweird.f32 %v11866
  %vm11873 = vmor %vm11871, %vm11872
  %v11874 = vsel %vm11873, %v11866, %v11870
  %v11875 = vand.u32 2147483647, %v11510
  %vm11876 = vcmp.eq.f32.partialorder %v11875, 8.507059e+37
  %v11877 = vand.u32 %v11510, 2147483648
  %v11878 = vor.u32 1.1754944e-38, %v11877
  %v11879 = vsel %vm11876, %v11878, %v11874
  %v11880 = vmul.f32 1.0, %v11879
  %v11881 = vrcp.pop %v11511
  %v11882 = vmul.f32 %v11511, %v11881
  %v11883 = vsub.f32 1.0, %v11882
  %v11884 = vmul.f32 %v11881, %v11883
  %v11885 = vadd.f32 %v11881, %v11884
  %vm11886 = vweird.f32 %v11511
  %vm11887 = vweird.f32 %v11881
  %vm11888 = vmor %vm11886, %vm11887
  %v11889 = vsel %vm11888, %v11881, %v11885
  %v11890 = vand.u32 2147483647, %v11511
  %vm11891 = vcmp.eq.f32.partialorder %v11890, 8.507059e+37
  %v11892 = vand.u32 %v11511, 2147483648
  %v11893 = vor.u32 1.1754944e-38, %v11892
  %v11894 = vsel %vm11891, %v11893, %v11889
  %v11895 = vmul.f32 1.0, %v11894
  %v11896 = vrcp.pop %v11512
  %v11897 = vmul.f32 %v11512, %v11896
  %v11898 = vsub.f32 1.0, %v11897
  %v11899 = vmul.f32 %v11896, %v11898
  %v11900 = vadd.f32 %v11896, %v11899
  %vm11901 = vweird.f32 %v11512
  %vm11902 = vweird.f32 %v11896
  %vm11903 = vmor %vm11901, %vm11902
  %v11904 = vsel %vm11903, %v11896, %v11900
  %v11905 = vand.u32 2147483647, %v11512
  %vm11906 = vcmp.eq.f32.partialorder %v11905, 8.507059e+37
  %v11907 = vand.u32 %v11512, 2147483648
  %v11908 = vor.u32 1.1754944e-38, %v11907
  %v11909 = vsel %vm11906, %v11908, %v11904
  %v11910 = vmul.f32 1.0, %v11909
  %v11911 = vrcp.pop %v11513
  %v11912 = vmul.f32 %v11513, %v11911
  %v11913 = vsub.f32 1.0, %v11912
  %v11914 = vmul.f32 %v11911, %v11913
  %v11915 = vadd.f32 %v11911, %v11914
  %vm11916 = vweird.f32 %v11513
  %vm11917 = vweird.f32 %v11911
  %vm11918 = vmor %vm11916, %vm11917
  %v11919 = vsel %vm11918, %v11911, %v11915
  %v11920 = vand.u32 2147483647, %v11513
  %vm11921 = vcmp.eq.f32.partialorder %v11920, 8.507059e+37
  %v11922 = vand.u32 %v11513, 2147483648
  %v11923 = vor.u32 1.1754944e-38, %v11922
  %v11924 = vsel %vm11921, %v11923, %v11919
  %v11925 = vmul.f32 1.0, %v11924
  %v11926 = vrcp.pop %v11514
  %v11927 = vmul.f32 %v11514, %v11926
  %v11928 = vsub.f32 1.0, %v11927
  %v11929 = vmul.f32 %v11926, %v11928
  %v11930 = vadd.f32 %v11926, %v11929
  %vm11931 = vweird.f32 %v11514
  %vm11932 = vweird.f32 %v11926
  %vm11933 = vmor %vm11931, %vm11932
  %v11934 = vsel %vm11933, %v11926, %v11930
  %v11935 = vand.u32 2147483647, %v11514
  %vm11936 = vcmp.eq.f32.partialorder %v11935, 8.507059e+37
  %v11937 = vand.u32 %v11514, 2147483648
  %v11938 = vor.u32 1.1754944e-38, %v11937
  %v11939 = vsel %vm11936, %v11938, %v11934
  %v11940 = vmul.f32 1.0, %v11939
  %v11941 = vrcp.pop %v11515
  %v11942 = vmul.f32 %v11515, %v11941
  %v11943 = vsub.f32 1.0, %v11942
  %v11944 = vmul.f32 %v11941, %v11943
  %v11945 = vadd.f32 %v11941, %v11944
  %vm11946 = vweird.f32 %v11515
  %vm11947 = vweird.f32 %v11941
  %vm11948 = vmor %vm11946, %vm11947
  %v11949 = vsel %vm11948, %v11941, %v11945
  %v11950 = vand.u32 2147483647, %v11515
  %vm11951 = vcmp.eq.f32.partialorder %v11950, 8.507059e+37
  %v11952 = vand.u32 %v11515, 2147483648
  %v11953 = vor.u32 1.1754944e-38, %v11952
  %v11954 = vsel %vm11951, %v11953, %v11949
  %v11955 = vmul.f32 1.0, %v11954
  %v11956 = vrcp.pop %v11516
  %v11957 = vmul.f32 %v11516, %v11956
  %v11958 = vsub.f32 1.0, %v11957
  %v11959 = vmul.f32 %v11956, %v11958
  %v11960 = vadd.f32 %v11956, %v11959
  %vm11961 = vweird.f32 %v11516
  %vm11962 = vweird.f32 %v11956
  %vm11963 = vmor %vm11961, %vm11962
  %v11964 = vsel %vm11963, %v11956, %v11960
  %v11965 = vand.u32 2147483647, %v11516
  %vm11966 = vcmp.eq.f32.partialorder %v11965, 8.507059e+37
  %v11967 = vand.u32 %v11516, 2147483648
  %v11968 = vor.u32 1.1754944e-38, %v11967
  %v11969 = vsel %vm11966, %v11968, %v11964
  %v11970 = vmul.f32 1.0, %v11969
  %v11971 = vrcp.pop %v11517
  %v11972 = vmul.f32 %v11517, %v11971
  %v11973 = vsub.f32 1.0, %v11972
  %v11974 = vmul.f32 %v11971, %v11973
  %v11975 = vadd.f32 %v11971, %v11974
  %vm11976 = vweird.f32 %v11517
  %vm11977 = vweird.f32 %v11971
  %vm11978 = vmor %vm11976, %vm11977
  %v11979 = vsel %vm11978, %v11971, %v11975
  %v11980 = vand.u32 2147483647, %v11517
  %vm11981 = vcmp.eq.f32.partialorder %v11980, 8.507059e+37
  %v11982 = vand.u32 %v11517, 2147483648
  %v11983 = vor.u32 1.1754944e-38, %v11982
  %v11984 = vsel %vm11981, %v11983, %v11979
  %v11985 = vmul.f32 1.0, %v11984
  %v11986 = vrcp.pop %v11518
  %v11987 = vmul.f32 %v11518, %v11986
  %v11988 = vsub.f32 1.0, %v11987
  %v11989 = vmul.f32 %v11986, %v11988
  %v11990 = vadd.f32 %v11986, %v11989
  %vm11991 = vweird.f32 %v11518
  %vm11992 = vweird.f32 %v11986
  %vm11993 = vmor %vm11991, %vm11992
  %v11994 = vsel %vm11993, %v11986, %v11990
  %v11995 = vand.u32 2147483647, %v11518
  %vm11996 = vcmp.eq.f32.partialorder %v11995, 8.507059e+37
  %v11997 = vand.u32 %v11518, 2147483648
  %v11998 = vor.u32 1.1754944e-38, %v11997
  %v11999 = vsel %vm11996, %v11998, %v11994
  %v12000 = vmul.f32 1.0, %v11999
  %v12001 = vrcp.pop %v11519
  %v12002 = vmul.f32 %v11519, %v12001
  %v12003 = vsub.f32 1.0, %v12002
  %v12004 = vmul.f32 %v12001, %v12003
  %v12005 = vadd.f32 %v12001, %v12004
  %vm12006 = vweird.f32 %v11519
  %vm12007 = vweird.f32 %v12001
  %vm12008 = vmor %vm12006, %vm12007
  %v12009 = vsel %vm12008, %v12001, %v12005
  %v12010 = vand.u32 2147483647, %v11519
  %vm12011 = vcmp.eq.f32.partialorder %v12010, 8.507059e+37
  %v12012 = vand.u32 %v11519, 2147483648
  %v12013 = vor.u32 1.1754944e-38, %v12012
  %v12014 = vsel %vm12011, %v12013, %v12009
  %v12015 = vmul.f32 1.0, %v12014
  %v12016 = vrcp.pop %v11520
  %v12017 = vmul.f32 %v11520, %v12016
  %v12018 = vsub.f32 1.0, %v12017
  %v12019 = vmul.f32 %v12016, %v12018
  %v12020 = vadd.f32 %v12016, %v12019
  %vm12021 = vweird.f32 %v11520
  %vm12022 = vweird.f32 %v12016
  %vm12023 = vmor %vm12021, %vm12022
  %v12024 = vsel %vm12023, %v12016, %v12020
  %v12025 = vand.u32 2147483647, %v11520
  %vm12026 = vcmp.eq.f32.partialorder %v12025, 8.507059e+37
  %v12027 = vand.u32 %v11520, 2147483648
  %v12028 = vor.u32 1.1754944e-38, %v12027
  %v12029 = vsel %vm12026, %v12028, %v12024
  %v12030 = vmul.f32 1.0, %v12029
  %v12031 = vrcp.pop %v11521
  %v12032 = vmul.f32 %v11521, %v12031
  %v12033 = vsub.f32 1.0, %v12032
  %v12034 = vmul.f32 %v12031, %v12033
  %v12035 = vadd.f32 %v12031, %v12034
  %vm12036 = vweird.f32 %v11521
  %vm12037 = vweird.f32 %v12031
  %vm12038 = vmor %vm12036, %vm12037
  %v12039 = vsel %vm12038, %v12031, %v12035
  %v12040 = vand.u32 2147483647, %v11521
  %vm12041 = vcmp.eq.f32.partialorder %v12040, 8.507059e+37
  %v12042 = vand.u32 %v11521, 2147483648
  %v12043 = vor.u32 1.1754944e-38, %v12042
  %v12044 = vsel %vm12041, %v12043, %v12039
  %v12045 = vmul.f32 1.0, %v12044
  %v12046 = vrcp.pop %v11522
  %v12047 = vmul.f32 %v11522, %v12046
  %v12048 = vsub.f32 1.0, %v12047
  %v12049 = vmul.f32 %v12046, %v12048
  %v12050 = vadd.f32 %v12046, %v12049
  %vm12051 = vweird.f32 %v11522
  %vm12052 = vweird.f32 %v12046
  %vm12053 = vmor %vm12051, %vm12052
  %v12054 = vsel %vm12053, %v12046, %v12050
  %v12055 = vand.u32 2147483647, %v11522
  %vm12056 = vcmp.eq.f32.partialorder %v12055, 8.507059e+37
  %v12057 = vand.u32 %v11522, 2147483648
  %v12058 = vor.u32 1.1754944e-38, %v12057
  %v12059 = vsel %vm12056, %v12058, %v12054
  %v12060 = vmul.f32 1.0, %v12059
  %v12061 = vrcp.pop %v11523
  %v12062 = vmul.f32 %v11523, %v12061
  %v12063 = vsub.f32 1.0, %v12062
  %v12064 = vmul.f32 %v12061, %v12063
  %v12065 = vadd.f32 %v12061, %v12064
  %vm12066 = vweird.f32 %v11523
  %vm12067 = vweird.f32 %v12061
  %vm12068 = vmor %vm12066, %vm12067
  %v12069 = vsel %vm12068, %v12061, %v12065
  %v12070 = vand.u32 2147483647, %v11523
  %vm12071 = vcmp.eq.f32.partialorder %v12070, 8.507059e+37
  %v12072 = vand.u32 %v11523, 2147483648
  %v12073 = vor.u32 1.1754944e-38, %v12072
  %v12074 = vsel %vm12071, %v12073, %v12069
  %v12075 = vmul.f32 1.0, %v12074
  %v12076 = vrcp.pop %v11524
  %v12077 = vmul.f32 %v11524, %v12076
  %v12078 = vsub.f32 1.0, %v12077
  %v12079 = vmul.f32 %v12076, %v12078
  %v12080 = vadd.f32 %v12076, %v12079
  %vm12081 = vweird.f32 %v11524
  %vm12082 = vweird.f32 %v12076
  %vm12083 = vmor %vm12081, %vm12082
  %v12084 = vsel %vm12083, %v12076, %v12080
  %v12085 = vand.u32 2147483647, %v11524
  %vm12086 = vcmp.eq.f32.partialorder %v12085, 8.507059e+37
  %v12087 = vand.u32 %v11524, 2147483648
  %v12088 = vor.u32 1.1754944e-38, %v12087
  %v12089 = vsel %vm12086, %v12088, %v12084
  %v12090 = vmul.f32 1.0, %v12089
  %v12091 = vrcp.pop %v11525
  %v12092 = vmul.f32 %v11525, %v12091
  %v12093 = vsub.f32 1.0, %v12092
  %v12094 = vmul.f32 %v12091, %v12093
  %v12095 = vadd.f32 %v12091, %v12094
  %vm12096 = vweird.f32 %v11525
  %vm12097 = vweird.f32 %v12091
  %vm12098 = vmor %vm12096, %vm12097
  %v12099 = vsel %vm12098, %v12091, %v12095
  %v12100 = vand.u32 2147483647, %v11525
  %vm12101 = vcmp.eq.f32.partialorder %v12100, 8.507059e+37
  %v12102 = vand.u32 %v11525, 2147483648
  %v12103 = vor.u32 1.1754944e-38, %v12102
  %v12104 = vsel %vm12101, %v12103, %v12099
  %v12105 = vmul.f32 1.0, %v12104
  %v12106 = vrcp.pop %v11526
  %v12107 = vmul.f32 %v11526, %v12106
  %v12108 = vsub.f32 1.0, %v12107
  %v12109 = vmul.f32 %v12106, %v12108
  %v12110 = vadd.f32 %v12106, %v12109
  %vm12111 = vweird.f32 %v11526
  %vm12112 = vweird.f32 %v12106
  %vm12113 = vmor %vm12111, %vm12112
  %v12114 = vsel %vm12113, %v12106, %v12110
  %v12115 = vand.u32 2147483647, %v11526
  %vm12116 = vcmp.eq.f32.partialorder %v12115, 8.507059e+37
  %v12117 = vand.u32 %v11526, 2147483648
  %v12118 = vor.u32 1.1754944e-38, %v12117
  %v12119 = vsel %vm12116, %v12118, %v12114
  %v12120 = vmul.f32 1.0, %v12119
  %v12121 = vrcp.pop %v11527
  %v12122 = vmul.f32 %v11527, %v12121
  %v12123 = vsub.f32 1.0, %v12122
  %v12124 = vmul.f32 %v12121, %v12123
  %v12125 = vadd.f32 %v12121, %v12124
  %vm12126 = vweird.f32 %v11527
  %vm12127 = vweird.f32 %v12121
  %vm12128 = vmor %vm12126, %vm12127
  %v12129 = vsel %vm12128, %v12121, %v12125
  %v12130 = vand.u32 2147483647, %v11527
  %vm12131 = vcmp.eq.f32.partialorder %v12130, 8.507059e+37
  %v12132 = vand.u32 %v11527, 2147483648
  %v12133 = vor.u32 1.1754944e-38, %v12132
  %v12134 = vsel %vm12131, %v12133, %v12129
  %v12135 = vmul.f32 1.0, %v12134
  %v12136 = vrcp.pop %v11528
  %v12137 = vmul.f32 %v11528, %v12136
  %v12138 = vsub.f32 1.0, %v12137
  %v12139 = vmul.f32 %v12136, %v12138
  %v12140 = vadd.f32 %v12136, %v12139
  %vm12141 = vweird.f32 %v11528
  %vm12142 = vweird.f32 %v12136
  %vm12143 = vmor %vm12141, %vm12142
  %v12144 = vsel %vm12143, %v12136, %v12140
  %v12145 = vand.u32 2147483647, %v11528
  %vm12146 = vcmp.eq.f32.partialorder %v12145, 8.507059e+37
  %v12147 = vand.u32 %v11528, 2147483648
  %v12148 = vor.u32 1.1754944e-38, %v12147
  %v12149 = vsel %vm12146, %v12148, %v12144
  %v12150 = vmul.f32 1.0, %v12149
  %v12151 = vrcp.pop %v11529
  %v12152 = vmul.f32 %v11529, %v12151
  %v12153 = vsub.f32 1.0, %v12152
  %v12154 = vmul.f32 %v12151, %v12153
  %v12155 = vadd.f32 %v12151, %v12154
  %vm12156 = vweird.f32 %v11529
  %vm12157 = vweird.f32 %v12151
  %vm12158 = vmor %vm12156, %vm12157
  %v12159 = vsel %vm12158, %v12151, %v12155
  %v12160 = vand.u32 2147483647, %v11529
  %vm12161 = vcmp.eq.f32.partialorder %v12160, 8.507059e+37
  %v12162 = vand.u32 %v11529, 2147483648
  %v12163 = vor.u32 1.1754944e-38, %v12162
  %v12164 = vsel %vm12161, %v12163, %v12159
  %v12165 = vmul.f32 1.0, %v12164
  %v12166 = vrcp.pop %v11530
  %v12167 = vmul.f32 %v11530, %v12166
  %v12168 = vsub.f32 1.0, %v12167
  %v12169 = vmul.f32 %v12166, %v12168
  %v12170 = vadd.f32 %v12166, %v12169
  %vm12171 = vweird.f32 %v11530
  %vm12172 = vweird.f32 %v12166
  %vm12173 = vmor %vm12171, %vm12172
  %v12174 = vsel %vm12173, %v12166, %v12170
  %v12175 = vand.u32 2147483647, %v11530
  %vm12176 = vcmp.eq.f32.partialorder %v12175, 8.507059e+37
  %v12177 = vand.u32 %v11530, 2147483648
  %v12178 = vor.u32 1.1754944e-38, %v12177
  %v12179 = vsel %vm12176, %v12178, %v12174
  %v12180 = vmul.f32 1.0, %v12179
  %v12181 = vrcp.pop %v11531
  %v12182 = vmul.f32 %v11531, %v12181
  %v12183 = vsub.f32 1.0, %v12182
  %v12184 = vmul.f32 %v12181, %v12183
  %v12185 = vadd.f32 %v12181, %v12184
  %vm12186 = vweird.f32 %v11531
  %vm12187 = vweird.f32 %v12181
  %vm12188 = vmor %vm12186, %vm12187
  %v12189 = vsel %vm12188, %v12181, %v12185
  %v12190 = vand.u32 2147483647, %v11531
  %vm12191 = vcmp.eq.f32.partialorder %v12190, 8.507059e+37
  %v12192 = vand.u32 %v11531, 2147483648
  %v12193 = vor.u32 1.1754944e-38, %v12192
  %v12194 = vsel %vm12191, %v12193, %v12189
  %v12195 = vmul.f32 1.0, %v12194
  %v12196 = vrcp.pop %v11532
  %v12197 = vmul.f32 %v11532, %v12196
  %v12198 = vsub.f32 1.0, %v12197
  %v12199 = vmul.f32 %v12196, %v12198
  %v12200 = vadd.f32 %v12196, %v12199
  %vm12201 = vweird.f32 %v11532
  %vm12202 = vweird.f32 %v12196
  %vm12203 = vmor %vm12201, %vm12202
  %v12204 = vsel %vm12203, %v12196, %v12200
  %v12205 = vand.u32 2147483647, %v11532
  %vm12206 = vcmp.eq.f32.partialorder %v12205, 8.507059e+37
  %v12207 = vand.u32 %v11532, 2147483648
  %v12208 = vor.u32 1.1754944e-38, %v12207
  %v12209 = vsel %vm12206, %v12208, %v12204
  %v12210 = vmul.f32 1.0, %v12209
  %v12211 = vrcp.pop %v11533
  %v12212 = vmul.f32 %v11533, %v12211
  %v12213 = vsub.f32 1.0, %v12212
  %v12214 = vmul.f32 %v12211, %v12213
  %v12215 = vadd.f32 %v12211, %v12214
  %vm12216 = vweird.f32 %v11533
  %vm12217 = vweird.f32 %v12211
  %vm12218 = vmor %vm12216, %vm12217
  %v12219 = vsel %vm12218, %v12211, %v12215
  %v12220 = vand.u32 2147483647, %v11533
  %vm12221 = vcmp.eq.f32.partialorder %v12220, 8.507059e+37
  %v12222 = vand.u32 %v11533, 2147483648
  %v12223 = vor.u32 1.1754944e-38, %v12222
  %v12224 = vsel %vm12221, %v12223, %v12219
  %v12225 = vmul.f32 1.0, %v12224
  %v12226 = vrcp.pop %v11534
  %v12227 = vmul.f32 %v11534, %v12226
  %v12228 = vsub.f32 1.0, %v12227
  %v12229 = vmul.f32 %v12226, %v12228
  %v12230 = vadd.f32 %v12226, %v12229
  %vm12231 = vweird.f32 %v11534
  %vm12232 = vweird.f32 %v12226
  %vm12233 = vmor %vm12231, %vm12232
  %v12234 = vsel %vm12233, %v12226, %v12230
  %v12235 = vand.u32 2147483647, %v11534
  %vm12236 = vcmp.eq.f32.partialorder %v12235, 8.507059e+37
  %v12237 = vand.u32 %v11534, 2147483648
  %v12238 = vor.u32 1.1754944e-38, %v12237
  %v12239 = vsel %vm12236, %v12238, %v12234
  %v12240 = vmul.f32 1.0, %v12239
  %v12241 = vrcp.pop %v11535
  %v12242 = vmul.f32 %v11535, %v12241
  %v12243 = vsub.f32 1.0, %v12242
  %v12244 = vmul.f32 %v12241, %v12243
  %v12245 = vadd.f32 %v12241, %v12244
  %vm12246 = vweird.f32 %v11535
  %vm12247 = vweird.f32 %v12241
  %vm12248 = vmor %vm12246, %vm12247
  %v12249 = vsel %vm12248, %v12241, %v12245
  %v12250 = vand.u32 2147483647, %v11535
  %vm12251 = vcmp.eq.f32.partialorder %v12250, 8.507059e+37
  %v12252 = vand.u32 %v11535, 2147483648
  %v12253 = vor.u32 1.1754944e-38, %v12252
  %v12254 = vsel %vm12251, %v12253, %v12249
  %v12255 = vmul.f32 1.0, %v12254
  %v12256 = vtanh.pop %v11328
  %v12257 = vtanh.pop %v11329
  %v12258 = vtanh.pop %v11330
  %v12259 = vtanh.pop %v11331
  %v12260 = vtanh.pop %v11332
  %v12261 = vtanh.pop %v11333
  %v12262 = vtanh.pop %v11334
  %v12263 = vtanh.pop %v11335
  %v12264 = vtanh.pop %v11336
  %v12265 = vtanh.pop %v11337
  %v12266 = vtanh.pop %v11338
  %v12267 = vtanh.pop %v11339
  %v12268 = vtanh.pop %v11340
  %v12269 = vtanh.pop %v11341
  %v12270 = vtanh.pop %v11342
  %v12271 = vtanh.pop %v11343
  %v12272 = vmul.f32 %v11790, %v6028
  %v12273 = vmul.f32 %v11805, %v6029
  %v12274 = vmul.f32 %v11820, %v6030
  %v12275 = vmul.f32 %v11835, %v6031
  %v12276 = vmul.f32 %v11850, %v6032
  %v12277 = vmul.f32 %v11865, %v6033
  %v12278 = vmul.f32 %v11880, %v6034
  %v12279 = vmul.f32 %v11895, %v6035
  %v12280 = vmul.f32 %v11910, %v6036
  %v12281 = vmul.f32 %v11925, %v6037
  %v12282 = vmul.f32 %v11940, %v6038
  %v12283 = vmul.f32 %v11955, %v6039
  %v12284 = vmul.f32 %v11970, %v6040
  %v12285 = vmul.f32 %v11985, %v6041
  %v12286 = vmul.f32 %v12000, %v6042
  %v12287 = vmul.f32 %v12015, %v6043
  %v12288 = vmul.f32 %v11550, %v12256
  %v12289 = vmul.f32 %v11565, %v12257
  %v12290 = vmul.f32 %v11580, %v12258
  %v12291 = vmul.f32 %v11595, %v12259
  %v12292 = vmul.f32 %v11610, %v12260
  %v12293 = vmul.f32 %v11625, %v12261
  %v12294 = vmul.f32 %v11640, %v12262
  %v12295 = vmul.f32 %v11655, %v12263
  %v12296 = vmul.f32 %v11670, %v12264
  %v12297 = vmul.f32 %v11685, %v12265
  %v12298 = vmul.f32 %v11700, %v12266
  %v12299 = vmul.f32 %v11715, %v12267
  %v12300 = vmul.f32 %v11730, %v12268
  %v12301 = vmul.f32 %v11745, %v12269
  %v12302 = vmul.f32 %v11760, %v12270
  %v12303 = vmul.f32 %v11775, %v12271
  %v12304 = vadd.f32 %v12272, %v12288
  %v12305 = vadd.f32 %v12273, %v12289
  %v12306 = vadd.f32 %v12274, %v12290
  %v12307 = vadd.f32 %v12275, %v12291
  %v12308 = vadd.f32 %v12276, %v12292
  %v12309 = vadd.f32 %v12277, %v12293
  %v12310 = vadd.f32 %v12278, %v12294
  %v12311 = vadd.f32 %v12279, %v12295
  %v12312 = vadd.f32 %v12280, %v12296
  %v12313 = vadd.f32 %v12281, %v12297
  %v12314 = vadd.f32 %v12282, %v12298
  %v12315 = vadd.f32 %v12283, %v12299
  %v12316 = vadd.f32 %v12284, %v12300
  %v12317 = vadd.f32 %v12285, %v12301
  %v12318 = vadd.f32 %v12286, %v12302
  %v12319 = vadd.f32 %v12287, %v12303
  %v12320 = vtanh.pop %v12304
  %v12321 = vtanh.pop %v12305
  %v12322 = vtanh.pop %v12306
  %v12323 = vtanh.pop %v12307
  %v12324 = vtanh.pop %v12308
  %v12325 = vtanh.pop %v12309
  %v12326 = vtanh.pop %v12310
  %v12327 = vtanh.pop %v12311
  %v12328 = vtanh.pop %v12312
  %v12329 = vtanh.pop %v12313
  %v12330 = vtanh.pop %v12314
  %v12331 = vtanh.pop %v12315
  %v12332 = vtanh.pop %v12316
  %v12333 = vtanh.pop %v12317
  %v12334 = vtanh.pop %v12318
  %v12335 = vtanh.pop %v12319
  %v12336 = vmul.f32 %v12030, %v12320
  %v12337 = vmul.f32 %v12045, %v12321
  %v12338 = vmul.f32 %v12060, %v12322
  %v12339 = vmul.f32 %v12075, %v12323
  %v12340 = vmul.f32 %v12090, %v12324
  %v12341 = vmul.f32 %v12105, %v12325
  %v12342 = vmul.f32 %v12120, %v12326
  %v12343 = vmul.f32 %v12135, %v12327
  %v12344 = vmul.f32 %v12150, %v12328
  %v12345 = vmul.f32 %v12165, %v12329
  %v12346 = vmul.f32 %v12180, %v12330
  %v12347 = vmul.f32 %v12195, %v12331
  %v12348 = vmul.f32 %v12210, %v12332
  %v12349 = vmul.f32 %v12225, %v12333
  %v12350 = vmul.f32 %v12240, %v12334
  %v12351 = vmul.f32 %v12255, %v12335
  %12352 = vst [vmem:[%s12] sm:$0xff] %v12336
  %12353 = vst [vmem:[%s12 + $0x8] sm:$0xff] %v12337
  %12354 = vst [vmem:[%s12 + $0x10] sm:$0xff] %v12338
  %12355 = vst [vmem:[%s12 + $0x18] sm:$0xff] %v12339
  %12356 = vst [vmem:[%s12 + $0x20] sm:$0xff] %v12340
  %12357 = vst [vmem:[%s12 + $0x28] sm:$0xff] %v12341
  %12358 = vst [vmem:[%s12 + $0x30] sm:$0xff] %v12342
  %12359 = vst [vmem:[%s12 + $0x38] sm:$0xff] %v12343
  %12360 = vst [vmem:[%s12 + $0x40] sm:$0xff] %v12344
  %12361 = vst [vmem:[%s12 + $0x48] sm:$0xff] %v12345
  %12362 = vst [vmem:[%s12 + $0x50] sm:$0xff] %v12346
  %12363 = vst [vmem:[%s12 + $0x58] sm:$0xff] %v12347
  %12364 = vst [vmem:[%s12 + $0x60] sm:$0xff] %v12348
  %12365 = vst [vmem:[%s12 + $0x68] sm:$0xff] %v12349
  %12366 = vst [vmem:[%s12 + $0x70] sm:$0xff] %v12350
  %12367 = vst [vmem:[%s12 + $0x78] sm:$0xff] %v12351
  %12368 = vst [vmem:[%s12 + $0x80] sm:$0xff] %v12304
  %12369 = vst [vmem:[%s12 + $0x88] sm:$0xff] %v12305
  %12370 = vst [vmem:[%s12 + $0x90] sm:$0xff] %v12306
  %12371 = vst [vmem:[%s12 + $0x98] sm:$0xff] %v12307
  %12372 = vst [vmem:[%s12 + $0xa0] sm:$0xff] %v12308
  %12373 = vst [vmem:[%s12 + $0xa8] sm:$0xff] %v12309
  %12374 = vst [vmem:[%s12 + $0xb0] sm:$0xff] %v12310
  %12375 = vst [vmem:[%s12 + $0xb8] sm:$0xff] %v12311
  %12376 = vst [vmem:[%s12 + $0xc0] sm:$0xff] %v12312
  %12377 = vst [vmem:[%s12 + $0xc8] sm:$0xff] %v12313
  %12378 = vst [vmem:[%s12 + $0xd0] sm:$0xff] %v12314
  %12379 = vst [vmem:[%s12 + $0xd8] sm:$0xff] %v12315
  %12380 = vst [vmem:[%s12 + $0xe0] sm:$0xff] %v12316
  %12381 = vst [vmem:[%s12 + $0xe8] sm:$0xff] %v12317
  %12382 = vst [vmem:[%s12 + $0xf0] sm:$0xff] %v12318
  %12383 = vst [vmem:[%s12 + $0xf8] sm:$0xff] %v12319
  // Predicated region
  $region46: #{convlstm_forward.1} parent=0 // pred_check
    _
  $region47: #{convlstm_forward.1} parent=0 // pred_check_branch
    %12385 = sbr.rel (0) target = $region49
  $region48: #{convlstm_forward.1} parent=0 // pred_region
    _
  $region49: #{convlstm_forward.1} parent=0 // pred_fallthru
    _
  // Predicated region
  $region50: #{convlstm_forward.1} parent=0 // pred_check
    _
  $region51: #{convlstm_forward.1} parent=0 // pred_check_branch
    %12387 = sbr.rel (0) target = $region53
  $region52: #{convlstm_forward.1} parent=0 // pred_region
    _
  $region53: #{convlstm_forward.1} parent=0 // pred_fallthru
    _
  // Predicated region
  $region54: #{convlstm_forward.1} parent=0 // pred_check
    _
  $region55: #{convlstm_forward.1} parent=0 // pred_check_branch
    %12389 = sbr.rel (0) target = $region57
  $region56: #{convlstm_forward.1} parent=0 // pred_region
    _
  $region57: #{convlstm_forward.1} parent=0 // pred_fallthru
    _
  // Predicated region
  $region58: #{convlstm_forward.1} parent=0 // pred_check
    _
  $region59: #{convlstm_forward.1} parent=0 // pred_check_branch
    %12391 = sbr.rel (0) target = $region61
  $region60: #{convlstm_forward.1} parent=0 // pred_region
    _
  $region61: #{convlstm_forward.1} parent=0 // pred_fallthru
    _

</llo_original>
